<compile_context>
chip_gen: v6e
topology: v6e:2x2x1
jax: 0.10.0
libtpu: 0.0.40
codegen_flags: <defaults>
</compile_context>

<pallas_src>
import functools

import jax
import jax.numpy as jnp
from jax.experimental import pallas as pl
from jax.experimental.pallas import tpu as pltpu


_PAR = pltpu.CompilerParams(dimension_semantics=("parallel",))


# ----------------------------------------------------------------------------
# small helpers
# ----------------------------------------------------------------------------
def _row_split(m):
    """(grid, block_rows) for an 8-aligned row count.  Two row blocks give the
    v7x megacore a parallel axis; on single-TC chips it is a cheap 2-step loop."""
    if m % 16 == 0:
        return 2, m // 2
    assert m % 8 == 0, m
    return 1, m


def _gelu_exact(x):
    # Exact (erf-based) GELU matching torch.nn.GELU() default.
    # erf via Abramowitz-Stegun 7.1.26 (|err| < 1.5e-7), only exp/mul/div/where
    # so it always lowers in Mosaic.  Division kept full precision on purpose
    # (approx EUP reciprocal would inject ~1e-4 relative error).
    z = x * jnp.float32(0.7071067811865476)
    a = jnp.abs(z)
    t = 1.0 / (1.0 + jnp.float32(0.3275911) * a)
    poly = t * (jnp.float32(0.254829592)
                + t * (jnp.float32(-0.284496736)
                       + t * (jnp.float32(1.421413741)
                              + t * (jnp.float32(-1.453152027)
                                     + t * jnp.float32(1.061405429)))))
    erf_a = 1.0 - poly * jnp.exp(-a * a)
    erf_z = jnp.where(z >= 0, erf_a, -erf_a)
    return 0.5 * x * (1.0 + erf_z)


# ----------------------------------------------------------------------------
# Pallas kernel 1: token embedding (3-tap circular conv) + forward real DFT
# ----------------------------------------------------------------------------
def _embed_dft_kernel(feat_ref, ew_ref, cs_ref, enc_ref, xf_ref):
    f = feat_ref[...]                                   # (tm, 3): x_{t-1}, x_t, x_{t+1}
    w = ew_ref[...]                                     # (3, D)
    # VPU broadcast-FMAs instead of a K=3 MXU matmul.
    enc = f[:, 0:1] * w[0:1, :]
    enc = enc + f[:, 1:2] * w[1:2, :]
    enc = enc + f[:, 2:3] * w[2:3, :]
    enc_ref[...] = enc
    xf_ref[...] = jnp.dot(enc, cs_ref[...], preferred_element_type=jnp.float32)


def embed_and_dft_fwd(feats, embed_w, cs):
    """feats: (M, 3), embed_w: (3, D), cs: (D, 2F) -> (enc (M, D), xf (M, 2F))."""
    M = feats.shape[0]
    D = embed_w.shape[1]
    F2 = cs.shape[1]
    g, tm = _row_split(M)
    return pl.pallas_call(
        _embed_dft_kernel,
        out_shape=(jax.ShapeDtypeStruct((M, D), jnp.float32),
                   jax.ShapeDtypeStruct((M, F2), jnp.float32)),
        grid=(g,),
        in_specs=[pl.BlockSpec((tm, 3), lambda i: (i, 0)),
                  pl.BlockSpec((3, D), lambda i: (0, 0)),
                  pl.BlockSpec((D, F2), lambda i: (0, 0))],
        out_specs=(pl.BlockSpec((tm, D), lambda i: (i, 0)),
                   pl.BlockSpec((tm, F2), lambda i: (i, 0))),
        compiler_params=_PAR,
    )(feats, embed_w, cs)


# ----------------------------------------------------------------------------
# Pallas kernel 2: masked inverse real DFT + trend (x - season)
# ----------------------------------------------------------------------------
def _idft_kernel(xf_ref, x_ref, icis_ref, sea_ref, trd_ref):
    season = jnp.dot(xf_ref[...], icis_ref[...], preferred_element_type=jnp.float32)
    sea_ref[...] = season
    trd_ref[...] = x_ref[...] - season


def idft_and_trend(xf_keep, x_all, icis):
    """xf_keep: (M, 2F) already threshold-masked, x_all: (M, D), icis: (2F, D)."""
    M, F2 = xf_keep.shape
    D = x_all.shape[1]
    g, tm = _row_split(M)
    return pl.pallas_call(
        _idft_kernel,
        out_shape=(jax.ShapeDtypeStruct((M, D), jnp.float32),) * 2,
        grid=(g,),
        in_specs=[pl.BlockSpec((tm, F2), lambda i: (i, 0)),
                  pl.BlockSpec((tm, D), lambda i: (i, 0)),
                  pl.BlockSpec((F2, D), lambda i: (0, 0))],
        out_specs=(pl.BlockSpec((tm, D), lambda i: (i, 0)),) * 2,
        compiler_params=_PAR,
    )(xf_keep, x_all, icis)


# ----------------------------------------------------------------------------
# Pallas kernel 3: full multi-scale season + trend mixing (all MLPs fused)
# ----------------------------------------------------------------------------
def _mixing_kernel(*refs, n):
    k = 0
    season = [refs[k + i][...] for i in range(n)]; k += n
    trend = [refs[k + i][...] for i in range(n)]; k += n
    sw = [tuple(refs[k + 4 * i + j][...] for j in range(4)) for i in range(n - 1)]
    k += 4 * (n - 1)
    tw = [tuple(refs[k + 4 * i + j][...] for j in range(4)) for i in range(n - 1)]
    k += 4 * (n - 1)
    outs = refs[k:k + n]

    def mlp(x, w1, b1, w2, b2):
        h = _gelu_exact(jnp.dot(x, w1, preferred_element_type=jnp.float32) + b1)
        return jnp.dot(h, w2, preferred_element_type=jnp.float32) + b2

    # MultiScaleSeasonMixing (bottom-up)
    out_high, out_low = season[0], season[1]
    out_season = [out_high]
    for i in range(n - 1):
        out_low = out_low + mlp(out_high, *sw[i])
        out_high = out_low
        if i + 2 <= n - 1:
            out_low = season[i + 2]
        out_season.append(out_high)

    # MultiScaleTrendMixing (top-down)
    rev = trend[::-1]
    out_low, out_high = rev[0], rev[1]
    out_trend = [out_low]
    for i in range(n - 1):
        out_high = out_high + mlp(out_low, *tw[i])
        out_low = out_high
        if i + 2 <= n - 1:
            out_high = rev[i + 2]
        out_trend.append(out_low)
    out_trend = out_trend[::-1]

    for i in range(n):
        outs[i][...] = out_season[i] + out_trend[i]


def _data_map(i):
    return (i, 0)


def _weight_map(i):
    return (0, 0)


def multiscale_mixing(season_t, trend_t, season_w, trend_w):
    """season_t/trend_t: lists of (R, T_i) (time-major); *_w: lists of
    (w1, b1, w2, b2) with biases shaped (1, N).  Returns list of (R, T_i)
    containing out_season + out_trend per scale (still time-major)."""
    n = len(season_t)
    R = season_t[0].shape[0]
    g, tr = _row_split(R)

    data_in = list(season_t) + list(trend_t)
    wt_in = ([w for tup in season_w for w in tup]
             + [w for tup in trend_w for w in tup])

    in_specs = ([pl.BlockSpec((tr, a.shape[1]), _data_map) for a in data_in]
                + [pl.BlockSpec(a.shape, _weight_map) for a in wt_in])
    out_specs = tuple(pl.BlockSpec((tr, a.shape[1]), _data_map) for a in season_t)
    out_shape = tuple(jax.ShapeDtypeStruct((R, a.shape[1]), jnp.float32)
                      for a in season_t)

    return pl.pallas_call(
        functools.partial(_mixing_kernel, n=n),
        out_shape=out_shape,
        grid=(g,),
        in_specs=in_specs,
        out_specs=out_specs,
        compiler_params=_PAR,
    )(*data_in, *wt_in)


# ----------------------------------------------------------------------------
# Pallas kernel 4: cross MLP + residual (+ next layer's forward DFT)
# ----------------------------------------------------------------------------
def _cross_kernel(*refs, with_dft):
    if with_dft:
        ori_ref, mix_ref, w1_ref, b1_ref, w2_ref, b2_ref, cs_ref, out_ref, xf_ref = refs
    else:
        ori_ref, mix_ref, w1_ref, b1_ref, w2_ref, b2_ref, out_ref = refs
    h = _gelu_exact(jnp.dot(mix_ref[...], w1_ref[...],
                            preferred_element_type=jnp.float32) + b1_ref[...])
    out = ori_ref[...] + jnp.dot(h, w2_ref[...],
                                 preferred_element_type=jnp.float32) + b2_ref[...]
    out_ref[...] = out
    if with_dft:
        xf_ref[...] = jnp.dot(out, cs_ref[...], preferred_element_type=jnp.float32)


def cross_residual(ori, mix, w1, b1, w2, b2, cs=None):
    """out = ori + Linear(GELU(Linear(mix)));  optionally also out @ CS."""
    M, D = ori.shape
    dff = w1.shape[1]
    g, tm = _row_split(M)
    with_dft = cs is not None

    inputs = [ori, mix, w1, b1, w2, b2] + ([cs] if with_dft else [])
    in_specs = [pl.BlockSpec((tm, D), _data_map),
                pl.BlockSpec((tm, D), _data_map),
                pl.BlockSpec((D, dff), _weight_map),
                pl.BlockSpec((1, dff), _weight_map),
                pl.BlockSpec((dff, D), _weight_map),
                pl.BlockSpec((1, D), _weight_map)]
    if with_dft:
        F2 = cs.shape[1]
        in_specs.append(pl.BlockSpec((D, F2), _weight_map))
        out_shape = (jax.ShapeDtypeStruct((M, D), jnp.float32),
                     jax.ShapeDtypeStruct((M, F2), jnp.float32))
        out_specs = (pl.BlockSpec((tm, D), _data_map),
                     pl.BlockSpec((tm, F2), _data_map))
    else:
        out_shape = jax.ShapeDtypeStruct((M, D), jnp.float32)
        out_specs = pl.BlockSpec((tm, D), _data_map)

    return pl.pallas_call(
        functools.partial(_cross_kernel, with_dft=with_dft),
        out_shape=out_shape,
        grid=(g,),
        in_specs=in_specs,
        out_specs=out_specs,
        compiler_params=_PAR,
    )(*inputs)


# ----------------------------------------------------------------------------
# glue pieces (layout plumbing / tiny stats, plain XLA)
# ----------------------------------------------------------------------------
def dft_matrices(D):
    """Concatenated real-DFT / inverse-real-DFT matrices (D even)."""
    F = D // 2 + 1
    n = jnp.arange(D, dtype=jnp.float32)[:, None]
    k = jnp.arange(F, dtype=jnp.float32)[None, :]
    ang = 2.0 * jnp.pi * n * k / D                       # (D, F)
    Cm = jnp.cos(ang)                                    # rfft real part
    Sm = -jnp.sin(ang)                                   # rfft imag part
    wk = jnp.where((jnp.arange(F) == 0) | (jnp.arange(F) == D // 2), 1.0, 2.0)
    ICm = (wk[:, None] / D) * jnp.cos(ang.T)             # (F, D)
    ISm = -(wk[:, None] / D) * jnp.sin(ang.T)            # (F, D)
    cs = jnp.concatenate([Cm, Sm], axis=1).astype(jnp.float32)       # (D, 2F)
    icis = jnp.concatenate([ICm, ISm], axis=0).astype(jnp.float32)   # (2F, D)
    return cs, icis


def dft_topk_mask(xf_all, offsets, Ts, BC, F, top_k):
    """Per-scale `freq[0]=0` + top-k threshold masking of the rfft output."""
    parts = []
    for off, T in zip(offsets, Ts):
        xf = xf_all[off:off + BC * T]                    # (BC*T, 2F)
        re = xf[:, :F].reshape(BC, T, F)
        im = xf[:, F:].reshape(BC, T, F)
        freq = jnp.sqrt(re * re + im * im)
        freq = freq.at[0].set(0.0)                       # torch quirk: freq[0] = 0
        # TODO(synk): top-k has no clean Pallas TPU primitive; tiny XLA glue.
        thr = jnp.min(jax.lax.top_k(freq, top_k)[0])
        keep = (freq > thr).reshape(BC * T, F)
        parts.append(jnp.where(jnp.concatenate([keep, keep], axis=-1), xf, 0.0))
    return jnp.concatenate(parts, axis=0)


def to_time_major(x_all, offsets, Ts, BC, D):
    """(sum BC*T_i, D) -> list of (BC*D, T_i)."""
    outs = []
    for off, T in zip(offsets, Ts):
        v = x_all[off:off + BC * T].reshape(BC, T, D)
        outs.append(jnp.transpose(v, (0, 2, 1)).reshape(BC * D, T))
    return outs


def from_time_major(xs, BC, D):
    """list of (BC*D, T_i) -> (sum BC*T_i, D)."""
    parts = []
    for v in xs:
        T = v.shape[1]
        parts.append(jnp.transpose(v.reshape(BC, D, T), (0, 2, 1)).reshape(BC * T, D))
    return jnp.concatenate(parts, axis=0)


def revin_norm(x, weight, bias, eps=1e-5):
    """Normalize(..., affine=True, non_norm=False) 'norm' branch.  x: (B, T, C)."""
    mean = jnp.mean(x, axis=1, keepdims=True)
    var = jnp.mean((x - mean) ** 2, axis=1, keepdims=True)    # unbiased=False
    std = jnp.sqrt(var + eps)
    return (x - mean) / std * weight + bias


def avg_downsample(x_btc, w):
    """AvgPool1d(kernel=stride=w) over time of a (B, T, C) tensor."""
    B, T, C = x_btc.shape
    return x_btc.reshape(B, T // w, w, C).mean(axis=2)


# ----------------------------------------------------------------------------
# PastDecomposableMixing block (all scales concatenated)
# ----------------------------------------------------------------------------
def pdm_block(enc_all, xf_all, blk, cs, icis, BC, D, F, Ts, offsets, top_k,
              with_next_dft):
    xf_keep = dft_topk_mask(xf_all, offsets, Ts, BC, F, top_k)
    season_all, trend_all = idft_and_trend(xf_keep, enc_all, icis)

    season_t = to_time_major(season_all, offsets, Ts, BC, D)
    trend_t = to_time_major(trend_all, offsets, Ts, BC, D)
    mixed_t = multiscale_mixing(season_t, trend_t, blk["season"], blk["trend"])
    mix_all = from_time_major(mixed_t, BC, D)

    cw1, cb1, cw2, cb2 = blk["cross"]
    if with_next_dft:
        return cross_residual(enc_all, mix_all, cw1, cb1, cw2, cb2, cs)
    return cross_residual(enc_all, mix_all, cw1, cb1, cw2, cb2), None


# ----------------------------------------------------------------------------
# full TimeMixer forward
# ----------------------------------------------------------------------------
def timemixer_forward(x_enc, params, cfg):
    B, _, C = x_enc.shape
    win, dsl = cfg.down_sampling_window, cfg.down_sampling_layers
    D = cfg.d_model
    F = D // 2 + 1
    BC = B * C
    cs, icis = params["dft_mats"]

    # multi-scale inputs (down_sampling_method='avg')
    x_scales = [x_enc]
    cur = x_enc
    for _ in range(dsl):
        cur = avg_downsample(cur, win)
        x_scales.append(cur)
    Ts = [int(x.shape[1]) for x in x_scales]
    offsets, off = [], 0
    for t in Ts:
        offsets.append(off)
        off += BC * t

    # RevIN norm + 3-tap circular features for the TokenEmbedding conv,
    # concatenated over scales -> (sum BC*T_i, 3)
    feat_parts = []
    for i, x in enumerate(x_scales):
        nw, nb = params["norm"][i]
        xn = revin_norm(x, nw, nb)                               # (B, T_i, C)
        xs = jnp.transpose(xn, (0, 2, 1)).reshape(BC, Ts[i])     # (BC, T_i)
        f = jnp.stack([jnp.roll(xs, 1, axis=1), xs, jnp.roll(xs, -1, axis=1)],
                      axis=-1)
        feat_parts.append(f.reshape(BC * Ts[i], 3))
    feats = jnp.concatenate(feat_parts, axis=0)

    # embedding + first forward DFT in one kernel (dropout is identity at eval)
    enc_all, xf_all = embed_and_dft_fwd(feats, params["embed_w"], cs)

    # PDM blocks
    n_layers = len(params["pdm"])
    for li, blk in enumerate(params["pdm"]):
        enc_all, xf_all = pdm_block(enc_all, xf_all, blk, cs, icis,
                                    BC, D, F, Ts, offsets, cfg.top_k,
                                    with_next_dft=(li < n_layers - 1))

    # future_multi_mixing + projection + fc head: tiny scalar-output layers,
    # kept in plain XLA per perf review (N=1 outputs would waste pallas_calls).
    dec = jnp.zeros((B, C), jnp.float32)
    for i, (o, T) in enumerate(zip(offsets, Ts)):
        enc3 = enc_all[o:o + BC * T].reshape(BC, T, D)
        pw, pb = params["predict"][i]                            # (T, 1), (1,)
        tmp = jnp.einsum("btd,t->bd", enc3, pw[:, 0]) + pb[0]    # (BC, D)
        d = tmp @ params["proj_w"][:, 0] + params["proj_b"][0]   # (BC,)
        dec = dec + d.reshape(B, C)
    h = jax.nn.gelu(dec @ params["fc_w1"] + params["fc_b1"], approximate=False)
    out = h @ params["fc_w2"] + params["fc_b2"]                  # (B, 1)
    return jnp.squeeze(out)                                      # (B,)


# ----------------------------------------------------------------------------
# deterministic parameter init
# ----------------------------------------------------------------------------
def init_params(key, cfg):
    keys = iter(jax.random.split(key, 64))

    def W(shape, scale=0.1):
        return jax.random.normal(next(keys), shape, jnp.float32) * scale

    dsl = cfg.down_sampling_layers
    T = [cfg.seq_len // cfg.down_sampling_window ** i for i in range(dsl + 1)]
    p = {}
    p["dft_mats"] = dft_matrices(cfg.d_model)
    p["embed_w"] = W((3, cfg.d_model))                   # Conv1d(1, d_model, 3)
    p["norm"] = [(jnp.ones((cfg.enc_in,), jnp.float32),
                  jnp.zeros((cfg.enc_in,), jnp.float32)) for _ in range(dsl + 1)]
    pdm = []
    for _ in range(cfg.e_layers):
        blk = {}
        blk["season"] = [
            (W((T[i], T[i + 1])), jnp.zeros((1, T[i + 1]), jnp.float32),
             W((T[i + 1], T[i + 1])), jnp.zeros((1, T[i + 1]), jnp.float32))
            for i in range(dsl)]
        blk["trend"] = [
            (W((T[i + 1], T[i])), jnp.zeros((1, T[i]), jnp.float32),
             W((T[i], T[i])), jnp.zeros((1, T[i]), jnp.float32))
            for i in reversed(range(dsl))]               # layer 0: coarsest -> next
        blk["cross"] = (W((cfg.d_model, cfg.d_ff)),
                        jnp.zeros((1, cfg.d_ff), jnp.float32),
                        W((cfg.d_ff, cfg.d_model)),
                        jnp.zeros((1, cfg.d_model), jnp.float32))
        pdm.append(blk)
    p["pdm"] = pdm
    p["predict"] = [(W((T[i], 1)), jnp.zeros((1,), jnp.float32))
                    for i in range(dsl + 1)]
    p["proj_w"] = W((cfg.d_model, 1))
    p["proj_b"] = jnp.zeros((1,), jnp.float32)
    p["fc_w1"] = W((cfg.enc_in, cfg.enc_in // 2))
    p["fc_b1"] = jnp.zeros((cfg.enc_in // 2,), jnp.float32)
    p["fc_w2"] = W((cfg.enc_in // 2, 1))
    p["fc_b2"] = jnp.zeros((1,), jnp.float32)
    return p


# ----------------------------------------------------------------------------
class Cfg:
    pass


cfg = Cfg()
cfg.seq_len = 16
cfg.pred_len = 1
cfg.down_sampling_window = 2
cfg.down_sampling_layers = 2          # scales: T = 16, 8, 4
cfg.e_layers = 2
cfg.d_model = 16                      # even -> irfft length == d_model
cfg.d_ff = 32
cfg.dropout = 0.1                     # identity at inference
cfg.decomp_method = "dft_decomp"
cfg.top_k = 5
cfg.enc_in = 4
cfg.c_out = 4
cfg.use_norm = 1
cfg.down_sampling_method = "avg"
cfg.moving_avg = 25                   # preprocess (declared but unused in forward)


if __name__ == "__main__":
    kx, kp = jax.random.split(jax.random.PRNGKey(0))
    x_enc = jax.random.normal(kx, (2, cfg.seq_len, cfg.enc_in), jnp.float32)
    params = init_params(kp, cfg)

    fwd = jax.jit(lambda x, p: timemixer_forward(x, p, cfg))
    out = jax.block_until_ready(fwd(x_enc, params))

    assert out.shape == (2,), out.shape
    assert bool(jnp.all(jnp.isfinite(out)))
    print("KERNEL_OK")
</pallas_src>

<mosaic_0001>
module attributes {stable_mosaic.version = 11 : i64} {
  func.func @_embed_dft_kernel(%arg0: i32, %arg1: memref<112x3xf32, #tpu.memory_space<vmem>>, %arg2: memref<3x16xf32, #tpu.memory_space<vmem>>, %arg3: memref<16x18xf32, #tpu.memory_space<vmem>>, %arg4: memref<112x16xf32, #tpu.memory_space<vmem>>, %arg5: memref<112x18xf32, #tpu.memory_space<vmem>>) attributes {dimension_semantics = [#tpu.dimension_semantics<parallel>], iteration_bounds = array<i64: 2>, scalar_prefetch = 0 : i64, scratch_operands = 0 : i64, tpu.core_type = #tpu.core_type<tc>, window_params = [{transform_indices = @transform_0, window_bounds = array<i64: 112, 3>}, {pipeline_mode = #tpu.pipeline_mode<synchronous>, transform_indices = @transform_1, window_bounds = array<i64: 3, 16>}, {pipeline_mode = #tpu.pipeline_mode<synchronous>, transform_indices = @transform_2, window_bounds = array<i64: 16, 18>}, {transform_indices = @transform_3, window_bounds = array<i64: 112, 16>}, {transform_indices = @transform_4, window_bounds = array<i64: 112, 18>}]} {
    %c0 = arith.constant 0 : index
    %c0_0 = arith.constant 0 : index
    %0 = vector.load %arg1[%c0, %c0_0] : memref<112x3xf32, #tpu.memory_space<vmem>>, vector<112x3xf32>
    %c0_1 = arith.constant 0 : index
    %c0_2 = arith.constant 0 : index
    %1 = vector.load %arg2[%c0_1, %c0_2] : memref<3x16xf32, #tpu.memory_space<vmem>>, vector<3x16xf32>
    %2 = vector.extract_strided_slice %0 {offsets = [0, 0], sizes = [112, 1], strides = [1, 1]} : vector<112x3xf32> to vector<112x1xf32>
    %3 = vector.extract_strided_slice %1 {offsets = [0, 0], sizes = [1, 16], strides = [1, 1]} : vector<3x16xf32> to vector<1x16xf32>
    %4 = vector.broadcast %2 : vector<112x1xf32> to vector<112x16xf32>
    %5 = vector.broadcast %3 : vector<1x16xf32> to vector<112x16xf32>
    %6 = arith.mulf %4, %5 : vector<112x16xf32>
    %7 = vector.extract_strided_slice %0 {offsets = [0, 1], sizes = [112, 1], strides = [1, 1]} : vector<112x3xf32> to vector<112x1xf32>
    %8 = vector.extract_strided_slice %1 {offsets = [1, 0], sizes = [1, 16], strides = [1, 1]} : vector<3x16xf32> to vector<1x16xf32>
    %9 = vector.broadcast %7 : vector<112x1xf32> to vector<112x16xf32>
    %10 = vector.broadcast %8 : vector<1x16xf32> to vector<112x16xf32>
    %11 = arith.mulf %9, %10 : vector<112x16xf32>
    %12 = arith.addf %6, %11 : vector<112x16xf32>
    %13 = vector.extract_strided_slice %0 {offsets = [0, 2], sizes = [112, 1], strides = [1, 1]} : vector<112x3xf32> to vector<112x1xf32>
    %14 = vector.extract_strided_slice %1 {offsets = [2, 0], sizes = [1, 16], strides = [1, 1]} : vector<3x16xf32> to vector<1x16xf32>
    %15 = vector.broadcast %13 : vector<112x1xf32> to vector<112x16xf32>
    %16 = vector.broadcast %14 : vector<1x16xf32> to vector<112x16xf32>
    %17 = arith.mulf %15, %16 : vector<112x16xf32>
    %18 = arith.addf %12, %17 : vector<112x16xf32>
    %c0_3 = arith.constant 0 : index
    %c0_4 = arith.constant 0 : index
    %19 = vector.load %arg4[%c0_3, %c0_4] : memref<112x16xf32, #tpu.memory_space<vmem>>, vector<112x16xf32>
    tpu.vector_store %arg4[%c0_3, %c0_4], %18 {strides = array<i32>} : memref<112x16xf32, #tpu.memory_space<vmem>>, vector<112x16xf32>,
    %c0_5 = arith.constant 0 : index
    %c0_6 = arith.constant 0 : index
    %20 = vector.load %arg3[%c0_5, %c0_6] : memref<16x18xf32, #tpu.memory_space<vmem>>, vector<16x18xf32>
    %cst = arith.constant dense<0.000000e+00> : vector<112x18xf32>
    %21 = tpu.matmul %18, %20, %cst {dimension_numbers = #tpu.dot_dimension_numbers<[1], [0], [0], [1], [0, 0, 1, 1], [], []>} : vector<112x16xf32>, vector<16x18xf32>, vector<112x18xf32> -> vector<112x18xf32>
    %c0_7 = arith.constant 0 : index
    %c0_8 = arith.constant 0 : index
    %22 = vector.load %arg5[%c0_7, %c0_8] : memref<112x18xf32, #tpu.memory_space<vmem>>, vector<112x18xf32>
    tpu.vector_store %arg5[%c0_7, %c0_8], %21 {strides = array<i32>} : memref<112x18xf32, #tpu.memory_space<vmem>>, vector<112x18xf32>,
    return
  }
  func.func @transform_0(%arg0: i32) -> (i32, i32) {
    %c0_i32 = arith.constant 0 : i32
    %c0_i32_0 = arith.constant 0 : i32
    return %arg0, %c0_i32 : i32, i32
  }
  func.func @transform_1(%arg0: i32) -> (i32, i32) {
    %c0_i32 = arith.constant 0 : i32
    %c0_i32_0 = arith.constant 0 : i32
    %c0_i32_1 = arith.constant 0 : i32
    return %c0_i32, %c0_i32_0 : i32, i32
  }
  func.func @transform_2(%arg0: i32) -> (i32, i32) {
    %c0_i32 = arith.constant 0 : i32
    %c0_i32_0 = arith.constant 0 : i32
    %c0_i32_1 = arith.constant 0 : i32
    return %c0_i32, %c0_i32_0 : i32, i32
  }
  func.func @transform_3(%arg0: i32) -> (i32, i32) {
    %c0_i32 = arith.constant 0 : i32
    %c0_i32_0 = arith.constant 0 : i32
    return %arg0, %c0_i32 : i32, i32
  }
  func.func @transform_4(%arg0: i32) -> (i32, i32) {
    %c0_i32 = arith.constant 0 : i32
    %c0_i32_0 = arith.constant 0 : i32
    return %arg0, %c0_i32 : i32, i32
  }
}

module attributes {stable_mosaic.version = 11 : i64} {
  func.func @_idft_kernel(%arg0: i32, %arg1: memref<112x18xf32, #tpu.memory_space<vmem>>, %arg2: memref<112x16xf32, #tpu.memory_space<vmem>>, %arg3: memref<18x16xf32, #tpu.memory_space<vmem>>, %arg4: memref<112x16xf32, #tpu.memory_space<vmem>>, %arg5: memref<112x16xf32, #tpu.memory_space<vmem>>) attributes {dimension_semantics = [#tpu.dimension_semantics<parallel>], iteration_bounds = array<i64: 2>, scalar_prefetch = 0 : i64, scratch_operands = 0 : i64, tpu.core_type = #tpu.core_type<tc>, window_params = [{transform_indices = @transform_0, window_bounds = array<i64: 112, 18>}, {transform_indices = @transform_1, window_bounds = array<i64: 112, 16>}, {pipeline_mode = #tpu.pipeline_mode<synchronous>, transform_indices = @transform_2, window_bounds = array<i64: 18, 16>}, {transform_indices = @transform_3, window_bounds = array<i64: 112, 16>}, {transform_indices = @transform_4, window_bounds = array<i64: 112, 16>}]} {
    %c0 = arith.constant 0 : index
    %c0_0 = arith.constant 0 : index
    %0 = vector.load %arg1[%c0, %c0_0] : memref<112x18xf32, #tpu.memory_space<vmem>>, vector<112x18xf32>
    %c0_1 = arith.constant 0 : index
    %c0_2 = arith.constant 0 : index
    %1 = vector.load %arg3[%c0_1, %c0_2] : memref<18x16xf32, #tpu.memory_space<vmem>>, vector<18x16xf32>
    %cst = arith.constant dense<0.000000e+00> : vector<112x16xf32>
    %2 = tpu.matmul %0, %1, %cst {dimension_numbers = #tpu.dot_dimension_numbers<[1], [0], [0], [1], [0, 0, 1, 1], [], []>} : vector<112x18xf32>, vector<18x16xf32>, vector<112x16xf32> -> vector<112x16xf32>
    %c0_3 = arith.constant 0 : index
    %c0_4 = arith.constant 0 : index
    %3 = vector.load %arg4[%c0_3, %c0_4] : memref<112x16xf32, #tpu.memory_space<vmem>>, vector<112x16xf32>
    tpu.vector_store %arg4[%c0_3, %c0_4], %2 {strides = array<i32>} : memref<112x16xf32, #tpu.memory_space<vmem>>, vector<112x16xf32>,
    %c0_5 = arith.constant 0 : index
    %c0_6 = arith.constant 0 : index
    %4 = vector.load %arg2[%c0_5, %c0_6] : memref<112x16xf32, #tpu.memory_space<vmem>>, vector<112x16xf32>
    %5 = arith.subf %4, %2 : vector<112x16xf32>
    %c0_7 = arith.constant 0 : index
    %c0_8 = arith.constant 0 : index
    %6 = vector.load %arg5[%c0_7, %c0_8] : memref<112x16xf32, #tpu.memory_space<vmem>>, vector<112x16xf32>
    tpu.vector_store %arg5[%c0_7, %c0_8], %5 {strides = array<i32>} : memref<112x16xf32, #tpu.memory_space<vmem>>, vector<112x16xf32>,
    return
  }
  func.func @transform_0(%arg0: i32) -> (i32, i32) {
    %c0_i32 = arith.constant 0 : i32
    %c0_i32_0 = arith.constant 0 : i32
    return %arg0, %c0_i32 : i32, i32
  }
  func.func @transform_1(%arg0: i32) -> (i32, i32) {
    %c0_i32 = arith.constant 0 : i32
    %c0_i32_0 = arith.constant 0 : i32
    return %arg0, %c0_i32 : i32, i32
  }
  func.func @transform_2(%arg0: i32) -> (i32, i32) {
    %c0_i32 = arith.constant 0 : i32
    %c0_i32_0 = arith.constant 0 : i32
    %c0_i32_1 = arith.constant 0 : i32
    return %c0_i32, %c0_i32_0 : i32, i32
  }
  func.func @transform_3(%arg0: i32) -> (i32, i32) {
    %c0_i32 = arith.constant 0 : i32
    %c0_i32_0 = arith.constant 0 : i32
    return %arg0, %c0_i32 : i32, i32
  }
  func.func @transform_4(%arg0: i32) -> (i32, i32) {
    %c0_i32 = arith.constant 0 : i32
    %c0_i32_0 = arith.constant 0 : i32
    return %arg0, %c0_i32 : i32, i32
  }
}

module attributes {stable_mosaic.version = 11 : i64} {
  func.func @_mixing_kernel(%arg0: i32, %arg1: memref<64x16xf32, #tpu.memory_space<vmem>>, %arg2: memref<64x8xf32, #tpu.memory_space<vmem>>, %arg3: memref<64x4xf32, #tpu.memory_space<vmem>>, %arg4: memref<64x16xf32, #tpu.memory_space<vmem>>, %arg5: memref<64x8xf32, #tpu.memory_space<vmem>>, %arg6: memref<64x4xf32, #tpu.memory_space<vmem>>, %arg7: memref<16x8xf32, #tpu.memory_space<vmem>>, %arg8: memref<1x8xf32, #tpu.memory_space<vmem>>, %arg9: memref<8x8xf32, #tpu.memory_space<vmem>>, %arg10: memref<1x8xf32, #tpu.memory_space<vmem>>, %arg11: memref<8x4xf32, #tpu.memory_space<vmem>>, %arg12: memref<1x4xf32, #tpu.memory_space<vmem>>, %arg13: memref<4x4xf32, #tpu.memory_space<vmem>>, %arg14: memref<1x4xf32, #tpu.memory_space<vmem>>, %arg15: memref<4x8xf32, #tpu.memory_space<vmem>>, %arg16: memref<1x8xf32, #tpu.memory_space<vmem>>, %arg17: memref<8x8xf32, #tpu.memory_space<vmem>>, %arg18: memref<1x8xf32, #tpu.memory_space<vmem>>, %arg19: memref<8x16xf32, #tpu.memory_space<vmem>>, %arg20: memref<1x16xf32, #tpu.memory_space<vmem>>, %arg21: memref<16x16xf32, #tpu.memory_space<vmem>>, %arg22: memref<1x16xf32, #tpu.memory_space<vmem>>, %arg23: memref<64x16xf32, #tpu.memory_space<vmem>>, %arg24: memref<64x8xf32, #tpu.memory_space<vmem>>, %arg25: memref<64x4xf32, #tpu.memory_space<vmem>>) attributes {dimension_semantics = [#tpu.dimension_semantics<parallel>], iteration_bounds = array<i64: 2>, scalar_prefetch = 0 : i64, scratch_operands = 0 : i64, tpu.core_type = #tpu.core_type<tc>, window_params = [{transform_indices = @transform_0, window_bounds = array<i64: 64, 16>}, {transform_indices = @transform_1, window_bounds = array<i64: 64, 8>}, {transform_indices = @transform_2, window_bounds = array<i64: 64, 4>}, {transform_indices = @transform_3, window_bounds = array<i64: 64, 16>}, {transform_indices = @transform_4, window_bounds = array<i64: 64, 8>}, {transform_indices = @transform_5, window_bounds = array<i64: 64, 4>}, {pipeline_mode = #tpu.pipeline_mode<synchronous>, transform_indices = @transform_6, window_bounds = array<i64: 16, 8>}, {pipeline_mode = #tpu.pipeline_mode<synchronous>, transform_indices = @transform_7, window_bounds = array<i64: 1, 8>}, {pipeline_mode = #tpu.pipeline_mode<synchronous>, transform_indices = @transform_8, window_bounds = array<i64: 8, 8>}, {pipeline_mode = #tpu.pipeline_mode<synchronous>, transform_indices = @transform_9, window_bounds = array<i64: 1, 8>}, {pipeline_mode = #tpu.pipeline_mode<synchronous>, transform_indices = @transform_10, window_bounds = array<i64: 8, 4>}, {pipeline_mode = #tpu.pipeline_mode<synchronous>, transform_indices = @transform_11, window_bounds = array<i64: 1, 4>}, {pipeline_mode = #tpu.pipeline_mode<synchronous>, transform_indices = @transform_12, window_bounds = array<i64: 4, 4>}, {pipeline_mode = #tpu.pipeline_mode<synchronous>, transform_indices = @transform_13, window_bounds = array<i64: 1, 4>}, {pipeline_mode = #tpu.pipeline_mode<synchronous>, transform_indices = @transform_14, window_bounds = array<i64: 4, 8>}, {pipeline_mode = #tpu.pipeline_mode<synchronous>, transform_indices = @transform_15, window_bounds = array<i64: 1, 8>}, {pipeline_mode = #tpu.pipeline_mode<synchronous>, transform_indices = @transform_16, window_bounds = array<i64: 8, 8>}, {pipeline_mode = #tpu.pipeline_mode<synchronous>, transform_indices = @transform_17, window_bounds = array<i64: 1, 8>}, {pipeline_mode = #tpu.pipeline_mode<synchronous>, transform_indices = @transform_18, window_bounds = array<i64: 8, 16>}, {pipeline_mode = #tpu.pipeline_mode<synchronous>, transform_indices = @transform_19, window_bounds = array<i64: 1, 16>}, {pipeline_mode = #tpu.pipeline_mode<synchronous>, transform_indices = @transform_20, window_bounds = array<i64: 16, 16>}, {pipeline_mode = #tpu.pipeline_mode<synchronous>, transform_indices = @transform_21, window_bounds = array<i64: 1, 16>}, {transform_indices = @transform_22, window_bounds = array<i64: 64, 16>}, {transform_indices = @transform_23, window_bounds = array<i64: 64, 8>}, {transform_indices = @transform_24, window_bounds = array<i64: 64, 4>}]} {
    %c0 = arith.constant 0 : index
    %c0_0 = arith.constant 0 : index
    %0 = vector.load %arg1[%c0, %c0_0] : memref<64x16xf32, #tpu.memory_space<vmem>>, vector<64x16xf32>
    %c0_1 = arith.constant 0 : index
    %c0_2 = arith.constant 0 : index
    %1 = vector.load %arg2[%c0_1, %c0_2] : memref<64x8xf32, #tpu.memory_space<vmem>>, vector<64x8xf32>
    %c0_3 = arith.constant 0 : index
    %c0_4 = arith.constant 0 : index
    %2 = vector.load %arg3[%c0_3, %c0_4] : memref<64x4xf32, #tpu.memory_space<vmem>>, vector<64x4xf32>
    %c0_5 = arith.constant 0 : index
    %c0_6 = arith.constant 0 : index
    %3 = vector.load %arg4[%c0_5, %c0_6] : memref<64x16xf32, #tpu.memory_space<vmem>>, vector<64x16xf32>
    %c0_7 = arith.constant 0 : index
    %c0_8 = arith.constant 0 : index
    %4 = vector.load %arg5[%c0_7, %c0_8] : memref<64x8xf32, #tpu.memory_space<vmem>>, vector<64x8xf32>
    %c0_9 = arith.constant 0 : index
    %c0_10 = arith.constant 0 : index
    %5 = vector.load %arg6[%c0_9, %c0_10] : memref<64x4xf32, #tpu.memory_space<vmem>>, vector<64x4xf32>
    %c0_11 = arith.constant 0 : index
    %c0_12 = arith.constant 0 : index
    %6 = vector.load %arg7[%c0_11, %c0_12] : memref<16x8xf32, #tpu.memory_space<vmem>>, vector<16x8xf32>
    %c0_13 = arith.constant 0 : index
    %c0_14 = arith.constant 0 : index
    %7 = vector.load %arg8[%c0_13, %c0_14] : memref<1x8xf32, #tpu.memory_space<vmem>>, vector<1x8xf32>
    %c0_15 = arith.constant 0 : index
    %c0_16 = arith.constant 0 : index
    %8 = vector.load %arg9[%c0_15, %c0_16] : memref<8x8xf32, #tpu.memory_space<vmem>>, vector<8x8xf32>
    %c0_17 = arith.constant 0 : index
    %c0_18 = arith.constant 0 : index
    %9 = vector.load %arg10[%c0_17, %c0_18] : memref<1x8xf32, #tpu.memory_space<vmem>>, vector<1x8xf32>
    %c0_19 = arith.constant 0 : index
    %c0_20 = arith.constant 0 : index
    %10 = vector.load %arg11[%c0_19, %c0_20] : memref<8x4xf32, #tpu.memory_space<vmem>>, vector<8x4xf32>
    %c0_21 = arith.constant 0 : index
    %c0_22 = arith.constant 0 : index
    %11 = vector.load %arg12[%c0_21, %c0_22] : memref<1x4xf32, #tpu.memory_space<vmem>>, vector<1x4xf32>
    %c0_23 = arith.constant 0 : index
    %c0_24 = arith.constant 0 : index
    %12 = vector.load %arg13[%c0_23, %c0_24] : memref<4x4xf32, #tpu.memory_space<vmem>>, vector<4x4xf32>
    %c0_25 = arith.constant 0 : index
    %c0_26 = arith.constant 0 : index
    %13 = vector.load %arg14[%c0_25, %c0_26] : memref<1x4xf32, #tpu.memory_space<vmem>>, vector<1x4xf32>
    %c0_27 = arith.constant 0 : index
    %c0_28 = arith.constant 0 : index
    %14 = vector.load %arg15[%c0_27, %c0_28] : memref<4x8xf32, #tpu.memory_space<vmem>>, vector<4x8xf32>
    %c0_29 = arith.constant 0 : index
    %c0_30 = arith.constant 0 : index
    %15 = vector.load %arg16[%c0_29, %c0_30] : memref<1x8xf32, #tpu.memory_space<vmem>>, vector<1x8xf32>
    %c0_31 = arith.constant 0 : index
    %c0_32 = arith.constant 0 : index
    %16 = vector.load %arg17[%c0_31, %c0_32] : memref<8x8xf32, #tpu.memory_space<vmem>>, vector<8x8xf32>
    %c0_33 = arith.constant 0 : index
    %c0_34 = arith.constant 0 : index
    %17 = vector.load %arg18[%c0_33, %c0_34] : memref<1x8xf32, #tpu.memory_space<vmem>>, vector<1x8xf32>
    %c0_35 = arith.constant 0 : index
    %c0_36 = arith.constant 0 : index
    %18 = vector.load %arg19[%c0_35, %c0_36] : memref<8x16xf32, #tpu.memory_space<vmem>>, vector<8x16xf32>
    %c0_37 = arith.constant 0 : index
    %c0_38 = arith.constant 0 : index
    %19 = vector.load %arg20[%c0_37, %c0_38] : memref<1x16xf32, #tpu.memory_space<vmem>>, vector<1x16xf32>
    %c0_39 = arith.constant 0 : index
    %c0_40 = arith.constant 0 : index
    %20 = vector.load %arg21[%c0_39, %c0_40] : memref<16x16xf32, #tpu.memory_space<vmem>>, vector<16x16xf32>
    %c0_41 = arith.constant 0 : index
    %c0_42 = arith.constant 0 : index
    %21 = vector.load %arg22[%c0_41, %c0_42] : memref<1x16xf32, #tpu.memory_space<vmem>>, vector<1x16xf32>
    %cst = arith.constant dense<0.000000e+00> : vector<64x8xf32>
    %22 = tpu.matmul %0, %6, %cst {dimension_numbers = #tpu.dot_dimension_numbers<[1], [0], [0], [1], [0, 0, 1, 1], [], []>} : vector<64x16xf32>, vector<16x8xf32>, vector<64x8xf32> -> vector<64x8xf32>
    %23 = vector.broadcast %7 : vector<1x8xf32> to vector<64x8xf32>
    %24 = arith.addf %22, %23 : vector<64x8xf32>
    %cst_43 = arith.constant 0.707106769 : f32
    %25 = vector.broadcast %cst_43 : f32 to vector<64x8xf32>
    %26 = arith.mulf %24, %25 : vector<64x8xf32>
    %27 = math.absf %26 : vector<64x8xf32>
    %cst_44 = arith.constant 0.327591091 : f32
    %28 = vector.broadcast %cst_44 : f32 to vector<64x8xf32>
    %29 = arith.mulf %28, %27 : vector<64x8xf32>
    %cst_45 = arith.constant 1.000000e+00 : f32
    %30 = vector.broadcast %cst_45 : f32 to vector<64x8xf32>
    %31 = arith.addf %30, %29 : vector<64x8xf32>
    %cst_46 = arith.constant 1.000000e+00 : f32
    %32 = vector.broadcast %cst_46 : f32 to vector<64x8xf32>
    %33 = arith.divf %32, %31 : vector<64x8xf32>
    %cst_47 = arith.constant 1.06140542 : f32
    %34 = vector.broadcast %cst_47 : f32 to vector<64x8xf32>
    %35 = arith.mulf %33, %34 : vector<64x8xf32>
    %cst_48 = arith.constant -1.45315206 : f32
    %36 = vector.broadcast %cst_48 : f32 to vector<64x8xf32>
    %37 = arith.addf %36, %35 : vector<64x8xf32>
    %38 = arith.mulf %33, %37 : vector<64x8xf32>
    %cst_49 = arith.constant 1.42141378 : f32
    %39 = vector.broadcast %cst_49 : f32 to vector<64x8xf32>
    %40 = arith.addf %39, %38 : vector<64x8xf32>
    %41 = arith.mulf %33, %40 : vector<64x8xf32>
    %cst_50 = arith.constant -0.284496725 : f32
    %42 = vector.broadcast %cst_50 : f32 to vector<64x8xf32>
    %43 = arith.addf %42, %41 : vector<64x8xf32>
    %44 = arith.mulf %33, %43 : vector<64x8xf32>
    %cst_51 = arith.constant 0.254829586 : f32
    %45 = vector.broadcast %cst_51 : f32 to vector<64x8xf32>
    %46 = arith.addf %45, %44 : vector<64x8xf32>
    %47 = arith.mulf %33, %46 : vector<64x8xf32>
    %cst_52 = arith.constant 0.000000e+00 : f32
    %48 = vector.broadcast %cst_52 : f32 to vector<64x8xf32>
    %49 = arith.subf %48, %27 : vector<64x8xf32>
    %50 = arith.mulf %49, %27 : vector<64x8xf32>
    %51 = math.exp %50 : vector<64x8xf32>
    %52 = arith.mulf %47, %51 : vector<64x8xf32>
    %cst_53 = arith.constant 1.000000e+00 : f32
    %53 = vector.broadcast %cst_53 : f32 to vector<64x8xf32>
    %54 = arith.subf %53, %52 : vector<64x8xf32>
    %cst_54 = arith.constant 0.000000e+00 : f32
    %55 = vector.broadcast %cst_54 : f32 to vector<64x8xf32>
    %56 = arith.cmpf oge, %26, %55 : vector<64x8xf32>
    %cst_55 = arith.constant 0.000000e+00 : f32
    %57 = vector.broadcast %cst_55 : f32 to vector<64x8xf32>
    %58 = arith.subf %57, %54 : vector<64x8xf32>
    %59 = arith.select %56, %54, %58 : vector<64x8xi1>, vector<64x8xf32>
    %cst_56 = arith.constant 5.000000e-01 : f32
    %60 = vector.broadcast %cst_56 : f32 to vector<64x8xf32>
    %61 = arith.mulf %60, %24 : vector<64x8xf32>
    %cst_57 = arith.constant 1.000000e+00 : f32
    %62 = vector.broadcast %cst_57 : f32 to vector<64x8xf32>
    %63 = arith.addf %62, %59 : vector<64x8xf32>
    %64 = arith.mulf %61, %63 : vector<64x8xf32>
    %cst_58 = arith.constant dense<0.000000e+00> : vector<64x8xf32>
    %65 = tpu.matmul %64, %8, %cst_58 {dimension_numbers = #tpu.dot_dimension_numbers<[1], [0], [0], [1], [0, 0, 1, 1], [], []>} : vector<64x8xf32>, vector<8x8xf32>, vector<64x8xf32> -> vector<64x8xf32>
    %66 = vector.broadcast %9 : vector<1x8xf32> to vector<64x8xf32>
    %67 = arith.addf %65, %66 : vector<64x8xf32>
    %68 = arith.addf %1, %67 : vector<64x8xf32>
    %cst_59 = arith.constant dense<0.000000e+00> : vector<64x4xf32>
    %69 = tpu.matmul %68, %10, %cst_59 {dimension_numbers = #tpu.dot_dimension_numbers<[1], [0], [0], [1], [0, 0, 1, 1], [], []>} : vector<64x8xf32>, vector<8x4xf32>, vector<64x4xf32> -> vector<64x4xf32>
    %70 = vector.broadcast %11 : vector<1x4xf32> to vector<64x4xf32>
    %71 = arith.addf %69, %70 : vector<64x4xf32>
    %cst_60 = arith.constant 0.707106769 : f32
    %72 = vector.broadcast %cst_60 : f32 to vector<64x4xf32>
    %73 = arith.mulf %71, %72 : vector<64x4xf32>
    %74 = math.absf %73 : vector<64x4xf32>
    %cst_61 = arith.constant 0.327591091 : f32
    %75 = vector.broadcast %cst_61 : f32 to vector<64x4xf32>
    %76 = arith.mulf %75, %74 : vector<64x4xf32>
    %cst_62 = arith.constant 1.000000e+00 : f32
    %77 = vector.broadcast %cst_62 : f32 to vector<64x4xf32>
    %78 = arith.addf %77, %76 : vector<64x4xf32>
    %cst_63 = arith.constant 1.000000e+00 : f32
    %79 = vector.broadcast %cst_63 : f32 to vector<64x4xf32>
    %80 = arith.divf %79, %78 : vector<64x4xf32>
    %cst_64 = arith.constant 1.06140542 : f32
    %81 = vector.broadcast %cst_64 : f32 to vector<64x4xf32>
    %82 = arith.mulf %80, %81 : vector<64x4xf32>
    %cst_65 = arith.constant -1.45315206 : f32
    %83 = vector.broadcast %cst_65 : f32 to vector<64x4xf32>
    %84 = arith.addf %83, %82 : vector<64x4xf32>
    %85 = arith.mulf %80, %84 : vector<64x4xf32>
    %cst_66 = arith.constant 1.42141378 : f32
    %86 = vector.broadcast %cst_66 : f32 to vector<64x4xf32>
    %87 = arith.addf %86, %85 : vector<64x4xf32>
    %88 = arith.mulf %80, %87 : vector<64x4xf32>
    %cst_67 = arith.constant -0.284496725 : f32
    %89 = vector.broadcast %cst_67 : f32 to vector<64x4xf32>
    %90 = arith.addf %89, %88 : vector<64x4xf32>
    %91 = arith.mulf %80, %90 : vector<64x4xf32>
    %cst_68 = arith.constant 0.254829586 : f32
    %92 = vector.broadcast %cst_68 : f32 to vector<64x4xf32>
    %93 = arith.addf %92, %91 : vector<64x4xf32>
    %94 = arith.mulf %80, %93 : vector<64x4xf32>
    %cst_69 = arith.constant 0.000000e+00 : f32
    %95 = vector.broadcast %cst_69 : f32 to vector<64x4xf32>
    %96 = arith.subf %95, %74 : vector<64x4xf32>
    %97 = arith.mulf %96, %74 : vector<64x4xf32>
    %98 = math.exp %97 : vector<64x4xf32>
    %99 = arith.mulf %94, %98 : vector<64x4xf32>
    %cst_70 = arith.constant 1.000000e+00 : f32
    %100 = vector.broadcast %cst_70 : f32 to vector<64x4xf32>
    %101 = arith.subf %100, %99 : vector<64x4xf32>
    %cst_71 = arith.constant 0.000000e+00 : f32
    %102 = vector.broadcast %cst_71 : f32 to vector<64x4xf32>
    %103 = arith.cmpf oge, %73, %102 : vector<64x4xf32>
    %cst_72 = arith.constant 0.000000e+00 : f32
    %104 = vector.broadcast %cst_72 : f32 to vector<64x4xf32>
    %105 = arith.subf %104, %101 : vector<64x4xf32>
    %106 = arith.select %103, %101, %105 : vector<64x4xi1>, vector<64x4xf32>
    %cst_73 = arith.constant 5.000000e-01 : f32
    %107 = vector.broadcast %cst_73 : f32 to vector<64x4xf32>
    %108 = arith.mulf %107, %71 : vector<64x4xf32>
    %cst_74 = arith.constant 1.000000e+00 : f32
    %109 = vector.broadcast %cst_74 : f32 to vector<64x4xf32>
    %110 = arith.addf %109, %106 : vector<64x4xf32>
    %111 = arith.mulf %108, %110 : vector<64x4xf32>
    %cst_75 = arith.constant dense<0.000000e+00> : vector<64x4xf32>
    %112 = tpu.matmul %111, %12, %cst_75 {dimension_numbers = #tpu.dot_dimension_numbers<[1], [0], [0], [1], [0, 0, 1, 1], [], []>} : vector<64x4xf32>, vector<4x4xf32>, vector<64x4xf32> -> vector<64x4xf32>
    %113 = vector.broadcast %13 : vector<1x4xf32> to vector<64x4xf32>
    %114 = arith.addf %112, %113 : vector<64x4xf32>
    %115 = arith.addf %2, %114 : vector<64x4xf32>
    %cst_76 = arith.constant dense<0.000000e+00> : vector<64x8xf32>
    %116 = tpu.matmul %5, %14, %cst_76 {dimension_numbers = #tpu.dot_dimension_numbers<[1], [0], [0], [1], [0, 0, 1, 1], [], []>} : vector<64x4xf32>, vector<4x8xf32>, vector<64x8xf32> -> vector<64x8xf32>
    %117 = vector.broadcast %15 : vector<1x8xf32> to vector<64x8xf32>
    %118 = arith.addf %116, %117 : vector<64x8xf32>
    %cst_77 = arith.constant 0.707106769 : f32
    %119 = vector.broadcast %cst_77 : f32 to vector<64x8xf32>
    %120 = arith.mulf %118, %119 : vector<64x8xf32>
    %121 = math.absf %120 : vector<64x8xf32>
    %cst_78 = arith.constant 0.327591091 : f32
    %122 = vector.broadcast %cst_78 : f32 to vector<64x8xf32>
    %123 = arith.mulf %122, %121 : vector<64x8xf32>
    %cst_79 = arith.constant 1.000000e+00 : f32
    %124 = vector.broadcast %cst_79 : f32 to vector<64x8xf32>
    %125 = arith.addf %124, %123 : vector<64x8xf32>
    %cst_80 = arith.constant 1.000000e+00 : f32
    %126 = vector.broadcast %cst_80 : f32 to vector<64x8xf32>
    %127 = arith.divf %126, %125 : vector<64x8xf32>
    %cst_81 = arith.constant 1.06140542 : f32
    %128 = vector.broadcast %cst_81 : f32 to vector<64x8xf32>
    %129 = arith.mulf %127, %128 : vector<64x8xf32>
    %cst_82 = arith.constant -1.45315206 : f32
    %130 = vector.broadcast %cst_82 : f32 to vector<64x8xf32>
    %131 = arith.addf %130, %129 : vector<64x8xf32>
    %132 = arith.mulf %127, %131 : vector<64x8xf32>
    %cst_83 = arith.constant 1.42141378 : f32
    %133 = vector.broadcast %cst_83 : f32 to vector<64x8xf32>
    %134 = arith.addf %133, %132 : vector<64x8xf32>
    %135 = arith.mulf %127, %134 : vector<64x8xf32>
    %cst_84 = arith.constant -0.284496725 : f32
    %136 = vector.broadcast %cst_84 : f32 to vector<64x8xf32>
    %137 = arith.addf %136, %135 : vector<64x8xf32>
    %138 = arith.mulf %127, %137 : vector<64x8xf32>
    %cst_85 = arith.constant 0.254829586 : f32
    %139 = vector.broadcast %cst_85 : f32 to vector<64x8xf32>
    %140 = arith.addf %139, %138 : vector<64x8xf32>
    %141 = arith.mulf %127, %140 : vector<64x8xf32>
    %cst_86 = arith.constant 0.000000e+00 : f32
    %142 = vector.broadcast %cst_86 : f32 to vector<64x8xf32>
    %143 = arith.subf %142, %121 : vector<64x8xf32>
    %144 = arith.mulf %143, %121 : vector<64x8xf32>
    %145 = math.exp %144 : vector<64x8xf32>
    %146 = arith.mulf %141, %145 : vector<64x8xf32>
    %cst_87 = arith.constant 1.000000e+00 : f32
    %147 = vector.broadcast %cst_87 : f32 to vector<64x8xf32>
    %148 = arith.subf %147, %146 : vector<64x8xf32>
    %cst_88 = arith.constant 0.000000e+00 : f32
    %149 = vector.broadcast %cst_88 : f32 to vector<64x8xf32>
    %150 = arith.cmpf oge, %120, %149 : vector<64x8xf32>
    %cst_89 = arith.constant 0.000000e+00 : f32
    %151 = vector.broadcast %cst_89 : f32 to vector<64x8xf32>
    %152 = arith.subf %151, %148 : vector<64x8xf32>
    %153 = arith.select %150, %148, %152 : vector<64x8xi1>, vector<64x8xf32>
    %cst_90 = arith.constant 5.000000e-01 : f32
    %154 = vector.broadcast %cst_90 : f32 to vector<64x8xf32>
    %155 = arith.mulf %154, %118 : vector<64x8xf32>
    %cst_91 = arith.constant 1.000000e+00 : f32
    %156 = vector.broadcast %cst_91 : f32 to vector<64x8xf32>
    %157 = arith.addf %156, %153 : vector<64x8xf32>
    %158 = arith.mulf %155, %157 : vector<64x8xf32>
    %cst_92 = arith.constant dense<0.000000e+00> : vector<64x8xf32>
    %159 = tpu.matmul %158, %16, %cst_92 {dimension_numbers = #tpu.dot_dimension_numbers<[1], [0], [0], [1], [0, 0, 1, 1], [], []>} : vector<64x8xf32>, vector<8x8xf32>, vector<64x8xf32> -> vector<64x8xf32>
    %160 = vector.broadcast %17 : vector<1x8xf32> to vector<64x8xf32>
    %161 = arith.addf %159, %160 : vector<64x8xf32>
    %162 = arith.addf %4, %161 : vector<64x8xf32>
    %cst_93 = arith.constant dense<0.000000e+00> : vector<64x16xf32>
    %163 = tpu.matmul %162, %18, %cst_93 {dimension_numbers = #tpu.dot_dimension_numbers<[1], [0], [0], [1], [0, 0, 1, 1], [], []>} : vector<64x8xf32>, vector<8x16xf32>, vector<64x16xf32> -> vector<64x16xf32>
    %164 = vector.broadcast %19 : vector<1x16xf32> to vector<64x16xf32>
    %165 = arith.addf %163, %164 : vector<64x16xf32>
    %cst_94 = arith.constant 0.707106769 : f32
    %166 = vector.broadcast %cst_94 : f32 to vector<64x16xf32>
    %167 = arith.mulf %165, %166 : vector<64x16xf32>
    %168 = math.absf %167 : vector<64x16xf32>
    %cst_95 = arith.constant 0.327591091 : f32
    %169 = vector.broadcast %cst_95 : f32 to vector<64x16xf32>
    %170 = arith.mulf %169, %168 : vector<64x16xf32>
    %cst_96 = arith.constant 1.000000e+00 : f32
    %171 = vector.broadcast %cst_96 : f32 to vector<64x16xf32>
    %172 = arith.addf %171, %170 : vector<64x16xf32>
    %cst_97 = arith.constant 1.000000e+00 : f32
    %173 = vector.broadcast %cst_97 : f32 to vector<64x16xf32>
    %174 = arith.divf %173, %172 : vector<64x16xf32>
    %cst_98 = arith.constant 1.06140542 : f32
    %175 = vector.broadcast %cst_98 : f32 to vector<64x16xf32>
    %176 = arith.mulf %174, %175 : vector<64x16xf32>
    %cst_99 = arith.constant -1.45315206 : f32
    %177 = vector.broadcast %cst_99 : f32 to vector<64x16xf32>
    %178 = arith.addf %177, %176 : vector<64x16xf32>
    %179 = arith.mulf %174, %178 : vector<64x16xf32>
    %cst_100 = arith.constant 1.42141378 : f32
    %180 = vector.broadcast %cst_100 : f32 to vector<64x16xf32>
    %181 = arith.addf %180, %179 : vector<64x16xf32>
    %182 = arith.mulf %174, %181 : vector<64x16xf32>
    %cst_101 = arith.constant -0.284496725 : f32
    %183 = vector.broadcast %cst_101 : f32 to vector<64x16xf32>
    %184 = arith.addf %183, %182 : vector<64x16xf32>
    %185 = arith.mulf %174, %184 : vector<64x16xf32>
    %cst_102 = arith.constant 0.254829586 : f32
    %186 = vector.broadcast %cst_102 : f32 to vector<64x16xf32>
    %187 = arith.addf %186, %185 : vector<64x16xf32>
    %188 = arith.mulf %174, %187 : vector<64x16xf32>
    %cst_103 = arith.constant 0.000000e+00 : f32
    %189 = vector.broadcast %cst_103 : f32 to vector<64x16xf32>
    %190 = arith.subf %189, %168 : vector<64x16xf32>
    %191 = arith.mulf %190, %168 : vector<64x16xf32>
    %192 = math.exp %191 : vector<64x16xf32>
    %193 = arith.mulf %188, %192 : vector<64x16xf32>
    %cst_104 = arith.constant 1.000000e+00 : f32
    %194 = vector.broadcast %cst_104 : f32 to vector<64x16xf32>
    %195 = arith.subf %194, %193 : vector<64x16xf32>
    %cst_105 = arith.constant 0.000000e+00 : f32
    %196 = vector.broadcast %cst_105 : f32 to vector<64x16xf32>
    %197 = arith.cmpf oge, %167, %196 : vector<64x16xf32>
    %cst_106 = arith.constant 0.000000e+00 : f32
    %198 = vector.broadcast %cst_106 : f32 to vector<64x16xf32>
    %199 = arith.subf %198, %195 : vector<64x16xf32>
    %200 = arith.select %197, %195, %199 : vector<64x16xi1>, vector<64x16xf32>
    %cst_107 = arith.constant 5.000000e-01 : f32
    %201 = vector.broadcast %cst_107 : f32 to vector<64x16xf32>
    %202 = arith.mulf %201, %165 : vector<64x16xf32>
    %cst_108 = arith.constant 1.000000e+00 : f32
    %203 = vector.broadcast %cst_108 : f32 to vector<64x16xf32>
    %204 = arith.addf %203, %200 : vector<64x16xf32>
    %205 = arith.mulf %202, %204 : vector<64x16xf32>
    %cst_109 = arith.constant dense<0.000000e+00> : vector<64x16xf32>
    %206 = tpu.matmul %205, %20, %cst_109 {dimension_numbers = #tpu.dot_dimension_numbers<[1], [0], [0], [1], [0, 0, 1, 1], [], []>} : vector<64x16xf32>, vector<16x16xf32>, vector<64x16xf32> -> vector<64x16xf32>
    %207 = vector.broadcast %21 : vector<1x16xf32> to vector<64x16xf32>
    %208 = arith.addf %206, %207 : vector<64x16xf32>
    %209 = arith.addf %3, %208 : vector<64x16xf32>
    %210 = arith.addf %0, %209 : vector<64x16xf32>
    %c0_110 = arith.constant 0 : index
    %c0_111 = arith.constant 0 : index
    %211 = vector.load %arg23[%c0_110, %c0_111] : memref<64x16xf32, #tpu.memory_space<vmem>>, vector<64x16xf32>
    tpu.vector_store %arg23[%c0_110, %c0_111], %210 {strides = array<i32>} : memref<64x16xf32, #tpu.memory_space<vmem>>, vector<64x16xf32>,
    %212 = arith.addf %68, %162 : vector<64x8xf32>
    %c0_112 = arith.constant 0 : index
    %c0_113 = arith.constant 0 : index
    %213 = vector.load %arg24[%c0_112, %c0_113] : memref<64x8xf32, #tpu.memory_space<vmem>>, vector<64x8xf32>
    tpu.vector_store %arg24[%c0_112, %c0_113], %212 {strides = array<i32>} : memref<64x8xf32, #tpu.memory_space<vmem>>, vector<64x8xf32>,
    %214 = arith.addf %115, %5 : vector<64x4xf32>
    %c0_114 = arith.constant 0 : index
    %c0_115 = arith.constant 0 : index
    %215 = vector.load %arg25[%c0_114, %c0_115] : memref<64x4xf32, #tpu.memory_space<vmem>>, vector<64x4xf32>
    tpu.vector_store %arg25[%c0_114, %c0_115], %214 {strides = array<i32>} : memref<64x4xf32, #tpu.memory_space<vmem>>, vector<64x4xf32>,
    return
  }
  func.func @transform_0(%arg0: i32) -> (i32, i32) {
    %c0_i32 = arith.constant 0 : i32
    %c0_i32_0 = arith.constant 0 : i32
    return %arg0, %c0_i32 : i32, i32
  }
  func.func @transform_1(%arg0: i32) -> (i32, i32) {
    %c0_i32 = arith.constant 0 : i32
    %c0_i32_0 = arith.constant 0 : i32
    return %arg0, %c0_i32 : i32, i32
  }
  func.func @transform_2(%arg0: i32) -> (i32, i32) {
    %c0_i32 = arith.constant 0 : i32
    %c0_i32_0 = arith.constant 0 : i32
    return %arg0, %c0_i32 : i32, i32
  }
  func.func @transform_3(%arg0: i32) -> (i32, i32) {
    %c0_i32 = arith.constant 0 : i32
    %c0_i32_0 = arith.constant 0 : i32
    return %arg0, %c0_i32 : i32, i32
  }
  func.func @transform_4(%arg0: i32) -> (i32, i32) {
    %c0_i32 = arith.constant 0 : i32
    %c0_i32_0 = arith.constant 0 : i32
    return %arg0, %c0_i32 : i32, i32
  }
  func.func @transform_5(%arg0: i32) -> (i32, i32) {
    %c0_i32 = arith.constant 0 : i32
    %c0_i32_0 = arith.constant 0 : i32
    return %arg0, %c0_i32 : i32, i32
  }
  func.func @transform_6(%arg0: i32) -> (i32, i32) {
    %c0_i32 = arith.constant 0 : i32
    %c0_i32_0 = arith.constant 0 : i32
    %c0_i32_1 = arith.constant 0 : i32
    return %c0_i32, %c0_i32_0 : i32, i32
  }
  func.func @transform_7(%arg0: i32) -> (i32, i32) {
    %c0_i32 = arith.constant 0 : i32
    %c0_i32_0 = arith.constant 0 : i32
    %c0_i32_1 = arith.constant 0 : i32
    return %c0_i32, %c0_i32_0 : i32, i32
  }
  func.func @transform_8(%arg0: i32) -> (i32, i32) {
    %c0_i32 = arith.constant 0 : i32
    %c0_i32_0 = arith.constant 0 : i32
    %c0_i32_1 = arith.constant 0 : i32
    return %c0_i32, %c0_i32_0 : i32, i32
  }
  func.func @transform_9(%arg0: i32) -> (i32, i32) {
    %c0_i32 = arith.constant 0 : i32
    %c0_i32_0 = arith.constant 0 : i32
    %c0_i32_1 = arith.constant 0 : i32
    return %c0_i32, %c0_i32_0 : i32, i32
  }
  func.func @transform_10(%arg0: i32) -> (i32, i32) {
    %c0_i32 = arith.constant 0 : i32
    %c0_i32_0 = arith.constant 0 : i32
    %c0_i32_1 = arith.constant 0 : i32
    return %c0_i32, %c0_i32_0 : i32, i32
  }
  func.func @transform_11(%arg0: i32) -> (i32, i32) {
    %c0_i32 = arith.constant 0 : i32
    %c0_i32_0 = arith.constant 0 : i32
    %c0_i32_1 = arith.constant 0 : i32
    return %c0_i32, %c0_i32_0 : i32, i32
  }
  func.func @transform_12(%arg0: i32) -> (i32, i32) {
    %c0_i32 = arith.constant 0 : i32
    %c0_i32_0 = arith.constant 0 : i32
    %c0_i32_1 = arith.constant 0 : i32
    return %c0_i32, %c0_i32_0 : i32, i32
  }
  func.func @transform_13(%arg0: i32) -> (i32, i32) {
    %c0_i32 = arith.constant 0 : i32
    %c0_i32_0 = arith.constant 0 : i32
    %c0_i32_1 = arith.constant 0 : i32
    return %c0_i32, %c0_i32_0 : i32, i32
  }
  func.func @transform_14(%arg0: i32) -> (i32, i32) {
    %c0_i32 = arith.constant 0 : i32
    %c0_i32_0 = arith.constant 0 : i32
    %c0_i32_1 = arith.constant 0 : i32
    return %c0_i32, %c0_i32_0 : i32, i32
  }
  func.func @transform_15(%arg0: i32) -> (i32, i32) {
    %c0_i32 = arith.constant 0 : i32
    %c0_i32_0 = arith.constant 0 : i32
    %c0_i32_1 = arith.constant 0 : i32
    return %c0_i32, %c0_i32_0 : i32, i32
  }
  func.func @transform_16(%arg0: i32) -> (i32, i32) {
    %c0_i32 = arith.constant 0 : i32
    %c0_i32_0 = arith.constant 0 : i32
    %c0_i32_1 = arith.constant 0 : i32
    return %c0_i32, %c0_i32_0 : i32, i32
  }
  func.func @transform_17(%arg0: i32) -> (i32, i32) {
    %c0_i32 = arith.constant 0 : i32
    %c0_i32_0 = arith.constant 0 : i32
    %c0_i32_1 = arith.constant 0 : i32
    return %c0_i32, %c0_i32_0 : i32, i32
  }
  func.func @transform_18(%arg0: i32) -> (i32, i32) {
    %c0_i32 = arith.constant 0 : i32
    %c0_i32_0 = arith.constant 0 : i32
    %c0_i32_1 = arith.constant 0 : i32
    return %c0_i32, %c0_i32_0 : i32, i32
  }
  func.func @transform_19(%arg0: i32) -> (i32, i32) {
    %c0_i32 = arith.constant 0 : i32
    %c0_i32_0 = arith.constant 0 : i32
    %c0_i32_1 = arith.constant 0 : i32
    return %c0_i32, %c0_i32_0 : i32, i32
  }
  func.func @transform_20(%arg0: i32) -> (i32, i32) {
    %c0_i32 = arith.constant 0 : i32
    %c0_i32_0 = arith.constant 0 : i32
    %c0_i32_1 = arith.constant 0 : i32
    return %c0_i32, %c0_i32_0 : i32, i32
  }
  func.func @transform_21(%arg0: i32) -> (i32, i32) {
    %c0_i32 = arith.constant 0 : i32
    %c0_i32_0 = arith.constant 0 : i32
    %c0_i32_1 = arith.constant 0 : i32
    return %c0_i32, %c0_i32_0 : i32, i32
  }
  func.func @transform_22(%arg0: i32) -> (i32, i32) {
    %c0_i32 = arith.constant 0 : i32
    %c0_i32_0 = arith.constant 0 : i32
    return %arg0, %c0_i32 : i32, i32
  }
  func.func @transform_23(%arg0: i32) -> (i32, i32) {
    %c0_i32 = arith.constant 0 : i32
    %c0_i32_0 = arith.constant 0 : i32
    return %arg0, %c0_i32 : i32, i32
  }
  func.func @transform_24(%arg0: i32) -> (i32, i32) {
    %c0_i32 = arith.constant 0 : i32
    %c0_i32_0 = arith.constant 0 : i32
    return %arg0, %c0_i32 : i32, i32
  }
}

module attributes {stable_mosaic.version = 11 : i64} {
  func.func @_cross_kernel(%arg0: i32, %arg1: memref<112x16xf32, #tpu.memory_space<vmem>>, %arg2: memref<112x16xf32, #tpu.memory_space<vmem>>, %arg3: memref<16x32xf32, #tpu.memory_space<vmem>>, %arg4: memref<1x32xf32, #tpu.memory_space<vmem>>, %arg5: memref<32x16xf32, #tpu.memory_space<vmem>>, %arg6: memref<1x16xf32, #tpu.memory_space<vmem>>, %arg7: memref<16x18xf32, #tpu.memory_space<vmem>>, %arg8: memref<112x16xf32, #tpu.memory_space<vmem>>, %arg9: memref<112x18xf32, #tpu.memory_space<vmem>>) attributes {dimension_semantics = [#tpu.dimension_semantics<parallel>], iteration_bounds = array<i64: 2>, scalar_prefetch = 0 : i64, scratch_operands = 0 : i64, tpu.core_type = #tpu.core_type<tc>, window_params = [{transform_indices = @transform_0, window_bounds = array<i64: 112, 16>}, {transform_indices = @transform_1, window_bounds = array<i64: 112, 16>}, {pipeline_mode = #tpu.pipeline_mode<synchronous>, transform_indices = @transform_2, window_bounds = array<i64: 16, 32>}, {pipeline_mode = #tpu.pipeline_mode<synchronous>, transform_indices = @transform_3, window_bounds = array<i64: 1, 32>}, {pipeline_mode = #tpu.pipeline_mode<synchronous>, transform_indices = @transform_4, window_bounds = array<i64: 32, 16>}, {pipeline_mode = #tpu.pipeline_mode<synchronous>, transform_indices = @transform_5, window_bounds = array<i64: 1, 16>}, {pipeline_mode = #tpu.pipeline_mode<synchronous>, transform_indices = @transform_6, window_bounds = array<i64: 16, 18>}, {transform_indices = @transform_7, window_bounds = array<i64: 112, 16>}, {transform_indices = @transform_8, window_bounds = array<i64: 112, 18>}]} {
    %c0 = arith.constant 0 : index
    %c0_0 = arith.constant 0 : index
    %0 = vector.load %arg2[%c0, %c0_0] : memref<112x16xf32, #tpu.memory_space<vmem>>, vector<112x16xf32>
    %c0_1 = arith.constant 0 : index
    %c0_2 = arith.constant 0 : index
    %1 = vector.load %arg3[%c0_1, %c0_2] : memref<16x32xf32, #tpu.memory_space<vmem>>, vector<16x32xf32>
    %cst = arith.constant dense<0.000000e+00> : vector<112x32xf32>
    %2 = tpu.matmul %0, %1, %cst {dimension_numbers = #tpu.dot_dimension_numbers<[1], [0], [0], [1], [0, 0, 1, 1], [], []>} : vector<112x16xf32>, vector<16x32xf32>, vector<112x32xf32> -> vector<112x32xf32>
    %c0_3 = arith.constant 0 : index
    %c0_4 = arith.constant 0 : index
    %3 = vector.load %arg4[%c0_3, %c0_4] : memref<1x32xf32, #tpu.memory_space<vmem>>, vector<1x32xf32>
    %4 = vector.broadcast %3 : vector<1x32xf32> to vector<112x32xf32>
    %5 = arith.addf %2, %4 : vector<112x32xf32>
    %cst_5 = arith.constant 0.707106769 : f32
    %6 = vector.broadcast %cst_5 : f32 to vector<112x32xf32>
    %7 = arith.mulf %5, %6 : vector<112x32xf32>
    %8 = math.absf %7 : vector<112x32xf32>
    %cst_6 = arith.constant 0.327591091 : f32
    %9 = vector.broadcast %cst_6 : f32 to vector<112x32xf32>
    %10 = arith.mulf %9, %8 : vector<112x32xf32>
    %cst_7 = arith.constant 1.000000e+00 : f32
    %11 = vector.broadcast %cst_7 : f32 to vector<112x32xf32>
    %12 = arith.addf %11, %10 : vector<112x32xf32>
    %cst_8 = arith.constant 1.000000e+00 : f32
    %13 = vector.broadcast %cst_8 : f32 to vector<112x32xf32>
    %14 = arith.divf %13, %12 : vector<112x32xf32>
    %cst_9 = arith.constant 1.06140542 : f32
    %15 = vector.broadcast %cst_9 : f32 to vector<112x32xf32>
    %16 = arith.mulf %14, %15 : vector<112x32xf32>
    %cst_10 = arith.constant -1.45315206 : f32
    %17 = vector.broadcast %cst_10 : f32 to vector<112x32xf32>
    %18 = arith.addf %17, %16 : vector<112x32xf32>
    %19 = arith.mulf %14, %18 : vector<112x32xf32>
    %cst_11 = arith.constant 1.42141378 : f32
    %20 = vector.broadcast %cst_11 : f32 to vector<112x32xf32>
    %21 = arith.addf %20, %19 : vector<112x32xf32>
    %22 = arith.mulf %14, %21 : vector<112x32xf32>
    %cst_12 = arith.constant -0.284496725 : f32
    %23 = vector.broadcast %cst_12 : f32 to vector<112x32xf32>
    %24 = arith.addf %23, %22 : vector<112x32xf32>
    %25 = arith.mulf %14, %24 : vector<112x32xf32>
    %cst_13 = arith.constant 0.254829586 : f32
    %26 = vector.broadcast %cst_13 : f32 to vector<112x32xf32>
    %27 = arith.addf %26, %25 : vector<112x32xf32>
    %28 = arith.mulf %14, %27 : vector<112x32xf32>
    %cst_14 = arith.constant 0.000000e+00 : f32
    %29 = vector.broadcast %cst_14 : f32 to vector<112x32xf32>
    %30 = arith.subf %29, %8 : vector<112x32xf32>
    %31 = arith.mulf %30, %8 : vector<112x32xf32>
    %32 = math.exp %31 : vector<112x32xf32>
    %33 = arith.mulf %28, %32 : vector<112x32xf32>
    %cst_15 = arith.constant 1.000000e+00 : f32
    %34 = vector.broadcast %cst_15 : f32 to vector<112x32xf32>
    %35 = arith.subf %34, %33 : vector<112x32xf32>
    %cst_16 = arith.constant 0.000000e+00 : f32
    %36 = vector.broadcast %cst_16 : f32 to vector<112x32xf32>
    %37 = arith.cmpf oge, %7, %36 : vector<112x32xf32>
    %cst_17 = arith.constant 0.000000e+00 : f32
    %38 = vector.broadcast %cst_17 : f32 to vector<112x32xf32>
    %39 = arith.subf %38, %35 : vector<112x32xf32>
    %40 = arith.select %37, %35, %39 : vector<112x32xi1>, vector<112x32xf32>
    %cst_18 = arith.constant 5.000000e-01 : f32
    %41 = vector.broadcast %cst_18 : f32 to vector<112x32xf32>
    %42 = arith.mulf %41, %5 : vector<112x32xf32>
    %cst_19 = arith.constant 1.000000e+00 : f32
    %43 = vector.broadcast %cst_19 : f32 to vector<112x32xf32>
    %44 = arith.addf %43, %40 : vector<112x32xf32>
    %45 = arith.mulf %42, %44 : vector<112x32xf32>
    %c0_20 = arith.constant 0 : index
    %c0_21 = arith.constant 0 : index
    %46 = vector.load %arg1[%c0_20, %c0_21] : memref<112x16xf32, #tpu.memory_space<vmem>>, vector<112x16xf32>
    %c0_22 = arith.constant 0 : index
    %c0_23 = arith.constant 0 : index
    %47 = vector.load %arg5[%c0_22, %c0_23] : memref<32x16xf32, #tpu.memory_space<vmem>>, vector<32x16xf32>
    %cst_24 = arith.constant dense<0.000000e+00> : vector<112x16xf32>
    %48 = tpu.matmul %45, %47, %cst_24 {dimension_numbers = #tpu.dot_dimension_numbers<[1], [0], [0], [1], [0, 0, 1, 1], [], []>} : vector<112x32xf32>, vector<32x16xf32>, vector<112x16xf32> -> vector<112x16xf32>
    %49 = arith.addf %46, %48 : vector<112x16xf32>
    %c0_25 = arith.constant 0 : index
    %c0_26 = arith.constant 0 : index
    %50 = vector.load %arg6[%c0_25, %c0_26] : memref<1x16xf32, #tpu.memory_space<vmem>>, vector<1x16xf32>
    %51 = vector.broadcast %50 : vector<1x16xf32> to vector<112x16xf32>
    %52 = arith.addf %49, %51 : vector<112x16xf32>
    %c0_27 = arith.constant 0 : index
    %c0_28 = arith.constant 0 : index
    %53 = vector.load %arg8[%c0_27, %c0_28] : memref<112x16xf32, #tpu.memory_space<vmem>>, vector<112x16xf32>
    tpu.vector_store %arg8[%c0_27, %c0_28], %52 {strides = array<i32>} : memref<112x16xf32, #tpu.memory_space<vmem>>, vector<112x16xf32>,
    %c0_29 = arith.constant 0 : index
    %c0_30 = arith.constant 0 : index
    %54 = vector.load %arg7[%c0_29, %c0_30] : memref<16x18xf32, #tpu.memory_space<vmem>>, vector<16x18xf32>
    %cst_31 = arith.constant dense<0.000000e+00> : vector<112x18xf32>
    %55 = tpu.matmul %52, %54, %cst_31 {dimension_numbers = #tpu.dot_dimension_numbers<[1], [0], [0], [1], [0, 0, 1, 1], [], []>} : vector<112x16xf32>, vector<16x18xf32>, vector<112x18xf32> -> vector<112x18xf32>
    %c0_32 = arith.constant 0 : index
    %c0_33 = arith.constant 0 : index
    %56 = vector.load %arg9[%c0_32, %c0_33] : memref<112x18xf32, #tpu.memory_space<vmem>>, vector<112x18xf32>
    tpu.vector_store %arg9[%c0_32, %c0_33], %55 {strides = array<i32>} : memref<112x18xf32, #tpu.memory_space<vmem>>, vector<112x18xf32>,
    return
  }
  func.func @transform_0(%arg0: i32) -> (i32, i32) {
    %c0_i32 = arith.constant 0 : i32
    %c0_i32_0 = arith.constant 0 : i32
    return %arg0, %c0_i32 : i32, i32
  }
  func.func @transform_1(%arg0: i32) -> (i32, i32) {
    %c0_i32 = arith.constant 0 : i32
    %c0_i32_0 = arith.constant 0 : i32
    return %arg0, %c0_i32 : i32, i32
  }
  func.func @transform_2(%arg0: i32) -> (i32, i32) {
    %c0_i32 = arith.constant 0 : i32
    %c0_i32_0 = arith.constant 0 : i32
    %c0_i32_1 = arith.constant 0 : i32
    return %c0_i32, %c0_i32_0 : i32, i32
  }
  func.func @transform_3(%arg0: i32) -> (i32, i32) {
    %c0_i32 = arith.constant 0 : i32
    %c0_i32_0 = arith.constant 0 : i32
    %c0_i32_1 = arith.constant 0 : i32
    return %c0_i32, %c0_i32_0 : i32, i32
  }
  func.func @transform_4(%arg0: i32) -> (i32, i32) {
    %c0_i32 = arith.constant 0 : i32
    %c0_i32_0 = arith.constant 0 : i32
    %c0_i32_1 = arith.constant 0 : i32
    return %c0_i32, %c0_i32_0 : i32, i32
  }
  func.func @transform_5(%arg0: i32) -> (i32, i32) {
    %c0_i32 = arith.constant 0 : i32
    %c0_i32_0 = arith.constant 0 : i32
    %c0_i32_1 = arith.constant 0 : i32
    return %c0_i32, %c0_i32_0 : i32, i32
  }
  func.func @transform_6(%arg0: i32) -> (i32, i32) {
    %c0_i32 = arith.constant 0 : i32
    %c0_i32_0 = arith.constant 0 : i32
    %c0_i32_1 = arith.constant 0 : i32
    return %c0_i32, %c0_i32_0 : i32, i32
  }
  func.func @transform_7(%arg0: i32) -> (i32, i32) {
    %c0_i32 = arith.constant 0 : i32
    %c0_i32_0 = arith.constant 0 : i32
    return %arg0, %c0_i32 : i32, i32
  }
  func.func @transform_8(%arg0: i32) -> (i32, i32) {
    %c0_i32 = arith.constant 0 : i32
    %c0_i32_0 = arith.constant 0 : i32
    return %arg0, %c0_i32 : i32, i32
  }
}

module attributes {stable_mosaic.version = 11 : i64} {
  func.func @_cross_kernel(%arg0: i32, %arg1: memref<112x16xf32, #tpu.memory_space<vmem>>, %arg2: memref<112x16xf32, #tpu.memory_space<vmem>>, %arg3: memref<16x32xf32, #tpu.memory_space<vmem>>, %arg4: memref<1x32xf32, #tpu.memory_space<vmem>>, %arg5: memref<32x16xf32, #tpu.memory_space<vmem>>, %arg6: memref<1x16xf32, #tpu.memory_space<vmem>>, %arg7: memref<112x16xf32, #tpu.memory_space<vmem>>) attributes {dimension_semantics = [#tpu.dimension_semantics<parallel>], iteration_bounds = array<i64: 2>, scalar_prefetch = 0 : i64, scratch_operands = 0 : i64, tpu.core_type = #tpu.core_type<tc>, window_params = [{transform_indices = @transform_0, window_bounds = array<i64: 112, 16>}, {transform_indices = @transform_1, window_bounds = array<i64: 112, 16>}, {pipeline_mode = #tpu.pipeline_mode<synchronous>, transform_indices = @transform_2, window_bounds = array<i64: 16, 32>}, {pipeline_mode = #tpu.pipeline_mode<synchronous>, transform_indices = @transform_3, window_bounds = array<i64: 1, 32>}, {pipeline_mode = #tpu.pipeline_mode<synchronous>, transform_indices = @transform_4, window_bounds = array<i64: 32, 16>}, {pipeline_mode = #tpu.pipeline_mode<synchronous>, transform_indices = @transform_5, window_bounds = array<i64: 1, 16>}, {transform_indices = @transform_6, window_bounds = array<i64: 112, 16>}]} {
    %c0 = arith.constant 0 : index
    %c0_0 = arith.constant 0 : index
    %0 = vector.load %arg2[%c0, %c0_0] : memref<112x16xf32, #tpu.memory_space<vmem>>, vector<112x16xf32>
    %c0_1 = arith.constant 0 : index
    %c0_2 = arith.constant 0 : index
    %1 = vector.load %arg3[%c0_1, %c0_2] : memref<16x32xf32, #tpu.memory_space<vmem>>, vector<16x32xf32>
    %cst = arith.constant dense<0.000000e+00> : vector<112x32xf32>
    %2 = tpu.matmul %0, %1, %cst {dimension_numbers = #tpu.dot_dimension_numbers<[1], [0], [0], [1], [0, 0, 1, 1], [], []>} : vector<112x16xf32>, vector<16x32xf32>, vector<112x32xf32> -> vector<112x32xf32>
    %c0_3 = arith.constant 0 : index
    %c0_4 = arith.constant 0 : index
    %3 = vector.load %arg4[%c0_3, %c0_4] : memref<1x32xf32, #tpu.memory_space<vmem>>, vector<1x32xf32>
    %4 = vector.broadcast %3 : vector<1x32xf32> to vector<112x32xf32>
    %5 = arith.addf %2, %4 : vector<112x32xf32>
    %cst_5 = arith.constant 0.707106769 : f32
    %6 = vector.broadcast %cst_5 : f32 to vector<112x32xf32>
    %7 = arith.mulf %5, %6 : vector<112x32xf32>
    %8 = math.absf %7 : vector<112x32xf32>
    %cst_6 = arith.constant 0.327591091 : f32
    %9 = vector.broadcast %cst_6 : f32 to vector<112x32xf32>
    %10 = arith.mulf %9, %8 : vector<112x32xf32>
    %cst_7 = arith.constant 1.000000e+00 : f32
    %11 = vector.broadcast %cst_7 : f32 to vector<112x32xf32>
    %12 = arith.addf %11, %10 : vector<112x32xf32>
    %cst_8 = arith.constant 1.000000e+00 : f32
    %13 = vector.broadcast %cst_8 : f32 to vector<112x32xf32>
    %14 = arith.divf %13, %12 : vector<112x32xf32>
    %cst_9 = arith.constant 1.06140542 : f32
    %15 = vector.broadcast %cst_9 : f32 to vector<112x32xf32>
    %16 = arith.mulf %14, %15 : vector<112x32xf32>
    %cst_10 = arith.constant -1.45315206 : f32
    %17 = vector.broadcast %cst_10 : f32 to vector<112x32xf32>
    %18 = arith.addf %17, %16 : vector<112x32xf32>
    %19 = arith.mulf %14, %18 : vector<112x32xf32>
    %cst_11 = arith.constant 1.42141378 : f32
    %20 = vector.broadcast %cst_11 : f32 to vector<112x32xf32>
    %21 = arith.addf %20, %19 : vector<112x32xf32>
    %22 = arith.mulf %14, %21 : vector<112x32xf32>
    %cst_12 = arith.constant -0.284496725 : f32
    %23 = vector.broadcast %cst_12 : f32 to vector<112x32xf32>
    %24 = arith.addf %23, %22 : vector<112x32xf32>
    %25 = arith.mulf %14, %24 : vector<112x32xf32>
    %cst_13 = arith.constant 0.254829586 : f32
    %26 = vector.broadcast %cst_13 : f32 to vector<112x32xf32>
    %27 = arith.addf %26, %25 : vector<112x32xf32>
    %28 = arith.mulf %14, %27 : vector<112x32xf32>
    %cst_14 = arith.constant 0.000000e+00 : f32
    %29 = vector.broadcast %cst_14 : f32 to vector<112x32xf32>
    %30 = arith.subf %29, %8 : vector<112x32xf32>
    %31 = arith.mulf %30, %8 : vector<112x32xf32>
    %32 = math.exp %31 : vector<112x32xf32>
    %33 = arith.mulf %28, %32 : vector<112x32xf32>
    %cst_15 = arith.constant 1.000000e+00 : f32
    %34 = vector.broadcast %cst_15 : f32 to vector<112x32xf32>
    %35 = arith.subf %34, %33 : vector<112x32xf32>
    %cst_16 = arith.constant 0.000000e+00 : f32
    %36 = vector.broadcast %cst_16 : f32 to vector<112x32xf32>
    %37 = arith.cmpf oge, %7, %36 : vector<112x32xf32>
    %cst_17 = arith.constant 0.000000e+00 : f32
    %38 = vector.broadcast %cst_17 : f32 to vector<112x32xf32>
    %39 = arith.subf %38, %35 : vector<112x32xf32>
    %40 = arith.select %37, %35, %39 : vector<112x32xi1>, vector<112x32xf32>
    %cst_18 = arith.constant 5.000000e-01 : f32
    %41 = vector.broadcast %cst_18 : f32 to vector<112x32xf32>
    %42 = arith.mulf %41, %5 : vector<112x32xf32>
    %cst_19 = arith.constant 1.000000e+00 : f32
    %43 = vector.broadcast %cst_19 : f32 to vector<112x32xf32>
    %44 = arith.addf %43, %40 : vector<112x32xf32>
    %45 = arith.mulf %42, %44 : vector<112x32xf32>
    %c0_20 = arith.constant 0 : index
    %c0_21 = arith.constant 0 : index
    %46 = vector.load %arg1[%c0_20, %c0_21] : memref<112x16xf32, #tpu.memory_space<vmem>>, vector<112x16xf32>
    %c0_22 = arith.constant 0 : index
    %c0_23 = arith.constant 0 : index
    %47 = vector.load %arg5[%c0_22, %c0_23] : memref<32x16xf32, #tpu.memory_space<vmem>>, vector<32x16xf32>
    %cst_24 = arith.constant dense<0.000000e+00> : vector<112x16xf32>
    %48 = tpu.matmul %45, %47, %cst_24 {dimension_numbers = #tpu.dot_dimension_numbers<[1], [0], [0], [1], [0, 0, 1, 1], [], []>} : vector<112x32xf32>, vector<32x16xf32>, vector<112x16xf32> -> vector<112x16xf32>
    %49 = arith.addf %46, %48 : vector<112x16xf32>
    %c0_25 = arith.constant 0 : index
    %c0_26 = arith.constant 0 : index
    %50 = vector.load %arg6[%c0_25, %c0_26] : memref<1x16xf32, #tpu.memory_space<vmem>>, vector<1x16xf32>
    %51 = vector.broadcast %50 : vector<1x16xf32> to vector<112x16xf32>
    %52 = arith.addf %49, %51 : vector<112x16xf32>
    %c0_27 = arith.constant 0 : index
    %c0_28 = arith.constant 0 : index
    %53 = vector.load %arg7[%c0_27, %c0_28] : memref<112x16xf32, #tpu.memory_space<vmem>>, vector<112x16xf32>
    tpu.vector_store %arg7[%c0_27, %c0_28], %52 {strides = array<i32>} : memref<112x16xf32, #tpu.memory_space<vmem>>, vector<112x16xf32>,
    return
  }
  func.func @transform_0(%arg0: i32) -> (i32, i32) {
    %c0_i32 = arith.constant 0 : i32
    %c0_i32_0 = arith.constant 0 : i32
    return %arg0, %c0_i32 : i32, i32
  }
  func.func @transform_1(%arg0: i32) -> (i32, i32) {
    %c0_i32 = arith.constant 0 : i32
    %c0_i32_0 = arith.constant 0 : i32
    return %arg0, %c0_i32 : i32, i32
  }
  func.func @transform_2(%arg0: i32) -> (i32, i32) {
    %c0_i32 = arith.constant 0 : i32
    %c0_i32_0 = arith.constant 0 : i32
    %c0_i32_1 = arith.constant 0 : i32
    return %c0_i32, %c0_i32_0 : i32, i32
  }
  func.func @transform_3(%arg0: i32) -> (i32, i32) {
    %c0_i32 = arith.constant 0 : i32
    %c0_i32_0 = arith.constant 0 : i32
    %c0_i32_1 = arith.constant 0 : i32
    return %c0_i32, %c0_i32_0 : i32, i32
  }
  func.func @transform_4(%arg0: i32) -> (i32, i32) {
    %c0_i32 = arith.constant 0 : i32
    %c0_i32_0 = arith.constant 0 : i32
    %c0_i32_1 = arith.constant 0 : i32
    return %c0_i32, %c0_i32_0 : i32, i32
  }
  func.func @transform_5(%arg0: i32) -> (i32, i32) {
    %c0_i32 = arith.constant 0 : i32
    %c0_i32_0 = arith.constant 0 : i32
    %c0_i32_1 = arith.constant 0 : i32
    return %c0_i32, %c0_i32_0 : i32, i32
  }
  func.func @transform_6(%arg0: i32) -> (i32, i32) {
    %c0_i32 = arith.constant 0 : i32
    %c0_i32_0 = arith.constant 0 : i32
    return %arg0, %c0_i32 : i32, i32
  }
}

</mosaic_0001>

<llo_original>
// kernel: _lambda_.7
$region0: #{_lambda_.7}
  #allocation0 [shape = 'u32[]', space=smem, size = 0x4, offset = 0x4, fixed_abs, tag = 'smem constant byte address 0x4 - core index']
  #allocation1 [shape = 'u32[144,128]{1,0:T(1,128)}', space=vmem, size = 0x12000, scoped, tag = 'internal scratch']
  %s0 = inlined_call_operand.vmem [shape: f32[224,3], index: 0, kind: input, shape index: {}]
  %s1 = inlined_call_operand.vmem [shape: f32[3,16], index: 1, kind: input, shape index: {}]
  %s2 = inlined_call_operand.vmem [shape: f32[16,18], index: 2, kind: input, shape index: {}]
  %s3 = inlined_call_operand.vmem [shape: f32[224,16], index: 3, kind: output, shape index: {0}]
  %s4 = inlined_call_operand.vmem [shape: f32[224,18], index: 4, kind: output, shape index: {1}]
  %5 = xla_tuple %s3, %s4
  %s6 = sld [smem:[#allocation0]]
  $region53: #{_lambda_.7} parent=0
    _
  %s8 = ssub.s32 1, %s6
  %s9 = scalar_select 0, %s8, %s6
  loop: start=0, step=1, limit=4
  $region2: #{_lambda_.7} parent=0 // loop_pre_header
    _
  $region3: #{_lambda_.7} parent=0 // loop_header
    %s11 = sphi 0, %s15
    %p12 = scmp.ge.s32.totalorder %s11, 4
    %s21 = sphi 0, %s23
    %s24 = sphi 0, %s21
    %s25 = sphi 0, %s24
    %s41 = sphi 0, %s25
    %s45 = sphi 0, %s45
    %s47 = sphi 0, %s45
    %s48 = sphi 0, %s47
    %s62 = sphi 0, %s48
    %s66 = sphi 0, %s66
    %s68 = sphi 0, %s66
    %s69 = sphi 0, %s68
    %s83 = sphi 0, %s69
    %s89 = sphi 0, %s91
    %s92 = sphi 0, %s89
    %s93 = sphi 0, %s92
    %s109 = sphi 0, %s93
    %s115 = sphi 0, %s117
    %s118 = sphi 0, %s115
    %s119 = sphi 0, %s118
    %s135 = sphi 0, %s119
  $region4: #{_lambda_.7} parent=0 // loop_header_branch
    %14 = sbr.rel (%p12) target = $region8
  $region5: #{_lambda_.7} parent=0 // loop_body
    %s16 = ssub.s32 %s11, 1
    %s17 = ssub.s32 %s11, 2
    %s18 = sadd.s32 %s11, 1
    %s19 = ssub.s32 %s11, %s18
    %p20 = scmp.eq.s32.totalorder %s19, 0
    %s22 = sadd.s32 %s21, 1
    %s23 = scalar_select %p20, %s21, %s22
    %p26 = pneg %p20
    %p27 = scmp.eq.s32.totalorder %s11, 1
    %p28 = por %p26, %p27
    %p29 = scmp.ne.s32.totalorder %s21, %s24
    %p30 = scmp.eq.s32.totalorder %s11, 0
    %p31 = por %p29, %p30
    %p32 = scmp.ne.s32.totalorder %s21, %s24
    %p33 = scmp.eq.s32.totalorder %s16, 1
    %p34 = por %p32, %p33
    %p35 = scmp.ne.s32.totalorder %s24, %s25
    %p36 = scmp.eq.s32.totalorder %s16, 0
    %p37 = por %p35, %p36
    %p38 = scmp.ne.s32.totalorder %s24, %s25
    %p39 = scmp.eq.s32.totalorder %s17, 1
    %p40 = por %p38, %p39
    %p42 = scmp.ne.s32.totalorder %s25, %s41
    %p43 = scmp.eq.s32.totalorder %s17, 0
    %p44 = por %p42, %p43
    %s46 = sadd.s32 %s45, 1
    %p49 = scmp.eq.s32.totalorder %s11, 1
    %p50 = scmp.ne.s32.totalorder %s45, %s47
    %p51 = scmp.eq.s32.totalorder %s11, 0
    %p52 = por %p50, %p51
    %p53 = scmp.ne.s32.totalorder %s45, %s47
    %p54 = scmp.eq.s32.totalorder %s16, 1
    %p55 = por %p53, %p54
    %p56 = scmp.ne.s32.totalorder %s47, %s48
    %p57 = scmp.eq.s32.totalorder %s16, 0
    %p58 = por %p56, %p57
    %p59 = scmp.ne.s32.totalorder %s47, %s48
    %p60 = scmp.eq.s32.totalorder %s17, 1
    %p61 = por %p59, %p60
    %p63 = scmp.ne.s32.totalorder %s48, %s62
    %p64 = scmp.eq.s32.totalorder %s17, 0
    %p65 = por %p63, %p64
    %s67 = sadd.s32 %s66, 1
    %p70 = scmp.eq.s32.totalorder %s11, 1
    %p71 = scmp.ne.s32.totalorder %s66, %s68
    %p72 = scmp.eq.s32.totalorder %s11, 0
    %p73 = por %p71, %p72
    %p74 = scmp.ne.s32.totalorder %s66, %s68
    %p75 = scmp.eq.s32.totalorder %s16, 1
    %p76 = por %p74, %p75
    %p77 = scmp.ne.s32.totalorder %s68, %s69
    %p78 = scmp.eq.s32.totalorder %s16, 0
    %p79 = por %p77, %p78
    %p80 = scmp.ne.s32.totalorder %s68, %s69
    %p81 = scmp.eq.s32.totalorder %s17, 1
    %p82 = por %p80, %p81
    %p84 = scmp.ne.s32.totalorder %s69, %s83
    %p85 = scmp.eq.s32.totalorder %s17, 0
    %p86 = por %p84, %p85
    %s87 = ssub.s32 %s11, %s18
    %p88 = scmp.eq.s32.totalorder %s87, 0
    %s90 = sadd.s32 %s89, 1
    %s91 = scalar_select %p88, %s89, %s90
    %p94 = pneg %p88
    %p95 = scmp.eq.s32.totalorder %s11, 1
    %p96 = por %p94, %p95
    %p97 = scmp.ne.s32.totalorder %s89, %s92
    %p98 = scmp.eq.s32.totalorder %s11, 0
    %p99 = por %p97, %p98
    %p100 = scmp.ne.s32.totalorder %s89, %s92
    %p101 = scmp.eq.s32.totalorder %s16, 1
    %p102 = por %p100, %p101
    %p103 = scmp.ne.s32.totalorder %s92, %s93
    %p104 = scmp.eq.s32.totalorder %s16, 0
    %p105 = por %p103, %p104
    %p106 = scmp.ne.s32.totalorder %s92, %s93
    %p107 = scmp.eq.s32.totalorder %s17, 1
    %p108 = por %p106, %p107
    %p110 = scmp.ne.s32.totalorder %s93, %s109
    %p111 = scmp.eq.s32.totalorder %s17, 0
    %p112 = por %p110, %p111
    %s113 = ssub.s32 %s11, %s18
    %p114 = scmp.eq.s32.totalorder %s113, 0
    %s116 = sadd.s32 %s115, 1
    %s117 = scalar_select %p114, %s115, %s116
    %p120 = pneg %p114
    %p121 = scmp.eq.s32.totalorder %s11, 1
    %p122 = por %p120, %p121
    %p123 = scmp.ne.s32.totalorder %s115, %s118
    %p124 = scmp.eq.s32.totalorder %s11, 0
    %p125 = por %p123, %p124
    %p126 = scmp.ne.s32.totalorder %s115, %s118
    %p127 = scmp.eq.s32.totalorder %s16, 1
    %p128 = por %p126, %p127
    %p129 = scmp.ne.s32.totalorder %s118, %s119
    %p130 = scmp.eq.s32.totalorder %s16, 0
    %p131 = por %p129, %p130
    %p132 = scmp.ne.s32.totalorder %s118, %s119
    %p133 = scmp.eq.s32.totalorder %s17, 1
    %p134 = por %p132, %p133
    %p136 = scmp.ne.s32.totalorder %s119, %s135
    %p137 = scmp.eq.s32.totalorder %s17, 0
    %p138 = por %p136, %p137
    %p139 = scmp.le.s32.totalorder 1, %s11
    %p140 = scmp.lt.s32.totalorder %s11, 3
    %p141 = pnand %p139, %p140
    %p142 = pneg %p141
    // Predicated region
    $region9: #{_lambda_.7} parent=5 // pred_check
      _
    $region10: #{_lambda_.7} parent=5 // pred_check_branch
      %144 = sbr.rel (%p141) target = $region12
    $region11: #{_lambda_.7} parent=5 // pred_region
      %s145 = ssub.s32 %s11, 1
      // Predicated region
      $region13: #{_lambda_.7} parent=11 // pred_check
        %p146 = pneg %p58
      $region14: #{_lambda_.7} parent=11 // pred_check_branch
        %148 = sbr.rel (%p146) target = $region16
      $region15: #{_lambda_.7} parent=11 // pred_region
        _
      $region16: #{_lambda_.7} parent=11 // pred_fallthru
        _
      // Predicated region
      $region17: #{_lambda_.7} parent=11 // pred_check
        %p149 = pneg %p79
      $region18: #{_lambda_.7} parent=11 // pred_check_branch
        %151 = sbr.rel (%p149) target = $region20
      $region19: #{_lambda_.7} parent=11 // pred_region
        _
      $region20: #{_lambda_.7} parent=11 // pred_fallthru
        _
    $region12: #{_lambda_.7} parent=5 // pred_fallthru
      _
    %p152 = scmp.lt.s32.totalorder %s11, 2
    // Predicated region
    $region21: #{_lambda_.7} parent=5 // pred_check
      %p153 = pneg %p152
    $region22: #{_lambda_.7} parent=5 // pred_check_branch
      %155 = sbr.rel (%p153) target = $region24
    $region23: #{_lambda_.7} parent=5 // pred_region
      // Predicated region
      $region25: #{_lambda_.7} parent=23 // pred_check
        %p156 = pneg %p31
      $region26: #{_lambda_.7} parent=23 // pred_check_branch
        %158 = sbr.rel (%p156) target = $region28
      $region27: #{_lambda_.7} parent=23 // pred_region
        %s159 = smul.u32 14, %s11
        %p160 = scmp.lt.s32.totalorder %s159, 27
        %s161 = scalar_select %p160, %s159, 27
        %s162 = smul.addr %s161, 8
        %s163 = scalar_lea.vmem %s0, %s162
        %s164 = smul.u32 14, %s11
      $region28: #{_lambda_.7} parent=23 // pred_fallthru
        _
    $region24: #{_lambda_.7} parent=5 // pred_fallthru
      _
    %p165 = scmp.le.s32.totalorder 1, %s11
    %p166 = scmp.lt.s32.totalorder %s11, 3
    %p167 = pnand %p165, %p166
    %p168 = pneg %p167
    // Predicated region
    $region29: #{_lambda_.7} parent=5 // pred_check
      _
    $region30: #{_lambda_.7} parent=5 // pred_check_branch
      %170 = sbr.rel (%p167) target = $region32
    $region31: #{_lambda_.7} parent=5 // pred_region
      %s171 = ssub.s32 %s11, 1
      %s172 = smul.u32 14, %s16
      %p173 = scmp.lt.s32.totalorder %s172, 27
      %s174 = scalar_select %p173, %s172, 27
      %s175 = smul.addr %s174, 8
      %s176 = scalar_lea.vmem %s0, %s175
      %p177 = pneg %p37
      %p178 = pneg %p34
      %p179 = pneg %p58
      %p180 = pneg %p55
      %p181 = pneg %p79
      %p182 = pneg %p76
      %p183 = pneg %p105
      %p184 = pneg %p102
      %s185 = smul.u32 14, %s16
      %p186 = scmp.lt.s32.totalorder %s185, 27
      %s187 = scalar_select %p186, %s185, 27
      %s188 = smul.addr %s187, 8
      %s189 = scalar_lea.vmem %s3, %s188
      %p190 = pneg %p131
      %p191 = pneg %p128
      %s192 = smul.u32 14, %s16
      %p193 = scmp.lt.s32.totalorder %s192, 27
      %s194 = scalar_select %p193, %s192, 27
      %s195 = smul.addr %s194, 8
      %s196 = scalar_lea.vmem %s4, %s195
      %s197 = smul.u32 14, %s16
      %p198 = scmp.lt.s32.totalorder %s197, 27
      %s199 = scalar_select %p198, %s197, 27
      %s200 = smul.addr %s199, 8
      %s201 = scalar_lea.vmem %s0, %s200
      %s202 = smul.u32 14, %s16
      %s203 = smul.u32 14, %s16
      %p204 = scmp.lt.s32.totalorder %s203, 27
      %s205 = scalar_select %p204, %s203, 27
      %s206 = smul.addr %s205, 8
      %s207 = scalar_lea.vmem %s3, %s206
      %s208 = smul.u32 14, %s16
      %s209 = smul.u32 14, %s16
      %p210 = scmp.lt.s32.totalorder %s209, 27
      %s211 = scalar_select %p210, %s209, 27
      %s212 = smul.addr %s211, 8
      %s213 = scalar_lea.vmem %s4, %s212
      %s214 = smul.u32 14, %s16
      %v215 = vld [vmem:[%s201] sm:$0xff]
      %v216 = vld [vmem:[%s201 + $0x8] sm:$0xff]
      %v217 = vld [vmem:[%s201 + $0x10] sm:$0xff]
      %v218 = vld [vmem:[%s201 + $0x18] sm:$0xff]
      %v219 = vld [vmem:[%s201 + $0x20] sm:$0xff]
      %v220 = vld [vmem:[%s201 + $0x28] sm:$0xff]
      %v221 = vld [vmem:[%s201 + $0x30] sm:$0xff]
      %v222 = vld [vmem:[%s201 + $0x38] sm:$0xff]
      %v223 = vld [vmem:[%s201 + $0x40] sm:$0xff]
      %v224 = vld [vmem:[%s201 + $0x48] sm:$0xff]
      %v225 = vld [vmem:[%s201 + $0x50] sm:$0xff]
      %v226 = vld [vmem:[%s201 + $0x58] sm:$0xff]
      %v227 = vld [vmem:[%s201 + $0x60] sm:$0xff]
      %v228 = vld [vmem:[%s201 + $0x68] sm:$0xff]
      %v229 = vld [vmem:[%s1] sm:$0x7]
      %231 = vset.pattern.permute.xlu0 0
      %232 = vperm.xlu0 %231, %v215
      %v233 = vpop.permute.xlu0 %232
      %236 = vset.pattern.permute.xlu0 0
      %237 = vperm.xlu0 %236, %v216
      %v238 = vpop.permute.xlu0 %237
      %241 = vset.pattern.permute.xlu0 0
      %242 = vperm.xlu0 %241, %v217
      %v243 = vpop.permute.xlu0 %242
      %246 = vset.pattern.permute.xlu0 0
      %247 = vperm.xlu0 %246, %v218
      %v248 = vpop.permute.xlu0 %247
      %251 = vset.pattern.permute.xlu0 0
      %252 = vperm.xlu0 %251, %v219
      %v253 = vpop.permute.xlu0 %252
      %256 = vset.pattern.permute.xlu0 0
      %257 = vperm.xlu0 %256, %v220
      %v258 = vpop.permute.xlu0 %257
      %261 = vset.pattern.permute.xlu0 0
      %262 = vperm.xlu0 %261, %v221
      %v263 = vpop.permute.xlu0 %262
      %266 = vset.pattern.permute.xlu0 0
      %267 = vperm.xlu0 %266, %v222
      %v268 = vpop.permute.xlu0 %267
      %271 = vset.pattern.permute.xlu0 0
      %272 = vperm.xlu0 %271, %v223
      %v273 = vpop.permute.xlu0 %272
      %276 = vset.pattern.permute.xlu0 0
      %277 = vperm.xlu0 %276, %v224
      %v278 = vpop.permute.xlu0 %277
      %281 = vset.pattern.permute.xlu0 0
      %282 = vperm.xlu0 %281, %v225
      %v283 = vpop.permute.xlu0 %282
      %286 = vset.pattern.permute.xlu0 0
      %287 = vperm.xlu0 %286, %v226
      %v288 = vpop.permute.xlu0 %287
      %291 = vset.pattern.permute.xlu0 0
      %292 = vperm.xlu0 %291, %v227
      %v293 = vpop.permute.xlu0 %292
      %296 = vset.pattern.permute.xlu0 0
      %297 = vperm.xlu0 %296, %v228
      %v298 = vpop.permute.xlu0 %297
      %v300 = vlaneseq
      %v301 = vshrl.u32 %v300, 7
      %v302 = vsub.s32 0, %v301
      %v303 = vrot.slane %v229, %v302
      %v304 = vmul.f32 %v233, %v303
      %v305 = vmul.f32 %v238, %v303
      %v306 = vmul.f32 %v243, %v303
      %v307 = vmul.f32 %v248, %v303
      %v308 = vmul.f32 %v253, %v303
      %v309 = vmul.f32 %v258, %v303
      %v310 = vmul.f32 %v263, %v303
      %v311 = vmul.f32 %v268, %v303
      %v312 = vmul.f32 %v273, %v303
      %v313 = vmul.f32 %v278, %v303
      %v314 = vmul.f32 %v283, %v303
      %v315 = vmul.f32 %v288, %v303
      %v316 = vmul.f32 %v293, %v303
      %v317 = vmul.f32 %v298, %v303
      %318 = vset.pattern.permute.xlu0 1
      %319 = vperm.xlu0 %318, %v215
      %v320 = vpop.permute.xlu0 %319
      %322 = vset.pattern.permute.xlu0 1
      %323 = vperm.xlu0 %322, %v216
      %v324 = vpop.permute.xlu0 %323
      %326 = vset.pattern.permute.xlu0 1
      %327 = vperm.xlu0 %326, %v217
      %v328 = vpop.permute.xlu0 %327
      %330 = vset.pattern.permute.xlu0 1
      %331 = vperm.xlu0 %330, %v218
      %v332 = vpop.permute.xlu0 %331
      %334 = vset.pattern.permute.xlu0 1
      %335 = vperm.xlu0 %334, %v219
      %v336 = vpop.permute.xlu0 %335
      %338 = vset.pattern.permute.xlu0 1
      %339 = vperm.xlu0 %338, %v220
      %v340 = vpop.permute.xlu0 %339
      %342 = vset.pattern.permute.xlu0 1
      %343 = vperm.xlu0 %342, %v221
      %v344 = vpop.permute.xlu0 %343
      %346 = vset.pattern.permute.xlu0 1
      %347 = vperm.xlu0 %346, %v222
      %v348 = vpop.permute.xlu0 %347
      %350 = vset.pattern.permute.xlu0 1
      %351 = vperm.xlu0 %350, %v223
      %v352 = vpop.permute.xlu0 %351
      %354 = vset.pattern.permute.xlu0 1
      %355 = vperm.xlu0 %354, %v224
      %v356 = vpop.permute.xlu0 %355
      %358 = vset.pattern.permute.xlu0 1
      %359 = vperm.xlu0 %358, %v225
      %v360 = vpop.permute.xlu0 %359
      %362 = vset.pattern.permute.xlu0 1
      %363 = vperm.xlu0 %362, %v226
      %v364 = vpop.permute.xlu0 %363
      %366 = vset.pattern.permute.xlu0 1
      %367 = vperm.xlu0 %366, %v227
      %v368 = vpop.permute.xlu0 %367
      %370 = vset.pattern.permute.xlu0 1
      %371 = vperm.xlu0 %370, %v228
      %v372 = vpop.permute.xlu0 %371
      %v374 = vlaneseq
      %v375 = vshrl.u32 %v374, 7
      %v376 = vsub.s32 1, %v375
      %v377 = vrot.slane %v229, %v376
      %v378 = vmul.f32 %v320, %v377
      %v379 = vmul.f32 %v324, %v377
      %v380 = vmul.f32 %v328, %v377
      %v381 = vmul.f32 %v332, %v377
      %v382 = vmul.f32 %v336, %v377
      %v383 = vmul.f32 %v340, %v377
      %v384 = vmul.f32 %v344, %v377
      %v385 = vmul.f32 %v348, %v377
      %v386 = vmul.f32 %v352, %v377
      %v387 = vmul.f32 %v356, %v377
      %v388 = vmul.f32 %v360, %v377
      %v389 = vmul.f32 %v364, %v377
      %v390 = vmul.f32 %v368, %v377
      %v391 = vmul.f32 %v372, %v377
      %v392 = vadd.f32 %v304, %v378
      %v393 = vadd.f32 %v305, %v379
      %v394 = vadd.f32 %v306, %v380
      %v395 = vadd.f32 %v307, %v381
      %v396 = vadd.f32 %v308, %v382
      %v397 = vadd.f32 %v309, %v383
      %v398 = vadd.f32 %v310, %v384
      %v399 = vadd.f32 %v311, %v385
      %v400 = vadd.f32 %v312, %v386
      %v401 = vadd.f32 %v313, %v387
      %v402 = vadd.f32 %v314, %v388
      %v403 = vadd.f32 %v315, %v389
      %v404 = vadd.f32 %v316, %v390
      %v405 = vadd.f32 %v317, %v391
      %406 = vset.pattern.permute.xlu0 2
      %407 = vperm.xlu0 %406, %v215
      %v408 = vpop.permute.xlu0 %407
      %410 = vset.pattern.permute.xlu0 2
      %411 = vperm.xlu0 %410, %v216
      %v412 = vpop.permute.xlu0 %411
      %414 = vset.pattern.permute.xlu0 2
      %415 = vperm.xlu0 %414, %v217
      %v416 = vpop.permute.xlu0 %415
      %418 = vset.pattern.permute.xlu0 2
      %419 = vperm.xlu0 %418, %v218
      %v420 = vpop.permute.xlu0 %419
      %422 = vset.pattern.permute.xlu0 2
      %423 = vperm.xlu0 %422, %v219
      %v424 = vpop.permute.xlu0 %423
      %426 = vset.pattern.permute.xlu0 2
      %427 = vperm.xlu0 %426, %v220
      %v428 = vpop.permute.xlu0 %427
      %430 = vset.pattern.permute.xlu0 2
      %431 = vperm.xlu0 %430, %v221
      %v432 = vpop.permute.xlu0 %431
      %434 = vset.pattern.permute.xlu0 2
      %435 = vperm.xlu0 %434, %v222
      %v436 = vpop.permute.xlu0 %435
      %438 = vset.pattern.permute.xlu0 2
      %439 = vperm.xlu0 %438, %v223
      %v440 = vpop.permute.xlu0 %439
      %442 = vset.pattern.permute.xlu0 2
      %443 = vperm.xlu0 %442, %v224
      %v444 = vpop.permute.xlu0 %443
      %446 = vset.pattern.permute.xlu0 2
      %447 = vperm.xlu0 %446, %v225
      %v448 = vpop.permute.xlu0 %447
      %450 = vset.pattern.permute.xlu0 2
      %451 = vperm.xlu0 %450, %v226
      %v452 = vpop.permute.xlu0 %451
      %454 = vset.pattern.permute.xlu0 2
      %455 = vperm.xlu0 %454, %v227
      %v456 = vpop.permute.xlu0 %455
      %458 = vset.pattern.permute.xlu0 2
      %459 = vperm.xlu0 %458, %v228
      %v460 = vpop.permute.xlu0 %459
      %v462 = vlaneseq
      %v463 = vshrl.u32 %v462, 7
      %v464 = vsub.s32 2, %v463
      %v465 = vrot.slane %v229, %v464
      %v466 = vmul.f32 %v408, %v465
      %v467 = vmul.f32 %v412, %v465
      %v468 = vmul.f32 %v416, %v465
      %v469 = vmul.f32 %v420, %v465
      %v470 = vmul.f32 %v424, %v465
      %v471 = vmul.f32 %v428, %v465
      %v472 = vmul.f32 %v432, %v465
      %v473 = vmul.f32 %v436, %v465
      %v474 = vmul.f32 %v440, %v465
      %v475 = vmul.f32 %v444, %v465
      %v476 = vmul.f32 %v448, %v465
      %v477 = vmul.f32 %v452, %v465
      %v478 = vmul.f32 %v456, %v465
      %v479 = vmul.f32 %v460, %v465
      %v480 = vadd.f32 %v392, %v466
      %v481 = vadd.f32 %v393, %v467
      %v482 = vadd.f32 %v394, %v468
      %v483 = vadd.f32 %v395, %v469
      %v484 = vadd.f32 %v396, %v470
      %v485 = vadd.f32 %v397, %v471
      %v486 = vadd.f32 %v398, %v472
      %v487 = vadd.f32 %v399, %v473
      %v488 = vadd.f32 %v400, %v474
      %v489 = vadd.f32 %v401, %v475
      %v490 = vadd.f32 %v402, %v476
      %v491 = vadd.f32 %v403, %v477
      %v492 = vadd.f32 %v404, %v478
      %v493 = vadd.f32 %v405, %v479
      %vm494 = vcmask 130048
      %495 = vst.msk [vmem:[%s207] sm:$0xff] %vm494, %v480
      %496 = vst.msk [vmem:[%s207 + $0x8] sm:$0xff] %vm494, %v481
      %497 = vst.msk [vmem:[%s207 + $0x10] sm:$0xff] %vm494, %v482
      %498 = vst.msk [vmem:[%s207 + $0x18] sm:$0xff] %vm494, %v483
      %499 = vst.msk [vmem:[%s207 + $0x20] sm:$0xff] %vm494, %v484
      %500 = vst.msk [vmem:[%s207 + $0x28] sm:$0xff] %vm494, %v485
      %501 = vst.msk [vmem:[%s207 + $0x30] sm:$0xff] %vm494, %v486
      %502 = vst.msk [vmem:[%s207 + $0x38] sm:$0xff] %vm494, %v487
      %503 = vst.msk [vmem:[%s207 + $0x40] sm:$0xff] %vm494, %v488
      %504 = vst.msk [vmem:[%s207 + $0x48] sm:$0xff] %vm494, %v489
      %505 = vst.msk [vmem:[%s207 + $0x50] sm:$0xff] %vm494, %v490
      %506 = vst.msk [vmem:[%s207 + $0x58] sm:$0xff] %vm494, %v491
      %507 = vst.msk [vmem:[%s207 + $0x60] sm:$0xff] %vm494, %v492
      %508 = vst.msk [vmem:[%s207 + $0x68] sm:$0xff] %vm494, %v493
      %v509 = vld [vmem:[%s2] sm:$0xff]
      %v510 = vld [vmem:[%s2 + $0x8] sm:$0xff]
      %v512 = vsel %vm494, %v480, 0
      %v515 = vsel %vm494, %v481, 0
      %v518 = vsel %vm494, %v482, 0
      %v521 = vsel %vm494, %v483, 0
      %v524 = vsel %vm494, %v484, 0
      %v527 = vsel %vm494, %v485, 0
      %v530 = vsel %vm494, %v486, 0
      %v533 = vsel %vm494, %v487, 0
      %v536 = vsel %vm494, %v488, 0
      %v539 = vsel %vm494, %v489, 0
      %v542 = vsel %vm494, %v490, 0
      %v545 = vsel %vm494, %v491, 0
      %v548 = vsel %vm494, %v492, 0
      %v551 = vsel %vm494, %v493, 0
      %553 = vmatprep.subr.mxu0 0.0
      %554 = vmatpush1.msra.mxu0 0.0
      %555 = vmatprep.subr.mxu0 0.0
      %556 = vmatpush1.msra.mxu0 0.0
      %557 = vmatprep.subr.mxu0 0.0
      %558 = vmatpush1.msra.mxu0 0.0
      %559 = vmatprep.subr.mxu0 0.0
      %560 = vmatpush1.msra.mxu0 0.0
      %561 = vmatprep.subr.mxu0 0.0
      %562 = vmatpush1.msra.mxu0 0.0
      %563 = vmatprep.subr.mxu0 0.0
      %564 = vmatpush1.msra.mxu0 0.0
      %565 = vmatprep.subr.mxu0 0.0
      %566 = vmatpush1.msra.mxu0 0.0
      %567 = vmatprep.subr.mxu0 0.0
      %568 = vmatpush1.msra.mxu0 0.0
      %569 = vmatprep.subr.mxu0 0.0
      %570 = vmatpush1.msra.mxu0 0.0
      %571 = vmatprep.subr.mxu0 0.0
      %572 = vmatpush1.msra.mxu0 0.0
      %573 = vmatprep.subr.mxu0 0.0
      %574 = vmatpush1.msra.mxu0 0.0
      %575 = vmatprep.subr.mxu0 0.0
      %576 = vmatpush1.msra.mxu0 0.0
      %577 = vmatprep.subr.mxu0 0.0
      %578 = vmatpush1.msra.mxu0 0.0
      %579 = vmatprep.subr.mxu0 0.0
      %580 = vmatpush1.msra.mxu0 0.0
      %581 = vmatprep.subr.mxu0 0.0
      %582 = vmatpush1.msra.mxu0 %v510
      %583 = vmatprep.subr.mxu0 0.0
      %584 = vmatpush1.msra.mxu0 %v509
      %585 = vmatprep.subr.mxu0 0.0
      %586 = vmatpush2.msra.mxu0 0.0
      %587 = vmatprep.subr.mxu0 0.0
      %588 = vmatpush2.msra.mxu0 0.0
      %589 = vmatprep.subr.mxu0 0.0
      %590 = vmatpush2.msra.mxu0 0.0
      %591 = vmatprep.subr.mxu0 0.0
      %592 = vmatpush2.msra.mxu0 0.0
      %593 = vmatprep.subr.mxu0 0.0
      %594 = vmatpush2.msra.mxu0 0.0
      %595 = vmatprep.subr.mxu0 0.0
      %596 = vmatpush2.msra.mxu0 0.0
      %597 = vmatprep.subr.mxu0 0.0
      %598 = vmatpush2.msra.mxu0 0.0
      %599 = vmatprep.subr.mxu0 0.0
      %600 = vmatpush2.msra.mxu0 0.0
      %601 = vmatprep.subr.mxu0 0.0
      %602 = vmatpush2.msra.mxu0 0.0
      %603 = vmatprep.subr.mxu0 0.0
      %604 = vmatpush2.msra.mxu0 0.0
      %605 = vmatprep.subr.mxu0 0.0
      %606 = vmatpush2.msra.mxu0 0.0
      %607 = vmatprep.subr.mxu0 0.0
      %608 = vmatpush2.msra.mxu0 0.0
      %609 = vmatprep.subr.mxu0 0.0
      %610 = vmatpush2.msra.mxu0 0.0
      %611 = vmatprep.subr.mxu0 0.0
      %612 = vmatpush2.msra.mxu0 0.0
      %613 = vmatprep.subr.mxu0 0.0
      %614 = vmatpush2.msra.mxu0 0.0
      %615 = vmatprep.subr.mxu0 0.0
      %616 = vmatpush2.msra.mxu0 0.0
      %617 = vmatprep.mubr.f32.mxu0 0.0
      %618 = vmatmul.mubr.f32.gmra.mxu0 %v512
      %v619 = vpop.f32.mrf.mxu0
      %v620 = vadd.f32 0.0, %v619
      %v621 = vpop.f32.mrf.mxu0
      %622 = vmatprep.mubr.f32.mxu0 0.0
      %623 = vmatmul.mubr.f32.gmra.mxu0 %v515
      %v624 = vpop.f32.mrf.mxu0
      %v625 = vadd.f32 0.0, %v624
      %v626 = vpop.f32.mrf.mxu0
      %627 = vmatprep.mubr.f32.mxu0 0.0
      %628 = vmatmul.mubr.f32.gmra.mxu0 %v518
      %v629 = vpop.f32.mrf.mxu0
      %v630 = vadd.f32 0.0, %v629
      %v631 = vpop.f32.mrf.mxu0
      %632 = vmatprep.mubr.f32.mxu0 0.0
      %633 = vmatmul.mubr.f32.gmra.mxu0 %v521
      %v634 = vpop.f32.mrf.mxu0
      %v635 = vadd.f32 0.0, %v634
      %v636 = vpop.f32.mrf.mxu0
      %637 = vmatprep.mubr.f32.mxu0 0.0
      %638 = vmatmul.mubr.f32.gmra.mxu0 %v524
      %v639 = vpop.f32.mrf.mxu0
      %v640 = vadd.f32 0.0, %v639
      %v641 = vpop.f32.mrf.mxu0
      %642 = vmatprep.mubr.f32.mxu0 0.0
      %643 = vmatmul.mubr.f32.gmra.mxu0 %v527
      %v644 = vpop.f32.mrf.mxu0
      %v645 = vadd.f32 0.0, %v644
      %v646 = vpop.f32.mrf.mxu0
      %647 = vmatprep.mubr.f32.mxu0 0.0
      %648 = vmatmul.mubr.f32.gmra.mxu0 %v530
      %v649 = vpop.f32.mrf.mxu0
      %v650 = vadd.f32 0.0, %v649
      %v651 = vpop.f32.mrf.mxu0
      %652 = vmatprep.mubr.f32.mxu0 0.0
      %653 = vmatmul.mubr.f32.gmra.mxu0 %v533
      %v654 = vpop.f32.mrf.mxu0
      %v655 = vadd.f32 0.0, %v654
      %v656 = vpop.f32.mrf.mxu0
      %657 = vmatprep.mubr.f32.mxu0 0.0
      %658 = vmatmul.mubr.f32.gmra.mxu0 %v536
      %v659 = vpop.f32.mrf.mxu0
      %v660 = vadd.f32 0.0, %v659
      %v661 = vpop.f32.mrf.mxu0
      %662 = vmatprep.mubr.f32.mxu0 0.0
      %663 = vmatmul.mubr.f32.gmra.mxu0 %v539
      %v664 = vpop.f32.mrf.mxu0
      %v665 = vadd.f32 0.0, %v664
      %v666 = vpop.f32.mrf.mxu0
      %667 = vmatprep.mubr.f32.mxu0 0.0
      %668 = vmatmul.mubr.f32.gmra.mxu0 %v542
      %v669 = vpop.f32.mrf.mxu0
      %v670 = vadd.f32 0.0, %v669
      %v671 = vpop.f32.mrf.mxu0
      %672 = vmatprep.mubr.f32.mxu0 0.0
      %673 = vmatmul.mubr.f32.gmra.mxu0 %v545
      %v674 = vpop.f32.mrf.mxu0
      %v675 = vadd.f32 0.0, %v674
      %v676 = vpop.f32.mrf.mxu0
      %677 = vmatprep.mubr.f32.mxu0 0.0
      %678 = vmatmul.mubr.f32.gmra.mxu0 %v548
      %v679 = vpop.f32.mrf.mxu0
      %v680 = vadd.f32 0.0, %v679
      %v681 = vpop.f32.mrf.mxu0
      %682 = vmatprep.mubr.f32.mxu0 0.0
      %683 = vmatmul.mubr.f32.gmra.mxu0 %v551
      %v684 = vpop.f32.mrf.mxu0
      %v685 = vadd.f32 0.0, %v684
      %v686 = vpop.f32.mrf.mxu0
      %687 = vdwg.mxu0
      %vm688 = vcmask 146432
      %689 = vst.msk [vmem:[%s213] sm:$0xff] %vm688, %v620
      %690 = vst.msk [vmem:[%s213 + $0x8] sm:$0xff] %vm688, %v625
      %691 = vst.msk [vmem:[%s213 + $0x10] sm:$0xff] %vm688, %v630
      %692 = vst.msk [vmem:[%s213 + $0x18] sm:$0xff] %vm688, %v635
      %693 = vst.msk [vmem:[%s213 + $0x20] sm:$0xff] %vm688, %v640
      %694 = vst.msk [vmem:[%s213 + $0x28] sm:$0xff] %vm688, %v645
      %695 = vst.msk [vmem:[%s213 + $0x30] sm:$0xff] %vm688, %v650
      %696 = vst.msk [vmem:[%s213 + $0x38] sm:$0xff] %vm688, %v655
      %697 = vst.msk [vmem:[%s213 + $0x40] sm:$0xff] %vm688, %v660
      %698 = vst.msk [vmem:[%s213 + $0x48] sm:$0xff] %vm688, %v665
      %699 = vst.msk [vmem:[%s213 + $0x50] sm:$0xff] %vm688, %v670
      %700 = vst.msk [vmem:[%s213 + $0x58] sm:$0xff] %vm688, %v675
      %701 = vst.msk [vmem:[%s213 + $0x60] sm:$0xff] %vm688, %v680
      %702 = vst.msk [vmem:[%s213 + $0x68] sm:$0xff] %vm688, %v685
      %s703 = smul.u32 14, %s16
      %p704 = scmp.lt.s32.totalorder %s703, 27
      %s705 = scalar_select %p704, %s703, 27
      %s706 = smul.addr %s705, 8
      %s707 = scalar_lea.vmem %s3, %s706
      %s708 = smul.u32 14, %s16
      %p709 = scmp.lt.s32.totalorder %s708, 27
      %s710 = scalar_select %p709, %s708, 27
      %s711 = smul.addr %s710, 8
      %s712 = scalar_lea.vmem %s4, %s711
      // Predicated region
      $region33: #{_lambda_.7} parent=31 // pred_check
        %p713 = pneg %p102
      $region34: #{_lambda_.7} parent=31 // pred_check_branch
        %715 = sbr.rel (%p713) target = $region36
      $region35: #{_lambda_.7} parent=31 // pred_region
        %s716 = smul.u32 14, %s16
      $region36: #{_lambda_.7} parent=31 // pred_fallthru
        _
      // Predicated region
      $region37: #{_lambda_.7} parent=31 // pred_check
        %p717 = pneg %p128
      $region38: #{_lambda_.7} parent=31 // pred_check_branch
        %719 = sbr.rel (%p717) target = $region40
      $region39: #{_lambda_.7} parent=31 // pred_region
        %s720 = smul.u32 14, %s16
      $region40: #{_lambda_.7} parent=31 // pred_fallthru
        _
    $region32: #{_lambda_.7} parent=5 // pred_fallthru
      _
    %p721 = scmp.le.s32.totalorder 2, %s11
    // Predicated region
    $region41: #{_lambda_.7} parent=5 // pred_check
      %p722 = pneg %p721
    $region42: #{_lambda_.7} parent=5 // pred_check_branch
      %724 = sbr.rel (%p722) target = $region44
    $region43: #{_lambda_.7} parent=5 // pred_region
      %s725 = ssub.s32 %s11, 2
      // Predicated region
      $region45: #{_lambda_.7} parent=43 // pred_check
        %p726 = pneg %p108
      $region46: #{_lambda_.7} parent=43 // pred_check_branch
        %728 = sbr.rel (%p726) target = $region48
      $region47: #{_lambda_.7} parent=43 // pred_region
        %s729 = smul.u32 14, %s17
        %p730 = scmp.lt.s32.totalorder %s729, 27
        %s731 = scalar_select %p730, %s729, 27
        %s732 = smul.addr %s731, 8
        %s733 = scalar_lea.vmem %s3, %s732
      $region48: #{_lambda_.7} parent=43 // pred_fallthru
        _
      // Predicated region
      $region49: #{_lambda_.7} parent=43 // pred_check
        %p734 = pneg %p134
      $region50: #{_lambda_.7} parent=43 // pred_check_branch
        %736 = sbr.rel (%p734) target = $region52
      $region51: #{_lambda_.7} parent=43 // pred_region
        %s737 = smul.u32 14, %s17
        %p738 = scmp.lt.s32.totalorder %s737, 27
        %s739 = scalar_select %p738, %s737, 27
        %s740 = smul.addr %s739, 8
        %s741 = scalar_lea.vmem %s4, %s740
      $region52: #{_lambda_.7} parent=43 // pred_fallthru
        _
    $region44: #{_lambda_.7} parent=5 // pred_fallthru
      _
  $region6: #{_lambda_.7} parent=0 // loop_footer
    %s15 = sadd.s32 1, %s11
  $region7: #{_lambda_.7} parent=0 // loop_footer_branch
    %10 = sbr.rel target = $region3
  $region8: #{_lambda_.7} parent=0 // loop_exit
    _

// kernel: _lambda_.8
$region0: #{_lambda_.8}
  #allocation0 [shape = 'u32[]', space=smem, size = 0x4, offset = 0x4, fixed_abs, tag = 'smem constant byte address 0x4 - core index']
  #allocation1 [shape = 'u32[144,128]{1,0:T(1,128)}', space=vmem, size = 0x12000, scoped, tag = 'internal scratch']
  %s0 = inlined_call_operand.vmem [shape: f32[224,18], index: 0, kind: input, shape index: {}]
  %s1 = inlined_call_operand.vmem [shape: f32[224,16], index: 1, kind: input, shape index: {}]
  %s2 = inlined_call_operand.vmem [shape: f32[18,16], index: 2, kind: input, shape index: {}]
  %s3 = inlined_call_operand.vmem [shape: f32[224,16], index: 3, kind: output, shape index: {0}]
  %s4 = inlined_call_operand.vmem [shape: f32[224,16], index: 4, kind: output, shape index: {1}]
  %5 = xla_tuple %s3, %s4
  %s6 = sld [smem:[#allocation0]]
  $region53: #{_lambda_.8} parent=0
    _
  %s8 = ssub.s32 1, %s6
  %s9 = scalar_select 0, %s8, %s6
  loop: start=0, step=1, limit=4
  $region2: #{_lambda_.8} parent=0 // loop_pre_header
    _
  $region3: #{_lambda_.8} parent=0 // loop_header
    %s11 = sphi 0, %s15
    %p12 = scmp.ge.s32.totalorder %s11, 4
    %s21 = sphi 0, %s23
    %s24 = sphi 0, %s21
    %s25 = sphi 0, %s24
    %s41 = sphi 0, %s25
    %s47 = sphi 0, %s49
    %s50 = sphi 0, %s47
    %s51 = sphi 0, %s50
    %s67 = sphi 0, %s51
    %s71 = sphi 0, %s71
    %s73 = sphi 0, %s71
    %s74 = sphi 0, %s73
    %s88 = sphi 0, %s74
    %s94 = sphi 0, %s96
    %s97 = sphi 0, %s94
    %s98 = sphi 0, %s97
    %s114 = sphi 0, %s98
    %s120 = sphi 0, %s122
    %s123 = sphi 0, %s120
    %s124 = sphi 0, %s123
    %s140 = sphi 0, %s124
  $region4: #{_lambda_.8} parent=0 // loop_header_branch
    %14 = sbr.rel (%p12) target = $region8
  $region5: #{_lambda_.8} parent=0 // loop_body
    %s16 = ssub.s32 %s11, 1
    %s17 = ssub.s32 %s11, 2
    %s18 = sadd.s32 %s11, 1
    %s19 = ssub.s32 %s11, %s18
    %p20 = scmp.eq.s32.totalorder %s19, 0
    %s22 = sadd.s32 %s21, 1
    %s23 = scalar_select %p20, %s21, %s22
    %p26 = pneg %p20
    %p27 = scmp.eq.s32.totalorder %s11, 1
    %p28 = por %p26, %p27
    %p29 = scmp.ne.s32.totalorder %s21, %s24
    %p30 = scmp.eq.s32.totalorder %s11, 0
    %p31 = por %p29, %p30
    %p32 = scmp.ne.s32.totalorder %s21, %s24
    %p33 = scmp.eq.s32.totalorder %s16, 1
    %p34 = por %p32, %p33
    %p35 = scmp.ne.s32.totalorder %s24, %s25
    %p36 = scmp.eq.s32.totalorder %s16, 0
    %p37 = por %p35, %p36
    %p38 = scmp.ne.s32.totalorder %s24, %s25
    %p39 = scmp.eq.s32.totalorder %s17, 1
    %p40 = por %p38, %p39
    %p42 = scmp.ne.s32.totalorder %s25, %s41
    %p43 = scmp.eq.s32.totalorder %s17, 0
    %p44 = por %p42, %p43
    %s45 = ssub.s32 %s11, %s18
    %p46 = scmp.eq.s32.totalorder %s45, 0
    %s48 = sadd.s32 %s47, 1
    %s49 = scalar_select %p46, %s47, %s48
    %p52 = pneg %p46
    %p53 = scmp.eq.s32.totalorder %s11, 1
    %p54 = por %p52, %p53
    %p55 = scmp.ne.s32.totalorder %s47, %s50
    %p56 = scmp.eq.s32.totalorder %s11, 0
    %p57 = por %p55, %p56
    %p58 = scmp.ne.s32.totalorder %s47, %s50
    %p59 = scmp.eq.s32.totalorder %s16, 1
    %p60 = por %p58, %p59
    %p61 = scmp.ne.s32.totalorder %s50, %s51
    %p62 = scmp.eq.s32.totalorder %s16, 0
    %p63 = por %p61, %p62
    %p64 = scmp.ne.s32.totalorder %s50, %s51
    %p65 = scmp.eq.s32.totalorder %s17, 1
    %p66 = por %p64, %p65
    %p68 = scmp.ne.s32.totalorder %s51, %s67
    %p69 = scmp.eq.s32.totalorder %s17, 0
    %p70 = por %p68, %p69
    %s72 = sadd.s32 %s71, 1
    %p75 = scmp.eq.s32.totalorder %s11, 1
    %p76 = scmp.ne.s32.totalorder %s71, %s73
    %p77 = scmp.eq.s32.totalorder %s11, 0
    %p78 = por %p76, %p77
    %p79 = scmp.ne.s32.totalorder %s71, %s73
    %p80 = scmp.eq.s32.totalorder %s16, 1
    %p81 = por %p79, %p80
    %p82 = scmp.ne.s32.totalorder %s73, %s74
    %p83 = scmp.eq.s32.totalorder %s16, 0
    %p84 = por %p82, %p83
    %p85 = scmp.ne.s32.totalorder %s73, %s74
    %p86 = scmp.eq.s32.totalorder %s17, 1
    %p87 = por %p85, %p86
    %p89 = scmp.ne.s32.totalorder %s74, %s88
    %p90 = scmp.eq.s32.totalorder %s17, 0
    %p91 = por %p89, %p90
    %s92 = ssub.s32 %s11, %s18
    %p93 = scmp.eq.s32.totalorder %s92, 0
    %s95 = sadd.s32 %s94, 1
    %s96 = scalar_select %p93, %s94, %s95
    %p99 = pneg %p93
    %p100 = scmp.eq.s32.totalorder %s11, 1
    %p101 = por %p99, %p100
    %p102 = scmp.ne.s32.totalorder %s94, %s97
    %p103 = scmp.eq.s32.totalorder %s11, 0
    %p104 = por %p102, %p103
    %p105 = scmp.ne.s32.totalorder %s94, %s97
    %p106 = scmp.eq.s32.totalorder %s16, 1
    %p107 = por %p105, %p106
    %p108 = scmp.ne.s32.totalorder %s97, %s98
    %p109 = scmp.eq.s32.totalorder %s16, 0
    %p110 = por %p108, %p109
    %p111 = scmp.ne.s32.totalorder %s97, %s98
    %p112 = scmp.eq.s32.totalorder %s17, 1
    %p113 = por %p111, %p112
    %p115 = scmp.ne.s32.totalorder %s98, %s114
    %p116 = scmp.eq.s32.totalorder %s17, 0
    %p117 = por %p115, %p116
    %s118 = ssub.s32 %s11, %s18
    %p119 = scmp.eq.s32.totalorder %s118, 0
    %s121 = sadd.s32 %s120, 1
    %s122 = scalar_select %p119, %s120, %s121
    %p125 = pneg %p119
    %p126 = scmp.eq.s32.totalorder %s11, 1
    %p127 = por %p125, %p126
    %p128 = scmp.ne.s32.totalorder %s120, %s123
    %p129 = scmp.eq.s32.totalorder %s11, 0
    %p130 = por %p128, %p129
    %p131 = scmp.ne.s32.totalorder %s120, %s123
    %p132 = scmp.eq.s32.totalorder %s16, 1
    %p133 = por %p131, %p132
    %p134 = scmp.ne.s32.totalorder %s123, %s124
    %p135 = scmp.eq.s32.totalorder %s16, 0
    %p136 = por %p134, %p135
    %p137 = scmp.ne.s32.totalorder %s123, %s124
    %p138 = scmp.eq.s32.totalorder %s17, 1
    %p139 = por %p137, %p138
    %p141 = scmp.ne.s32.totalorder %s124, %s140
    %p142 = scmp.eq.s32.totalorder %s17, 0
    %p143 = por %p141, %p142
    %p144 = scmp.le.s32.totalorder 1, %s11
    %p145 = scmp.lt.s32.totalorder %s11, 3
    %p146 = pnand %p144, %p145
    %p147 = pneg %p146
    // Predicated region
    $region9: #{_lambda_.8} parent=5 // pred_check
      _
    $region10: #{_lambda_.8} parent=5 // pred_check_branch
      %149 = sbr.rel (%p146) target = $region12
    $region11: #{_lambda_.8} parent=5 // pred_region
      %s150 = ssub.s32 %s11, 1
      // Predicated region
      $region13: #{_lambda_.8} parent=11 // pred_check
        %p151 = pneg %p84
      $region14: #{_lambda_.8} parent=11 // pred_check_branch
        %153 = sbr.rel (%p151) target = $region16
      $region15: #{_lambda_.8} parent=11 // pred_region
        _
      $region16: #{_lambda_.8} parent=11 // pred_fallthru
        _
    $region12: #{_lambda_.8} parent=5 // pred_fallthru
      _
    %p154 = scmp.lt.s32.totalorder %s11, 2
    // Predicated region
    $region17: #{_lambda_.8} parent=5 // pred_check
      %p155 = pneg %p154
    $region18: #{_lambda_.8} parent=5 // pred_check_branch
      %157 = sbr.rel (%p155) target = $region20
    $region19: #{_lambda_.8} parent=5 // pred_region
      // Predicated region
      $region21: #{_lambda_.8} parent=19 // pred_check
        %p158 = pneg %p31
      $region22: #{_lambda_.8} parent=19 // pred_check_branch
        %160 = sbr.rel (%p158) target = $region24
      $region23: #{_lambda_.8} parent=19 // pred_region
        %s161 = smul.u32 14, %s11
        %p162 = scmp.lt.s32.totalorder %s161, 27
        %s163 = scalar_select %p162, %s161, 27
        %s164 = smul.addr %s163, 8
        %s165 = scalar_lea.vmem %s0, %s164
        %s166 = smul.u32 14, %s11
      $region24: #{_lambda_.8} parent=19 // pred_fallthru
        _
      // Predicated region
      $region25: #{_lambda_.8} parent=19 // pred_check
        %p167 = pneg %p57
      $region26: #{_lambda_.8} parent=19 // pred_check_branch
        %169 = sbr.rel (%p167) target = $region28
      $region27: #{_lambda_.8} parent=19 // pred_region
        %s170 = smul.u32 14, %s11
        %p171 = scmp.lt.s32.totalorder %s170, 27
        %s172 = scalar_select %p171, %s170, 27
        %s173 = smul.addr %s172, 8
        %s174 = scalar_lea.vmem %s1, %s173
        %s175 = smul.u32 14, %s11
      $region28: #{_lambda_.8} parent=19 // pred_fallthru
        _
    $region20: #{_lambda_.8} parent=5 // pred_fallthru
      _
    %p176 = scmp.le.s32.totalorder 1, %s11
    %p177 = scmp.lt.s32.totalorder %s11, 3
    %p178 = pnand %p176, %p177
    %p179 = pneg %p178
    // Predicated region
    $region29: #{_lambda_.8} parent=5 // pred_check
      _
    $region30: #{_lambda_.8} parent=5 // pred_check_branch
      %181 = sbr.rel (%p178) target = $region32
    $region31: #{_lambda_.8} parent=5 // pred_region
      %s182 = ssub.s32 %s11, 1
      %s183 = smul.u32 14, %s16
      %p184 = scmp.lt.s32.totalorder %s183, 27
      %s185 = scalar_select %p184, %s183, 27
      %s186 = smul.addr %s185, 8
      %s187 = scalar_lea.vmem %s0, %s186
      %p188 = pneg %p37
      %p189 = pneg %p34
      %s190 = smul.u32 14, %s16
      %p191 = scmp.lt.s32.totalorder %s190, 27
      %s192 = scalar_select %p191, %s190, 27
      %s193 = smul.addr %s192, 8
      %s194 = scalar_lea.vmem %s1, %s193
      %p195 = pneg %p63
      %p196 = pneg %p60
      %p197 = pneg %p84
      %p198 = pneg %p81
      %p199 = pneg %p110
      %p200 = pneg %p107
      %s201 = smul.u32 14, %s16
      %p202 = scmp.lt.s32.totalorder %s201, 27
      %s203 = scalar_select %p202, %s201, 27
      %s204 = smul.addr %s203, 8
      %s205 = scalar_lea.vmem %s3, %s204
      %p206 = pneg %p136
      %p207 = pneg %p133
      %s208 = smul.u32 14, %s16
      %p209 = scmp.lt.s32.totalorder %s208, 27
      %s210 = scalar_select %p209, %s208, 27
      %s211 = smul.addr %s210, 8
      %s212 = scalar_lea.vmem %s4, %s211
      %s213 = smul.u32 14, %s16
      %p214 = scmp.lt.s32.totalorder %s213, 27
      %s215 = scalar_select %p214, %s213, 27
      %s216 = smul.addr %s215, 8
      %s217 = scalar_lea.vmem %s0, %s216
      %s218 = smul.u32 14, %s16
      %s219 = smul.u32 14, %s16
      %p220 = scmp.lt.s32.totalorder %s219, 27
      %s221 = scalar_select %p220, %s219, 27
      %s222 = smul.addr %s221, 8
      %s223 = scalar_lea.vmem %s1, %s222
      %s224 = smul.u32 14, %s16
      %s225 = smul.u32 14, %s16
      %p226 = scmp.lt.s32.totalorder %s225, 27
      %s227 = scalar_select %p226, %s225, 27
      %s228 = smul.addr %s227, 8
      %s229 = scalar_lea.vmem %s3, %s228
      %s230 = smul.u32 14, %s16
      %s231 = smul.u32 14, %s16
      %p232 = scmp.lt.s32.totalorder %s231, 27
      %s233 = scalar_select %p232, %s231, 27
      %s234 = smul.addr %s233, 8
      %s235 = scalar_lea.vmem %s4, %s234
      %s236 = smul.u32 14, %s16
      %v237 = vld [vmem:[%s217] sm:$0xff]
      %v238 = vld [vmem:[%s217 + $0x8] sm:$0xff]
      %v239 = vld [vmem:[%s217 + $0x10] sm:$0xff]
      %v240 = vld [vmem:[%s217 + $0x18] sm:$0xff]
      %v241 = vld [vmem:[%s217 + $0x20] sm:$0xff]
      %v242 = vld [vmem:[%s217 + $0x28] sm:$0xff]
      %v243 = vld [vmem:[%s217 + $0x30] sm:$0xff]
      %v244 = vld [vmem:[%s217 + $0x38] sm:$0xff]
      %v245 = vld [vmem:[%s217 + $0x40] sm:$0xff]
      %v246 = vld [vmem:[%s217 + $0x48] sm:$0xff]
      %v247 = vld [vmem:[%s217 + $0x50] sm:$0xff]
      %v248 = vld [vmem:[%s217 + $0x58] sm:$0xff]
      %v249 = vld [vmem:[%s217 + $0x60] sm:$0xff]
      %v250 = vld [vmem:[%s217 + $0x68] sm:$0xff]
      %v251 = vld [vmem:[%s2] sm:$0xff]
      %v252 = vld [vmem:[%s2 + $0x8] sm:$0xff]
      %v253 = vld [vmem:[%s2 + $0x10] sm:$0x3]
      %vm254 = vcmask 146432
      %v256 = vsel %vm254, %v237, 0
      %v259 = vsel %vm254, %v238, 0
      %v262 = vsel %vm254, %v239, 0
      %v265 = vsel %vm254, %v240, 0
      %v268 = vsel %vm254, %v241, 0
      %v271 = vsel %vm254, %v242, 0
      %v274 = vsel %vm254, %v243, 0
      %v277 = vsel %vm254, %v244, 0
      %v280 = vsel %vm254, %v245, 0
      %v283 = vsel %vm254, %v246, 0
      %v286 = vsel %vm254, %v247, 0
      %v289 = vsel %vm254, %v248, 0
      %v292 = vsel %vm254, %v249, 0
      %v295 = vsel %vm254, %v250, 0
      %vm297 = vcmask 1041408
      %v299 = vsel %vm297, %v253, 0
      %301 = vmatprep.subr.mxu0 0.0
      %302 = vmatpush1.msra.mxu0 0.0
      %303 = vmatprep.subr.mxu0 0.0
      %304 = vmatpush1.msra.mxu0 0.0
      %305 = vmatprep.subr.mxu0 0.0
      %306 = vmatpush1.msra.mxu0 0.0
      %307 = vmatprep.subr.mxu0 0.0
      %308 = vmatpush1.msra.mxu0 0.0
      %309 = vmatprep.subr.mxu0 0.0
      %310 = vmatpush1.msra.mxu0 0.0
      %311 = vmatprep.subr.mxu0 0.0
      %312 = vmatpush1.msra.mxu0 0.0
      %313 = vmatprep.subr.mxu0 0.0
      %314 = vmatpush1.msra.mxu0 0.0
      %315 = vmatprep.subr.mxu0 0.0
      %316 = vmatpush1.msra.mxu0 0.0
      %317 = vmatprep.subr.mxu0 0.0
      %318 = vmatpush1.msra.mxu0 0.0
      %319 = vmatprep.subr.mxu0 0.0
      %320 = vmatpush1.msra.mxu0 0.0
      %321 = vmatprep.subr.mxu0 0.0
      %322 = vmatpush1.msra.mxu0 0.0
      %323 = vmatprep.subr.mxu0 0.0
      %324 = vmatpush1.msra.mxu0 0.0
      %325 = vmatprep.subr.mxu0 0.0
      %326 = vmatpush1.msra.mxu0 0.0
      %327 = vmatprep.subr.mxu0 0.0
      %328 = vmatpush1.msra.mxu0 %v299
      %329 = vmatprep.subr.mxu0 0.0
      %330 = vmatpush1.msra.mxu0 %v252
      %331 = vmatprep.subr.mxu0 0.0
      %332 = vmatpush1.msra.mxu0 %v251
      %333 = vmatprep.subr.mxu0 0.0
      %334 = vmatpush2.msra.mxu0 0.0
      %335 = vmatprep.subr.mxu0 0.0
      %336 = vmatpush2.msra.mxu0 0.0
      %337 = vmatprep.subr.mxu0 0.0
      %338 = vmatpush2.msra.mxu0 0.0
      %339 = vmatprep.subr.mxu0 0.0
      %340 = vmatpush2.msra.mxu0 0.0
      %341 = vmatprep.subr.mxu0 0.0
      %342 = vmatpush2.msra.mxu0 0.0
      %343 = vmatprep.subr.mxu0 0.0
      %344 = vmatpush2.msra.mxu0 0.0
      %345 = vmatprep.subr.mxu0 0.0
      %346 = vmatpush2.msra.mxu0 0.0
      %347 = vmatprep.subr.mxu0 0.0
      %348 = vmatpush2.msra.mxu0 0.0
      %349 = vmatprep.subr.mxu0 0.0
      %350 = vmatpush2.msra.mxu0 0.0
      %351 = vmatprep.subr.mxu0 0.0
      %352 = vmatpush2.msra.mxu0 0.0
      %353 = vmatprep.subr.mxu0 0.0
      %354 = vmatpush2.msra.mxu0 0.0
      %355 = vmatprep.subr.mxu0 0.0
      %356 = vmatpush2.msra.mxu0 0.0
      %357 = vmatprep.subr.mxu0 0.0
      %358 = vmatpush2.msra.mxu0 0.0
      %359 = vmatprep.subr.mxu0 0.0
      %360 = vmatpush2.msra.mxu0 0.0
      %361 = vmatprep.subr.mxu0 0.0
      %362 = vmatpush2.msra.mxu0 0.0
      %363 = vmatprep.subr.mxu0 0.0
      %364 = vmatpush2.msra.mxu0 0.0
      %365 = vmatprep.mubr.f32.mxu0 0.0
      %366 = vmatmul.mubr.f32.gmra.mxu0 %v256
      %v367 = vpop.f32.mrf.mxu0
      %v368 = vadd.f32 0.0, %v367
      %v369 = vpop.f32.mrf.mxu0
      %370 = vmatprep.mubr.f32.mxu0 0.0
      %371 = vmatmul.mubr.f32.gmra.mxu0 %v259
      %v372 = vpop.f32.mrf.mxu0
      %v373 = vadd.f32 0.0, %v372
      %v374 = vpop.f32.mrf.mxu0
      %375 = vmatprep.mubr.f32.mxu0 0.0
      %376 = vmatmul.mubr.f32.gmra.mxu0 %v262
      %v377 = vpop.f32.mrf.mxu0
      %v378 = vadd.f32 0.0, %v377
      %v379 = vpop.f32.mrf.mxu0
      %380 = vmatprep.mubr.f32.mxu0 0.0
      %381 = vmatmul.mubr.f32.gmra.mxu0 %v265
      %v382 = vpop.f32.mrf.mxu0
      %v383 = vadd.f32 0.0, %v382
      %v384 = vpop.f32.mrf.mxu0
      %385 = vmatprep.mubr.f32.mxu0 0.0
      %386 = vmatmul.mubr.f32.gmra.mxu0 %v268
      %v387 = vpop.f32.mrf.mxu0
      %v388 = vadd.f32 0.0, %v387
      %v389 = vpop.f32.mrf.mxu0
      %390 = vmatprep.mubr.f32.mxu0 0.0
      %391 = vmatmul.mubr.f32.gmra.mxu0 %v271
      %v392 = vpop.f32.mrf.mxu0
      %v393 = vadd.f32 0.0, %v392
      %v394 = vpop.f32.mrf.mxu0
      %395 = vmatprep.mubr.f32.mxu0 0.0
      %396 = vmatmul.mubr.f32.gmra.mxu0 %v274
      %v397 = vpop.f32.mrf.mxu0
      %v398 = vadd.f32 0.0, %v397
      %v399 = vpop.f32.mrf.mxu0
      %400 = vmatprep.mubr.f32.mxu0 0.0
      %401 = vmatmul.mubr.f32.gmra.mxu0 %v277
      %v402 = vpop.f32.mrf.mxu0
      %v403 = vadd.f32 0.0, %v402
      %v404 = vpop.f32.mrf.mxu0
      %405 = vmatprep.mubr.f32.mxu0 0.0
      %406 = vmatmul.mubr.f32.gmra.mxu0 %v280
      %v407 = vpop.f32.mrf.mxu0
      %v408 = vadd.f32 0.0, %v407
      %v409 = vpop.f32.mrf.mxu0
      %410 = vmatprep.mubr.f32.mxu0 0.0
      %411 = vmatmul.mubr.f32.gmra.mxu0 %v283
      %v412 = vpop.f32.mrf.mxu0
      %v413 = vadd.f32 0.0, %v412
      %v414 = vpop.f32.mrf.mxu0
      %415 = vmatprep.mubr.f32.mxu0 0.0
      %416 = vmatmul.mubr.f32.gmra.mxu0 %v286
      %v417 = vpop.f32.mrf.mxu0
      %v418 = vadd.f32 0.0, %v417
      %v419 = vpop.f32.mrf.mxu0
      %420 = vmatprep.mubr.f32.mxu0 0.0
      %421 = vmatmul.mubr.f32.gmra.mxu0 %v289
      %v422 = vpop.f32.mrf.mxu0
      %v423 = vadd.f32 0.0, %v422
      %v424 = vpop.f32.mrf.mxu0
      %425 = vmatprep.mubr.f32.mxu0 0.0
      %426 = vmatmul.mubr.f32.gmra.mxu0 %v292
      %v427 = vpop.f32.mrf.mxu0
      %v428 = vadd.f32 0.0, %v427
      %v429 = vpop.f32.mrf.mxu0
      %430 = vmatprep.mubr.f32.mxu0 0.0
      %431 = vmatmul.mubr.f32.gmra.mxu0 %v295
      %v432 = vpop.f32.mrf.mxu0
      %v433 = vadd.f32 0.0, %v432
      %v434 = vpop.f32.mrf.mxu0
      %435 = vdwg.mxu0
      %vm436 = vcmask 130048
      %437 = vst.msk [vmem:[%s229] sm:$0xff] %vm436, %v368
      %438 = vst.msk [vmem:[%s229 + $0x8] sm:$0xff] %vm436, %v373
      %439 = vst.msk [vmem:[%s229 + $0x10] sm:$0xff] %vm436, %v378
      %440 = vst.msk [vmem:[%s229 + $0x18] sm:$0xff] %vm436, %v383
      %441 = vst.msk [vmem:[%s229 + $0x20] sm:$0xff] %vm436, %v388
      %442 = vst.msk [vmem:[%s229 + $0x28] sm:$0xff] %vm436, %v393
      %443 = vst.msk [vmem:[%s229 + $0x30] sm:$0xff] %vm436, %v398
      %444 = vst.msk [vmem:[%s229 + $0x38] sm:$0xff] %vm436, %v403
      %445 = vst.msk [vmem:[%s229 + $0x40] sm:$0xff] %vm436, %v408
      %446 = vst.msk [vmem:[%s229 + $0x48] sm:$0xff] %vm436, %v413
      %447 = vst.msk [vmem:[%s229 + $0x50] sm:$0xff] %vm436, %v418
      %448 = vst.msk [vmem:[%s229 + $0x58] sm:$0xff] %vm436, %v423
      %449 = vst.msk [vmem:[%s229 + $0x60] sm:$0xff] %vm436, %v428
      %450 = vst.msk [vmem:[%s229 + $0x68] sm:$0xff] %vm436, %v433
      %v451 = vld [vmem:[%s223] sm:$0xff]
      %v452 = vld [vmem:[%s223 + $0x8] sm:$0xff]
      %v453 = vld [vmem:[%s223 + $0x10] sm:$0xff]
      %v454 = vld [vmem:[%s223 + $0x18] sm:$0xff]
      %v455 = vld [vmem:[%s223 + $0x20] sm:$0xff]
      %v456 = vld [vmem:[%s223 + $0x28] sm:$0xff]
      %v457 = vld [vmem:[%s223 + $0x30] sm:$0xff]
      %v458 = vld [vmem:[%s223 + $0x38] sm:$0xff]
      %v459 = vld [vmem:[%s223 + $0x40] sm:$0xff]
      %v460 = vld [vmem:[%s223 + $0x48] sm:$0xff]
      %v461 = vld [vmem:[%s223 + $0x50] sm:$0xff]
      %v462 = vld [vmem:[%s223 + $0x58] sm:$0xff]
      %v463 = vld [vmem:[%s223 + $0x60] sm:$0xff]
      %v464 = vld [vmem:[%s223 + $0x68] sm:$0xff]
      %v465 = vsub.f32 %v451, %v368
      %v466 = vsub.f32 %v452, %v373
      %v467 = vsub.f32 %v453, %v378
      %v468 = vsub.f32 %v454, %v383
      %v469 = vsub.f32 %v455, %v388
      %v470 = vsub.f32 %v456, %v393
      %v471 = vsub.f32 %v457, %v398
      %v472 = vsub.f32 %v458, %v403
      %v473 = vsub.f32 %v459, %v408
      %v474 = vsub.f32 %v460, %v413
      %v475 = vsub.f32 %v461, %v418
      %v476 = vsub.f32 %v462, %v423
      %v477 = vsub.f32 %v463, %v428
      %v478 = vsub.f32 %v464, %v433
      %479 = vst.msk [vmem:[%s235] sm:$0xff] %vm436, %v465
      %480 = vst.msk [vmem:[%s235 + $0x8] sm:$0xff] %vm436, %v466
      %481 = vst.msk [vmem:[%s235 + $0x10] sm:$0xff] %vm436, %v467
      %482 = vst.msk [vmem:[%s235 + $0x18] sm:$0xff] %vm436, %v468
      %483 = vst.msk [vmem:[%s235 + $0x20] sm:$0xff] %vm436, %v469
      %484 = vst.msk [vmem:[%s235 + $0x28] sm:$0xff] %vm436, %v470
      %485 = vst.msk [vmem:[%s235 + $0x30] sm:$0xff] %vm436, %v471
      %486 = vst.msk [vmem:[%s235 + $0x38] sm:$0xff] %vm436, %v472
      %487 = vst.msk [vmem:[%s235 + $0x40] sm:$0xff] %vm436, %v473
      %488 = vst.msk [vmem:[%s235 + $0x48] sm:$0xff] %vm436, %v474
      %489 = vst.msk [vmem:[%s235 + $0x50] sm:$0xff] %vm436, %v475
      %490 = vst.msk [vmem:[%s235 + $0x58] sm:$0xff] %vm436, %v476
      %491 = vst.msk [vmem:[%s235 + $0x60] sm:$0xff] %vm436, %v477
      %492 = vst.msk [vmem:[%s235 + $0x68] sm:$0xff] %vm436, %v478
      %s493 = smul.u32 14, %s16
      %p494 = scmp.lt.s32.totalorder %s493, 27
      %s495 = scalar_select %p494, %s493, 27
      %s496 = smul.addr %s495, 8
      %s497 = scalar_lea.vmem %s3, %s496
      %s498 = smul.u32 14, %s16
      %p499 = scmp.lt.s32.totalorder %s498, 27
      %s500 = scalar_select %p499, %s498, 27
      %s501 = smul.addr %s500, 8
      %s502 = scalar_lea.vmem %s4, %s501
      // Predicated region
      $region33: #{_lambda_.8} parent=31 // pred_check
        %p503 = pneg %p107
      $region34: #{_lambda_.8} parent=31 // pred_check_branch
        %505 = sbr.rel (%p503) target = $region36
      $region35: #{_lambda_.8} parent=31 // pred_region
        %s506 = smul.u32 14, %s16
      $region36: #{_lambda_.8} parent=31 // pred_fallthru
        _
      // Predicated region
      $region37: #{_lambda_.8} parent=31 // pred_check
        %p507 = pneg %p133
      $region38: #{_lambda_.8} parent=31 // pred_check_branch
        %509 = sbr.rel (%p507) target = $region40
      $region39: #{_lambda_.8} parent=31 // pred_region
        %s510 = smul.u32 14, %s16
      $region40: #{_lambda_.8} parent=31 // pred_fallthru
        _
    $region32: #{_lambda_.8} parent=5 // pred_fallthru
      _
    %p511 = scmp.le.s32.totalorder 2, %s11
    // Predicated region
    $region41: #{_lambda_.8} parent=5 // pred_check
      %p512 = pneg %p511
    $region42: #{_lambda_.8} parent=5 // pred_check_branch
      %514 = sbr.rel (%p512) target = $region44
    $region43: #{_lambda_.8} parent=5 // pred_region
      %s515 = ssub.s32 %s11, 2
      // Predicated region
      $region45: #{_lambda_.8} parent=43 // pred_check
        %p516 = pneg %p113
      $region46: #{_lambda_.8} parent=43 // pred_check_branch
        %518 = sbr.rel (%p516) target = $region48
      $region47: #{_lambda_.8} parent=43 // pred_region
        %s519 = smul.u32 14, %s17
        %p520 = scmp.lt.s32.totalorder %s519, 27
        %s521 = scalar_select %p520, %s519, 27
        %s522 = smul.addr %s521, 8
        %s523 = scalar_lea.vmem %s3, %s522
      $region48: #{_lambda_.8} parent=43 // pred_fallthru
        _
      // Predicated region
      $region49: #{_lambda_.8} parent=43 // pred_check
        %p524 = pneg %p139
      $region50: #{_lambda_.8} parent=43 // pred_check_branch
        %526 = sbr.rel (%p524) target = $region52
      $region51: #{_lambda_.8} parent=43 // pred_region
        %s527 = smul.u32 14, %s17
        %p528 = scmp.lt.s32.totalorder %s527, 27
        %s529 = scalar_select %p528, %s527, 27
        %s530 = smul.addr %s529, 8
        %s531 = scalar_lea.vmem %s4, %s530
      $region52: #{_lambda_.8} parent=43 // pred_fallthru
        _
    $region44: #{_lambda_.8} parent=5 // pred_fallthru
      _
  $region6: #{_lambda_.8} parent=0 // loop_footer
    %s15 = sadd.s32 1, %s11
  $region7: #{_lambda_.8} parent=0 // loop_footer_branch
    %10 = sbr.rel target = $region3
  $region8: #{_lambda_.8} parent=0 // loop_exit
    _

// kernel: _lambda_.10
$region0: #{_lambda_.10}
  #allocation0 [shape = 'u32[]', space=smem, size = 0x4, offset = 0x4, fixed_abs, tag = 'smem constant byte address 0x4 - core index']
  #allocation1 [shape = 'u32[144,128]{1,0:T(1,128)}', space=vmem, size = 0x12000, scoped, tag = 'internal scratch']
  %s0 = inlined_call_operand.vmem [shape: f32[224,16], index: 0, kind: input, shape index: {}]
  %s1 = inlined_call_operand.vmem [shape: f32[224,16], index: 1, kind: input, shape index: {}]
  %s2 = inlined_call_operand.vmem [shape: f32[16,32], index: 2, kind: input, shape index: {}]
  %s3 = inlined_call_operand.vmem [shape: f32[1,32], index: 3, kind: input, shape index: {}]
  %s4 = inlined_call_operand.vmem [shape: f32[32,16], index: 4, kind: input, shape index: {}]
  %s5 = inlined_call_operand.vmem [shape: f32[1,16], index: 5, kind: input, shape index: {}]
  %s6 = inlined_call_operand.vmem [shape: f32[16,18], index: 6, kind: input, shape index: {}]
  %s7 = inlined_call_operand.vmem [shape: f32[224,16], index: 7, kind: output, shape index: {0}]
  %s8 = inlined_call_operand.vmem [shape: f32[224,18], index: 8, kind: output, shape index: {1}]
  %9 = xla_tuple %s7, %s8
  %s10 = sld [smem:[#allocation0]]
  $region69: #{_lambda_.10} parent=0
    _
  %s12 = ssub.s32 1, %s10
  %s13 = scalar_select 0, %s12, %s10
  loop: start=0, step=1, limit=4
  $region2: #{_lambda_.10} parent=0 // loop_pre_header
    _
  $region3: #{_lambda_.10} parent=0 // loop_header
    %s15 = sphi 0, %s19
    %p16 = scmp.ge.s32.totalorder %s15, 4
    %s25 = sphi 0, %s27
    %s28 = sphi 0, %s25
    %s29 = sphi 0, %s28
    %s45 = sphi 0, %s29
    %s51 = sphi 0, %s53
    %s54 = sphi 0, %s51
    %s55 = sphi 0, %s54
    %s71 = sphi 0, %s55
    %s75 = sphi 0, %s75
    %s77 = sphi 0, %s75
    %s78 = sphi 0, %s77
    %s92 = sphi 0, %s78
    %s96 = sphi 0, %s96
    %s98 = sphi 0, %s96
    %s99 = sphi 0, %s98
    %s113 = sphi 0, %s99
    %s117 = sphi 0, %s117
    %s119 = sphi 0, %s117
    %s120 = sphi 0, %s119
    %s134 = sphi 0, %s120
    %s138 = sphi 0, %s138
    %s140 = sphi 0, %s138
    %s141 = sphi 0, %s140
    %s155 = sphi 0, %s141
    %s159 = sphi 0, %s159
    %s161 = sphi 0, %s159
    %s162 = sphi 0, %s161
    %s176 = sphi 0, %s162
    %s182 = sphi 0, %s184
    %s185 = sphi 0, %s182
    %s186 = sphi 0, %s185
    %s202 = sphi 0, %s186
    %s208 = sphi 0, %s210
    %s211 = sphi 0, %s208
    %s212 = sphi 0, %s211
    %s228 = sphi 0, %s212
  $region4: #{_lambda_.10} parent=0 // loop_header_branch
    %18 = sbr.rel (%p16) target = $region8
  $region5: #{_lambda_.10} parent=0 // loop_body
    %s20 = ssub.s32 %s15, 1
    %s21 = ssub.s32 %s15, 2
    %s22 = sadd.s32 %s15, 1
    %s23 = ssub.s32 %s15, %s22
    %p24 = scmp.eq.s32.totalorder %s23, 0
    %s26 = sadd.s32 %s25, 1
    %s27 = scalar_select %p24, %s25, %s26
    %p30 = pneg %p24
    %p31 = scmp.eq.s32.totalorder %s15, 1
    %p32 = por %p30, %p31
    %p33 = scmp.ne.s32.totalorder %s25, %s28
    %p34 = scmp.eq.s32.totalorder %s15, 0
    %p35 = por %p33, %p34
    %p36 = scmp.ne.s32.totalorder %s25, %s28
    %p37 = scmp.eq.s32.totalorder %s20, 1
    %p38 = por %p36, %p37
    %p39 = scmp.ne.s32.totalorder %s28, %s29
    %p40 = scmp.eq.s32.totalorder %s20, 0
    %p41 = por %p39, %p40
    %p42 = scmp.ne.s32.totalorder %s28, %s29
    %p43 = scmp.eq.s32.totalorder %s21, 1
    %p44 = por %p42, %p43
    %p46 = scmp.ne.s32.totalorder %s29, %s45
    %p47 = scmp.eq.s32.totalorder %s21, 0
    %p48 = por %p46, %p47
    %s49 = ssub.s32 %s15, %s22
    %p50 = scmp.eq.s32.totalorder %s49, 0
    %s52 = sadd.s32 %s51, 1
    %s53 = scalar_select %p50, %s51, %s52
    %p56 = pneg %p50
    %p57 = scmp.eq.s32.totalorder %s15, 1
    %p58 = por %p56, %p57
    %p59 = scmp.ne.s32.totalorder %s51, %s54
    %p60 = scmp.eq.s32.totalorder %s15, 0
    %p61 = por %p59, %p60
    %p62 = scmp.ne.s32.totalorder %s51, %s54
    %p63 = scmp.eq.s32.totalorder %s20, 1
    %p64 = por %p62, %p63
    %p65 = scmp.ne.s32.totalorder %s54, %s55
    %p66 = scmp.eq.s32.totalorder %s20, 0
    %p67 = por %p65, %p66
    %p68 = scmp.ne.s32.totalorder %s54, %s55
    %p69 = scmp.eq.s32.totalorder %s21, 1
    %p70 = por %p68, %p69
    %p72 = scmp.ne.s32.totalorder %s55, %s71
    %p73 = scmp.eq.s32.totalorder %s21, 0
    %p74 = por %p72, %p73
    %s76 = sadd.s32 %s75, 1
    %p79 = scmp.eq.s32.totalorder %s15, 1
    %p80 = scmp.ne.s32.totalorder %s75, %s77
    %p81 = scmp.eq.s32.totalorder %s15, 0
    %p82 = por %p80, %p81
    %p83 = scmp.ne.s32.totalorder %s75, %s77
    %p84 = scmp.eq.s32.totalorder %s20, 1
    %p85 = por %p83, %p84
    %p86 = scmp.ne.s32.totalorder %s77, %s78
    %p87 = scmp.eq.s32.totalorder %s20, 0
    %p88 = por %p86, %p87
    %p89 = scmp.ne.s32.totalorder %s77, %s78
    %p90 = scmp.eq.s32.totalorder %s21, 1
    %p91 = por %p89, %p90
    %p93 = scmp.ne.s32.totalorder %s78, %s92
    %p94 = scmp.eq.s32.totalorder %s21, 0
    %p95 = por %p93, %p94
    %s97 = sadd.s32 %s96, 1
    %p100 = scmp.eq.s32.totalorder %s15, 1
    %p101 = scmp.ne.s32.totalorder %s96, %s98
    %p102 = scmp.eq.s32.totalorder %s15, 0
    %p103 = por %p101, %p102
    %p104 = scmp.ne.s32.totalorder %s96, %s98
    %p105 = scmp.eq.s32.totalorder %s20, 1
    %p106 = por %p104, %p105
    %p107 = scmp.ne.s32.totalorder %s98, %s99
    %p108 = scmp.eq.s32.totalorder %s20, 0
    %p109 = por %p107, %p108
    %p110 = scmp.ne.s32.totalorder %s98, %s99
    %p111 = scmp.eq.s32.totalorder %s21, 1
    %p112 = por %p110, %p111
    %p114 = scmp.ne.s32.totalorder %s99, %s113
    %p115 = scmp.eq.s32.totalorder %s21, 0
    %p116 = por %p114, %p115
    %s118 = sadd.s32 %s117, 1
    %p121 = scmp.eq.s32.totalorder %s15, 1
    %p122 = scmp.ne.s32.totalorder %s117, %s119
    %p123 = scmp.eq.s32.totalorder %s15, 0
    %p124 = por %p122, %p123
    %p125 = scmp.ne.s32.totalorder %s117, %s119
    %p126 = scmp.eq.s32.totalorder %s20, 1
    %p127 = por %p125, %p126
    %p128 = scmp.ne.s32.totalorder %s119, %s120
    %p129 = scmp.eq.s32.totalorder %s20, 0
    %p130 = por %p128, %p129
    %p131 = scmp.ne.s32.totalorder %s119, %s120
    %p132 = scmp.eq.s32.totalorder %s21, 1
    %p133 = por %p131, %p132
    %p135 = scmp.ne.s32.totalorder %s120, %s134
    %p136 = scmp.eq.s32.totalorder %s21, 0
    %p137 = por %p135, %p136
    %s139 = sadd.s32 %s138, 1
    %p142 = scmp.eq.s32.totalorder %s15, 1
    %p143 = scmp.ne.s32.totalorder %s138, %s140
    %p144 = scmp.eq.s32.totalorder %s15, 0
    %p145 = por %p143, %p144
    %p146 = scmp.ne.s32.totalorder %s138, %s140
    %p147 = scmp.eq.s32.totalorder %s20, 1
    %p148 = por %p146, %p147
    %p149 = scmp.ne.s32.totalorder %s140, %s141
    %p150 = scmp.eq.s32.totalorder %s20, 0
    %p151 = por %p149, %p150
    %p152 = scmp.ne.s32.totalorder %s140, %s141
    %p153 = scmp.eq.s32.totalorder %s21, 1
    %p154 = por %p152, %p153
    %p156 = scmp.ne.s32.totalorder %s141, %s155
    %p157 = scmp.eq.s32.totalorder %s21, 0
    %p158 = por %p156, %p157
    %s160 = sadd.s32 %s159, 1
    %p163 = scmp.eq.s32.totalorder %s15, 1
    %p164 = scmp.ne.s32.totalorder %s159, %s161
    %p165 = scmp.eq.s32.totalorder %s15, 0
    %p166 = por %p164, %p165
    %p167 = scmp.ne.s32.totalorder %s159, %s161
    %p168 = scmp.eq.s32.totalorder %s20, 1
    %p169 = por %p167, %p168
    %p170 = scmp.ne.s32.totalorder %s161, %s162
    %p171 = scmp.eq.s32.totalorder %s20, 0
    %p172 = por %p170, %p171
    %p173 = scmp.ne.s32.totalorder %s161, %s162
    %p174 = scmp.eq.s32.totalorder %s21, 1
    %p175 = por %p173, %p174
    %p177 = scmp.ne.s32.totalorder %s162, %s176
    %p178 = scmp.eq.s32.totalorder %s21, 0
    %p179 = por %p177, %p178
    %s180 = ssub.s32 %s15, %s22
    %p181 = scmp.eq.s32.totalorder %s180, 0
    %s183 = sadd.s32 %s182, 1
    %s184 = scalar_select %p181, %s182, %s183
    %p187 = pneg %p181
    %p188 = scmp.eq.s32.totalorder %s15, 1
    %p189 = por %p187, %p188
    %p190 = scmp.ne.s32.totalorder %s182, %s185
    %p191 = scmp.eq.s32.totalorder %s15, 0
    %p192 = por %p190, %p191
    %p193 = scmp.ne.s32.totalorder %s182, %s185
    %p194 = scmp.eq.s32.totalorder %s20, 1
    %p195 = por %p193, %p194
    %p196 = scmp.ne.s32.totalorder %s185, %s186
    %p197 = scmp.eq.s32.totalorder %s20, 0
    %p198 = por %p196, %p197
    %p199 = scmp.ne.s32.totalorder %s185, %s186
    %p200 = scmp.eq.s32.totalorder %s21, 1
    %p201 = por %p199, %p200
    %p203 = scmp.ne.s32.totalorder %s186, %s202
    %p204 = scmp.eq.s32.totalorder %s21, 0
    %p205 = por %p203, %p204
    %s206 = ssub.s32 %s15, %s22
    %p207 = scmp.eq.s32.totalorder %s206, 0
    %s209 = sadd.s32 %s208, 1
    %s210 = scalar_select %p207, %s208, %s209
    %p213 = pneg %p207
    %p214 = scmp.eq.s32.totalorder %s15, 1
    %p215 = por %p213, %p214
    %p216 = scmp.ne.s32.totalorder %s208, %s211
    %p217 = scmp.eq.s32.totalorder %s15, 0
    %p218 = por %p216, %p217
    %p219 = scmp.ne.s32.totalorder %s208, %s211
    %p220 = scmp.eq.s32.totalorder %s20, 1
    %p221 = por %p219, %p220
    %p222 = scmp.ne.s32.totalorder %s211, %s212
    %p223 = scmp.eq.s32.totalorder %s20, 0
    %p224 = por %p222, %p223
    %p225 = scmp.ne.s32.totalorder %s211, %s212
    %p226 = scmp.eq.s32.totalorder %s21, 1
    %p227 = por %p225, %p226
    %p229 = scmp.ne.s32.totalorder %s212, %s228
    %p230 = scmp.eq.s32.totalorder %s21, 0
    %p231 = por %p229, %p230
    %p232 = scmp.le.s32.totalorder 1, %s15
    %p233 = scmp.lt.s32.totalorder %s15, 3
    %p234 = pnand %p232, %p233
    %p235 = pneg %p234
    // Predicated region
    $region9: #{_lambda_.10} parent=5 // pred_check
      _
    $region10: #{_lambda_.10} parent=5 // pred_check_branch
      %237 = sbr.rel (%p234) target = $region12
    $region11: #{_lambda_.10} parent=5 // pred_region
      %s238 = ssub.s32 %s15, 1
      // Predicated region
      $region13: #{_lambda_.10} parent=11 // pred_check
        %p239 = pneg %p88
      $region14: #{_lambda_.10} parent=11 // pred_check_branch
        %241 = sbr.rel (%p239) target = $region16
      $region15: #{_lambda_.10} parent=11 // pred_region
        _
      $region16: #{_lambda_.10} parent=11 // pred_fallthru
        _
      // Predicated region
      $region17: #{_lambda_.10} parent=11 // pred_check
        %p242 = pneg %p109
      $region18: #{_lambda_.10} parent=11 // pred_check_branch
        %244 = sbr.rel (%p242) target = $region20
      $region19: #{_lambda_.10} parent=11 // pred_region
        _
      $region20: #{_lambda_.10} parent=11 // pred_fallthru
        _
      // Predicated region
      $region21: #{_lambda_.10} parent=11 // pred_check
        %p245 = pneg %p130
      $region22: #{_lambda_.10} parent=11 // pred_check_branch
        %247 = sbr.rel (%p245) target = $region24
      $region23: #{_lambda_.10} parent=11 // pred_region
        _
      $region24: #{_lambda_.10} parent=11 // pred_fallthru
        _
      // Predicated region
      $region25: #{_lambda_.10} parent=11 // pred_check
        %p248 = pneg %p151
      $region26: #{_lambda_.10} parent=11 // pred_check_branch
        %250 = sbr.rel (%p248) target = $region28
      $region27: #{_lambda_.10} parent=11 // pred_region
        _
      $region28: #{_lambda_.10} parent=11 // pred_fallthru
        _
      // Predicated region
      $region29: #{_lambda_.10} parent=11 // pred_check
        %p251 = pneg %p172
      $region30: #{_lambda_.10} parent=11 // pred_check_branch
        %253 = sbr.rel (%p251) target = $region32
      $region31: #{_lambda_.10} parent=11 // pred_region
        _
      $region32: #{_lambda_.10} parent=11 // pred_fallthru
        _
    $region12: #{_lambda_.10} parent=5 // pred_fallthru
      _
    %p254 = scmp.lt.s32.totalorder %s15, 2
    // Predicated region
    $region33: #{_lambda_.10} parent=5 // pred_check
      %p255 = pneg %p254
    $region34: #{_lambda_.10} parent=5 // pred_check_branch
      %257 = sbr.rel (%p255) target = $region36
    $region35: #{_lambda_.10} parent=5 // pred_region
      // Predicated region
      $region37: #{_lambda_.10} parent=35 // pred_check
        %p258 = pneg %p35
      $region38: #{_lambda_.10} parent=35 // pred_check_branch
        %260 = sbr.rel (%p258) target = $region40
      $region39: #{_lambda_.10} parent=35 // pred_region
        %s261 = smul.u32 14, %s15
        %p262 = scmp.lt.s32.totalorder %s261, 27
        %s263 = scalar_select %p262, %s261, 27
        %s264 = smul.addr %s263, 8
        %s265 = scalar_lea.vmem %s0, %s264
        %s266 = smul.u32 14, %s15
      $region40: #{_lambda_.10} parent=35 // pred_fallthru
        _
      // Predicated region
      $region41: #{_lambda_.10} parent=35 // pred_check
        %p267 = pneg %p61
      $region42: #{_lambda_.10} parent=35 // pred_check_branch
        %269 = sbr.rel (%p267) target = $region44
      $region43: #{_lambda_.10} parent=35 // pred_region
        %s270 = smul.u32 14, %s15
        %p271 = scmp.lt.s32.totalorder %s270, 27
        %s272 = scalar_select %p271, %s270, 27
        %s273 = smul.addr %s272, 8
        %s274 = scalar_lea.vmem %s1, %s273
        %s275 = smul.u32 14, %s15
      $region44: #{_lambda_.10} parent=35 // pred_fallthru
        _
    $region36: #{_lambda_.10} parent=5 // pred_fallthru
      _
    %p276 = scmp.le.s32.totalorder 1, %s15
    %p277 = scmp.lt.s32.totalorder %s15, 3
    %p278 = pnand %p276, %p277
    %p279 = pneg %p278
    // Predicated region
    $region45: #{_lambda_.10} parent=5 // pred_check
      _
    $region46: #{_lambda_.10} parent=5 // pred_check_branch
      %281 = sbr.rel (%p278) target = $region48
    $region47: #{_lambda_.10} parent=5 // pred_region
      %s282 = ssub.s32 %s15, 1
      %s283 = smul.u32 14, %s20
      %p284 = scmp.lt.s32.totalorder %s283, 27
      %s285 = scalar_select %p284, %s283, 27
      %s286 = smul.addr %s285, 8
      %s287 = scalar_lea.vmem %s0, %s286
      %p288 = pneg %p41
      %p289 = pneg %p38
      %s290 = smul.u32 14, %s20
      %p291 = scmp.lt.s32.totalorder %s290, 27
      %s292 = scalar_select %p291, %s290, 27
      %s293 = smul.addr %s292, 8
      %s294 = scalar_lea.vmem %s1, %s293
      %p295 = pneg %p67
      %p296 = pneg %p64
      %p297 = pneg %p88
      %p298 = pneg %p85
      %p299 = pneg %p109
      %p300 = pneg %p106
      %p301 = pneg %p130
      %p302 = pneg %p127
      %p303 = pneg %p151
      %p304 = pneg %p148
      %p305 = pneg %p172
      %p306 = pneg %p169
      %p307 = pneg %p198
      %p308 = pneg %p195
      %s309 = smul.u32 14, %s20
      %p310 = scmp.lt.s32.totalorder %s309, 27
      %s311 = scalar_select %p310, %s309, 27
      %s312 = smul.addr %s311, 8
      %s313 = scalar_lea.vmem %s7, %s312
      %p314 = pneg %p224
      %p315 = pneg %p221
      %s316 = smul.u32 14, %s20
      %p317 = scmp.lt.s32.totalorder %s316, 27
      %s318 = scalar_select %p317, %s316, 27
      %s319 = smul.addr %s318, 8
      %s320 = scalar_lea.vmem %s8, %s319
      %s321 = smul.u32 14, %s20
      %p322 = scmp.lt.s32.totalorder %s321, 27
      %s323 = scalar_select %p322, %s321, 27
      %s324 = smul.addr %s323, 8
      %s325 = scalar_lea.vmem %s0, %s324
      %s326 = smul.u32 14, %s20
      %s327 = smul.u32 14, %s20
      %p328 = scmp.lt.s32.totalorder %s327, 27
      %s329 = scalar_select %p328, %s327, 27
      %s330 = smul.addr %s329, 8
      %s331 = scalar_lea.vmem %s1, %s330
      %s332 = smul.u32 14, %s20
      %s333 = smul.u32 14, %s20
      %p334 = scmp.lt.s32.totalorder %s333, 27
      %s335 = scalar_select %p334, %s333, 27
      %s336 = smul.addr %s335, 8
      %s337 = scalar_lea.vmem %s7, %s336
      %s338 = smul.u32 14, %s20
      %s339 = smul.u32 14, %s20
      %p340 = scmp.lt.s32.totalorder %s339, 27
      %s341 = scalar_select %p340, %s339, 27
      %s342 = smul.addr %s341, 8
      %s343 = scalar_lea.vmem %s8, %s342
      %s344 = smul.u32 14, %s20
      %v345 = vld [vmem:[%s331] sm:$0xff]
      %v346 = vld [vmem:[%s331 + $0x8] sm:$0xff]
      %v347 = vld [vmem:[%s331 + $0x10] sm:$0xff]
      %v348 = vld [vmem:[%s331 + $0x18] sm:$0xff]
      %v349 = vld [vmem:[%s331 + $0x20] sm:$0xff]
      %v350 = vld [vmem:[%s331 + $0x28] sm:$0xff]
      %v351 = vld [vmem:[%s331 + $0x30] sm:$0xff]
      %v352 = vld [vmem:[%s331 + $0x38] sm:$0xff]
      %v353 = vld [vmem:[%s331 + $0x40] sm:$0xff]
      %v354 = vld [vmem:[%s331 + $0x48] sm:$0xff]
      %v355 = vld [vmem:[%s331 + $0x50] sm:$0xff]
      %v356 = vld [vmem:[%s331 + $0x58] sm:$0xff]
      %v357 = vld [vmem:[%s331 + $0x60] sm:$0xff]
      %v358 = vld [vmem:[%s331 + $0x68] sm:$0xff]
      %v359 = vld [vmem:[%s2] sm:$0xff]
      %v360 = vld [vmem:[%s2 + $0x8] sm:$0xff]
      %v361 = vld [vmem:[%s3] sm:$0x1]
      %v363 = vlaneseq
      %v364 = vshrl.u32 %v363, 7
      %v365 = vsub.s32 0, %v364
      %v366 = vrot.slane %v361, %v365
      %vm368 = vcmask 130048
      %v370 = vsel %vm368, %v345, 0
      %v373 = vsel %vm368, %v346, 0
      %v376 = vsel %vm368, %v347, 0
      %v379 = vsel %vm368, %v348, 0
      %v382 = vsel %vm368, %v349, 0
      %v385 = vsel %vm368, %v350, 0
      %v388 = vsel %vm368, %v351, 0
      %v391 = vsel %vm368, %v352, 0
      %v394 = vsel %vm368, %v353, 0
      %v397 = vsel %vm368, %v354, 0
      %v400 = vsel %vm368, %v355, 0
      %v403 = vsel %vm368, %v356, 0
      %v406 = vsel %vm368, %v357, 0
      %v409 = vsel %vm368, %v358, 0
      %411 = vmatprep.subr.mxu0 0.0
      %412 = vmatpush1.msra.mxu0 0.0
      %413 = vmatprep.subr.mxu0 0.0
      %414 = vmatpush1.msra.mxu0 0.0
      %415 = vmatprep.subr.mxu0 0.0
      %416 = vmatpush1.msra.mxu0 0.0
      %417 = vmatprep.subr.mxu0 0.0
      %418 = vmatpush1.msra.mxu0 0.0
      %419 = vmatprep.subr.mxu0 0.0
      %420 = vmatpush1.msra.mxu0 0.0
      %421 = vmatprep.subr.mxu0 0.0
      %422 = vmatpush1.msra.mxu0 0.0
      %423 = vmatprep.subr.mxu0 0.0
      %424 = vmatpush1.msra.mxu0 0.0
      %425 = vmatprep.subr.mxu0 0.0
      %426 = vmatpush1.msra.mxu0 0.0
      %427 = vmatprep.subr.mxu0 0.0
      %428 = vmatpush1.msra.mxu0 0.0
      %429 = vmatprep.subr.mxu0 0.0
      %430 = vmatpush1.msra.mxu0 0.0
      %431 = vmatprep.subr.mxu0 0.0
      %432 = vmatpush1.msra.mxu0 0.0
      %433 = vmatprep.subr.mxu0 0.0
      %434 = vmatpush1.msra.mxu0 0.0
      %435 = vmatprep.subr.mxu0 0.0
      %436 = vmatpush1.msra.mxu0 0.0
      %437 = vmatprep.subr.mxu0 0.0
      %438 = vmatpush1.msra.mxu0 0.0
      %439 = vmatprep.subr.mxu0 0.0
      %440 = vmatpush1.msra.mxu0 %v360
      %441 = vmatprep.subr.mxu0 0.0
      %442 = vmatpush1.msra.mxu0 %v359
      %443 = vmatprep.subr.mxu0 0.0
      %444 = vmatpush2.msra.mxu0 0.0
      %445 = vmatprep.subr.mxu0 0.0
      %446 = vmatpush2.msra.mxu0 0.0
      %447 = vmatprep.subr.mxu0 0.0
      %448 = vmatpush2.msra.mxu0 0.0
      %449 = vmatprep.subr.mxu0 0.0
      %450 = vmatpush2.msra.mxu0 0.0
      %451 = vmatprep.subr.mxu0 0.0
      %452 = vmatpush2.msra.mxu0 0.0
      %453 = vmatprep.subr.mxu0 0.0
      %454 = vmatpush2.msra.mxu0 0.0
      %455 = vmatprep.subr.mxu0 0.0
      %456 = vmatpush2.msra.mxu0 0.0
      %457 = vmatprep.subr.mxu0 0.0
      %458 = vmatpush2.msra.mxu0 0.0
      %459 = vmatprep.subr.mxu0 0.0
      %460 = vmatpush2.msra.mxu0 0.0
      %461 = vmatprep.subr.mxu0 0.0
      %462 = vmatpush2.msra.mxu0 0.0
      %463 = vmatprep.subr.mxu0 0.0
      %464 = vmatpush2.msra.mxu0 0.0
      %465 = vmatprep.subr.mxu0 0.0
      %466 = vmatpush2.msra.mxu0 0.0
      %467 = vmatprep.subr.mxu0 0.0
      %468 = vmatpush2.msra.mxu0 0.0
      %469 = vmatprep.subr.mxu0 0.0
      %470 = vmatpush2.msra.mxu0 0.0
      %471 = vmatprep.subr.mxu0 0.0
      %472 = vmatpush2.msra.mxu0 0.0
      %473 = vmatprep.subr.mxu0 0.0
      %474 = vmatpush2.msra.mxu0 0.0
      %475 = vmatprep.mubr.f32.mxu0 0.0
      %476 = vmatmul.mubr.f32.gmra.mxu0 %v370
      %v477 = vpop.f32.mrf.mxu0
      %v478 = vadd.f32 %v366, %v477
      %v479 = vpop.f32.mrf.mxu0
      %480 = vmatprep.mubr.f32.mxu0 0.0
      %481 = vmatmul.mubr.f32.gmra.mxu0 %v373
      %v482 = vpop.f32.mrf.mxu0
      %v483 = vadd.f32 %v366, %v482
      %v484 = vpop.f32.mrf.mxu0
      %485 = vmatprep.mubr.f32.mxu0 0.0
      %486 = vmatmul.mubr.f32.gmra.mxu0 %v376
      %v487 = vpop.f32.mrf.mxu0
      %v488 = vadd.f32 %v366, %v487
      %v489 = vpop.f32.mrf.mxu0
      %490 = vmatprep.mubr.f32.mxu0 0.0
      %491 = vmatmul.mubr.f32.gmra.mxu0 %v379
      %v492 = vpop.f32.mrf.mxu0
      %v493 = vadd.f32 %v366, %v492
      %v494 = vpop.f32.mrf.mxu0
      %495 = vmatprep.mubr.f32.mxu0 0.0
      %496 = vmatmul.mubr.f32.gmra.mxu0 %v382
      %v497 = vpop.f32.mrf.mxu0
      %v498 = vadd.f32 %v366, %v497
      %v499 = vpop.f32.mrf.mxu0
      %500 = vmatprep.mubr.f32.mxu0 0.0
      %501 = vmatmul.mubr.f32.gmra.mxu0 %v385
      %v502 = vpop.f32.mrf.mxu0
      %v503 = vadd.f32 %v366, %v502
      %v504 = vpop.f32.mrf.mxu0
      %505 = vmatprep.mubr.f32.mxu0 0.0
      %506 = vmatmul.mubr.f32.gmra.mxu0 %v388
      %v507 = vpop.f32.mrf.mxu0
      %v508 = vadd.f32 %v366, %v507
      %v509 = vpop.f32.mrf.mxu0
      %510 = vmatprep.mubr.f32.mxu0 0.0
      %511 = vmatmul.mubr.f32.gmra.mxu0 %v391
      %v512 = vpop.f32.mrf.mxu0
      %v513 = vadd.f32 %v366, %v512
      %v514 = vpop.f32.mrf.mxu0
      %515 = vmatprep.mubr.f32.mxu0 0.0
      %516 = vmatmul.mubr.f32.gmra.mxu0 %v394
      %v517 = vpop.f32.mrf.mxu0
      %v518 = vadd.f32 %v366, %v517
      %v519 = vpop.f32.mrf.mxu0
      %520 = vmatprep.mubr.f32.mxu0 0.0
      %521 = vmatmul.mubr.f32.gmra.mxu0 %v397
      %v522 = vpop.f32.mrf.mxu0
      %v523 = vadd.f32 %v366, %v522
      %v524 = vpop.f32.mrf.mxu0
      %525 = vmatprep.mubr.f32.mxu0 0.0
      %526 = vmatmul.mubr.f32.gmra.mxu0 %v400
      %v527 = vpop.f32.mrf.mxu0
      %v528 = vadd.f32 %v366, %v527
      %v529 = vpop.f32.mrf.mxu0
      %530 = vmatprep.mubr.f32.mxu0 0.0
      %531 = vmatmul.mubr.f32.gmra.mxu0 %v403
      %v532 = vpop.f32.mrf.mxu0
      %v533 = vadd.f32 %v366, %v532
      %v534 = vpop.f32.mrf.mxu0
      %535 = vmatprep.mubr.f32.mxu0 0.0
      %536 = vmatmul.mubr.f32.gmra.mxu0 %v406
      %v537 = vpop.f32.mrf.mxu0
      %v538 = vadd.f32 %v366, %v537
      %v539 = vpop.f32.mrf.mxu0
      %540 = vmatprep.mubr.f32.mxu0 0.0
      %541 = vmatmul.mubr.f32.gmra.mxu0 %v409
      %v542 = vpop.f32.mrf.mxu0
      %v543 = vadd.f32 %v366, %v542
      %v544 = vpop.f32.mrf.mxu0
      %545 = vdwg.mxu0
      %v546 = vmul.f32 %v478, 0.70710677
      %v547 = vmul.f32 %v483, 0.70710677
      %v548 = vmul.f32 %v488, 0.70710677
      %v549 = vmul.f32 %v493, 0.70710677
      %v550 = vmul.f32 %v498, 0.70710677
      %v551 = vmul.f32 %v503, 0.70710677
      %v552 = vmul.f32 %v508, 0.70710677
      %v553 = vmul.f32 %v513, 0.70710677
      %v554 = vmul.f32 %v518, 0.70710677
      %v555 = vmul.f32 %v523, 0.70710677
      %v556 = vmul.f32 %v528, 0.70710677
      %v557 = vmul.f32 %v533, 0.70710677
      %v558 = vmul.f32 %v538, 0.70710677
      %v559 = vmul.f32 %v543, 0.70710677
      %v560 = vand.u32 2147483647, %v546
      %v561 = vand.u32 2147483647, %v547
      %v562 = vand.u32 2147483647, %v548
      %v563 = vand.u32 2147483647, %v549
      %v564 = vand.u32 2147483647, %v550
      %v565 = vand.u32 2147483647, %v551
      %v566 = vand.u32 2147483647, %v552
      %v567 = vand.u32 2147483647, %v553
      %v568 = vand.u32 2147483647, %v554
      %v569 = vand.u32 2147483647, %v555
      %v570 = vand.u32 2147483647, %v556
      %v571 = vand.u32 2147483647, %v557
      %v572 = vand.u32 2147483647, %v558
      %v573 = vand.u32 2147483647, %v559
      %v574 = vmul.f32 %v560, 0.3275911
      %v575 = vmul.f32 %v561, 0.3275911
      %v576 = vmul.f32 %v562, 0.3275911
      %v577 = vmul.f32 %v563, 0.3275911
      %v578 = vmul.f32 %v564, 0.3275911
      %v579 = vmul.f32 %v565, 0.3275911
      %v580 = vmul.f32 %v566, 0.3275911
      %v581 = vmul.f32 %v567, 0.3275911
      %v582 = vmul.f32 %v568, 0.3275911
      %v583 = vmul.f32 %v569, 0.3275911
      %v584 = vmul.f32 %v570, 0.3275911
      %v585 = vmul.f32 %v571, 0.3275911
      %v586 = vmul.f32 %v572, 0.3275911
      %v587 = vmul.f32 %v573, 0.3275911
      %v588 = vadd.f32 %v574, 1.0
      %v589 = vadd.f32 %v575, 1.0
      %v590 = vadd.f32 %v576, 1.0
      %v591 = vadd.f32 %v577, 1.0
      %v592 = vadd.f32 %v578, 1.0
      %v593 = vadd.f32 %v579, 1.0
      %v594 = vadd.f32 %v580, 1.0
      %v595 = vadd.f32 %v581, 1.0
      %v596 = vadd.f32 %v582, 1.0
      %v597 = vadd.f32 %v583, 1.0
      %v598 = vadd.f32 %v584, 1.0
      %v599 = vadd.f32 %v585, 1.0
      %v600 = vadd.f32 %v586, 1.0
      %v601 = vadd.f32 %v587, 1.0
      %v602 = vrcp.pop %v588
      %v603 = vmul.f32 1.0, %v602
      %v604 = vrcp.pop %v589
      %v605 = vmul.f32 1.0, %v604
      %v606 = vrcp.pop %v590
      %v607 = vmul.f32 1.0, %v606
      %v608 = vrcp.pop %v591
      %v609 = vmul.f32 1.0, %v608
      %v610 = vrcp.pop %v592
      %v611 = vmul.f32 1.0, %v610
      %v612 = vrcp.pop %v593
      %v613 = vmul.f32 1.0, %v612
      %v614 = vrcp.pop %v594
      %v615 = vmul.f32 1.0, %v614
      %v616 = vrcp.pop %v595
      %v617 = vmul.f32 1.0, %v616
      %v618 = vrcp.pop %v596
      %v619 = vmul.f32 1.0, %v618
      %v620 = vrcp.pop %v597
      %v621 = vmul.f32 1.0, %v620
      %v622 = vrcp.pop %v598
      %v623 = vmul.f32 1.0, %v622
      %v624 = vrcp.pop %v599
      %v625 = vmul.f32 1.0, %v624
      %v626 = vrcp.pop %v600
      %v627 = vmul.f32 1.0, %v626
      %v628 = vrcp.pop %v601
      %v629 = vmul.f32 1.0, %v628
      %v630 = vmul.f32 %v603, 1.0614054
      %v631 = vmul.f32 %v605, 1.0614054
      %v632 = vmul.f32 %v607, 1.0614054
      %v633 = vmul.f32 %v609, 1.0614054
      %v634 = vmul.f32 %v611, 1.0614054
      %v635 = vmul.f32 %v613, 1.0614054
      %v636 = vmul.f32 %v615, 1.0614054
      %v637 = vmul.f32 %v617, 1.0614054
      %v638 = vmul.f32 %v619, 1.0614054
      %v639 = vmul.f32 %v621, 1.0614054
      %v640 = vmul.f32 %v623, 1.0614054
      %v641 = vmul.f32 %v625, 1.0614054
      %v642 = vmul.f32 %v627, 1.0614054
      %v643 = vmul.f32 %v629, 1.0614054
      %v644 = vadd.f32 %v630, -1.4531521
      %v645 = vadd.f32 %v631, -1.4531521
      %v646 = vadd.f32 %v632, -1.4531521
      %v647 = vadd.f32 %v633, -1.4531521
      %v648 = vadd.f32 %v634, -1.4531521
      %v649 = vadd.f32 %v635, -1.4531521
      %v650 = vadd.f32 %v636, -1.4531521
      %v651 = vadd.f32 %v637, -1.4531521
      %v652 = vadd.f32 %v638, -1.4531521
      %v653 = vadd.f32 %v639, -1.4531521
      %v654 = vadd.f32 %v640, -1.4531521
      %v655 = vadd.f32 %v641, -1.4531521
      %v656 = vadd.f32 %v642, -1.4531521
      %v657 = vadd.f32 %v643, -1.4531521
      %v658 = vmul.f32 %v603, %v644
      %v659 = vmul.f32 %v605, %v645
      %v660 = vmul.f32 %v607, %v646
      %v661 = vmul.f32 %v609, %v647
      %v662 = vmul.f32 %v611, %v648
      %v663 = vmul.f32 %v613, %v649
      %v664 = vmul.f32 %v615, %v650
      %v665 = vmul.f32 %v617, %v651
      %v666 = vmul.f32 %v619, %v652
      %v667 = vmul.f32 %v621, %v653
      %v668 = vmul.f32 %v623, %v654
      %v669 = vmul.f32 %v625, %v655
      %v670 = vmul.f32 %v627, %v656
      %v671 = vmul.f32 %v629, %v657
      %v672 = vadd.f32 %v658, 1.4214138
      %v673 = vadd.f32 %v659, 1.4214138
      %v674 = vadd.f32 %v660, 1.4214138
      %v675 = vadd.f32 %v661, 1.4214138
      %v676 = vadd.f32 %v662, 1.4214138
      %v677 = vadd.f32 %v663, 1.4214138
      %v678 = vadd.f32 %v664, 1.4214138
      %v679 = vadd.f32 %v665, 1.4214138
      %v680 = vadd.f32 %v666, 1.4214138
      %v681 = vadd.f32 %v667, 1.4214138
      %v682 = vadd.f32 %v668, 1.4214138
      %v683 = vadd.f32 %v669, 1.4214138
      %v684 = vadd.f32 %v670, 1.4214138
      %v685 = vadd.f32 %v671, 1.4214138
      %v686 = vmul.f32 %v603, %v672
      %v687 = vmul.f32 %v605, %v673
      %v688 = vmul.f32 %v607, %v674
      %v689 = vmul.f32 %v609, %v675
      %v690 = vmul.f32 %v611, %v676
      %v691 = vmul.f32 %v613, %v677
      %v692 = vmul.f32 %v615, %v678
      %v693 = vmul.f32 %v617, %v679
      %v694 = vmul.f32 %v619, %v680
      %v695 = vmul.f32 %v621, %v681
      %v696 = vmul.f32 %v623, %v682
      %v697 = vmul.f32 %v625, %v683
      %v698 = vmul.f32 %v627, %v684
      %v699 = vmul.f32 %v629, %v685
      %v700 = vadd.f32 %v686, -0.28449672
      %v701 = vadd.f32 %v687, -0.28449672
      %v702 = vadd.f32 %v688, -0.28449672
      %v703 = vadd.f32 %v689, -0.28449672
      %v704 = vadd.f32 %v690, -0.28449672
      %v705 = vadd.f32 %v691, -0.28449672
      %v706 = vadd.f32 %v692, -0.28449672
      %v707 = vadd.f32 %v693, -0.28449672
      %v708 = vadd.f32 %v694, -0.28449672
      %v709 = vadd.f32 %v695, -0.28449672
      %v710 = vadd.f32 %v696, -0.28449672
      %v711 = vadd.f32 %v697, -0.28449672
      %v712 = vadd.f32 %v698, -0.28449672
      %v713 = vadd.f32 %v699, -0.28449672
      %v714 = vmul.f32 %v603, %v700
      %v715 = vmul.f32 %v605, %v701
      %v716 = vmul.f32 %v607, %v702
      %v717 = vmul.f32 %v609, %v703
      %v718 = vmul.f32 %v611, %v704
      %v719 = vmul.f32 %v613, %v705
      %v720 = vmul.f32 %v615, %v706
      %v721 = vmul.f32 %v617, %v707
      %v722 = vmul.f32 %v619, %v708
      %v723 = vmul.f32 %v621, %v709
      %v724 = vmul.f32 %v623, %v710
      %v725 = vmul.f32 %v625, %v711
      %v726 = vmul.f32 %v627, %v712
      %v727 = vmul.f32 %v629, %v713
      %v728 = vadd.f32 %v714, 0.2548296
      %v729 = vadd.f32 %v715, 0.2548296
      %v730 = vadd.f32 %v716, 0.2548296
      %v731 = vadd.f32 %v717, 0.2548296
      %v732 = vadd.f32 %v718, 0.2548296
      %v733 = vadd.f32 %v719, 0.2548296
      %v734 = vadd.f32 %v720, 0.2548296
      %v735 = vadd.f32 %v721, 0.2548296
      %v736 = vadd.f32 %v722, 0.2548296
      %v737 = vadd.f32 %v723, 0.2548296
      %v738 = vadd.f32 %v724, 0.2548296
      %v739 = vadd.f32 %v725, 0.2548296
      %v740 = vadd.f32 %v726, 0.2548296
      %v741 = vadd.f32 %v727, 0.2548296
      %v742 = vmul.f32 %v603, %v728
      %v743 = vmul.f32 %v605, %v729
      %v744 = vmul.f32 %v607, %v730
      %v745 = vmul.f32 %v609, %v731
      %v746 = vmul.f32 %v611, %v732
      %v747 = vmul.f32 %v613, %v733
      %v748 = vmul.f32 %v615, %v734
      %v749 = vmul.f32 %v617, %v735
      %v750 = vmul.f32 %v619, %v736
      %v751 = vmul.f32 %v621, %v737
      %v752 = vmul.f32 %v623, %v738
      %v753 = vmul.f32 %v625, %v739
      %v754 = vmul.f32 %v627, %v740
      %v755 = vmul.f32 %v629, %v741
      %v756 = vsub.f32 0.0, %v560
      %v757 = vsub.f32 0.0, %v561
      %v758 = vsub.f32 0.0, %v562
      %v759 = vsub.f32 0.0, %v563
      %v760 = vsub.f32 0.0, %v564
      %v761 = vsub.f32 0.0, %v565
      %v762 = vsub.f32 0.0, %v566
      %v763 = vsub.f32 0.0, %v567
      %v764 = vsub.f32 0.0, %v568
      %v765 = vsub.f32 0.0, %v569
      %v766 = vsub.f32 0.0, %v570
      %v767 = vsub.f32 0.0, %v571
      %v768 = vsub.f32 0.0, %v572
      %v769 = vsub.f32 0.0, %v573
      %v770 = vmul.f32 %v756, %v560
      %v771 = vmul.f32 %v757, %v561
      %v772 = vmul.f32 %v758, %v562
      %v773 = vmul.f32 %v759, %v563
      %v774 = vmul.f32 %v760, %v564
      %v775 = vmul.f32 %v761, %v565
      %v776 = vmul.f32 %v762, %v566
      %v777 = vmul.f32 %v763, %v567
      %v778 = vmul.f32 %v764, %v568
      %v779 = vmul.f32 %v765, %v569
      %v780 = vmul.f32 %v766, %v570
      %v781 = vmul.f32 %v767, %v571
      %v782 = vmul.f32 %v768, %v572
      %v783 = vmul.f32 %v769, %v573
      %v784 = vmul.f32 %v770, 1.442695
      %v785 = vpow.pop %v784
      %v786 = vmul.f32 %v771, 1.442695
      %v787 = vpow.pop %v786
      %v788 = vmul.f32 %v772, 1.442695
      %v789 = vpow.pop %v788
      %v790 = vmul.f32 %v773, 1.442695
      %v791 = vpow.pop %v790
      %v792 = vmul.f32 %v774, 1.442695
      %v793 = vpow.pop %v792
      %v794 = vmul.f32 %v775, 1.442695
      %v795 = vpow.pop %v794
      %v796 = vmul.f32 %v776, 1.442695
      %v797 = vpow.pop %v796
      %v798 = vmul.f32 %v777, 1.442695
      %v799 = vpow.pop %v798
      %v800 = vmul.f32 %v778, 1.442695
      %v801 = vpow.pop %v800
      %v802 = vmul.f32 %v779, 1.442695
      %v803 = vpow.pop %v802
      %v804 = vmul.f32 %v780, 1.442695
      %v805 = vpow.pop %v804
      %v806 = vmul.f32 %v781, 1.442695
      %v807 = vpow.pop %v806
      %v808 = vmul.f32 %v782, 1.442695
      %v809 = vpow.pop %v808
      %v810 = vmul.f32 %v783, 1.442695
      %v811 = vpow.pop %v810
      %v812 = vmul.f32 %v742, %v785
      %v813 = vmul.f32 %v743, %v787
      %v814 = vmul.f32 %v744, %v789
      %v815 = vmul.f32 %v745, %v791
      %v816 = vmul.f32 %v746, %v793
      %v817 = vmul.f32 %v747, %v795
      %v818 = vmul.f32 %v748, %v797
      %v819 = vmul.f32 %v749, %v799
      %v820 = vmul.f32 %v750, %v801
      %v821 = vmul.f32 %v751, %v803
      %v822 = vmul.f32 %v752, %v805
      %v823 = vmul.f32 %v753, %v807
      %v824 = vmul.f32 %v754, %v809
      %v825 = vmul.f32 %v755, %v811
      %v826 = vsub.f32 1.0, %v812
      %v827 = vsub.f32 1.0, %v813
      %v828 = vsub.f32 1.0, %v814
      %v829 = vsub.f32 1.0, %v815
      %v830 = vsub.f32 1.0, %v816
      %v831 = vsub.f32 1.0, %v817
      %v832 = vsub.f32 1.0, %v818
      %v833 = vsub.f32 1.0, %v819
      %v834 = vsub.f32 1.0, %v820
      %v835 = vsub.f32 1.0, %v821
      %v836 = vsub.f32 1.0, %v822
      %v837 = vsub.f32 1.0, %v823
      %v838 = vsub.f32 1.0, %v824
      %v839 = vsub.f32 1.0, %v825
      %vm840 = vcmp.ge.f32.partialorder %v546, 0.0
      %vm841 = vcmp.ge.f32.partialorder %v547, 0.0
      %vm842 = vcmp.ge.f32.partialorder %v548, 0.0
      %vm843 = vcmp.ge.f32.partialorder %v549, 0.0
      %vm844 = vcmp.ge.f32.partialorder %v550, 0.0
      %vm845 = vcmp.ge.f32.partialorder %v551, 0.0
      %vm846 = vcmp.ge.f32.partialorder %v552, 0.0
      %vm847 = vcmp.ge.f32.partialorder %v553, 0.0
      %vm848 = vcmp.ge.f32.partialorder %v554, 0.0
      %vm849 = vcmp.ge.f32.partialorder %v555, 0.0
      %vm850 = vcmp.ge.f32.partialorder %v556, 0.0
      %vm851 = vcmp.ge.f32.partialorder %v557, 0.0
      %vm852 = vcmp.ge.f32.partialorder %v558, 0.0
      %vm853 = vcmp.ge.f32.partialorder %v559, 0.0
      %v854 = vsub.f32 0.0, %v826
      %v855 = vsub.f32 0.0, %v827
      %v856 = vsub.f32 0.0, %v828
      %v857 = vsub.f32 0.0, %v829
      %v858 = vsub.f32 0.0, %v830
      %v859 = vsub.f32 0.0, %v831
      %v860 = vsub.f32 0.0, %v832
      %v861 = vsub.f32 0.0, %v833
      %v862 = vsub.f32 0.0, %v834
      %v863 = vsub.f32 0.0, %v835
      %v864 = vsub.f32 0.0, %v836
      %v865 = vsub.f32 0.0, %v837
      %v866 = vsub.f32 0.0, %v838
      %v867 = vsub.f32 0.0, %v839
      %v868 = vsel %vm840, %v826, %v854
      %v869 = vsel %vm841, %v827, %v855
      %v870 = vsel %vm842, %v828, %v856
      %v871 = vsel %vm843, %v829, %v857
      %v872 = vsel %vm844, %v830, %v858
      %v873 = vsel %vm845, %v831, %v859
      %v874 = vsel %vm846, %v832, %v860
      %v875 = vsel %vm847, %v833, %v861
      %v876 = vsel %vm848, %v834, %v862
      %v877 = vsel %vm849, %v835, %v863
      %v878 = vsel %vm850, %v836, %v864
      %v879 = vsel %vm851, %v837, %v865
      %v880 = vsel %vm852, %v838, %v866
      %v881 = vsel %vm853, %v839, %v867
      %v882 = vmul.f32 %v478, 0.5
      %v883 = vmul.f32 %v483, 0.5
      %v884 = vmul.f32 %v488, 0.5
      %v885 = vmul.f32 %v493, 0.5
      %v886 = vmul.f32 %v498, 0.5
      %v887 = vmul.f32 %v503, 0.5
      %v888 = vmul.f32 %v508, 0.5
      %v889 = vmul.f32 %v513, 0.5
      %v890 = vmul.f32 %v518, 0.5
      %v891 = vmul.f32 %v523, 0.5
      %v892 = vmul.f32 %v528, 0.5
      %v893 = vmul.f32 %v533, 0.5
      %v894 = vmul.f32 %v538, 0.5
      %v895 = vmul.f32 %v543, 0.5
      %v896 = vadd.f32 %v868, 1.0
      %v897 = vadd.f32 %v869, 1.0
      %v898 = vadd.f32 %v870, 1.0
      %v899 = vadd.f32 %v871, 1.0
      %v900 = vadd.f32 %v872, 1.0
      %v901 = vadd.f32 %v873, 1.0
      %v902 = vadd.f32 %v874, 1.0
      %v903 = vadd.f32 %v875, 1.0
      %v904 = vadd.f32 %v876, 1.0
      %v905 = vadd.f32 %v877, 1.0
      %v906 = vadd.f32 %v878, 1.0
      %v907 = vadd.f32 %v879, 1.0
      %v908 = vadd.f32 %v880, 1.0
      %v909 = vadd.f32 %v881, 1.0
      %v910 = vmul.f32 %v882, %v896
      %v911 = vmul.f32 %v883, %v897
      %v912 = vmul.f32 %v884, %v898
      %v913 = vmul.f32 %v885, %v899
      %v914 = vmul.f32 %v886, %v900
      %v915 = vmul.f32 %v887, %v901
      %v916 = vmul.f32 %v888, %v902
      %v917 = vmul.f32 %v889, %v903
      %v918 = vmul.f32 %v890, %v904
      %v919 = vmul.f32 %v891, %v905
      %v920 = vmul.f32 %v892, %v906
      %v921 = vmul.f32 %v893, %v907
      %v922 = vmul.f32 %v894, %v908
      %v923 = vmul.f32 %v895, %v909
      %v924 = vld [vmem:[%s325] sm:$0xff]
      %v925 = vld [vmem:[%s325 + $0x8] sm:$0xff]
      %v926 = vld [vmem:[%s325 + $0x10] sm:$0xff]
      %v927 = vld [vmem:[%s325 + $0x18] sm:$0xff]
      %v928 = vld [vmem:[%s325 + $0x20] sm:$0xff]
      %v929 = vld [vmem:[%s325 + $0x28] sm:$0xff]
      %v930 = vld [vmem:[%s325 + $0x30] sm:$0xff]
      %v931 = vld [vmem:[%s325 + $0x38] sm:$0xff]
      %v932 = vld [vmem:[%s325 + $0x40] sm:$0xff]
      %v933 = vld [vmem:[%s325 + $0x48] sm:$0xff]
      %v934 = vld [vmem:[%s325 + $0x50] sm:$0xff]
      %v935 = vld [vmem:[%s325 + $0x58] sm:$0xff]
      %v936 = vld [vmem:[%s325 + $0x60] sm:$0xff]
      %v937 = vld [vmem:[%s325 + $0x68] sm:$0xff]
      %v938 = vld [vmem:[%s4] sm:$0xff]
      %v939 = vld [vmem:[%s4 + $0x8] sm:$0xff]
      %v940 = vld [vmem:[%s4 + $0x10] sm:$0xff]
      %v941 = vld [vmem:[%s4 + $0x18] sm:$0xff]
      %vm942 = vcmask 261120
      %v944 = vsel %vm942, %v910, 0
      %v947 = vsel %vm942, %v911, 0
      %v950 = vsel %vm942, %v912, 0
      %v953 = vsel %vm942, %v913, 0
      %v956 = vsel %vm942, %v914, 0
      %v959 = vsel %vm942, %v915, 0
      %v962 = vsel %vm942, %v916, 0
      %v965 = vsel %vm942, %v917, 0
      %v968 = vsel %vm942, %v918, 0
      %v971 = vsel %vm942, %v919, 0
      %v974 = vsel %vm942, %v920, 0
      %v977 = vsel %vm942, %v921, 0
      %v980 = vsel %vm942, %v922, 0
      %v983 = vsel %vm942, %v923, 0
      %985 = vmatprep.subr.mxu0 0.0
      %986 = vmatpush1.msra.mxu0 0.0
      %987 = vmatprep.subr.mxu0 0.0
      %988 = vmatpush1.msra.mxu0 0.0
      %989 = vmatprep.subr.mxu0 0.0
      %990 = vmatpush1.msra.mxu0 0.0
      %991 = vmatprep.subr.mxu0 0.0
      %992 = vmatpush1.msra.mxu0 0.0
      %993 = vmatprep.subr.mxu0 0.0
      %994 = vmatpush1.msra.mxu0 0.0
      %995 = vmatprep.subr.mxu0 0.0
      %996 = vmatpush1.msra.mxu0 0.0
      %997 = vmatprep.subr.mxu0 0.0
      %998 = vmatpush1.msra.mxu0 0.0
      %999 = vmatprep.subr.mxu0 0.0
      %1000 = vmatpush1.msra.mxu0 0.0
      %1001 = vmatprep.subr.mxu0 0.0
      %1002 = vmatpush1.msra.mxu0 0.0
      %1003 = vmatprep.subr.mxu0 0.0
      %1004 = vmatpush1.msra.mxu0 0.0
      %1005 = vmatprep.subr.mxu0 0.0
      %1006 = vmatpush1.msra.mxu0 0.0
      %1007 = vmatprep.subr.mxu0 0.0
      %1008 = vmatpush1.msra.mxu0 0.0
      %1009 = vmatprep.subr.mxu0 0.0
      %1010 = vmatpush1.msra.mxu0 %v941
      %1011 = vmatprep.subr.mxu0 0.0
      %1012 = vmatpush1.msra.mxu0 %v940
      %1013 = vmatprep.subr.mxu0 0.0
      %1014 = vmatpush1.msra.mxu0 %v939
      %1015 = vmatprep.subr.mxu0 0.0
      %1016 = vmatpush1.msra.mxu0 %v938
      %1017 = vmatprep.subr.mxu0 0.0
      %1018 = vmatpush2.msra.mxu0 0.0
      %1019 = vmatprep.subr.mxu0 0.0
      %1020 = vmatpush2.msra.mxu0 0.0
      %1021 = vmatprep.subr.mxu0 0.0
      %1022 = vmatpush2.msra.mxu0 0.0
      %1023 = vmatprep.subr.mxu0 0.0
      %1024 = vmatpush2.msra.mxu0 0.0
      %1025 = vmatprep.subr.mxu0 0.0
      %1026 = vmatpush2.msra.mxu0 0.0
      %1027 = vmatprep.subr.mxu0 0.0
      %1028 = vmatpush2.msra.mxu0 0.0
      %1029 = vmatprep.subr.mxu0 0.0
      %1030 = vmatpush2.msra.mxu0 0.0
      %1031 = vmatprep.subr.mxu0 0.0
      %1032 = vmatpush2.msra.mxu0 0.0
      %1033 = vmatprep.subr.mxu0 0.0
      %1034 = vmatpush2.msra.mxu0 0.0
      %1035 = vmatprep.subr.mxu0 0.0
      %1036 = vmatpush2.msra.mxu0 0.0
      %1037 = vmatprep.subr.mxu0 0.0
      %1038 = vmatpush2.msra.mxu0 0.0
      %1039 = vmatprep.subr.mxu0 0.0
      %1040 = vmatpush2.msra.mxu0 0.0
      %1041 = vmatprep.subr.mxu0 0.0
      %1042 = vmatpush2.msra.mxu0 0.0
      %1043 = vmatprep.subr.mxu0 0.0
      %1044 = vmatpush2.msra.mxu0 0.0
      %1045 = vmatprep.subr.mxu0 0.0
      %1046 = vmatpush2.msra.mxu0 0.0
      %1047 = vmatprep.subr.mxu0 0.0
      %1048 = vmatpush2.msra.mxu0 0.0
      %1049 = vmatprep.mubr.f32.mxu0 0.0
      %1050 = vmatmul.mubr.f32.gmra.mxu0 %v944
      %v1051 = vpop.f32.mrf.mxu0
      %v1052 = vadd.f32 0.0, %v1051
      %v1053 = vpop.f32.mrf.mxu0
      %1054 = vmatprep.mubr.f32.mxu0 0.0
      %1055 = vmatmul.mubr.f32.gmra.mxu0 %v947
      %v1056 = vpop.f32.mrf.mxu0
      %v1057 = vadd.f32 0.0, %v1056
      %v1058 = vpop.f32.mrf.mxu0
      %1059 = vmatprep.mubr.f32.mxu0 0.0
      %1060 = vmatmul.mubr.f32.gmra.mxu0 %v950
      %v1061 = vpop.f32.mrf.mxu0
      %v1062 = vadd.f32 0.0, %v1061
      %v1063 = vpop.f32.mrf.mxu0
      %1064 = vmatprep.mubr.f32.mxu0 0.0
      %1065 = vmatmul.mubr.f32.gmra.mxu0 %v953
      %v1066 = vpop.f32.mrf.mxu0
      %v1067 = vadd.f32 0.0, %v1066
      %v1068 = vpop.f32.mrf.mxu0
      %1069 = vmatprep.mubr.f32.mxu0 0.0
      %1070 = vmatmul.mubr.f32.gmra.mxu0 %v956
      %v1071 = vpop.f32.mrf.mxu0
      %v1072 = vadd.f32 0.0, %v1071
      %v1073 = vpop.f32.mrf.mxu0
      %1074 = vmatprep.mubr.f32.mxu0 0.0
      %1075 = vmatmul.mubr.f32.gmra.mxu0 %v959
      %v1076 = vpop.f32.mrf.mxu0
      %v1077 = vadd.f32 0.0, %v1076
      %v1078 = vpop.f32.mrf.mxu0
      %1079 = vmatprep.mubr.f32.mxu0 0.0
      %1080 = vmatmul.mubr.f32.gmra.mxu0 %v962
      %v1081 = vpop.f32.mrf.mxu0
      %v1082 = vadd.f32 0.0, %v1081
      %v1083 = vpop.f32.mrf.mxu0
      %1084 = vmatprep.mubr.f32.mxu0 0.0
      %1085 = vmatmul.mubr.f32.gmra.mxu0 %v965
      %v1086 = vpop.f32.mrf.mxu0
      %v1087 = vadd.f32 0.0, %v1086
      %v1088 = vpop.f32.mrf.mxu0
      %1089 = vmatprep.mubr.f32.mxu0 0.0
      %1090 = vmatmul.mubr.f32.gmra.mxu0 %v968
      %v1091 = vpop.f32.mrf.mxu0
      %v1092 = vadd.f32 0.0, %v1091
      %v1093 = vpop.f32.mrf.mxu0
      %1094 = vmatprep.mubr.f32.mxu0 0.0
      %1095 = vmatmul.mubr.f32.gmra.mxu0 %v971
      %v1096 = vpop.f32.mrf.mxu0
      %v1097 = vadd.f32 0.0, %v1096
      %v1098 = vpop.f32.mrf.mxu0
      %1099 = vmatprep.mubr.f32.mxu0 0.0
      %1100 = vmatmul.mubr.f32.gmra.mxu0 %v974
      %v1101 = vpop.f32.mrf.mxu0
      %v1102 = vadd.f32 0.0, %v1101
      %v1103 = vpop.f32.mrf.mxu0
      %1104 = vmatprep.mubr.f32.mxu0 0.0
      %1105 = vmatmul.mubr.f32.gmra.mxu0 %v977
      %v1106 = vpop.f32.mrf.mxu0
      %v1107 = vadd.f32 0.0, %v1106
      %v1108 = vpop.f32.mrf.mxu0
      %1109 = vmatprep.mubr.f32.mxu0 0.0
      %1110 = vmatmul.mubr.f32.gmra.mxu0 %v980
      %v1111 = vpop.f32.mrf.mxu0
      %v1112 = vadd.f32 0.0, %v1111
      %v1113 = vpop.f32.mrf.mxu0
      %1114 = vmatprep.mubr.f32.mxu0 0.0
      %1115 = vmatmul.mubr.f32.gmra.mxu0 %v983
      %v1116 = vpop.f32.mrf.mxu0
      %v1117 = vadd.f32 0.0, %v1116
      %v1118 = vpop.f32.mrf.mxu0
      %1119 = vdwg.mxu0
      %v1120 = vadd.f32 %v924, %v1052
      %v1121 = vadd.f32 %v925, %v1057
      %v1122 = vadd.f32 %v926, %v1062
      %v1123 = vadd.f32 %v927, %v1067
      %v1124 = vadd.f32 %v928, %v1072
      %v1125 = vadd.f32 %v929, %v1077
      %v1126 = vadd.f32 %v930, %v1082
      %v1127 = vadd.f32 %v931, %v1087
      %v1128 = vadd.f32 %v932, %v1092
      %v1129 = vadd.f32 %v933, %v1097
      %v1130 = vadd.f32 %v934, %v1102
      %v1131 = vadd.f32 %v935, %v1107
      %v1132 = vadd.f32 %v936, %v1112
      %v1133 = vadd.f32 %v937, %v1117
      %v1134 = vld [vmem:[%s5] sm:$0x1]
      %v1136 = vlaneseq
      %v1137 = vshrl.u32 %v1136, 7
      %v1138 = vsub.s32 0, %v1137
      %v1139 = vrot.slane %v1134, %v1138
      %v1141 = vadd.f32 %v1120, %v1139
      %v1142 = vadd.f32 %v1121, %v1139
      %v1143 = vadd.f32 %v1122, %v1139
      %v1144 = vadd.f32 %v1123, %v1139
      %v1145 = vadd.f32 %v1124, %v1139
      %v1146 = vadd.f32 %v1125, %v1139
      %v1147 = vadd.f32 %v1126, %v1139
      %v1148 = vadd.f32 %v1127, %v1139
      %v1149 = vadd.f32 %v1128, %v1139
      %v1150 = vadd.f32 %v1129, %v1139
      %v1151 = vadd.f32 %v1130, %v1139
      %v1152 = vadd.f32 %v1131, %v1139
      %v1153 = vadd.f32 %v1132, %v1139
      %v1154 = vadd.f32 %v1133, %v1139
      %1155 = vst.msk [vmem:[%s337] sm:$0xff] %vm368, %v1141
      %1156 = vst.msk [vmem:[%s337 + $0x8] sm:$0xff] %vm368, %v1142
      %1157 = vst.msk [vmem:[%s337 + $0x10] sm:$0xff] %vm368, %v1143
      %1158 = vst.msk [vmem:[%s337 + $0x18] sm:$0xff] %vm368, %v1144
      %1159 = vst.msk [vmem:[%s337 + $0x20] sm:$0xff] %vm368, %v1145
      %1160 = vst.msk [vmem:[%s337 + $0x28] sm:$0xff] %vm368, %v1146
      %1161 = vst.msk [vmem:[%s337 + $0x30] sm:$0xff] %vm368, %v1147
      %1162 = vst.msk [vmem:[%s337 + $0x38] sm:$0xff] %vm368, %v1148
      %1163 = vst.msk [vmem:[%s337 + $0x40] sm:$0xff] %vm368, %v1149
      %1164 = vst.msk [vmem:[%s337 + $0x48] sm:$0xff] %vm368, %v1150
      %1165 = vst.msk [vmem:[%s337 + $0x50] sm:$0xff] %vm368, %v1151
      %1166 = vst.msk [vmem:[%s337 + $0x58] sm:$0xff] %vm368, %v1152
      %1167 = vst.msk [vmem:[%s337 + $0x60] sm:$0xff] %vm368, %v1153
      %1168 = vst.msk [vmem:[%s337 + $0x68] sm:$0xff] %vm368, %v1154
      %v1169 = vld [vmem:[%s6] sm:$0xff]
      %v1170 = vld [vmem:[%s6 + $0x8] sm:$0xff]
      %v1172 = vsel %vm368, %v1141, 0
      %v1175 = vsel %vm368, %v1142, 0
      %v1178 = vsel %vm368, %v1143, 0
      %v1181 = vsel %vm368, %v1144, 0
      %v1184 = vsel %vm368, %v1145, 0
      %v1187 = vsel %vm368, %v1146, 0
      %v1190 = vsel %vm368, %v1147, 0
      %v1193 = vsel %vm368, %v1148, 0
      %v1196 = vsel %vm368, %v1149, 0
      %v1199 = vsel %vm368, %v1150, 0
      %v1202 = vsel %vm368, %v1151, 0
      %v1205 = vsel %vm368, %v1152, 0
      %v1208 = vsel %vm368, %v1153, 0
      %v1211 = vsel %vm368, %v1154, 0
      %1213 = vmatprep.subr.mxu0 0.0
      %1214 = vmatpush1.msra.mxu0 0.0
      %1215 = vmatprep.subr.mxu0 0.0
      %1216 = vmatpush1.msra.mxu0 0.0
      %1217 = vmatprep.subr.mxu0 0.0
      %1218 = vmatpush1.msra.mxu0 0.0
      %1219 = vmatprep.subr.mxu0 0.0
      %1220 = vmatpush1.msra.mxu0 0.0
      %1221 = vmatprep.subr.mxu0 0.0
      %1222 = vmatpush1.msra.mxu0 0.0
      %1223 = vmatprep.subr.mxu0 0.0
      %1224 = vmatpush1.msra.mxu0 0.0
      %1225 = vmatprep.subr.mxu0 0.0
      %1226 = vmatpush1.msra.mxu0 0.0
      %1227 = vmatprep.subr.mxu0 0.0
      %1228 = vmatpush1.msra.mxu0 0.0
      %1229 = vmatprep.subr.mxu0 0.0
      %1230 = vmatpush1.msra.mxu0 0.0
      %1231 = vmatprep.subr.mxu0 0.0
      %1232 = vmatpush1.msra.mxu0 0.0
      %1233 = vmatprep.subr.mxu0 0.0
      %1234 = vmatpush1.msra.mxu0 0.0
      %1235 = vmatprep.subr.mxu0 0.0
      %1236 = vmatpush1.msra.mxu0 0.0
      %1237 = vmatprep.subr.mxu0 0.0
      %1238 = vmatpush1.msra.mxu0 0.0
      %1239 = vmatprep.subr.mxu0 0.0
      %1240 = vmatpush1.msra.mxu0 0.0
      %1241 = vmatprep.subr.mxu0 0.0
      %1242 = vmatpush1.msra.mxu0 %v1170
      %1243 = vmatprep.subr.mxu0 0.0
      %1244 = vmatpush1.msra.mxu0 %v1169
      %1245 = vmatprep.subr.mxu0 0.0
      %1246 = vmatpush2.msra.mxu0 0.0
      %1247 = vmatprep.subr.mxu0 0.0
      %1248 = vmatpush2.msra.mxu0 0.0
      %1249 = vmatprep.subr.mxu0 0.0
      %1250 = vmatpush2.msra.mxu0 0.0
      %1251 = vmatprep.subr.mxu0 0.0
      %1252 = vmatpush2.msra.mxu0 0.0
      %1253 = vmatprep.subr.mxu0 0.0
      %1254 = vmatpush2.msra.mxu0 0.0
      %1255 = vmatprep.subr.mxu0 0.0
      %1256 = vmatpush2.msra.mxu0 0.0
      %1257 = vmatprep.subr.mxu0 0.0
      %1258 = vmatpush2.msra.mxu0 0.0
      %1259 = vmatprep.subr.mxu0 0.0
      %1260 = vmatpush2.msra.mxu0 0.0
      %1261 = vmatprep.subr.mxu0 0.0
      %1262 = vmatpush2.msra.mxu0 0.0
      %1263 = vmatprep.subr.mxu0 0.0
      %1264 = vmatpush2.msra.mxu0 0.0
      %1265 = vmatprep.subr.mxu0 0.0
      %1266 = vmatpush2.msra.mxu0 0.0
      %1267 = vmatprep.subr.mxu0 0.0
      %1268 = vmatpush2.msra.mxu0 0.0
      %1269 = vmatprep.subr.mxu0 0.0
      %1270 = vmatpush2.msra.mxu0 0.0
      %1271 = vmatprep.subr.mxu0 0.0
      %1272 = vmatpush2.msra.mxu0 0.0
      %1273 = vmatprep.subr.mxu0 0.0
      %1274 = vmatpush2.msra.mxu0 0.0
      %1275 = vmatprep.subr.mxu0 0.0
      %1276 = vmatpush2.msra.mxu0 0.0
      %1277 = vmatprep.mubr.f32.mxu0 0.0
      %1278 = vmatmul.mubr.f32.gmra.mxu0 %v1172
      %v1279 = vpop.f32.mrf.mxu0
      %v1280 = vadd.f32 0.0, %v1279
      %v1281 = vpop.f32.mrf.mxu0
      %1282 = vmatprep.mubr.f32.mxu0 0.0
      %1283 = vmatmul.mubr.f32.gmra.mxu0 %v1175
      %v1284 = vpop.f32.mrf.mxu0
      %v1285 = vadd.f32 0.0, %v1284
      %v1286 = vpop.f32.mrf.mxu0
      %1287 = vmatprep.mubr.f32.mxu0 0.0
      %1288 = vmatmul.mubr.f32.gmra.mxu0 %v1178
      %v1289 = vpop.f32.mrf.mxu0
      %v1290 = vadd.f32 0.0, %v1289
      %v1291 = vpop.f32.mrf.mxu0
      %1292 = vmatprep.mubr.f32.mxu0 0.0
      %1293 = vmatmul.mubr.f32.gmra.mxu0 %v1181
      %v1294 = vpop.f32.mrf.mxu0
      %v1295 = vadd.f32 0.0, %v1294
      %v1296 = vpop.f32.mrf.mxu0
      %1297 = vmatprep.mubr.f32.mxu0 0.0
      %1298 = vmatmul.mubr.f32.gmra.mxu0 %v1184
      %v1299 = vpop.f32.mrf.mxu0
      %v1300 = vadd.f32 0.0, %v1299
      %v1301 = vpop.f32.mrf.mxu0
      %1302 = vmatprep.mubr.f32.mxu0 0.0
      %1303 = vmatmul.mubr.f32.gmra.mxu0 %v1187
      %v1304 = vpop.f32.mrf.mxu0
      %v1305 = vadd.f32 0.0, %v1304
      %v1306 = vpop.f32.mrf.mxu0
      %1307 = vmatprep.mubr.f32.mxu0 0.0
      %1308 = vmatmul.mubr.f32.gmra.mxu0 %v1190
      %v1309 = vpop.f32.mrf.mxu0
      %v1310 = vadd.f32 0.0, %v1309
      %v1311 = vpop.f32.mrf.mxu0
      %1312 = vmatprep.mubr.f32.mxu0 0.0
      %1313 = vmatmul.mubr.f32.gmra.mxu0 %v1193
      %v1314 = vpop.f32.mrf.mxu0
      %v1315 = vadd.f32 0.0, %v1314
      %v1316 = vpop.f32.mrf.mxu0
      %1317 = vmatprep.mubr.f32.mxu0 0.0
      %1318 = vmatmul.mubr.f32.gmra.mxu0 %v1196
      %v1319 = vpop.f32.mrf.mxu0
      %v1320 = vadd.f32 0.0, %v1319
      %v1321 = vpop.f32.mrf.mxu0
      %1322 = vmatprep.mubr.f32.mxu0 0.0
      %1323 = vmatmul.mubr.f32.gmra.mxu0 %v1199
      %v1324 = vpop.f32.mrf.mxu0
      %v1325 = vadd.f32 0.0, %v1324
      %v1326 = vpop.f32.mrf.mxu0
      %1327 = vmatprep.mubr.f32.mxu0 0.0
      %1328 = vmatmul.mubr.f32.gmra.mxu0 %v1202
      %v1329 = vpop.f32.mrf.mxu0
      %v1330 = vadd.f32 0.0, %v1329
      %v1331 = vpop.f32.mrf.mxu0
      %1332 = vmatprep.mubr.f32.mxu0 0.0
      %1333 = vmatmul.mubr.f32.gmra.mxu0 %v1205
      %v1334 = vpop.f32.mrf.mxu0
      %v1335 = vadd.f32 0.0, %v1334
      %v1336 = vpop.f32.mrf.mxu0
      %1337 = vmatprep.mubr.f32.mxu0 0.0
      %1338 = vmatmul.mubr.f32.gmra.mxu0 %v1208
      %v1339 = vpop.f32.mrf.mxu0
      %v1340 = vadd.f32 0.0, %v1339
      %v1341 = vpop.f32.mrf.mxu0
      %1342 = vmatprep.mubr.f32.mxu0 0.0
      %1343 = vmatmul.mubr.f32.gmra.mxu0 %v1211
      %v1344 = vpop.f32.mrf.mxu0
      %v1345 = vadd.f32 0.0, %v1344
      %v1346 = vpop.f32.mrf.mxu0
      %1347 = vdwg.mxu0
      %vm1348 = vcmask 146432
      %1349 = vst.msk [vmem:[%s343] sm:$0xff] %vm1348, %v1280
      %1350 = vst.msk [vmem:[%s343 + $0x8] sm:$0xff] %vm1348, %v1285
      %1351 = vst.msk [vmem:[%s343 + $0x10] sm:$0xff] %vm1348, %v1290
      %1352 = vst.msk [vmem:[%s343 + $0x18] sm:$0xff] %vm1348, %v1295
      %1353 = vst.msk [vmem:[%s343 + $0x20] sm:$0xff] %vm1348, %v1300
      %1354 = vst.msk [vmem:[%s343 + $0x28] sm:$0xff] %vm1348, %v1305
      %1355 = vst.msk [vmem:[%s343 + $0x30] sm:$0xff] %vm1348, %v1310
      %1356 = vst.msk [vmem:[%s343 + $0x38] sm:$0xff] %vm1348, %v1315
      %1357 = vst.msk [vmem:[%s343 + $0x40] sm:$0xff] %vm1348, %v1320
      %1358 = vst.msk [vmem:[%s343 + $0x48] sm:$0xff] %vm1348, %v1325
      %1359 = vst.msk [vmem:[%s343 + $0x50] sm:$0xff] %vm1348, %v1330
      %1360 = vst.msk [vmem:[%s343 + $0x58] sm:$0xff] %vm1348, %v1335
      %1361 = vst.msk [vmem:[%s343 + $0x60] sm:$0xff] %vm1348, %v1340
      %1362 = vst.msk [vmem:[%s343 + $0x68] sm:$0xff] %vm1348, %v1345
      %s1363 = smul.u32 14, %s20
      %p1364 = scmp.lt.s32.totalorder %s1363, 27
      %s1365 = scalar_select %p1364, %s1363, 27
      %s1366 = smul.addr %s1365, 8
      %s1367 = scalar_lea.vmem %s7, %s1366
      %s1368 = smul.u32 14, %s20
      %p1369 = scmp.lt.s32.totalorder %s1368, 27
      %s1370 = scalar_select %p1369, %s1368, 27
      %s1371 = smul.addr %s1370, 8
      %s1372 = scalar_lea.vmem %s8, %s1371
      // Predicated region
      $region49: #{_lambda_.10} parent=47 // pred_check
        %p1373 = pneg %p195
      $region50: #{_lambda_.10} parent=47 // pred_check_branch
        %1375 = sbr.rel (%p1373) target = $region52
      $region51: #{_lambda_.10} parent=47 // pred_region
        %s1376 = smul.u32 14, %s20
      $region52: #{_lambda_.10} parent=47 // pred_fallthru
        _
      // Predicated region
      $region53: #{_lambda_.10} parent=47 // pred_check
        %p1377 = pneg %p221
      $region54: #{_lambda_.10} parent=47 // pred_check_branch
        %1379 = sbr.rel (%p1377) target = $region56
      $region55: #{_lambda_.10} parent=47 // pred_region
        %s1380 = smul.u32 14, %s20
      $region56: #{_lambda_.10} parent=47 // pred_fallthru
        _
    $region48: #{_lambda_.10} parent=5 // pred_fallthru
      _
    %p1381 = scmp.le.s32.totalorder 2, %s15
    // Predicated region
    $region57: #{_lambda_.10} parent=5 // pred_check
      %p1382 = pneg %p1381
    $region58: #{_lambda_.10} parent=5 // pred_check_branch
      %1384 = sbr.rel (%p1382) target = $region60
    $region59: #{_lambda_.10} parent=5 // pred_region
      %s1385 = ssub.s32 %s15, 2
      // Predicated region
      $region61: #{_lambda_.10} parent=59 // pred_check
        %p1386 = pneg %p201
      $region62: #{_lambda_.10} parent=59 // pred_check_branch
        %1388 = sbr.rel (%p1386) target = $region64
      $region63: #{_lambda_.10} parent=59 // pred_region
        %s1389 = smul.u32 14, %s21
        %p1390 = scmp.lt.s32.totalorder %s1389, 27
        %s1391 = scalar_select %p1390, %s1389, 27
        %s1392 = smul.addr %s1391, 8
        %s1393 = scalar_lea.vmem %s7, %s1392
      $region64: #{_lambda_.10} parent=59 // pred_fallthru
        _
      // Predicated region
      $region65: #{_lambda_.10} parent=59 // pred_check
        %p1394 = pneg %p227
      $region66: #{_lambda_.10} parent=59 // pred_check_branch
        %1396 = sbr.rel (%p1394) target = $region68
      $region67: #{_lambda_.10} parent=59 // pred_region
        %s1397 = smul.u32 14, %s21
        %p1398 = scmp.lt.s32.totalorder %s1397, 27
        %s1399 = scalar_select %p1398, %s1397, 27
        %s1400 = smul.addr %s1399, 8
        %s1401 = scalar_lea.vmem %s8, %s1400
      $region68: #{_lambda_.10} parent=59 // pred_fallthru
        _
    $region60: #{_lambda_.10} parent=5 // pred_fallthru
      _
  $region6: #{_lambda_.10} parent=0 // loop_footer
    %s19 = sadd.s32 1, %s15
  $region7: #{_lambda_.10} parent=0 // loop_footer_branch
    %14 = sbr.rel target = $region3
  $region8: #{_lambda_.10} parent=0 // loop_exit
    _

// kernel: _lambda_.13
$region0: #{_lambda_.13}
  #allocation0 [shape = 'u32[]', space=smem, size = 0x4, offset = 0x4, fixed_abs, tag = 'smem constant byte address 0x4 - core index']
  #allocation1 [shape = 'u32[144,128]{1,0:T(1,128)}', space=vmem, size = 0x12000, scoped, tag = 'internal scratch']
  %s0 = inlined_call_operand.vmem [shape: f32[224,16], index: 0, kind: input, shape index: {}]
  %s1 = inlined_call_operand.vmem [shape: f32[224,16], index: 1, kind: input, shape index: {}]
  %s2 = inlined_call_operand.vmem [shape: f32[16,32], index: 2, kind: input, shape index: {}]
  %s3 = inlined_call_operand.vmem [shape: f32[1,32], index: 3, kind: input, shape index: {}]
  %s4 = inlined_call_operand.vmem [shape: f32[32,16], index: 4, kind: input, shape index: {}]
  %s5 = inlined_call_operand.vmem [shape: f32[1,16], index: 5, kind: input, shape index: {}]
  %s6 = inlined_call_operand.vmem [shape: f32[224,16], index: 6, kind: output, shape index: {}]
  %s7 = sld [smem:[#allocation0]]
  $region57: #{_lambda_.13} parent=0
    _
  %s9 = ssub.s32 1, %s7
  %s10 = scalar_select 0, %s9, %s7
  loop: start=0, step=1, limit=4
  $region2: #{_lambda_.13} parent=0 // loop_pre_header
    _
  $region3: #{_lambda_.13} parent=0 // loop_header
    %s12 = sphi 0, %s16
    %p13 = scmp.ge.s32.totalorder %s12, 4
    %s22 = sphi 0, %s24
    %s25 = sphi 0, %s22
    %s26 = sphi 0, %s25
    %s42 = sphi 0, %s26
    %s48 = sphi 0, %s50
    %s51 = sphi 0, %s48
    %s52 = sphi 0, %s51
    %s68 = sphi 0, %s52
    %s72 = sphi 0, %s72
    %s74 = sphi 0, %s72
    %s75 = sphi 0, %s74
    %s89 = sphi 0, %s75
    %s93 = sphi 0, %s93
    %s95 = sphi 0, %s93
    %s96 = sphi 0, %s95
    %s110 = sphi 0, %s96
    %s114 = sphi 0, %s114
    %s116 = sphi 0, %s114
    %s117 = sphi 0, %s116
    %s131 = sphi 0, %s117
    %s135 = sphi 0, %s135
    %s137 = sphi 0, %s135
    %s138 = sphi 0, %s137
    %s152 = sphi 0, %s138
    %s158 = sphi 0, %s160
    %s161 = sphi 0, %s158
    %s162 = sphi 0, %s161
    %s178 = sphi 0, %s162
  $region4: #{_lambda_.13} parent=0 // loop_header_branch
    %15 = sbr.rel (%p13) target = $region8
  $region5: #{_lambda_.13} parent=0 // loop_body
    %s17 = ssub.s32 %s12, 1
    %s18 = ssub.s32 %s12, 2
    %s19 = sadd.s32 %s12, 1
    %s20 = ssub.s32 %s12, %s19
    %p21 = scmp.eq.s32.totalorder %s20, 0
    %s23 = sadd.s32 %s22, 1
    %s24 = scalar_select %p21, %s22, %s23
    %p27 = pneg %p21
    %p28 = scmp.eq.s32.totalorder %s12, 1
    %p29 = por %p27, %p28
    %p30 = scmp.ne.s32.totalorder %s22, %s25
    %p31 = scmp.eq.s32.totalorder %s12, 0
    %p32 = por %p30, %p31
    %p33 = scmp.ne.s32.totalorder %s22, %s25
    %p34 = scmp.eq.s32.totalorder %s17, 1
    %p35 = por %p33, %p34
    %p36 = scmp.ne.s32.totalorder %s25, %s26
    %p37 = scmp.eq.s32.totalorder %s17, 0
    %p38 = por %p36, %p37
    %p39 = scmp.ne.s32.totalorder %s25, %s26
    %p40 = scmp.eq.s32.totalorder %s18, 1
    %p41 = por %p39, %p40
    %p43 = scmp.ne.s32.totalorder %s26, %s42
    %p44 = scmp.eq.s32.totalorder %s18, 0
    %p45 = por %p43, %p44
    %s46 = ssub.s32 %s12, %s19
    %p47 = scmp.eq.s32.totalorder %s46, 0
    %s49 = sadd.s32 %s48, 1
    %s50 = scalar_select %p47, %s48, %s49
    %p53 = pneg %p47
    %p54 = scmp.eq.s32.totalorder %s12, 1
    %p55 = por %p53, %p54
    %p56 = scmp.ne.s32.totalorder %s48, %s51
    %p57 = scmp.eq.s32.totalorder %s12, 0
    %p58 = por %p56, %p57
    %p59 = scmp.ne.s32.totalorder %s48, %s51
    %p60 = scmp.eq.s32.totalorder %s17, 1
    %p61 = por %p59, %p60
    %p62 = scmp.ne.s32.totalorder %s51, %s52
    %p63 = scmp.eq.s32.totalorder %s17, 0
    %p64 = por %p62, %p63
    %p65 = scmp.ne.s32.totalorder %s51, %s52
    %p66 = scmp.eq.s32.totalorder %s18, 1
    %p67 = por %p65, %p66
    %p69 = scmp.ne.s32.totalorder %s52, %s68
    %p70 = scmp.eq.s32.totalorder %s18, 0
    %p71 = por %p69, %p70
    %s73 = sadd.s32 %s72, 1
    %p76 = scmp.eq.s32.totalorder %s12, 1
    %p77 = scmp.ne.s32.totalorder %s72, %s74
    %p78 = scmp.eq.s32.totalorder %s12, 0
    %p79 = por %p77, %p78
    %p80 = scmp.ne.s32.totalorder %s72, %s74
    %p81 = scmp.eq.s32.totalorder %s17, 1
    %p82 = por %p80, %p81
    %p83 = scmp.ne.s32.totalorder %s74, %s75
    %p84 = scmp.eq.s32.totalorder %s17, 0
    %p85 = por %p83, %p84
    %p86 = scmp.ne.s32.totalorder %s74, %s75
    %p87 = scmp.eq.s32.totalorder %s18, 1
    %p88 = por %p86, %p87
    %p90 = scmp.ne.s32.totalorder %s75, %s89
    %p91 = scmp.eq.s32.totalorder %s18, 0
    %p92 = por %p90, %p91
    %s94 = sadd.s32 %s93, 1
    %p97 = scmp.eq.s32.totalorder %s12, 1
    %p98 = scmp.ne.s32.totalorder %s93, %s95
    %p99 = scmp.eq.s32.totalorder %s12, 0
    %p100 = por %p98, %p99
    %p101 = scmp.ne.s32.totalorder %s93, %s95
    %p102 = scmp.eq.s32.totalorder %s17, 1
    %p103 = por %p101, %p102
    %p104 = scmp.ne.s32.totalorder %s95, %s96
    %p105 = scmp.eq.s32.totalorder %s17, 0
    %p106 = por %p104, %p105
    %p107 = scmp.ne.s32.totalorder %s95, %s96
    %p108 = scmp.eq.s32.totalorder %s18, 1
    %p109 = por %p107, %p108
    %p111 = scmp.ne.s32.totalorder %s96, %s110
    %p112 = scmp.eq.s32.totalorder %s18, 0
    %p113 = por %p111, %p112
    %s115 = sadd.s32 %s114, 1
    %p118 = scmp.eq.s32.totalorder %s12, 1
    %p119 = scmp.ne.s32.totalorder %s114, %s116
    %p120 = scmp.eq.s32.totalorder %s12, 0
    %p121 = por %p119, %p120
    %p122 = scmp.ne.s32.totalorder %s114, %s116
    %p123 = scmp.eq.s32.totalorder %s17, 1
    %p124 = por %p122, %p123
    %p125 = scmp.ne.s32.totalorder %s116, %s117
    %p126 = scmp.eq.s32.totalorder %s17, 0
    %p127 = por %p125, %p126
    %p128 = scmp.ne.s32.totalorder %s116, %s117
    %p129 = scmp.eq.s32.totalorder %s18, 1
    %p130 = por %p128, %p129
    %p132 = scmp.ne.s32.totalorder %s117, %s131
    %p133 = scmp.eq.s32.totalorder %s18, 0
    %p134 = por %p132, %p133
    %s136 = sadd.s32 %s135, 1
    %p139 = scmp.eq.s32.totalorder %s12, 1
    %p140 = scmp.ne.s32.totalorder %s135, %s137
    %p141 = scmp.eq.s32.totalorder %s12, 0
    %p142 = por %p140, %p141
    %p143 = scmp.ne.s32.totalorder %s135, %s137
    %p144 = scmp.eq.s32.totalorder %s17, 1
    %p145 = por %p143, %p144
    %p146 = scmp.ne.s32.totalorder %s137, %s138
    %p147 = scmp.eq.s32.totalorder %s17, 0
    %p148 = por %p146, %p147
    %p149 = scmp.ne.s32.totalorder %s137, %s138
    %p150 = scmp.eq.s32.totalorder %s18, 1
    %p151 = por %p149, %p150
    %p153 = scmp.ne.s32.totalorder %s138, %s152
    %p154 = scmp.eq.s32.totalorder %s18, 0
    %p155 = por %p153, %p154
    %s156 = ssub.s32 %s12, %s19
    %p157 = scmp.eq.s32.totalorder %s156, 0
    %s159 = sadd.s32 %s158, 1
    %s160 = scalar_select %p157, %s158, %s159
    %p163 = pneg %p157
    %p164 = scmp.eq.s32.totalorder %s12, 1
    %p165 = por %p163, %p164
    %p166 = scmp.ne.s32.totalorder %s158, %s161
    %p167 = scmp.eq.s32.totalorder %s12, 0
    %p168 = por %p166, %p167
    %p169 = scmp.ne.s32.totalorder %s158, %s161
    %p170 = scmp.eq.s32.totalorder %s17, 1
    %p171 = por %p169, %p170
    %p172 = scmp.ne.s32.totalorder %s161, %s162
    %p173 = scmp.eq.s32.totalorder %s17, 0
    %p174 = por %p172, %p173
    %p175 = scmp.ne.s32.totalorder %s161, %s162
    %p176 = scmp.eq.s32.totalorder %s18, 1
    %p177 = por %p175, %p176
    %p179 = scmp.ne.s32.totalorder %s162, %s178
    %p180 = scmp.eq.s32.totalorder %s18, 0
    %p181 = por %p179, %p180
    %p182 = scmp.le.s32.totalorder 1, %s12
    %p183 = scmp.lt.s32.totalorder %s12, 3
    %p184 = pnand %p182, %p183
    %p185 = pneg %p184
    // Predicated region
    $region9: #{_lambda_.13} parent=5 // pred_check
      _
    $region10: #{_lambda_.13} parent=5 // pred_check_branch
      %187 = sbr.rel (%p184) target = $region12
    $region11: #{_lambda_.13} parent=5 // pred_region
      %s188 = ssub.s32 %s12, 1
      // Predicated region
      $region13: #{_lambda_.13} parent=11 // pred_check
        %p189 = pneg %p85
      $region14: #{_lambda_.13} parent=11 // pred_check_branch
        %191 = sbr.rel (%p189) target = $region16
      $region15: #{_lambda_.13} parent=11 // pred_region
        _
      $region16: #{_lambda_.13} parent=11 // pred_fallthru
        _
      // Predicated region
      $region17: #{_lambda_.13} parent=11 // pred_check
        %p192 = pneg %p106
      $region18: #{_lambda_.13} parent=11 // pred_check_branch
        %194 = sbr.rel (%p192) target = $region20
      $region19: #{_lambda_.13} parent=11 // pred_region
        _
      $region20: #{_lambda_.13} parent=11 // pred_fallthru
        _
      // Predicated region
      $region21: #{_lambda_.13} parent=11 // pred_check
        %p195 = pneg %p127
      $region22: #{_lambda_.13} parent=11 // pred_check_branch
        %197 = sbr.rel (%p195) target = $region24
      $region23: #{_lambda_.13} parent=11 // pred_region
        _
      $region24: #{_lambda_.13} parent=11 // pred_fallthru
        _
      // Predicated region
      $region25: #{_lambda_.13} parent=11 // pred_check
        %p198 = pneg %p148
      $region26: #{_lambda_.13} parent=11 // pred_check_branch
        %200 = sbr.rel (%p198) target = $region28
      $region27: #{_lambda_.13} parent=11 // pred_region
        _
      $region28: #{_lambda_.13} parent=11 // pred_fallthru
        _
    $region12: #{_lambda_.13} parent=5 // pred_fallthru
      _
    %p201 = scmp.lt.s32.totalorder %s12, 2
    // Predicated region
    $region29: #{_lambda_.13} parent=5 // pred_check
      %p202 = pneg %p201
    $region30: #{_lambda_.13} parent=5 // pred_check_branch
      %204 = sbr.rel (%p202) target = $region32
    $region31: #{_lambda_.13} parent=5 // pred_region
      // Predicated region
      $region33: #{_lambda_.13} parent=31 // pred_check
        %p205 = pneg %p32
      $region34: #{_lambda_.13} parent=31 // pred_check_branch
        %207 = sbr.rel (%p205) target = $region36
      $region35: #{_lambda_.13} parent=31 // pred_region
        %s208 = smul.u32 14, %s12
        %p209 = scmp.lt.s32.totalorder %s208, 27
        %s210 = scalar_select %p209, %s208, 27
        %s211 = smul.addr %s210, 8
        %s212 = scalar_lea.vmem %s0, %s211
        %s213 = smul.u32 14, %s12
      $region36: #{_lambda_.13} parent=31 // pred_fallthru
        _
      // Predicated region
      $region37: #{_lambda_.13} parent=31 // pred_check
        %p214 = pneg %p58
      $region38: #{_lambda_.13} parent=31 // pred_check_branch
        %216 = sbr.rel (%p214) target = $region40
      $region39: #{_lambda_.13} parent=31 // pred_region
        %s217 = smul.u32 14, %s12
        %p218 = scmp.lt.s32.totalorder %s217, 27
        %s219 = scalar_select %p218, %s217, 27
        %s220 = smul.addr %s219, 8
        %s221 = scalar_lea.vmem %s1, %s220
        %s222 = smul.u32 14, %s12
      $region40: #{_lambda_.13} parent=31 // pred_fallthru
        _
    $region32: #{_lambda_.13} parent=5 // pred_fallthru
      _
    %p223 = scmp.le.s32.totalorder 1, %s12
    %p224 = scmp.lt.s32.totalorder %s12, 3
    %p225 = pnand %p223, %p224
    %p226 = pneg %p225
    // Predicated region
    $region41: #{_lambda_.13} parent=5 // pred_check
      _
    $region42: #{_lambda_.13} parent=5 // pred_check_branch
      %228 = sbr.rel (%p225) target = $region44
    $region43: #{_lambda_.13} parent=5 // pred_region
      %s229 = ssub.s32 %s12, 1
      %s230 = smul.u32 14, %s17
      %p231 = scmp.lt.s32.totalorder %s230, 27
      %s232 = scalar_select %p231, %s230, 27
      %s233 = smul.addr %s232, 8
      %s234 = scalar_lea.vmem %s0, %s233
      %p235 = pneg %p38
      %p236 = pneg %p35
      %s237 = smul.u32 14, %s17
      %p238 = scmp.lt.s32.totalorder %s237, 27
      %s239 = scalar_select %p238, %s237, 27
      %s240 = smul.addr %s239, 8
      %s241 = scalar_lea.vmem %s1, %s240
      %p242 = pneg %p64
      %p243 = pneg %p61
      %p244 = pneg %p85
      %p245 = pneg %p82
      %p246 = pneg %p106
      %p247 = pneg %p103
      %p248 = pneg %p127
      %p249 = pneg %p124
      %p250 = pneg %p148
      %p251 = pneg %p145
      %p252 = pneg %p174
      %p253 = pneg %p171
      %s254 = smul.u32 14, %s17
      %p255 = scmp.lt.s32.totalorder %s254, 27
      %s256 = scalar_select %p255, %s254, 27
      %s257 = smul.addr %s256, 8
      %s258 = scalar_lea.vmem %s6, %s257
      %s259 = smul.u32 14, %s17
      %p260 = scmp.lt.s32.totalorder %s259, 27
      %s261 = scalar_select %p260, %s259, 27
      %s262 = smul.addr %s261, 8
      %s263 = scalar_lea.vmem %s0, %s262
      %s264 = smul.u32 14, %s17
      %s265 = smul.u32 14, %s17
      %p266 = scmp.lt.s32.totalorder %s265, 27
      %s267 = scalar_select %p266, %s265, 27
      %s268 = smul.addr %s267, 8
      %s269 = scalar_lea.vmem %s1, %s268
      %s270 = smul.u32 14, %s17
      %s271 = smul.u32 14, %s17
      %p272 = scmp.lt.s32.totalorder %s271, 27
      %s273 = scalar_select %p272, %s271, 27
      %s274 = smul.addr %s273, 8
      %s275 = scalar_lea.vmem %s6, %s274
      %s276 = smul.u32 14, %s17
      %v277 = vld [vmem:[%s269] sm:$0xff]
      %v278 = vld [vmem:[%s269 + $0x8] sm:$0xff]
      %v279 = vld [vmem:[%s269 + $0x10] sm:$0xff]
      %v280 = vld [vmem:[%s269 + $0x18] sm:$0xff]
      %v281 = vld [vmem:[%s269 + $0x20] sm:$0xff]
      %v282 = vld [vmem:[%s269 + $0x28] sm:$0xff]
      %v283 = vld [vmem:[%s269 + $0x30] sm:$0xff]
      %v284 = vld [vmem:[%s269 + $0x38] sm:$0xff]
      %v285 = vld [vmem:[%s269 + $0x40] sm:$0xff]
      %v286 = vld [vmem:[%s269 + $0x48] sm:$0xff]
      %v287 = vld [vmem:[%s269 + $0x50] sm:$0xff]
      %v288 = vld [vmem:[%s269 + $0x58] sm:$0xff]
      %v289 = vld [vmem:[%s269 + $0x60] sm:$0xff]
      %v290 = vld [vmem:[%s269 + $0x68] sm:$0xff]
      %v291 = vld [vmem:[%s2] sm:$0xff]
      %v292 = vld [vmem:[%s2 + $0x8] sm:$0xff]
      %v293 = vld [vmem:[%s3] sm:$0x1]
      %v295 = vlaneseq
      %v296 = vshrl.u32 %v295, 7
      %v297 = vsub.s32 0, %v296
      %v298 = vrot.slane %v293, %v297
      %vm300 = vcmask 130048
      %v302 = vsel %vm300, %v277, 0
      %v305 = vsel %vm300, %v278, 0
      %v308 = vsel %vm300, %v279, 0
      %v311 = vsel %vm300, %v280, 0
      %v314 = vsel %vm300, %v281, 0
      %v317 = vsel %vm300, %v282, 0
      %v320 = vsel %vm300, %v283, 0
      %v323 = vsel %vm300, %v284, 0
      %v326 = vsel %vm300, %v285, 0
      %v329 = vsel %vm300, %v286, 0
      %v332 = vsel %vm300, %v287, 0
      %v335 = vsel %vm300, %v288, 0
      %v338 = vsel %vm300, %v289, 0
      %v341 = vsel %vm300, %v290, 0
      %343 = vmatprep.subr.mxu0 0.0
      %344 = vmatpush1.msra.mxu0 0.0
      %345 = vmatprep.subr.mxu0 0.0
      %346 = vmatpush1.msra.mxu0 0.0
      %347 = vmatprep.subr.mxu0 0.0
      %348 = vmatpush1.msra.mxu0 0.0
      %349 = vmatprep.subr.mxu0 0.0
      %350 = vmatpush1.msra.mxu0 0.0
      %351 = vmatprep.subr.mxu0 0.0
      %352 = vmatpush1.msra.mxu0 0.0
      %353 = vmatprep.subr.mxu0 0.0
      %354 = vmatpush1.msra.mxu0 0.0
      %355 = vmatprep.subr.mxu0 0.0
      %356 = vmatpush1.msra.mxu0 0.0
      %357 = vmatprep.subr.mxu0 0.0
      %358 = vmatpush1.msra.mxu0 0.0
      %359 = vmatprep.subr.mxu0 0.0
      %360 = vmatpush1.msra.mxu0 0.0
      %361 = vmatprep.subr.mxu0 0.0
      %362 = vmatpush1.msra.mxu0 0.0
      %363 = vmatprep.subr.mxu0 0.0
      %364 = vmatpush1.msra.mxu0 0.0
      %365 = vmatprep.subr.mxu0 0.0
      %366 = vmatpush1.msra.mxu0 0.0
      %367 = vmatprep.subr.mxu0 0.0
      %368 = vmatpush1.msra.mxu0 0.0
      %369 = vmatprep.subr.mxu0 0.0
      %370 = vmatpush1.msra.mxu0 0.0
      %371 = vmatprep.subr.mxu0 0.0
      %372 = vmatpush1.msra.mxu0 %v292
      %373 = vmatprep.subr.mxu0 0.0
      %374 = vmatpush1.msra.mxu0 %v291
      %375 = vmatprep.subr.mxu0 0.0
      %376 = vmatpush2.msra.mxu0 0.0
      %377 = vmatprep.subr.mxu0 0.0
      %378 = vmatpush2.msra.mxu0 0.0
      %379 = vmatprep.subr.mxu0 0.0
      %380 = vmatpush2.msra.mxu0 0.0
      %381 = vmatprep.subr.mxu0 0.0
      %382 = vmatpush2.msra.mxu0 0.0
      %383 = vmatprep.subr.mxu0 0.0
      %384 = vmatpush2.msra.mxu0 0.0
      %385 = vmatprep.subr.mxu0 0.0
      %386 = vmatpush2.msra.mxu0 0.0
      %387 = vmatprep.subr.mxu0 0.0
      %388 = vmatpush2.msra.mxu0 0.0
      %389 = vmatprep.subr.mxu0 0.0
      %390 = vmatpush2.msra.mxu0 0.0
      %391 = vmatprep.subr.mxu0 0.0
      %392 = vmatpush2.msra.mxu0 0.0
      %393 = vmatprep.subr.mxu0 0.0
      %394 = vmatpush2.msra.mxu0 0.0
      %395 = vmatprep.subr.mxu0 0.0
      %396 = vmatpush2.msra.mxu0 0.0
      %397 = vmatprep.subr.mxu0 0.0
      %398 = vmatpush2.msra.mxu0 0.0
      %399 = vmatprep.subr.mxu0 0.0
      %400 = vmatpush2.msra.mxu0 0.0
      %401 = vmatprep.subr.mxu0 0.0
      %402 = vmatpush2.msra.mxu0 0.0
      %403 = vmatprep.subr.mxu0 0.0
      %404 = vmatpush2.msra.mxu0 0.0
      %405 = vmatprep.subr.mxu0 0.0
      %406 = vmatpush2.msra.mxu0 0.0
      %407 = vmatprep.mubr.f32.mxu0 0.0
      %408 = vmatmul.mubr.f32.gmra.mxu0 %v302
      %v409 = vpop.f32.mrf.mxu0
      %v410 = vadd.f32 %v298, %v409
      %v411 = vpop.f32.mrf.mxu0
      %412 = vmatprep.mubr.f32.mxu0 0.0
      %413 = vmatmul.mubr.f32.gmra.mxu0 %v305
      %v414 = vpop.f32.mrf.mxu0
      %v415 = vadd.f32 %v298, %v414
      %v416 = vpop.f32.mrf.mxu0
      %417 = vmatprep.mubr.f32.mxu0 0.0
      %418 = vmatmul.mubr.f32.gmra.mxu0 %v308
      %v419 = vpop.f32.mrf.mxu0
      %v420 = vadd.f32 %v298, %v419
      %v421 = vpop.f32.mrf.mxu0
      %422 = vmatprep.mubr.f32.mxu0 0.0
      %423 = vmatmul.mubr.f32.gmra.mxu0 %v311
      %v424 = vpop.f32.mrf.mxu0
      %v425 = vadd.f32 %v298, %v424
      %v426 = vpop.f32.mrf.mxu0
      %427 = vmatprep.mubr.f32.mxu0 0.0
      %428 = vmatmul.mubr.f32.gmra.mxu0 %v314
      %v429 = vpop.f32.mrf.mxu0
      %v430 = vadd.f32 %v298, %v429
      %v431 = vpop.f32.mrf.mxu0
      %432 = vmatprep.mubr.f32.mxu0 0.0
      %433 = vmatmul.mubr.f32.gmra.mxu0 %v317
      %v434 = vpop.f32.mrf.mxu0
      %v435 = vadd.f32 %v298, %v434
      %v436 = vpop.f32.mrf.mxu0
      %437 = vmatprep.mubr.f32.mxu0 0.0
      %438 = vmatmul.mubr.f32.gmra.mxu0 %v320
      %v439 = vpop.f32.mrf.mxu0
      %v440 = vadd.f32 %v298, %v439
      %v441 = vpop.f32.mrf.mxu0
      %442 = vmatprep.mubr.f32.mxu0 0.0
      %443 = vmatmul.mubr.f32.gmra.mxu0 %v323
      %v444 = vpop.f32.mrf.mxu0
      %v445 = vadd.f32 %v298, %v444
      %v446 = vpop.f32.mrf.mxu0
      %447 = vmatprep.mubr.f32.mxu0 0.0
      %448 = vmatmul.mubr.f32.gmra.mxu0 %v326
      %v449 = vpop.f32.mrf.mxu0
      %v450 = vadd.f32 %v298, %v449
      %v451 = vpop.f32.mrf.mxu0
      %452 = vmatprep.mubr.f32.mxu0 0.0
      %453 = vmatmul.mubr.f32.gmra.mxu0 %v329
      %v454 = vpop.f32.mrf.mxu0
      %v455 = vadd.f32 %v298, %v454
      %v456 = vpop.f32.mrf.mxu0
      %457 = vmatprep.mubr.f32.mxu0 0.0
      %458 = vmatmul.mubr.f32.gmra.mxu0 %v332
      %v459 = vpop.f32.mrf.mxu0
      %v460 = vadd.f32 %v298, %v459
      %v461 = vpop.f32.mrf.mxu0
      %462 = vmatprep.mubr.f32.mxu0 0.0
      %463 = vmatmul.mubr.f32.gmra.mxu0 %v335
      %v464 = vpop.f32.mrf.mxu0
      %v465 = vadd.f32 %v298, %v464
      %v466 = vpop.f32.mrf.mxu0
      %467 = vmatprep.mubr.f32.mxu0 0.0
      %468 = vmatmul.mubr.f32.gmra.mxu0 %v338
      %v469 = vpop.f32.mrf.mxu0
      %v470 = vadd.f32 %v298, %v469
      %v471 = vpop.f32.mrf.mxu0
      %472 = vmatprep.mubr.f32.mxu0 0.0
      %473 = vmatmul.mubr.f32.gmra.mxu0 %v341
      %v474 = vpop.f32.mrf.mxu0
      %v475 = vadd.f32 %v298, %v474
      %v476 = vpop.f32.mrf.mxu0
      %477 = vdwg.mxu0
      %v478 = vmul.f32 %v410, 0.70710677
      %v479 = vmul.f32 %v415, 0.70710677
      %v480 = vmul.f32 %v420, 0.70710677
      %v481 = vmul.f32 %v425, 0.70710677
      %v482 = vmul.f32 %v430, 0.70710677
      %v483 = vmul.f32 %v435, 0.70710677
      %v484 = vmul.f32 %v440, 0.70710677
      %v485 = vmul.f32 %v445, 0.70710677
      %v486 = vmul.f32 %v450, 0.70710677
      %v487 = vmul.f32 %v455, 0.70710677
      %v488 = vmul.f32 %v460, 0.70710677
      %v489 = vmul.f32 %v465, 0.70710677
      %v490 = vmul.f32 %v470, 0.70710677
      %v491 = vmul.f32 %v475, 0.70710677
      %v492 = vand.u32 2147483647, %v478
      %v493 = vand.u32 2147483647, %v479
      %v494 = vand.u32 2147483647, %v480
      %v495 = vand.u32 2147483647, %v481
      %v496 = vand.u32 2147483647, %v482
      %v497 = vand.u32 2147483647, %v483
      %v498 = vand.u32 2147483647, %v484
      %v499 = vand.u32 2147483647, %v485
      %v500 = vand.u32 2147483647, %v486
      %v501 = vand.u32 2147483647, %v487
      %v502 = vand.u32 2147483647, %v488
      %v503 = vand.u32 2147483647, %v489
      %v504 = vand.u32 2147483647, %v490
      %v505 = vand.u32 2147483647, %v491
      %v506 = vmul.f32 %v492, 0.3275911
      %v507 = vmul.f32 %v493, 0.3275911
      %v508 = vmul.f32 %v494, 0.3275911
      %v509 = vmul.f32 %v495, 0.3275911
      %v510 = vmul.f32 %v496, 0.3275911
      %v511 = vmul.f32 %v497, 0.3275911
      %v512 = vmul.f32 %v498, 0.3275911
      %v513 = vmul.f32 %v499, 0.3275911
      %v514 = vmul.f32 %v500, 0.3275911
      %v515 = vmul.f32 %v501, 0.3275911
      %v516 = vmul.f32 %v502, 0.3275911
      %v517 = vmul.f32 %v503, 0.3275911
      %v518 = vmul.f32 %v504, 0.3275911
      %v519 = vmul.f32 %v505, 0.3275911
      %v520 = vadd.f32 %v506, 1.0
      %v521 = vadd.f32 %v507, 1.0
      %v522 = vadd.f32 %v508, 1.0
      %v523 = vadd.f32 %v509, 1.0
      %v524 = vadd.f32 %v510, 1.0
      %v525 = vadd.f32 %v511, 1.0
      %v526 = vadd.f32 %v512, 1.0
      %v527 = vadd.f32 %v513, 1.0
      %v528 = vadd.f32 %v514, 1.0
      %v529 = vadd.f32 %v515, 1.0
      %v530 = vadd.f32 %v516, 1.0
      %v531 = vadd.f32 %v517, 1.0
      %v532 = vadd.f32 %v518, 1.0
      %v533 = vadd.f32 %v519, 1.0
      %v534 = vrcp.pop %v520
      %v535 = vmul.f32 1.0, %v534
      %v536 = vrcp.pop %v521
      %v537 = vmul.f32 1.0, %v536
      %v538 = vrcp.pop %v522
      %v539 = vmul.f32 1.0, %v538
      %v540 = vrcp.pop %v523
      %v541 = vmul.f32 1.0, %v540
      %v542 = vrcp.pop %v524
      %v543 = vmul.f32 1.0, %v542
      %v544 = vrcp.pop %v525
      %v545 = vmul.f32 1.0, %v544
      %v546 = vrcp.pop %v526
      %v547 = vmul.f32 1.0, %v546
      %v548 = vrcp.pop %v527
      %v549 = vmul.f32 1.0, %v548
      %v550 = vrcp.pop %v528
      %v551 = vmul.f32 1.0, %v550
      %v552 = vrcp.pop %v529
      %v553 = vmul.f32 1.0, %v552
      %v554 = vrcp.pop %v530
      %v555 = vmul.f32 1.0, %v554
      %v556 = vrcp.pop %v531
      %v557 = vmul.f32 1.0, %v556
      %v558 = vrcp.pop %v532
      %v559 = vmul.f32 1.0, %v558
      %v560 = vrcp.pop %v533
      %v561 = vmul.f32 1.0, %v560
      %v562 = vmul.f32 %v535, 1.0614054
      %v563 = vmul.f32 %v537, 1.0614054
      %v564 = vmul.f32 %v539, 1.0614054
      %v565 = vmul.f32 %v541, 1.0614054
      %v566 = vmul.f32 %v543, 1.0614054
      %v567 = vmul.f32 %v545, 1.0614054
      %v568 = vmul.f32 %v547, 1.0614054
      %v569 = vmul.f32 %v549, 1.0614054
      %v570 = vmul.f32 %v551, 1.0614054
      %v571 = vmul.f32 %v553, 1.0614054
      %v572 = vmul.f32 %v555, 1.0614054
      %v573 = vmul.f32 %v557, 1.0614054
      %v574 = vmul.f32 %v559, 1.0614054
      %v575 = vmul.f32 %v561, 1.0614054
      %v576 = vadd.f32 %v562, -1.4531521
      %v577 = vadd.f32 %v563, -1.4531521
      %v578 = vadd.f32 %v564, -1.4531521
      %v579 = vadd.f32 %v565, -1.4531521
      %v580 = vadd.f32 %v566, -1.4531521
      %v581 = vadd.f32 %v567, -1.4531521
      %v582 = vadd.f32 %v568, -1.4531521
      %v583 = vadd.f32 %v569, -1.4531521
      %v584 = vadd.f32 %v570, -1.4531521
      %v585 = vadd.f32 %v571, -1.4531521
      %v586 = vadd.f32 %v572, -1.4531521
      %v587 = vadd.f32 %v573, -1.4531521
      %v588 = vadd.f32 %v574, -1.4531521
      %v589 = vadd.f32 %v575, -1.4531521
      %v590 = vmul.f32 %v535, %v576
      %v591 = vmul.f32 %v537, %v577
      %v592 = vmul.f32 %v539, %v578
      %v593 = vmul.f32 %v541, %v579
      %v594 = vmul.f32 %v543, %v580
      %v595 = vmul.f32 %v545, %v581
      %v596 = vmul.f32 %v547, %v582
      %v597 = vmul.f32 %v549, %v583
      %v598 = vmul.f32 %v551, %v584
      %v599 = vmul.f32 %v553, %v585
      %v600 = vmul.f32 %v555, %v586
      %v601 = vmul.f32 %v557, %v587
      %v602 = vmul.f32 %v559, %v588
      %v603 = vmul.f32 %v561, %v589
      %v604 = vadd.f32 %v590, 1.4214138
      %v605 = vadd.f32 %v591, 1.4214138
      %v606 = vadd.f32 %v592, 1.4214138
      %v607 = vadd.f32 %v593, 1.4214138
      %v608 = vadd.f32 %v594, 1.4214138
      %v609 = vadd.f32 %v595, 1.4214138
      %v610 = vadd.f32 %v596, 1.4214138
      %v611 = vadd.f32 %v597, 1.4214138
      %v612 = vadd.f32 %v598, 1.4214138
      %v613 = vadd.f32 %v599, 1.4214138
      %v614 = vadd.f32 %v600, 1.4214138
      %v615 = vadd.f32 %v601, 1.4214138
      %v616 = vadd.f32 %v602, 1.4214138
      %v617 = vadd.f32 %v603, 1.4214138
      %v618 = vmul.f32 %v535, %v604
      %v619 = vmul.f32 %v537, %v605
      %v620 = vmul.f32 %v539, %v606
      %v621 = vmul.f32 %v541, %v607
      %v622 = vmul.f32 %v543, %v608
      %v623 = vmul.f32 %v545, %v609
      %v624 = vmul.f32 %v547, %v610
      %v625 = vmul.f32 %v549, %v611
      %v626 = vmul.f32 %v551, %v612
      %v627 = vmul.f32 %v553, %v613
      %v628 = vmul.f32 %v555, %v614
      %v629 = vmul.f32 %v557, %v615
      %v630 = vmul.f32 %v559, %v616
      %v631 = vmul.f32 %v561, %v617
      %v632 = vadd.f32 %v618, -0.28449672
      %v633 = vadd.f32 %v619, -0.28449672
      %v634 = vadd.f32 %v620, -0.28449672
      %v635 = vadd.f32 %v621, -0.28449672
      %v636 = vadd.f32 %v622, -0.28449672
      %v637 = vadd.f32 %v623, -0.28449672
      %v638 = vadd.f32 %v624, -0.28449672
      %v639 = vadd.f32 %v625, -0.28449672
      %v640 = vadd.f32 %v626, -0.28449672
      %v641 = vadd.f32 %v627, -0.28449672
      %v642 = vadd.f32 %v628, -0.28449672
      %v643 = vadd.f32 %v629, -0.28449672
      %v644 = vadd.f32 %v630, -0.28449672
      %v645 = vadd.f32 %v631, -0.28449672
      %v646 = vmul.f32 %v535, %v632
      %v647 = vmul.f32 %v537, %v633
      %v648 = vmul.f32 %v539, %v634
      %v649 = vmul.f32 %v541, %v635
      %v650 = vmul.f32 %v543, %v636
      %v651 = vmul.f32 %v545, %v637
      %v652 = vmul.f32 %v547, %v638
      %v653 = vmul.f32 %v549, %v639
      %v654 = vmul.f32 %v551, %v640
      %v655 = vmul.f32 %v553, %v641
      %v656 = vmul.f32 %v555, %v642
      %v657 = vmul.f32 %v557, %v643
      %v658 = vmul.f32 %v559, %v644
      %v659 = vmul.f32 %v561, %v645
      %v660 = vadd.f32 %v646, 0.2548296
      %v661 = vadd.f32 %v647, 0.2548296
      %v662 = vadd.f32 %v648, 0.2548296
      %v663 = vadd.f32 %v649, 0.2548296
      %v664 = vadd.f32 %v650, 0.2548296
      %v665 = vadd.f32 %v651, 0.2548296
      %v666 = vadd.f32 %v652, 0.2548296
      %v667 = vadd.f32 %v653, 0.2548296
      %v668 = vadd.f32 %v654, 0.2548296
      %v669 = vadd.f32 %v655, 0.2548296
      %v670 = vadd.f32 %v656, 0.2548296
      %v671 = vadd.f32 %v657, 0.2548296
      %v672 = vadd.f32 %v658, 0.2548296
      %v673 = vadd.f32 %v659, 0.2548296
      %v674 = vmul.f32 %v535, %v660
      %v675 = vmul.f32 %v537, %v661
      %v676 = vmul.f32 %v539, %v662
      %v677 = vmul.f32 %v541, %v663
      %v678 = vmul.f32 %v543, %v664
      %v679 = vmul.f32 %v545, %v665
      %v680 = vmul.f32 %v547, %v666
      %v681 = vmul.f32 %v549, %v667
      %v682 = vmul.f32 %v551, %v668
      %v683 = vmul.f32 %v553, %v669
      %v684 = vmul.f32 %v555, %v670
      %v685 = vmul.f32 %v557, %v671
      %v686 = vmul.f32 %v559, %v672
      %v687 = vmul.f32 %v561, %v673
      %v688 = vsub.f32 0.0, %v492
      %v689 = vsub.f32 0.0, %v493
      %v690 = vsub.f32 0.0, %v494
      %v691 = vsub.f32 0.0, %v495
      %v692 = vsub.f32 0.0, %v496
      %v693 = vsub.f32 0.0, %v497
      %v694 = vsub.f32 0.0, %v498
      %v695 = vsub.f32 0.0, %v499
      %v696 = vsub.f32 0.0, %v500
      %v697 = vsub.f32 0.0, %v501
      %v698 = vsub.f32 0.0, %v502
      %v699 = vsub.f32 0.0, %v503
      %v700 = vsub.f32 0.0, %v504
      %v701 = vsub.f32 0.0, %v505
      %v702 = vmul.f32 %v688, %v492
      %v703 = vmul.f32 %v689, %v493
      %v704 = vmul.f32 %v690, %v494
      %v705 = vmul.f32 %v691, %v495
      %v706 = vmul.f32 %v692, %v496
      %v707 = vmul.f32 %v693, %v497
      %v708 = vmul.f32 %v694, %v498
      %v709 = vmul.f32 %v695, %v499
      %v710 = vmul.f32 %v696, %v500
      %v711 = vmul.f32 %v697, %v501
      %v712 = vmul.f32 %v698, %v502
      %v713 = vmul.f32 %v699, %v503
      %v714 = vmul.f32 %v700, %v504
      %v715 = vmul.f32 %v701, %v505
      %v716 = vmul.f32 %v702, 1.442695
      %v717 = vpow.pop %v716
      %v718 = vmul.f32 %v703, 1.442695
      %v719 = vpow.pop %v718
      %v720 = vmul.f32 %v704, 1.442695
      %v721 = vpow.pop %v720
      %v722 = vmul.f32 %v705, 1.442695
      %v723 = vpow.pop %v722
      %v724 = vmul.f32 %v706, 1.442695
      %v725 = vpow.pop %v724
      %v726 = vmul.f32 %v707, 1.442695
      %v727 = vpow.pop %v726
      %v728 = vmul.f32 %v708, 1.442695
      %v729 = vpow.pop %v728
      %v730 = vmul.f32 %v709, 1.442695
      %v731 = vpow.pop %v730
      %v732 = vmul.f32 %v710, 1.442695
      %v733 = vpow.pop %v732
      %v734 = vmul.f32 %v711, 1.442695
      %v735 = vpow.pop %v734
      %v736 = vmul.f32 %v712, 1.442695
      %v737 = vpow.pop %v736
      %v738 = vmul.f32 %v713, 1.442695
      %v739 = vpow.pop %v738
      %v740 = vmul.f32 %v714, 1.442695
      %v741 = vpow.pop %v740
      %v742 = vmul.f32 %v715, 1.442695
      %v743 = vpow.pop %v742
      %v744 = vmul.f32 %v674, %v717
      %v745 = vmul.f32 %v675, %v719
      %v746 = vmul.f32 %v676, %v721
      %v747 = vmul.f32 %v677, %v723
      %v748 = vmul.f32 %v678, %v725
      %v749 = vmul.f32 %v679, %v727
      %v750 = vmul.f32 %v680, %v729
      %v751 = vmul.f32 %v681, %v731
      %v752 = vmul.f32 %v682, %v733
      %v753 = vmul.f32 %v683, %v735
      %v754 = vmul.f32 %v684, %v737
      %v755 = vmul.f32 %v685, %v739
      %v756 = vmul.f32 %v686, %v741
      %v757 = vmul.f32 %v687, %v743
      %v758 = vsub.f32 1.0, %v744
      %v759 = vsub.f32 1.0, %v745
      %v760 = vsub.f32 1.0, %v746
      %v761 = vsub.f32 1.0, %v747
      %v762 = vsub.f32 1.0, %v748
      %v763 = vsub.f32 1.0, %v749
      %v764 = vsub.f32 1.0, %v750
      %v765 = vsub.f32 1.0, %v751
      %v766 = vsub.f32 1.0, %v752
      %v767 = vsub.f32 1.0, %v753
      %v768 = vsub.f32 1.0, %v754
      %v769 = vsub.f32 1.0, %v755
      %v770 = vsub.f32 1.0, %v756
      %v771 = vsub.f32 1.0, %v757
      %vm772 = vcmp.ge.f32.partialorder %v478, 0.0
      %vm773 = vcmp.ge.f32.partialorder %v479, 0.0
      %vm774 = vcmp.ge.f32.partialorder %v480, 0.0
      %vm775 = vcmp.ge.f32.partialorder %v481, 0.0
      %vm776 = vcmp.ge.f32.partialorder %v482, 0.0
      %vm777 = vcmp.ge.f32.partialorder %v483, 0.0
      %vm778 = vcmp.ge.f32.partialorder %v484, 0.0
      %vm779 = vcmp.ge.f32.partialorder %v485, 0.0
      %vm780 = vcmp.ge.f32.partialorder %v486, 0.0
      %vm781 = vcmp.ge.f32.partialorder %v487, 0.0
      %vm782 = vcmp.ge.f32.partialorder %v488, 0.0
      %vm783 = vcmp.ge.f32.partialorder %v489, 0.0
      %vm784 = vcmp.ge.f32.partialorder %v490, 0.0
      %vm785 = vcmp.ge.f32.partialorder %v491, 0.0
      %v786 = vsub.f32 0.0, %v758
      %v787 = vsub.f32 0.0, %v759
      %v788 = vsub.f32 0.0, %v760
      %v789 = vsub.f32 0.0, %v761
      %v790 = vsub.f32 0.0, %v762
      %v791 = vsub.f32 0.0, %v763
      %v792 = vsub.f32 0.0, %v764
      %v793 = vsub.f32 0.0, %v765
      %v794 = vsub.f32 0.0, %v766
      %v795 = vsub.f32 0.0, %v767
      %v796 = vsub.f32 0.0, %v768
      %v797 = vsub.f32 0.0, %v769
      %v798 = vsub.f32 0.0, %v770
      %v799 = vsub.f32 0.0, %v771
      %v800 = vsel %vm772, %v758, %v786
      %v801 = vsel %vm773, %v759, %v787
      %v802 = vsel %vm774, %v760, %v788
      %v803 = vsel %vm775, %v761, %v789
      %v804 = vsel %vm776, %v762, %v790
      %v805 = vsel %vm777, %v763, %v791
      %v806 = vsel %vm778, %v764, %v792
      %v807 = vsel %vm779, %v765, %v793
      %v808 = vsel %vm780, %v766, %v794
      %v809 = vsel %vm781, %v767, %v795
      %v810 = vsel %vm782, %v768, %v796
      %v811 = vsel %vm783, %v769, %v797
      %v812 = vsel %vm784, %v770, %v798
      %v813 = vsel %vm785, %v771, %v799
      %v814 = vmul.f32 %v410, 0.5
      %v815 = vmul.f32 %v415, 0.5
      %v816 = vmul.f32 %v420, 0.5
      %v817 = vmul.f32 %v425, 0.5
      %v818 = vmul.f32 %v430, 0.5
      %v819 = vmul.f32 %v435, 0.5
      %v820 = vmul.f32 %v440, 0.5
      %v821 = vmul.f32 %v445, 0.5
      %v822 = vmul.f32 %v450, 0.5
      %v823 = vmul.f32 %v455, 0.5
      %v824 = vmul.f32 %v460, 0.5
      %v825 = vmul.f32 %v465, 0.5
      %v826 = vmul.f32 %v470, 0.5
      %v827 = vmul.f32 %v475, 0.5
      %v828 = vadd.f32 %v800, 1.0
      %v829 = vadd.f32 %v801, 1.0
      %v830 = vadd.f32 %v802, 1.0
      %v831 = vadd.f32 %v803, 1.0
      %v832 = vadd.f32 %v804, 1.0
      %v833 = vadd.f32 %v805, 1.0
      %v834 = vadd.f32 %v806, 1.0
      %v835 = vadd.f32 %v807, 1.0
      %v836 = vadd.f32 %v808, 1.0
      %v837 = vadd.f32 %v809, 1.0
      %v838 = vadd.f32 %v810, 1.0
      %v839 = vadd.f32 %v811, 1.0
      %v840 = vadd.f32 %v812, 1.0
      %v841 = vadd.f32 %v813, 1.0
      %v842 = vmul.f32 %v814, %v828
      %v843 = vmul.f32 %v815, %v829
      %v844 = vmul.f32 %v816, %v830
      %v845 = vmul.f32 %v817, %v831
      %v846 = vmul.f32 %v818, %v832
      %v847 = vmul.f32 %v819, %v833
      %v848 = vmul.f32 %v820, %v834
      %v849 = vmul.f32 %v821, %v835
      %v850 = vmul.f32 %v822, %v836
      %v851 = vmul.f32 %v823, %v837
      %v852 = vmul.f32 %v824, %v838
      %v853 = vmul.f32 %v825, %v839
      %v854 = vmul.f32 %v826, %v840
      %v855 = vmul.f32 %v827, %v841
      %v856 = vld [vmem:[%s263] sm:$0xff]
      %v857 = vld [vmem:[%s263 + $0x8] sm:$0xff]
      %v858 = vld [vmem:[%s263 + $0x10] sm:$0xff]
      %v859 = vld [vmem:[%s263 + $0x18] sm:$0xff]
      %v860 = vld [vmem:[%s263 + $0x20] sm:$0xff]
      %v861 = vld [vmem:[%s263 + $0x28] sm:$0xff]
      %v862 = vld [vmem:[%s263 + $0x30] sm:$0xff]
      %v863 = vld [vmem:[%s263 + $0x38] sm:$0xff]
      %v864 = vld [vmem:[%s263 + $0x40] sm:$0xff]
      %v865 = vld [vmem:[%s263 + $0x48] sm:$0xff]
      %v866 = vld [vmem:[%s263 + $0x50] sm:$0xff]
      %v867 = vld [vmem:[%s263 + $0x58] sm:$0xff]
      %v868 = vld [vmem:[%s263 + $0x60] sm:$0xff]
      %v869 = vld [vmem:[%s263 + $0x68] sm:$0xff]
      %v870 = vld [vmem:[%s4] sm:$0xff]
      %v871 = vld [vmem:[%s4 + $0x8] sm:$0xff]
      %v872 = vld [vmem:[%s4 + $0x10] sm:$0xff]
      %v873 = vld [vmem:[%s4 + $0x18] sm:$0xff]
      %vm874 = vcmask 261120
      %v876 = vsel %vm874, %v842, 0
      %v879 = vsel %vm874, %v843, 0
      %v882 = vsel %vm874, %v844, 0
      %v885 = vsel %vm874, %v845, 0
      %v888 = vsel %vm874, %v846, 0
      %v891 = vsel %vm874, %v847, 0
      %v894 = vsel %vm874, %v848, 0
      %v897 = vsel %vm874, %v849, 0
      %v900 = vsel %vm874, %v850, 0
      %v903 = vsel %vm874, %v851, 0
      %v906 = vsel %vm874, %v852, 0
      %v909 = vsel %vm874, %v853, 0
      %v912 = vsel %vm874, %v854, 0
      %v915 = vsel %vm874, %v855, 0
      %917 = vmatprep.subr.mxu0 0.0
      %918 = vmatpush1.msra.mxu0 0.0
      %919 = vmatprep.subr.mxu0 0.0
      %920 = vmatpush1.msra.mxu0 0.0
      %921 = vmatprep.subr.mxu0 0.0
      %922 = vmatpush1.msra.mxu0 0.0
      %923 = vmatprep.subr.mxu0 0.0
      %924 = vmatpush1.msra.mxu0 0.0
      %925 = vmatprep.subr.mxu0 0.0
      %926 = vmatpush1.msra.mxu0 0.0
      %927 = vmatprep.subr.mxu0 0.0
      %928 = vmatpush1.msra.mxu0 0.0
      %929 = vmatprep.subr.mxu0 0.0
      %930 = vmatpush1.msra.mxu0 0.0
      %931 = vmatprep.subr.mxu0 0.0
      %932 = vmatpush1.msra.mxu0 0.0
      %933 = vmatprep.subr.mxu0 0.0
      %934 = vmatpush1.msra.mxu0 0.0
      %935 = vmatprep.subr.mxu0 0.0
      %936 = vmatpush1.msra.mxu0 0.0
      %937 = vmatprep.subr.mxu0 0.0
      %938 = vmatpush1.msra.mxu0 0.0
      %939 = vmatprep.subr.mxu0 0.0
      %940 = vmatpush1.msra.mxu0 0.0
      %941 = vmatprep.subr.mxu0 0.0
      %942 = vmatpush1.msra.mxu0 %v873
      %943 = vmatprep.subr.mxu0 0.0
      %944 = vmatpush1.msra.mxu0 %v872
      %945 = vmatprep.subr.mxu0 0.0
      %946 = vmatpush1.msra.mxu0 %v871
      %947 = vmatprep.subr.mxu0 0.0
      %948 = vmatpush1.msra.mxu0 %v870
      %949 = vmatprep.subr.mxu0 0.0
      %950 = vmatpush2.msra.mxu0 0.0
      %951 = vmatprep.subr.mxu0 0.0
      %952 = vmatpush2.msra.mxu0 0.0
      %953 = vmatprep.subr.mxu0 0.0
      %954 = vmatpush2.msra.mxu0 0.0
      %955 = vmatprep.subr.mxu0 0.0
      %956 = vmatpush2.msra.mxu0 0.0
      %957 = vmatprep.subr.mxu0 0.0
      %958 = vmatpush2.msra.mxu0 0.0
      %959 = vmatprep.subr.mxu0 0.0
      %960 = vmatpush2.msra.mxu0 0.0
      %961 = vmatprep.subr.mxu0 0.0
      %962 = vmatpush2.msra.mxu0 0.0
      %963 = vmatprep.subr.mxu0 0.0
      %964 = vmatpush2.msra.mxu0 0.0
      %965 = vmatprep.subr.mxu0 0.0
      %966 = vmatpush2.msra.mxu0 0.0
      %967 = vmatprep.subr.mxu0 0.0
      %968 = vmatpush2.msra.mxu0 0.0
      %969 = vmatprep.subr.mxu0 0.0
      %970 = vmatpush2.msra.mxu0 0.0
      %971 = vmatprep.subr.mxu0 0.0
      %972 = vmatpush2.msra.mxu0 0.0
      %973 = vmatprep.subr.mxu0 0.0
      %974 = vmatpush2.msra.mxu0 0.0
      %975 = vmatprep.subr.mxu0 0.0
      %976 = vmatpush2.msra.mxu0 0.0
      %977 = vmatprep.subr.mxu0 0.0
      %978 = vmatpush2.msra.mxu0 0.0
      %979 = vmatprep.subr.mxu0 0.0
      %980 = vmatpush2.msra.mxu0 0.0
      %981 = vmatprep.mubr.f32.mxu0 0.0
      %982 = vmatmul.mubr.f32.gmra.mxu0 %v876
      %v983 = vpop.f32.mrf.mxu0
      %v984 = vadd.f32 0.0, %v983
      %v985 = vpop.f32.mrf.mxu0
      %986 = vmatprep.mubr.f32.mxu0 0.0
      %987 = vmatmul.mubr.f32.gmra.mxu0 %v879
      %v988 = vpop.f32.mrf.mxu0
      %v989 = vadd.f32 0.0, %v988
      %v990 = vpop.f32.mrf.mxu0
      %991 = vmatprep.mubr.f32.mxu0 0.0
      %992 = vmatmul.mubr.f32.gmra.mxu0 %v882
      %v993 = vpop.f32.mrf.mxu0
      %v994 = vadd.f32 0.0, %v993
      %v995 = vpop.f32.mrf.mxu0
      %996 = vmatprep.mubr.f32.mxu0 0.0
      %997 = vmatmul.mubr.f32.gmra.mxu0 %v885
      %v998 = vpop.f32.mrf.mxu0
      %v999 = vadd.f32 0.0, %v998
      %v1000 = vpop.f32.mrf.mxu0
      %1001 = vmatprep.mubr.f32.mxu0 0.0
      %1002 = vmatmul.mubr.f32.gmra.mxu0 %v888
      %v1003 = vpop.f32.mrf.mxu0
      %v1004 = vadd.f32 0.0, %v1003
      %v1005 = vpop.f32.mrf.mxu0
      %1006 = vmatprep.mubr.f32.mxu0 0.0
      %1007 = vmatmul.mubr.f32.gmra.mxu0 %v891
      %v1008 = vpop.f32.mrf.mxu0
      %v1009 = vadd.f32 0.0, %v1008
      %v1010 = vpop.f32.mrf.mxu0
      %1011 = vmatprep.mubr.f32.mxu0 0.0
      %1012 = vmatmul.mubr.f32.gmra.mxu0 %v894
      %v1013 = vpop.f32.mrf.mxu0
      %v1014 = vadd.f32 0.0, %v1013
      %v1015 = vpop.f32.mrf.mxu0
      %1016 = vmatprep.mubr.f32.mxu0 0.0
      %1017 = vmatmul.mubr.f32.gmra.mxu0 %v897
      %v1018 = vpop.f32.mrf.mxu0
      %v1019 = vadd.f32 0.0, %v1018
      %v1020 = vpop.f32.mrf.mxu0
      %1021 = vmatprep.mubr.f32.mxu0 0.0
      %1022 = vmatmul.mubr.f32.gmra.mxu0 %v900
      %v1023 = vpop.f32.mrf.mxu0
      %v1024 = vadd.f32 0.0, %v1023
      %v1025 = vpop.f32.mrf.mxu0
      %1026 = vmatprep.mubr.f32.mxu0 0.0
      %1027 = vmatmul.mubr.f32.gmra.mxu0 %v903
      %v1028 = vpop.f32.mrf.mxu0
      %v1029 = vadd.f32 0.0, %v1028
      %v1030 = vpop.f32.mrf.mxu0
      %1031 = vmatprep.mubr.f32.mxu0 0.0
      %1032 = vmatmul.mubr.f32.gmra.mxu0 %v906
      %v1033 = vpop.f32.mrf.mxu0
      %v1034 = vadd.f32 0.0, %v1033
      %v1035 = vpop.f32.mrf.mxu0
      %1036 = vmatprep.mubr.f32.mxu0 0.0
      %1037 = vmatmul.mubr.f32.gmra.mxu0 %v909
      %v1038 = vpop.f32.mrf.mxu0
      %v1039 = vadd.f32 0.0, %v1038
      %v1040 = vpop.f32.mrf.mxu0
      %1041 = vmatprep.mubr.f32.mxu0 0.0
      %1042 = vmatmul.mubr.f32.gmra.mxu0 %v912
      %v1043 = vpop.f32.mrf.mxu0
      %v1044 = vadd.f32 0.0, %v1043
      %v1045 = vpop.f32.mrf.mxu0
      %1046 = vmatprep.mubr.f32.mxu0 0.0
      %1047 = vmatmul.mubr.f32.gmra.mxu0 %v915
      %v1048 = vpop.f32.mrf.mxu0
      %v1049 = vadd.f32 0.0, %v1048
      %v1050 = vpop.f32.mrf.mxu0
      %1051 = vdwg.mxu0
      %v1052 = vadd.f32 %v856, %v984
      %v1053 = vadd.f32 %v857, %v989
      %v1054 = vadd.f32 %v858, %v994
      %v1055 = vadd.f32 %v859, %v999
      %v1056 = vadd.f32 %v860, %v1004
      %v1057 = vadd.f32 %v861, %v1009
      %v1058 = vadd.f32 %v862, %v1014
      %v1059 = vadd.f32 %v863, %v1019
      %v1060 = vadd.f32 %v864, %v1024
      %v1061 = vadd.f32 %v865, %v1029
      %v1062 = vadd.f32 %v866, %v1034
      %v1063 = vadd.f32 %v867, %v1039
      %v1064 = vadd.f32 %v868, %v1044
      %v1065 = vadd.f32 %v869, %v1049
      %v1066 = vld [vmem:[%s5] sm:$0x1]
      %v1068 = vlaneseq
      %v1069 = vshrl.u32 %v1068, 7
      %v1070 = vsub.s32 0, %v1069
      %v1071 = vrot.slane %v1066, %v1070
      %v1073 = vadd.f32 %v1052, %v1071
      %v1074 = vadd.f32 %v1053, %v1071
      %v1075 = vadd.f32 %v1054, %v1071
      %v1076 = vadd.f32 %v1055, %v1071
      %v1077 = vadd.f32 %v1056, %v1071
      %v1078 = vadd.f32 %v1057, %v1071
      %v1079 = vadd.f32 %v1058, %v1071
      %v1080 = vadd.f32 %v1059, %v1071
      %v1081 = vadd.f32 %v1060, %v1071
      %v1082 = vadd.f32 %v1061, %v1071
      %v1083 = vadd.f32 %v1062, %v1071
      %v1084 = vadd.f32 %v1063, %v1071
      %v1085 = vadd.f32 %v1064, %v1071
      %v1086 = vadd.f32 %v1065, %v1071
      %1087 = vst.msk [vmem:[%s275] sm:$0xff] %vm300, %v1073
      %1088 = vst.msk [vmem:[%s275 + $0x8] sm:$0xff] %vm300, %v1074
      %1089 = vst.msk [vmem:[%s275 + $0x10] sm:$0xff] %vm300, %v1075
      %1090 = vst.msk [vmem:[%s275 + $0x18] sm:$0xff] %vm300, %v1076
      %1091 = vst.msk [vmem:[%s275 + $0x20] sm:$0xff] %vm300, %v1077
      %1092 = vst.msk [vmem:[%s275 + $0x28] sm:$0xff] %vm300, %v1078
      %1093 = vst.msk [vmem:[%s275 + $0x30] sm:$0xff] %vm300, %v1079
      %1094 = vst.msk [vmem:[%s275 + $0x38] sm:$0xff] %vm300, %v1080
      %1095 = vst.msk [vmem:[%s275 + $0x40] sm:$0xff] %vm300, %v1081
      %1096 = vst.msk [vmem:[%s275 + $0x48] sm:$0xff] %vm300, %v1082
      %1097 = vst.msk [vmem:[%s275 + $0x50] sm:$0xff] %vm300, %v1083
      %1098 = vst.msk [vmem:[%s275 + $0x58] sm:$0xff] %vm300, %v1084
      %1099 = vst.msk [vmem:[%s275 + $0x60] sm:$0xff] %vm300, %v1085
      %1100 = vst.msk [vmem:[%s275 + $0x68] sm:$0xff] %vm300, %v1086
      %s1101 = smul.u32 14, %s17
      %p1102 = scmp.lt.s32.totalorder %s1101, 27
      %s1103 = scalar_select %p1102, %s1101, 27
      %s1104 = smul.addr %s1103, 8
      %s1105 = scalar_lea.vmem %s6, %s1104
      // Predicated region
      $region45: #{_lambda_.13} parent=43 // pred_check
        %p1106 = pneg %p171
      $region46: #{_lambda_.13} parent=43 // pred_check_branch
        %1108 = sbr.rel (%p1106) target = $region48
      $region47: #{_lambda_.13} parent=43 // pred_region
        %s1109 = smul.u32 14, %s17
      $region48: #{_lambda_.13} parent=43 // pred_fallthru
        _
    $region44: #{_lambda_.13} parent=5 // pred_fallthru
      _
    %p1110 = scmp.le.s32.totalorder 2, %s12
    // Predicated region
    $region49: #{_lambda_.13} parent=5 // pred_check
      %p1111 = pneg %p1110
    $region50: #{_lambda_.13} parent=5 // pred_check_branch
      %1113 = sbr.rel (%p1111) target = $region52
    $region51: #{_lambda_.13} parent=5 // pred_region
      %s1114 = ssub.s32 %s12, 2
      // Predicated region
      $region53: #{_lambda_.13} parent=51 // pred_check
        %p1115 = pneg %p177
      $region54: #{_lambda_.13} parent=51 // pred_check_branch
        %1117 = sbr.rel (%p1115) target = $region56
      $region55: #{_lambda_.13} parent=51 // pred_region
        %s1118 = smul.u32 14, %s18
        %p1119 = scmp.lt.s32.totalorder %s1118, 27
        %s1120 = scalar_select %p1119, %s1118, 27
        %s1121 = smul.addr %s1120, 8
        %s1122 = scalar_lea.vmem %s6, %s1121
      $region56: #{_lambda_.13} parent=51 // pred_fallthru
        _
    $region52: #{_lambda_.13} parent=5 // pred_fallthru
      _
  $region6: #{_lambda_.13} parent=0 // loop_footer
    %s16 = sadd.s32 1, %s12
  $region7: #{_lambda_.13} parent=0 // loop_footer_branch
    %11 = sbr.rel target = $region3
  $region8: #{_lambda_.13} parent=0 // loop_exit
    _

// kernel: _lambda_.9
$region0: #{_lambda_.9}
  #allocation0 [shape = 'u32[]', space=smem, size = 0x4, offset = 0x4, fixed_abs, tag = 'smem constant byte address 0x4 - core index']
  #allocation1 [shape = 'u32[144,128]{1,0:T(1,128)}', space=vmem, size = 0x12000, scoped, tag = 'internal scratch']
  %s0 = inlined_call_operand.vmem [shape: f32[128,16], index: 0, kind: input, shape index: {}]
  %s1 = inlined_call_operand.vmem [shape: f32[128,8], index: 1, kind: input, shape index: {}]
  %s2 = inlined_call_operand.vmem [shape: f32[128,4], index: 2, kind: input, shape index: {}]
  %s3 = inlined_call_operand.vmem [shape: f32[128,16], index: 3, kind: input, shape index: {}]
  %s4 = inlined_call_operand.vmem [shape: f32[128,8], index: 4, kind: input, shape index: {}]
  %s5 = inlined_call_operand.vmem [shape: f32[128,4], index: 5, kind: input, shape index: {}]
  %s6 = inlined_call_operand.vmem [shape: f32[16,8], index: 6, kind: input, shape index: {}]
  %s7 = inlined_call_operand.vmem [shape: f32[1,8], index: 7, kind: input, shape index: {}]
  %s8 = inlined_call_operand.vmem [shape: f32[8,8], index: 8, kind: input, shape index: {}]
  %s9 = inlined_call_operand.vmem [shape: f32[1,8], index: 9, kind: input, shape index: {}]
  %s10 = inlined_call_operand.vmem [shape: f32[8,4], index: 10, kind: input, shape index: {}]
  %s11 = inlined_call_operand.vmem [shape: f32[1,4], index: 11, kind: input, shape index: {}]
  %s12 = inlined_call_operand.vmem [shape: f32[4,4], index: 12, kind: input, shape index: {}]
  %s13 = inlined_call_operand.vmem [shape: f32[1,4], index: 13, kind: input, shape index: {}]
  %s14 = inlined_call_operand.vmem [shape: f32[4,8], index: 14, kind: input, shape index: {}]
  %s15 = inlined_call_operand.vmem [shape: f32[1,8], index: 15, kind: input, shape index: {}]
  %s16 = inlined_call_operand.vmem [shape: f32[8,8], index: 16, kind: input, shape index: {}]
  %s17 = inlined_call_operand.vmem [shape: f32[1,8], index: 17, kind: input, shape index: {}]
  %s18 = inlined_call_operand.vmem [shape: f32[8,16], index: 18, kind: input, shape index: {}]
  %s19 = inlined_call_operand.vmem [shape: f32[1,16], index: 19, kind: input, shape index: {}]
  %s20 = inlined_call_operand.vmem [shape: f32[16,16], index: 20, kind: input, shape index: {}]
  %s21 = inlined_call_operand.vmem [shape: f32[1,16], index: 21, kind: input, shape index: {}]
  %s22 = inlined_call_operand.vmem [shape: f32[128,16], index: 22, kind: output, shape index: {0}]
  %s23 = inlined_call_operand.vmem [shape: f32[128,8], index: 23, kind: output, shape index: {1}]
  %s24 = inlined_call_operand.vmem [shape: f32[128,4], index: 24, kind: output, shape index: {2}]
  %25 = xla_tuple %s22, %s23, %s24
  %s26 = sld [smem:[#allocation0]]
  $region137: #{_lambda_.9} parent=0
    _
  %s28 = ssub.s32 1, %s26
  %s29 = scalar_select 0, %s28, %s26
  loop: start=0, step=1, limit=4
  $region2: #{_lambda_.9} parent=0 // loop_pre_header
    _
  $region3: #{_lambda_.9} parent=0 // loop_header
    %s31 = sphi 0, %s35
    %p32 = scmp.ge.s32.totalorder %s31, 4
    %s41 = sphi 0, %s43
    %s44 = sphi 0, %s41
    %s45 = sphi 0, %s44
    %s61 = sphi 0, %s45
    %s67 = sphi 0, %s69
    %s70 = sphi 0, %s67
    %s71 = sphi 0, %s70
    %s87 = sphi 0, %s71
    %s93 = sphi 0, %s95
    %s96 = sphi 0, %s93
    %s97 = sphi 0, %s96
    %s113 = sphi 0, %s97
    %s119 = sphi 0, %s121
    %s122 = sphi 0, %s119
    %s123 = sphi 0, %s122
    %s139 = sphi 0, %s123
    %s145 = sphi 0, %s147
    %s148 = sphi 0, %s145
    %s149 = sphi 0, %s148
    %s165 = sphi 0, %s149
    %s171 = sphi 0, %s173
    %s174 = sphi 0, %s171
    %s175 = sphi 0, %s174
    %s191 = sphi 0, %s175
    %s195 = sphi 0, %s195
    %s197 = sphi 0, %s195
    %s198 = sphi 0, %s197
    %s212 = sphi 0, %s198
    %s216 = sphi 0, %s216
    %s218 = sphi 0, %s216
    %s219 = sphi 0, %s218
    %s233 = sphi 0, %s219
    %s237 = sphi 0, %s237
    %s239 = sphi 0, %s237
    %s240 = sphi 0, %s239
    %s254 = sphi 0, %s240
    %s258 = sphi 0, %s258
    %s260 = sphi 0, %s258
    %s261 = sphi 0, %s260
    %s275 = sphi 0, %s261
    %s279 = sphi 0, %s279
    %s281 = sphi 0, %s279
    %s282 = sphi 0, %s281
    %s296 = sphi 0, %s282
    %s300 = sphi 0, %s300
    %s302 = sphi 0, %s300
    %s303 = sphi 0, %s302
    %s317 = sphi 0, %s303
    %s321 = sphi 0, %s321
    %s323 = sphi 0, %s321
    %s324 = sphi 0, %s323
    %s338 = sphi 0, %s324
    %s342 = sphi 0, %s342
    %s344 = sphi 0, %s342
    %s345 = sphi 0, %s344
    %s359 = sphi 0, %s345
    %s363 = sphi 0, %s363
    %s365 = sphi 0, %s363
    %s366 = sphi 0, %s365
    %s380 = sphi 0, %s366
    %s384 = sphi 0, %s384
    %s386 = sphi 0, %s384
    %s387 = sphi 0, %s386
    %s401 = sphi 0, %s387
    %s405 = sphi 0, %s405
    %s407 = sphi 0, %s405
    %s408 = sphi 0, %s407
    %s422 = sphi 0, %s408
    %s426 = sphi 0, %s426
    %s428 = sphi 0, %s426
    %s429 = sphi 0, %s428
    %s443 = sphi 0, %s429
    %s447 = sphi 0, %s447
    %s449 = sphi 0, %s447
    %s450 = sphi 0, %s449
    %s464 = sphi 0, %s450
    %s468 = sphi 0, %s468
    %s470 = sphi 0, %s468
    %s471 = sphi 0, %s470
    %s485 = sphi 0, %s471
    %s489 = sphi 0, %s489
    %s491 = sphi 0, %s489
    %s492 = sphi 0, %s491
    %s506 = sphi 0, %s492
    %s510 = sphi 0, %s510
    %s512 = sphi 0, %s510
    %s513 = sphi 0, %s512
    %s527 = sphi 0, %s513
    %s533 = sphi 0, %s535
    %s536 = sphi 0, %s533
    %s537 = sphi 0, %s536
    %s553 = sphi 0, %s537
    %s559 = sphi 0, %s561
    %s562 = sphi 0, %s559
    %s563 = sphi 0, %s562
    %s579 = sphi 0, %s563
    %s585 = sphi 0, %s587
    %s588 = sphi 0, %s585
    %s589 = sphi 0, %s588
    %s605 = sphi 0, %s589
  $region4: #{_lambda_.9} parent=0 // loop_header_branch
    %34 = sbr.rel (%p32) target = $region8
  $region5: #{_lambda_.9} parent=0 // loop_body
    %s36 = ssub.s32 %s31, 1
    %s37 = ssub.s32 %s31, 2
    %s38 = sadd.s32 %s31, 1
    %s39 = ssub.s32 %s31, %s38
    %p40 = scmp.eq.s32.totalorder %s39, 0
    %s42 = sadd.s32 %s41, 1
    %s43 = scalar_select %p40, %s41, %s42
    %p46 = pneg %p40
    %p47 = scmp.eq.s32.totalorder %s31, 1
    %p48 = por %p46, %p47
    %p49 = scmp.ne.s32.totalorder %s41, %s44
    %p50 = scmp.eq.s32.totalorder %s31, 0
    %p51 = por %p49, %p50
    %p52 = scmp.ne.s32.totalorder %s41, %s44
    %p53 = scmp.eq.s32.totalorder %s36, 1
    %p54 = por %p52, %p53
    %p55 = scmp.ne.s32.totalorder %s44, %s45
    %p56 = scmp.eq.s32.totalorder %s36, 0
    %p57 = por %p55, %p56
    %p58 = scmp.ne.s32.totalorder %s44, %s45
    %p59 = scmp.eq.s32.totalorder %s37, 1
    %p60 = por %p58, %p59
    %p62 = scmp.ne.s32.totalorder %s45, %s61
    %p63 = scmp.eq.s32.totalorder %s37, 0
    %p64 = por %p62, %p63
    %s65 = ssub.s32 %s31, %s38
    %p66 = scmp.eq.s32.totalorder %s65, 0
    %s68 = sadd.s32 %s67, 1
    %s69 = scalar_select %p66, %s67, %s68
    %p72 = pneg %p66
    %p73 = scmp.eq.s32.totalorder %s31, 1
    %p74 = por %p72, %p73
    %p75 = scmp.ne.s32.totalorder %s67, %s70
    %p76 = scmp.eq.s32.totalorder %s31, 0
    %p77 = por %p75, %p76
    %p78 = scmp.ne.s32.totalorder %s67, %s70
    %p79 = scmp.eq.s32.totalorder %s36, 1
    %p80 = por %p78, %p79
    %p81 = scmp.ne.s32.totalorder %s70, %s71
    %p82 = scmp.eq.s32.totalorder %s36, 0
    %p83 = por %p81, %p82
    %p84 = scmp.ne.s32.totalorder %s70, %s71
    %p85 = scmp.eq.s32.totalorder %s37, 1
    %p86 = por %p84, %p85
    %p88 = scmp.ne.s32.totalorder %s71, %s87
    %p89 = scmp.eq.s32.totalorder %s37, 0
    %p90 = por %p88, %p89
    %s91 = ssub.s32 %s31, %s38
    %p92 = scmp.eq.s32.totalorder %s91, 0
    %s94 = sadd.s32 %s93, 1
    %s95 = scalar_select %p92, %s93, %s94
    %p98 = pneg %p92
    %p99 = scmp.eq.s32.totalorder %s31, 1
    %p100 = por %p98, %p99
    %p101 = scmp.ne.s32.totalorder %s93, %s96
    %p102 = scmp.eq.s32.totalorder %s31, 0
    %p103 = por %p101, %p102
    %p104 = scmp.ne.s32.totalorder %s93, %s96
    %p105 = scmp.eq.s32.totalorder %s36, 1
    %p106 = por %p104, %p105
    %p107 = scmp.ne.s32.totalorder %s96, %s97
    %p108 = scmp.eq.s32.totalorder %s36, 0
    %p109 = por %p107, %p108
    %p110 = scmp.ne.s32.totalorder %s96, %s97
    %p111 = scmp.eq.s32.totalorder %s37, 1
    %p112 = por %p110, %p111
    %p114 = scmp.ne.s32.totalorder %s97, %s113
    %p115 = scmp.eq.s32.totalorder %s37, 0
    %p116 = por %p114, %p115
    %s117 = ssub.s32 %s31, %s38
    %p118 = scmp.eq.s32.totalorder %s117, 0
    %s120 = sadd.s32 %s119, 1
    %s121 = scalar_select %p118, %s119, %s120
    %p124 = pneg %p118
    %p125 = scmp.eq.s32.totalorder %s31, 1
    %p126 = por %p124, %p125
    %p127 = scmp.ne.s32.totalorder %s119, %s122
    %p128 = scmp.eq.s32.totalorder %s31, 0
    %p129 = por %p127, %p128
    %p130 = scmp.ne.s32.totalorder %s119, %s122
    %p131 = scmp.eq.s32.totalorder %s36, 1
    %p132 = por %p130, %p131
    %p133 = scmp.ne.s32.totalorder %s122, %s123
    %p134 = scmp.eq.s32.totalorder %s36, 0
    %p135 = por %p133, %p134
    %p136 = scmp.ne.s32.totalorder %s122, %s123
    %p137 = scmp.eq.s32.totalorder %s37, 1
    %p138 = por %p136, %p137
    %p140 = scmp.ne.s32.totalorder %s123, %s139
    %p141 = scmp.eq.s32.totalorder %s37, 0
    %p142 = por %p140, %p141
    %s143 = ssub.s32 %s31, %s38
    %p144 = scmp.eq.s32.totalorder %s143, 0
    %s146 = sadd.s32 %s145, 1
    %s147 = scalar_select %p144, %s145, %s146
    %p150 = pneg %p144
    %p151 = scmp.eq.s32.totalorder %s31, 1
    %p152 = por %p150, %p151
    %p153 = scmp.ne.s32.totalorder %s145, %s148
    %p154 = scmp.eq.s32.totalorder %s31, 0
    %p155 = por %p153, %p154
    %p156 = scmp.ne.s32.totalorder %s145, %s148
    %p157 = scmp.eq.s32.totalorder %s36, 1
    %p158 = por %p156, %p157
    %p159 = scmp.ne.s32.totalorder %s148, %s149
    %p160 = scmp.eq.s32.totalorder %s36, 0
    %p161 = por %p159, %p160
    %p162 = scmp.ne.s32.totalorder %s148, %s149
    %p163 = scmp.eq.s32.totalorder %s37, 1
    %p164 = por %p162, %p163
    %p166 = scmp.ne.s32.totalorder %s149, %s165
    %p167 = scmp.eq.s32.totalorder %s37, 0
    %p168 = por %p166, %p167
    %s169 = ssub.s32 %s31, %s38
    %p170 = scmp.eq.s32.totalorder %s169, 0
    %s172 = sadd.s32 %s171, 1
    %s173 = scalar_select %p170, %s171, %s172
    %p176 = pneg %p170
    %p177 = scmp.eq.s32.totalorder %s31, 1
    %p178 = por %p176, %p177
    %p179 = scmp.ne.s32.totalorder %s171, %s174
    %p180 = scmp.eq.s32.totalorder %s31, 0
    %p181 = por %p179, %p180
    %p182 = scmp.ne.s32.totalorder %s171, %s174
    %p183 = scmp.eq.s32.totalorder %s36, 1
    %p184 = por %p182, %p183
    %p185 = scmp.ne.s32.totalorder %s174, %s175
    %p186 = scmp.eq.s32.totalorder %s36, 0
    %p187 = por %p185, %p186
    %p188 = scmp.ne.s32.totalorder %s174, %s175
    %p189 = scmp.eq.s32.totalorder %s37, 1
    %p190 = por %p188, %p189
    %p192 = scmp.ne.s32.totalorder %s175, %s191
    %p193 = scmp.eq.s32.totalorder %s37, 0
    %p194 = por %p192, %p193
    %s196 = sadd.s32 %s195, 1
    %p199 = scmp.eq.s32.totalorder %s31, 1
    %p200 = scmp.ne.s32.totalorder %s195, %s197
    %p201 = scmp.eq.s32.totalorder %s31, 0
    %p202 = por %p200, %p201
    %p203 = scmp.ne.s32.totalorder %s195, %s197
    %p204 = scmp.eq.s32.totalorder %s36, 1
    %p205 = por %p203, %p204
    %p206 = scmp.ne.s32.totalorder %s197, %s198
    %p207 = scmp.eq.s32.totalorder %s36, 0
    %p208 = por %p206, %p207
    %p209 = scmp.ne.s32.totalorder %s197, %s198
    %p210 = scmp.eq.s32.totalorder %s37, 1
    %p211 = por %p209, %p210
    %p213 = scmp.ne.s32.totalorder %s198, %s212
    %p214 = scmp.eq.s32.totalorder %s37, 0
    %p215 = por %p213, %p214
    %s217 = sadd.s32 %s216, 1
    %p220 = scmp.eq.s32.totalorder %s31, 1
    %p221 = scmp.ne.s32.totalorder %s216, %s218
    %p222 = scmp.eq.s32.totalorder %s31, 0
    %p223 = por %p221, %p222
    %p224 = scmp.ne.s32.totalorder %s216, %s218
    %p225 = scmp.eq.s32.totalorder %s36, 1
    %p226 = por %p224, %p225
    %p227 = scmp.ne.s32.totalorder %s218, %s219
    %p228 = scmp.eq.s32.totalorder %s36, 0
    %p229 = por %p227, %p228
    %p230 = scmp.ne.s32.totalorder %s218, %s219
    %p231 = scmp.eq.s32.totalorder %s37, 1
    %p232 = por %p230, %p231
    %p234 = scmp.ne.s32.totalorder %s219, %s233
    %p235 = scmp.eq.s32.totalorder %s37, 0
    %p236 = por %p234, %p235
    %s238 = sadd.s32 %s237, 1
    %p241 = scmp.eq.s32.totalorder %s31, 1
    %p242 = scmp.ne.s32.totalorder %s237, %s239
    %p243 = scmp.eq.s32.totalorder %s31, 0
    %p244 = por %p242, %p243
    %p245 = scmp.ne.s32.totalorder %s237, %s239
    %p246 = scmp.eq.s32.totalorder %s36, 1
    %p247 = por %p245, %p246
    %p248 = scmp.ne.s32.totalorder %s239, %s240
    %p249 = scmp.eq.s32.totalorder %s36, 0
    %p250 = por %p248, %p249
    %p251 = scmp.ne.s32.totalorder %s239, %s240
    %p252 = scmp.eq.s32.totalorder %s37, 1
    %p253 = por %p251, %p252
    %p255 = scmp.ne.s32.totalorder %s240, %s254
    %p256 = scmp.eq.s32.totalorder %s37, 0
    %p257 = por %p255, %p256
    %s259 = sadd.s32 %s258, 1
    %p262 = scmp.eq.s32.totalorder %s31, 1
    %p263 = scmp.ne.s32.totalorder %s258, %s260
    %p264 = scmp.eq.s32.totalorder %s31, 0
    %p265 = por %p263, %p264
    %p266 = scmp.ne.s32.totalorder %s258, %s260
    %p267 = scmp.eq.s32.totalorder %s36, 1
    %p268 = por %p266, %p267
    %p269 = scmp.ne.s32.totalorder %s260, %s261
    %p270 = scmp.eq.s32.totalorder %s36, 0
    %p271 = por %p269, %p270
    %p272 = scmp.ne.s32.totalorder %s260, %s261
    %p273 = scmp.eq.s32.totalorder %s37, 1
    %p274 = por %p272, %p273
    %p276 = scmp.ne.s32.totalorder %s261, %s275
    %p277 = scmp.eq.s32.totalorder %s37, 0
    %p278 = por %p276, %p277
    %s280 = sadd.s32 %s279, 1
    %p283 = scmp.eq.s32.totalorder %s31, 1
    %p284 = scmp.ne.s32.totalorder %s279, %s281
    %p285 = scmp.eq.s32.totalorder %s31, 0
    %p286 = por %p284, %p285
    %p287 = scmp.ne.s32.totalorder %s279, %s281
    %p288 = scmp.eq.s32.totalorder %s36, 1
    %p289 = por %p287, %p288
    %p290 = scmp.ne.s32.totalorder %s281, %s282
    %p291 = scmp.eq.s32.totalorder %s36, 0
    %p292 = por %p290, %p291
    %p293 = scmp.ne.s32.totalorder %s281, %s282
    %p294 = scmp.eq.s32.totalorder %s37, 1
    %p295 = por %p293, %p294
    %p297 = scmp.ne.s32.totalorder %s282, %s296
    %p298 = scmp.eq.s32.totalorder %s37, 0
    %p299 = por %p297, %p298
    %s301 = sadd.s32 %s300, 1
    %p304 = scmp.eq.s32.totalorder %s31, 1
    %p305 = scmp.ne.s32.totalorder %s300, %s302
    %p306 = scmp.eq.s32.totalorder %s31, 0
    %p307 = por %p305, %p306
    %p308 = scmp.ne.s32.totalorder %s300, %s302
    %p309 = scmp.eq.s32.totalorder %s36, 1
    %p310 = por %p308, %p309
    %p311 = scmp.ne.s32.totalorder %s302, %s303
    %p312 = scmp.eq.s32.totalorder %s36, 0
    %p313 = por %p311, %p312
    %p314 = scmp.ne.s32.totalorder %s302, %s303
    %p315 = scmp.eq.s32.totalorder %s37, 1
    %p316 = por %p314, %p315
    %p318 = scmp.ne.s32.totalorder %s303, %s317
    %p319 = scmp.eq.s32.totalorder %s37, 0
    %p320 = por %p318, %p319
    %s322 = sadd.s32 %s321, 1
    %p325 = scmp.eq.s32.totalorder %s31, 1
    %p326 = scmp.ne.s32.totalorder %s321, %s323
    %p327 = scmp.eq.s32.totalorder %s31, 0
    %p328 = por %p326, %p327
    %p329 = scmp.ne.s32.totalorder %s321, %s323
    %p330 = scmp.eq.s32.totalorder %s36, 1
    %p331 = por %p329, %p330
    %p332 = scmp.ne.s32.totalorder %s323, %s324
    %p333 = scmp.eq.s32.totalorder %s36, 0
    %p334 = por %p332, %p333
    %p335 = scmp.ne.s32.totalorder %s323, %s324
    %p336 = scmp.eq.s32.totalorder %s37, 1
    %p337 = por %p335, %p336
    %p339 = scmp.ne.s32.totalorder %s324, %s338
    %p340 = scmp.eq.s32.totalorder %s37, 0
    %p341 = por %p339, %p340
    %s343 = sadd.s32 %s342, 1
    %p346 = scmp.eq.s32.totalorder %s31, 1
    %p347 = scmp.ne.s32.totalorder %s342, %s344
    %p348 = scmp.eq.s32.totalorder %s31, 0
    %p349 = por %p347, %p348
    %p350 = scmp.ne.s32.totalorder %s342, %s344
    %p351 = scmp.eq.s32.totalorder %s36, 1
    %p352 = por %p350, %p351
    %p353 = scmp.ne.s32.totalorder %s344, %s345
    %p354 = scmp.eq.s32.totalorder %s36, 0
    %p355 = por %p353, %p354
    %p356 = scmp.ne.s32.totalorder %s344, %s345
    %p357 = scmp.eq.s32.totalorder %s37, 1
    %p358 = por %p356, %p357
    %p360 = scmp.ne.s32.totalorder %s345, %s359
    %p361 = scmp.eq.s32.totalorder %s37, 0
    %p362 = por %p360, %p361
    %s364 = sadd.s32 %s363, 1
    %p367 = scmp.eq.s32.totalorder %s31, 1
    %p368 = scmp.ne.s32.totalorder %s363, %s365
    %p369 = scmp.eq.s32.totalorder %s31, 0
    %p370 = por %p368, %p369
    %p371 = scmp.ne.s32.totalorder %s363, %s365
    %p372 = scmp.eq.s32.totalorder %s36, 1
    %p373 = por %p371, %p372
    %p374 = scmp.ne.s32.totalorder %s365, %s366
    %p375 = scmp.eq.s32.totalorder %s36, 0
    %p376 = por %p374, %p375
    %p377 = scmp.ne.s32.totalorder %s365, %s366
    %p378 = scmp.eq.s32.totalorder %s37, 1
    %p379 = por %p377, %p378
    %p381 = scmp.ne.s32.totalorder %s366, %s380
    %p382 = scmp.eq.s32.totalorder %s37, 0
    %p383 = por %p381, %p382
    %s385 = sadd.s32 %s384, 1
    %p388 = scmp.eq.s32.totalorder %s31, 1
    %p389 = scmp.ne.s32.totalorder %s384, %s386
    %p390 = scmp.eq.s32.totalorder %s31, 0
    %p391 = por %p389, %p390
    %p392 = scmp.ne.s32.totalorder %s384, %s386
    %p393 = scmp.eq.s32.totalorder %s36, 1
    %p394 = por %p392, %p393
    %p395 = scmp.ne.s32.totalorder %s386, %s387
    %p396 = scmp.eq.s32.totalorder %s36, 0
    %p397 = por %p395, %p396
    %p398 = scmp.ne.s32.totalorder %s386, %s387
    %p399 = scmp.eq.s32.totalorder %s37, 1
    %p400 = por %p398, %p399
    %p402 = scmp.ne.s32.totalorder %s387, %s401
    %p403 = scmp.eq.s32.totalorder %s37, 0
    %p404 = por %p402, %p403
    %s406 = sadd.s32 %s405, 1
    %p409 = scmp.eq.s32.totalorder %s31, 1
    %p410 = scmp.ne.s32.totalorder %s405, %s407
    %p411 = scmp.eq.s32.totalorder %s31, 0
    %p412 = por %p410, %p411
    %p413 = scmp.ne.s32.totalorder %s405, %s407
    %p414 = scmp.eq.s32.totalorder %s36, 1
    %p415 = por %p413, %p414
    %p416 = scmp.ne.s32.totalorder %s407, %s408
    %p417 = scmp.eq.s32.totalorder %s36, 0
    %p418 = por %p416, %p417
    %p419 = scmp.ne.s32.totalorder %s407, %s408
    %p420 = scmp.eq.s32.totalorder %s37, 1
    %p421 = por %p419, %p420
    %p423 = scmp.ne.s32.totalorder %s408, %s422
    %p424 = scmp.eq.s32.totalorder %s37, 0
    %p425 = por %p423, %p424
    %s427 = sadd.s32 %s426, 1
    %p430 = scmp.eq.s32.totalorder %s31, 1
    %p431 = scmp.ne.s32.totalorder %s426, %s428
    %p432 = scmp.eq.s32.totalorder %s31, 0
    %p433 = por %p431, %p432
    %p434 = scmp.ne.s32.totalorder %s426, %s428
    %p435 = scmp.eq.s32.totalorder %s36, 1
    %p436 = por %p434, %p435
    %p437 = scmp.ne.s32.totalorder %s428, %s429
    %p438 = scmp.eq.s32.totalorder %s36, 0
    %p439 = por %p437, %p438
    %p440 = scmp.ne.s32.totalorder %s428, %s429
    %p441 = scmp.eq.s32.totalorder %s37, 1
    %p442 = por %p440, %p441
    %p444 = scmp.ne.s32.totalorder %s429, %s443
    %p445 = scmp.eq.s32.totalorder %s37, 0
    %p446 = por %p444, %p445
    %s448 = sadd.s32 %s447, 1
    %p451 = scmp.eq.s32.totalorder %s31, 1
    %p452 = scmp.ne.s32.totalorder %s447, %s449
    %p453 = scmp.eq.s32.totalorder %s31, 0
    %p454 = por %p452, %p453
    %p455 = scmp.ne.s32.totalorder %s447, %s449
    %p456 = scmp.eq.s32.totalorder %s36, 1
    %p457 = por %p455, %p456
    %p458 = scmp.ne.s32.totalorder %s449, %s450
    %p459 = scmp.eq.s32.totalorder %s36, 0
    %p460 = por %p458, %p459
    %p461 = scmp.ne.s32.totalorder %s449, %s450
    %p462 = scmp.eq.s32.totalorder %s37, 1
    %p463 = por %p461, %p462
    %p465 = scmp.ne.s32.totalorder %s450, %s464
    %p466 = scmp.eq.s32.totalorder %s37, 0
    %p467 = por %p465, %p466
    %s469 = sadd.s32 %s468, 1
    %p472 = scmp.eq.s32.totalorder %s31, 1
    %p473 = scmp.ne.s32.totalorder %s468, %s470
    %p474 = scmp.eq.s32.totalorder %s31, 0
    %p475 = por %p473, %p474
    %p476 = scmp.ne.s32.totalorder %s468, %s470
    %p477 = scmp.eq.s32.totalorder %s36, 1
    %p478 = por %p476, %p477
    %p479 = scmp.ne.s32.totalorder %s470, %s471
    %p480 = scmp.eq.s32.totalorder %s36, 0
    %p481 = por %p479, %p480
    %p482 = scmp.ne.s32.totalorder %s470, %s471
    %p483 = scmp.eq.s32.totalorder %s37, 1
    %p484 = por %p482, %p483
    %p486 = scmp.ne.s32.totalorder %s471, %s485
    %p487 = scmp.eq.s32.totalorder %s37, 0
    %p488 = por %p486, %p487
    %s490 = sadd.s32 %s489, 1
    %p493 = scmp.eq.s32.totalorder %s31, 1
    %p494 = scmp.ne.s32.totalorder %s489, %s491
    %p495 = scmp.eq.s32.totalorder %s31, 0
    %p496 = por %p494, %p495
    %p497 = scmp.ne.s32.totalorder %s489, %s491
    %p498 = scmp.eq.s32.totalorder %s36, 1
    %p499 = por %p497, %p498
    %p500 = scmp.ne.s32.totalorder %s491, %s492
    %p501 = scmp.eq.s32.totalorder %s36, 0
    %p502 = por %p500, %p501
    %p503 = scmp.ne.s32.totalorder %s491, %s492
    %p504 = scmp.eq.s32.totalorder %s37, 1
    %p505 = por %p503, %p504
    %p507 = scmp.ne.s32.totalorder %s492, %s506
    %p508 = scmp.eq.s32.totalorder %s37, 0
    %p509 = por %p507, %p508
    %s511 = sadd.s32 %s510, 1
    %p514 = scmp.eq.s32.totalorder %s31, 1
    %p515 = scmp.ne.s32.totalorder %s510, %s512
    %p516 = scmp.eq.s32.totalorder %s31, 0
    %p517 = por %p515, %p516
    %p518 = scmp.ne.s32.totalorder %s510, %s512
    %p519 = scmp.eq.s32.totalorder %s36, 1
    %p520 = por %p518, %p519
    %p521 = scmp.ne.s32.totalorder %s512, %s513
    %p522 = scmp.eq.s32.totalorder %s36, 0
    %p523 = por %p521, %p522
    %p524 = scmp.ne.s32.totalorder %s512, %s513
    %p525 = scmp.eq.s32.totalorder %s37, 1
    %p526 = por %p524, %p525
    %p528 = scmp.ne.s32.totalorder %s513, %s527
    %p529 = scmp.eq.s32.totalorder %s37, 0
    %p530 = por %p528, %p529
    %s531 = ssub.s32 %s31, %s38
    %p532 = scmp.eq.s32.totalorder %s531, 0
    %s534 = sadd.s32 %s533, 1
    %s535 = scalar_select %p532, %s533, %s534
    %p538 = pneg %p532
    %p539 = scmp.eq.s32.totalorder %s31, 1
    %p540 = por %p538, %p539
    %p541 = scmp.ne.s32.totalorder %s533, %s536
    %p542 = scmp.eq.s32.totalorder %s31, 0
    %p543 = por %p541, %p542
    %p544 = scmp.ne.s32.totalorder %s533, %s536
    %p545 = scmp.eq.s32.totalorder %s36, 1
    %p546 = por %p544, %p545
    %p547 = scmp.ne.s32.totalorder %s536, %s537
    %p548 = scmp.eq.s32.totalorder %s36, 0
    %p549 = por %p547, %p548
    %p550 = scmp.ne.s32.totalorder %s536, %s537
    %p551 = scmp.eq.s32.totalorder %s37, 1
    %p552 = por %p550, %p551
    %p554 = scmp.ne.s32.totalorder %s537, %s553
    %p555 = scmp.eq.s32.totalorder %s37, 0
    %p556 = por %p554, %p555
    %s557 = ssub.s32 %s31, %s38
    %p558 = scmp.eq.s32.totalorder %s557, 0
    %s560 = sadd.s32 %s559, 1
    %s561 = scalar_select %p558, %s559, %s560
    %p564 = pneg %p558
    %p565 = scmp.eq.s32.totalorder %s31, 1
    %p566 = por %p564, %p565
    %p567 = scmp.ne.s32.totalorder %s559, %s562
    %p568 = scmp.eq.s32.totalorder %s31, 0
    %p569 = por %p567, %p568
    %p570 = scmp.ne.s32.totalorder %s559, %s562
    %p571 = scmp.eq.s32.totalorder %s36, 1
    %p572 = por %p570, %p571
    %p573 = scmp.ne.s32.totalorder %s562, %s563
    %p574 = scmp.eq.s32.totalorder %s36, 0
    %p575 = por %p573, %p574
    %p576 = scmp.ne.s32.totalorder %s562, %s563
    %p577 = scmp.eq.s32.totalorder %s37, 1
    %p578 = por %p576, %p577
    %p580 = scmp.ne.s32.totalorder %s563, %s579
    %p581 = scmp.eq.s32.totalorder %s37, 0
    %p582 = por %p580, %p581
    %s583 = ssub.s32 %s31, %s38
    %p584 = scmp.eq.s32.totalorder %s583, 0
    %s586 = sadd.s32 %s585, 1
    %s587 = scalar_select %p584, %s585, %s586
    %p590 = pneg %p584
    %p591 = scmp.eq.s32.totalorder %s31, 1
    %p592 = por %p590, %p591
    %p593 = scmp.ne.s32.totalorder %s585, %s588
    %p594 = scmp.eq.s32.totalorder %s31, 0
    %p595 = por %p593, %p594
    %p596 = scmp.ne.s32.totalorder %s585, %s588
    %p597 = scmp.eq.s32.totalorder %s36, 1
    %p598 = por %p596, %p597
    %p599 = scmp.ne.s32.totalorder %s588, %s589
    %p600 = scmp.eq.s32.totalorder %s36, 0
    %p601 = por %p599, %p600
    %p602 = scmp.ne.s32.totalorder %s588, %s589
    %p603 = scmp.eq.s32.totalorder %s37, 1
    %p604 = por %p602, %p603
    %p606 = scmp.ne.s32.totalorder %s589, %s605
    %p607 = scmp.eq.s32.totalorder %s37, 0
    %p608 = por %p606, %p607
    %p609 = scmp.le.s32.totalorder 1, %s31
    %p610 = scmp.lt.s32.totalorder %s31, 3
    %p611 = pnand %p609, %p610
    %p612 = pneg %p611
    // Predicated region
    $region9: #{_lambda_.9} parent=5 // pred_check
      _
    $region10: #{_lambda_.9} parent=5 // pred_check_branch
      %614 = sbr.rel (%p611) target = $region12
    $region11: #{_lambda_.9} parent=5 // pred_region
      %s615 = ssub.s32 %s31, 1
      // Predicated region
      $region13: #{_lambda_.9} parent=11 // pred_check
        %p616 = pneg %p208
      $region14: #{_lambda_.9} parent=11 // pred_check_branch
        %618 = sbr.rel (%p616) target = $region16
      $region15: #{_lambda_.9} parent=11 // pred_region
        _
      $region16: #{_lambda_.9} parent=11 // pred_fallthru
        _
      // Predicated region
      $region17: #{_lambda_.9} parent=11 // pred_check
        %p619 = pneg %p229
      $region18: #{_lambda_.9} parent=11 // pred_check_branch
        %621 = sbr.rel (%p619) target = $region20
      $region19: #{_lambda_.9} parent=11 // pred_region
        _
      $region20: #{_lambda_.9} parent=11 // pred_fallthru
        _
      // Predicated region
      $region21: #{_lambda_.9} parent=11 // pred_check
        %p622 = pneg %p250
      $region22: #{_lambda_.9} parent=11 // pred_check_branch
        %624 = sbr.rel (%p622) target = $region24
      $region23: #{_lambda_.9} parent=11 // pred_region
        _
      $region24: #{_lambda_.9} parent=11 // pred_fallthru
        _
      // Predicated region
      $region25: #{_lambda_.9} parent=11 // pred_check
        %p625 = pneg %p271
      $region26: #{_lambda_.9} parent=11 // pred_check_branch
        %627 = sbr.rel (%p625) target = $region28
      $region27: #{_lambda_.9} parent=11 // pred_region
        _
      $region28: #{_lambda_.9} parent=11 // pred_fallthru
        _
      // Predicated region
      $region29: #{_lambda_.9} parent=11 // pred_check
        %p628 = pneg %p292
      $region30: #{_lambda_.9} parent=11 // pred_check_branch
        %630 = sbr.rel (%p628) target = $region32
      $region31: #{_lambda_.9} parent=11 // pred_region
        _
      $region32: #{_lambda_.9} parent=11 // pred_fallthru
        _
      // Predicated region
      $region33: #{_lambda_.9} parent=11 // pred_check
        %p631 = pneg %p313
      $region34: #{_lambda_.9} parent=11 // pred_check_branch
        %633 = sbr.rel (%p631) target = $region36
      $region35: #{_lambda_.9} parent=11 // pred_region
        _
      $region36: #{_lambda_.9} parent=11 // pred_fallthru
        _
      // Predicated region
      $region37: #{_lambda_.9} parent=11 // pred_check
        %p634 = pneg %p334
      $region38: #{_lambda_.9} parent=11 // pred_check_branch
        %636 = sbr.rel (%p634) target = $region40
      $region39: #{_lambda_.9} parent=11 // pred_region
        _
      $region40: #{_lambda_.9} parent=11 // pred_fallthru
        _
      // Predicated region
      $region41: #{_lambda_.9} parent=11 // pred_check
        %p637 = pneg %p355
      $region42: #{_lambda_.9} parent=11 // pred_check_branch
        %639 = sbr.rel (%p637) target = $region44
      $region43: #{_lambda_.9} parent=11 // pred_region
        _
      $region44: #{_lambda_.9} parent=11 // pred_fallthru
        _
      // Predicated region
      $region45: #{_lambda_.9} parent=11 // pred_check
        %p640 = pneg %p376
      $region46: #{_lambda_.9} parent=11 // pred_check_branch
        %642 = sbr.rel (%p640) target = $region48
      $region47: #{_lambda_.9} parent=11 // pred_region
        _
      $region48: #{_lambda_.9} parent=11 // pred_fallthru
        _
      // Predicated region
      $region49: #{_lambda_.9} parent=11 // pred_check
        %p643 = pneg %p397
      $region50: #{_lambda_.9} parent=11 // pred_check_branch
        %645 = sbr.rel (%p643) target = $region52
      $region51: #{_lambda_.9} parent=11 // pred_region
        _
      $region52: #{_lambda_.9} parent=11 // pred_fallthru
        _
      // Predicated region
      $region53: #{_lambda_.9} parent=11 // pred_check
        %p646 = pneg %p418
      $region54: #{_lambda_.9} parent=11 // pred_check_branch
        %648 = sbr.rel (%p646) target = $region56
      $region55: #{_lambda_.9} parent=11 // pred_region
        _
      $region56: #{_lambda_.9} parent=11 // pred_fallthru
        _
      // Predicated region
      $region57: #{_lambda_.9} parent=11 // pred_check
        %p649 = pneg %p439
      $region58: #{_lambda_.9} parent=11 // pred_check_branch
        %651 = sbr.rel (%p649) target = $region60
      $region59: #{_lambda_.9} parent=11 // pred_region
        _
      $region60: #{_lambda_.9} parent=11 // pred_fallthru
        _
      // Predicated region
      $region61: #{_lambda_.9} parent=11 // pred_check
        %p652 = pneg %p460
      $region62: #{_lambda_.9} parent=11 // pred_check_branch
        %654 = sbr.rel (%p652) target = $region64
      $region63: #{_lambda_.9} parent=11 // pred_region
        _
      $region64: #{_lambda_.9} parent=11 // pred_fallthru
        _
      // Predicated region
      $region65: #{_lambda_.9} parent=11 // pred_check
        %p655 = pneg %p481
      $region66: #{_lambda_.9} parent=11 // pred_check_branch
        %657 = sbr.rel (%p655) target = $region68
      $region67: #{_lambda_.9} parent=11 // pred_region
        _
      $region68: #{_lambda_.9} parent=11 // pred_fallthru
        _
      // Predicated region
      $region69: #{_lambda_.9} parent=11 // pred_check
        %p658 = pneg %p502
      $region70: #{_lambda_.9} parent=11 // pred_check_branch
        %660 = sbr.rel (%p658) target = $region72
      $region71: #{_lambda_.9} parent=11 // pred_region
        _
      $region72: #{_lambda_.9} parent=11 // pred_fallthru
        _
      // Predicated region
      $region73: #{_lambda_.9} parent=11 // pred_check
        %p661 = pneg %p523
      $region74: #{_lambda_.9} parent=11 // pred_check_branch
        %663 = sbr.rel (%p661) target = $region76
      $region75: #{_lambda_.9} parent=11 // pred_region
        _
      $region76: #{_lambda_.9} parent=11 // pred_fallthru
        _
    $region12: #{_lambda_.9} parent=5 // pred_fallthru
      _
    %p664 = scmp.lt.s32.totalorder %s31, 2
    // Predicated region
    $region77: #{_lambda_.9} parent=5 // pred_check
      %p665 = pneg %p664
    $region78: #{_lambda_.9} parent=5 // pred_check_branch
      %667 = sbr.rel (%p665) target = $region80
    $region79: #{_lambda_.9} parent=5 // pred_region
      // Predicated region
      $region81: #{_lambda_.9} parent=79 // pred_check
        %p668 = pneg %p51
      $region82: #{_lambda_.9} parent=79 // pred_check_branch
        %670 = sbr.rel (%p668) target = $region84
      $region83: #{_lambda_.9} parent=79 // pred_region
        %s671 = smul.u32 8, %s31
        %p672 = scmp.lt.s32.totalorder %s671, 15
        %s673 = scalar_select %p672, %s671, 15
        %s674 = smul.addr %s673, 8
        %s675 = scalar_lea.vmem %s0, %s674
        %s676 = smul.u32 8, %s31
      $region84: #{_lambda_.9} parent=79 // pred_fallthru
        _
      // Predicated region
      $region85: #{_lambda_.9} parent=79 // pred_check
        %p677 = pneg %p77
      $region86: #{_lambda_.9} parent=79 // pred_check_branch
        %679 = sbr.rel (%p677) target = $region88
      $region87: #{_lambda_.9} parent=79 // pred_region
        %s680 = smul.u32 8, %s31
        %p681 = scmp.lt.s32.totalorder %s680, 15
        %s682 = scalar_select %p681, %s680, 15
        %s683 = smul.addr %s682, 8
        %s684 = scalar_lea.vmem %s1, %s683
        %s685 = smul.u32 8, %s31
      $region88: #{_lambda_.9} parent=79 // pred_fallthru
        _
      // Predicated region
      $region89: #{_lambda_.9} parent=79 // pred_check
        %p686 = pneg %p103
      $region90: #{_lambda_.9} parent=79 // pred_check_branch
        %688 = sbr.rel (%p686) target = $region92
      $region91: #{_lambda_.9} parent=79 // pred_region
        %s689 = smul.u32 8, %s31
        %p690 = scmp.lt.s32.totalorder %s689, 15
        %s691 = scalar_select %p690, %s689, 15
        %s692 = smul.addr %s691, 8
        %s693 = scalar_lea.vmem %s2, %s692
        %s694 = smul.u32 8, %s31
      $region92: #{_lambda_.9} parent=79 // pred_fallthru
        _
      // Predicated region
      $region93: #{_lambda_.9} parent=79 // pred_check
        %p695 = pneg %p129
      $region94: #{_lambda_.9} parent=79 // pred_check_branch
        %697 = sbr.rel (%p695) target = $region96
      $region95: #{_lambda_.9} parent=79 // pred_region
        %s698 = smul.u32 8, %s31
        %p699 = scmp.lt.s32.totalorder %s698, 15
        %s700 = scalar_select %p699, %s698, 15
        %s701 = smul.addr %s700, 8
        %s702 = scalar_lea.vmem %s3, %s701
        %s703 = smul.u32 8, %s31
      $region96: #{_lambda_.9} parent=79 // pred_fallthru
        _
      // Predicated region
      $region97: #{_lambda_.9} parent=79 // pred_check
        %p704 = pneg %p155
      $region98: #{_lambda_.9} parent=79 // pred_check_branch
        %706 = sbr.rel (%p704) target = $region100
      $region99: #{_lambda_.9} parent=79 // pred_region
        %s707 = smul.u32 8, %s31
        %p708 = scmp.lt.s32.totalorder %s707, 15
        %s709 = scalar_select %p708, %s707, 15
        %s710 = smul.addr %s709, 8
        %s711 = scalar_lea.vmem %s4, %s710
        %s712 = smul.u32 8, %s31
      $region100: #{_lambda_.9} parent=79 // pred_fallthru
        _
      // Predicated region
      $region101: #{_lambda_.9} parent=79 // pred_check
        %p713 = pneg %p181
      $region102: #{_lambda_.9} parent=79 // pred_check_branch
        %715 = sbr.rel (%p713) target = $region104
      $region103: #{_lambda_.9} parent=79 // pred_region
        %s716 = smul.u32 8, %s31
        %p717 = scmp.lt.s32.totalorder %s716, 15
        %s718 = scalar_select %p717, %s716, 15
        %s719 = smul.addr %s718, 8
        %s720 = scalar_lea.vmem %s5, %s719
        %s721 = smul.u32 8, %s31
      $region104: #{_lambda_.9} parent=79 // pred_fallthru
        _
    $region80: #{_lambda_.9} parent=5 // pred_fallthru
      _
    %p722 = scmp.le.s32.totalorder 1, %s31
    %p723 = scmp.lt.s32.totalorder %s31, 3
    %p724 = pnand %p722, %p723
    %p725 = pneg %p724
    // Predicated region
    $region105: #{_lambda_.9} parent=5 // pred_check
      _
    $region106: #{_lambda_.9} parent=5 // pred_check_branch
      %727 = sbr.rel (%p724) target = $region108
    $region107: #{_lambda_.9} parent=5 // pred_region
      %s728 = ssub.s32 %s31, 1
      %s729 = smul.u32 8, %s36
      %p730 = scmp.lt.s32.totalorder %s729, 15
      %s731 = scalar_select %p730, %s729, 15
      %s732 = smul.addr %s731, 8
      %s733 = scalar_lea.vmem %s0, %s732
      %p734 = pneg %p57
      %p735 = pneg %p54
      %s736 = smul.u32 8, %s36
      %p737 = scmp.lt.s32.totalorder %s736, 15
      %s738 = scalar_select %p737, %s736, 15
      %s739 = smul.addr %s738, 8
      %s740 = scalar_lea.vmem %s1, %s739
      %p741 = pneg %p83
      %p742 = pneg %p80
      %s743 = smul.u32 8, %s36
      %p744 = scmp.lt.s32.totalorder %s743, 15
      %s745 = scalar_select %p744, %s743, 15
      %s746 = smul.addr %s745, 8
      %s747 = scalar_lea.vmem %s2, %s746
      %p748 = pneg %p109
      %p749 = pneg %p106
      %s750 = smul.u32 8, %s36
      %p751 = scmp.lt.s32.totalorder %s750, 15
      %s752 = scalar_select %p751, %s750, 15
      %s753 = smul.addr %s752, 8
      %s754 = scalar_lea.vmem %s3, %s753
      %p755 = pneg %p135
      %p756 = pneg %p132
      %s757 = smul.u32 8, %s36
      %p758 = scmp.lt.s32.totalorder %s757, 15
      %s759 = scalar_select %p758, %s757, 15
      %s760 = smul.addr %s759, 8
      %s761 = scalar_lea.vmem %s4, %s760
      %p762 = pneg %p161
      %p763 = pneg %p158
      %s764 = smul.u32 8, %s36
      %p765 = scmp.lt.s32.totalorder %s764, 15
      %s766 = scalar_select %p765, %s764, 15
      %s767 = smul.addr %s766, 8
      %s768 = scalar_lea.vmem %s5, %s767
      %p769 = pneg %p187
      %p770 = pneg %p184
      %p771 = pneg %p208
      %p772 = pneg %p205
      %p773 = pneg %p229
      %p774 = pneg %p226
      %p775 = pneg %p250
      %p776 = pneg %p247
      %p777 = pneg %p271
      %p778 = pneg %p268
      %p779 = pneg %p292
      %p780 = pneg %p289
      %p781 = pneg %p313
      %p782 = pneg %p310
      %p783 = pneg %p334
      %p784 = pneg %p331
      %p785 = pneg %p355
      %p786 = pneg %p352
      %p787 = pneg %p376
      %p788 = pneg %p373
      %p789 = pneg %p397
      %p790 = pneg %p394
      %p791 = pneg %p418
      %p792 = pneg %p415
      %p793 = pneg %p439
      %p794 = pneg %p436
      %p795 = pneg %p460
      %p796 = pneg %p457
      %p797 = pneg %p481
      %p798 = pneg %p478
      %p799 = pneg %p502
      %p800 = pneg %p499
      %p801 = pneg %p523
      %p802 = pneg %p520
      %p803 = pneg %p549
      %p804 = pneg %p546
      %s805 = smul.u32 8, %s36
      %p806 = scmp.lt.s32.totalorder %s805, 15
      %s807 = scalar_select %p806, %s805, 15
      %s808 = smul.addr %s807, 8
      %s809 = scalar_lea.vmem %s22, %s808
      %p810 = pneg %p575
      %p811 = pneg %p572
      %s812 = smul.u32 8, %s36
      %p813 = scmp.lt.s32.totalorder %s812, 15
      %s814 = scalar_select %p813, %s812, 15
      %s815 = smul.addr %s814, 8
      %s816 = scalar_lea.vmem %s23, %s815
      %p817 = pneg %p601
      %p818 = pneg %p598
      %s819 = smul.u32 8, %s36
      %p820 = scmp.lt.s32.totalorder %s819, 15
      %s821 = scalar_select %p820, %s819, 15
      %s822 = smul.addr %s821, 8
      %s823 = scalar_lea.vmem %s24, %s822
      %s824 = smul.u32 8, %s36
      %p825 = scmp.lt.s32.totalorder %s824, 15
      %s826 = scalar_select %p825, %s824, 15
      %s827 = smul.addr %s826, 8
      %s828 = scalar_lea.vmem %s0, %s827
      %s829 = smul.u32 8, %s36
      %s830 = smul.u32 8, %s36
      %p831 = scmp.lt.s32.totalorder %s830, 15
      %s832 = scalar_select %p831, %s830, 15
      %s833 = smul.addr %s832, 8
      %s834 = scalar_lea.vmem %s1, %s833
      %s835 = smul.u32 8, %s36
      %s836 = smul.u32 8, %s36
      %p837 = scmp.lt.s32.totalorder %s836, 15
      %s838 = scalar_select %p837, %s836, 15
      %s839 = smul.addr %s838, 8
      %s840 = scalar_lea.vmem %s2, %s839
      %s841 = smul.u32 8, %s36
      %s842 = smul.u32 8, %s36
      %p843 = scmp.lt.s32.totalorder %s842, 15
      %s844 = scalar_select %p843, %s842, 15
      %s845 = smul.addr %s844, 8
      %s846 = scalar_lea.vmem %s3, %s845
      %s847 = smul.u32 8, %s36
      %s848 = smul.u32 8, %s36
      %p849 = scmp.lt.s32.totalorder %s848, 15
      %s850 = scalar_select %p849, %s848, 15
      %s851 = smul.addr %s850, 8
      %s852 = scalar_lea.vmem %s4, %s851
      %s853 = smul.u32 8, %s36
      %s854 = smul.u32 8, %s36
      %p855 = scmp.lt.s32.totalorder %s854, 15
      %s856 = scalar_select %p855, %s854, 15
      %s857 = smul.addr %s856, 8
      %s858 = scalar_lea.vmem %s5, %s857
      %s859 = smul.u32 8, %s36
      %s860 = smul.u32 8, %s36
      %p861 = scmp.lt.s32.totalorder %s860, 15
      %s862 = scalar_select %p861, %s860, 15
      %s863 = smul.addr %s862, 8
      %s864 = scalar_lea.vmem %s22, %s863
      %s865 = smul.u32 8, %s36
      %s866 = smul.u32 8, %s36
      %p867 = scmp.lt.s32.totalorder %s866, 15
      %s868 = scalar_select %p867, %s866, 15
      %s869 = smul.addr %s868, 8
      %s870 = scalar_lea.vmem %s23, %s869
      %s871 = smul.u32 8, %s36
      %s872 = smul.u32 8, %s36
      %p873 = scmp.lt.s32.totalorder %s872, 15
      %s874 = scalar_select %p873, %s872, 15
      %s875 = smul.addr %s874, 8
      %s876 = scalar_lea.vmem %s24, %s875
      %s877 = smul.u32 8, %s36
      %v878 = vld [vmem:[%s828] sm:$0xff]
      %v879 = vld [vmem:[%s828 + $0x8] sm:$0xff]
      %v880 = vld [vmem:[%s828 + $0x10] sm:$0xff]
      %v881 = vld [vmem:[%s828 + $0x18] sm:$0xff]
      %v882 = vld [vmem:[%s828 + $0x20] sm:$0xff]
      %v883 = vld [vmem:[%s828 + $0x28] sm:$0xff]
      %v884 = vld [vmem:[%s828 + $0x30] sm:$0xff]
      %v885 = vld [vmem:[%s828 + $0x38] sm:$0xff]
      %v886 = vld [vmem:[%s834] sm:$0xff]
      %v887 = vld [vmem:[%s834 + $0x8] sm:$0xff]
      %v888 = vld [vmem:[%s834 + $0x10] sm:$0xff]
      %v889 = vld [vmem:[%s834 + $0x18] sm:$0xff]
      %v890 = vld [vmem:[%s834 + $0x20] sm:$0xff]
      %v891 = vld [vmem:[%s834 + $0x28] sm:$0xff]
      %v892 = vld [vmem:[%s834 + $0x30] sm:$0xff]
      %v893 = vld [vmem:[%s834 + $0x38] sm:$0xff]
      %v894 = vld [vmem:[%s840] sm:$0xff]
      %v895 = vld [vmem:[%s840 + $0x8] sm:$0xff]
      %v896 = vld [vmem:[%s840 + $0x10] sm:$0xff]
      %v897 = vld [vmem:[%s840 + $0x18] sm:$0xff]
      %v898 = vld [vmem:[%s840 + $0x20] sm:$0xff]
      %v899 = vld [vmem:[%s840 + $0x28] sm:$0xff]
      %v900 = vld [vmem:[%s840 + $0x30] sm:$0xff]
      %v901 = vld [vmem:[%s840 + $0x38] sm:$0xff]
      %v902 = vld [vmem:[%s846] sm:$0xff]
      %v903 = vld [vmem:[%s846 + $0x8] sm:$0xff]
      %v904 = vld [vmem:[%s846 + $0x10] sm:$0xff]
      %v905 = vld [vmem:[%s846 + $0x18] sm:$0xff]
      %v906 = vld [vmem:[%s846 + $0x20] sm:$0xff]
      %v907 = vld [vmem:[%s846 + $0x28] sm:$0xff]
      %v908 = vld [vmem:[%s846 + $0x30] sm:$0xff]
      %v909 = vld [vmem:[%s846 + $0x38] sm:$0xff]
      %v910 = vld [vmem:[%s852] sm:$0xff]
      %v911 = vld [vmem:[%s852 + $0x8] sm:$0xff]
      %v912 = vld [vmem:[%s852 + $0x10] sm:$0xff]
      %v913 = vld [vmem:[%s852 + $0x18] sm:$0xff]
      %v914 = vld [vmem:[%s852 + $0x20] sm:$0xff]
      %v915 = vld [vmem:[%s852 + $0x28] sm:$0xff]
      %v916 = vld [vmem:[%s852 + $0x30] sm:$0xff]
      %v917 = vld [vmem:[%s852 + $0x38] sm:$0xff]
      %v918 = vld [vmem:[%s858] sm:$0xff]
      %v919 = vld [vmem:[%s858 + $0x8] sm:$0xff]
      %v920 = vld [vmem:[%s858 + $0x10] sm:$0xff]
      %v921 = vld [vmem:[%s858 + $0x18] sm:$0xff]
      %v922 = vld [vmem:[%s858 + $0x20] sm:$0xff]
      %v923 = vld [vmem:[%s858 + $0x28] sm:$0xff]
      %v924 = vld [vmem:[%s858 + $0x30] sm:$0xff]
      %v925 = vld [vmem:[%s858 + $0x38] sm:$0xff]
      %v926 = vld [vmem:[%s6] sm:$0xff]
      %v927 = vld [vmem:[%s6 + $0x8] sm:$0xff]
      %v928 = vld [vmem:[%s7] sm:$0x1]
      %v929 = vld [vmem:[%s8] sm:$0xff]
      %v930 = vld [vmem:[%s9] sm:$0x1]
      %v931 = vld [vmem:[%s10] sm:$0xff]
      %v932 = vld [vmem:[%s11] sm:$0x1]
      %v933 = vld [vmem:[%s12] sm:$0xf]
      %v934 = vld [vmem:[%s13] sm:$0x1]
      %v935 = vld [vmem:[%s14] sm:$0xf]
      %v936 = vld [vmem:[%s15] sm:$0x1]
      %v937 = vld [vmem:[%s16] sm:$0xff]
      %v938 = vld [vmem:[%s17] sm:$0x1]
      %v939 = vld [vmem:[%s18] sm:$0xff]
      %v940 = vld [vmem:[%s19] sm:$0x1]
      %v941 = vld [vmem:[%s20] sm:$0xff]
      %v942 = vld [vmem:[%s20 + $0x8] sm:$0xff]
      %v943 = vld [vmem:[%s21] sm:$0x1]
      %v945 = vlaneseq
      %v946 = vshrl.u32 %v945, 7
      %v947 = vsub.s32 0, %v946
      %v948 = vrot.slane %v928, %v947
      %vm950 = vcmask 130048
      %v952 = vsel %vm950, %v878, 0
      %v955 = vsel %vm950, %v879, 0
      %v958 = vsel %vm950, %v880, 0
      %v961 = vsel %vm950, %v881, 0
      %v964 = vsel %vm950, %v882, 0
      %v967 = vsel %vm950, %v883, 0
      %v970 = vsel %vm950, %v884, 0
      %v973 = vsel %vm950, %v885, 0
      %975 = vmatprep.subr.mxu0 0.0
      %976 = vmatpush1.msra.mxu0 0.0
      %977 = vmatprep.subr.mxu0 0.0
      %978 = vmatpush1.msra.mxu0 0.0
      %979 = vmatprep.subr.mxu0 0.0
      %980 = vmatpush1.msra.mxu0 0.0
      %981 = vmatprep.subr.mxu0 0.0
      %982 = vmatpush1.msra.mxu0 0.0
      %983 = vmatprep.subr.mxu0 0.0
      %984 = vmatpush1.msra.mxu0 0.0
      %985 = vmatprep.subr.mxu0 0.0
      %986 = vmatpush1.msra.mxu0 0.0
      %987 = vmatprep.subr.mxu0 0.0
      %988 = vmatpush1.msra.mxu0 0.0
      %989 = vmatprep.subr.mxu0 0.0
      %990 = vmatpush1.msra.mxu0 0.0
      %991 = vmatprep.subr.mxu0 0.0
      %992 = vmatpush1.msra.mxu0 0.0
      %993 = vmatprep.subr.mxu0 0.0
      %994 = vmatpush1.msra.mxu0 0.0
      %995 = vmatprep.subr.mxu0 0.0
      %996 = vmatpush1.msra.mxu0 0.0
      %997 = vmatprep.subr.mxu0 0.0
      %998 = vmatpush1.msra.mxu0 0.0
      %999 = vmatprep.subr.mxu0 0.0
      %1000 = vmatpush1.msra.mxu0 0.0
      %1001 = vmatprep.subr.mxu0 0.0
      %1002 = vmatpush1.msra.mxu0 0.0
      %1003 = vmatprep.subr.mxu0 0.0
      %1004 = vmatpush1.msra.mxu0 %v927
      %1005 = vmatprep.subr.mxu0 0.0
      %1006 = vmatpush1.msra.mxu0 %v926
      %1007 = vmatprep.subr.mxu0 0.0
      %1008 = vmatpush2.msra.mxu0 0.0
      %1009 = vmatprep.subr.mxu0 0.0
      %1010 = vmatpush2.msra.mxu0 0.0
      %1011 = vmatprep.subr.mxu0 0.0
      %1012 = vmatpush2.msra.mxu0 0.0
      %1013 = vmatprep.subr.mxu0 0.0
      %1014 = vmatpush2.msra.mxu0 0.0
      %1015 = vmatprep.subr.mxu0 0.0
      %1016 = vmatpush2.msra.mxu0 0.0
      %1017 = vmatprep.subr.mxu0 0.0
      %1018 = vmatpush2.msra.mxu0 0.0
      %1019 = vmatprep.subr.mxu0 0.0
      %1020 = vmatpush2.msra.mxu0 0.0
      %1021 = vmatprep.subr.mxu0 0.0
      %1022 = vmatpush2.msra.mxu0 0.0
      %1023 = vmatprep.subr.mxu0 0.0
      %1024 = vmatpush2.msra.mxu0 0.0
      %1025 = vmatprep.subr.mxu0 0.0
      %1026 = vmatpush2.msra.mxu0 0.0
      %1027 = vmatprep.subr.mxu0 0.0
      %1028 = vmatpush2.msra.mxu0 0.0
      %1029 = vmatprep.subr.mxu0 0.0
      %1030 = vmatpush2.msra.mxu0 0.0
      %1031 = vmatprep.subr.mxu0 0.0
      %1032 = vmatpush2.msra.mxu0 0.0
      %1033 = vmatprep.subr.mxu0 0.0
      %1034 = vmatpush2.msra.mxu0 0.0
      %1035 = vmatprep.subr.mxu0 0.0
      %1036 = vmatpush2.msra.mxu0 0.0
      %1037 = vmatprep.subr.mxu0 0.0
      %1038 = vmatpush2.msra.mxu0 0.0
      %1039 = vmatprep.mubr.f32.mxu0 0.0
      %1040 = vmatmul.mubr.f32.gmra.mxu0 %v952
      %v1041 = vpop.f32.mrf.mxu0
      %v1042 = vadd.f32 %v948, %v1041
      %v1043 = vpop.f32.mrf.mxu0
      %1044 = vmatprep.mubr.f32.mxu0 0.0
      %1045 = vmatmul.mubr.f32.gmra.mxu0 %v955
      %v1046 = vpop.f32.mrf.mxu0
      %v1047 = vadd.f32 %v948, %v1046
      %v1048 = vpop.f32.mrf.mxu0
      %1049 = vmatprep.mubr.f32.mxu0 0.0
      %1050 = vmatmul.mubr.f32.gmra.mxu0 %v958
      %v1051 = vpop.f32.mrf.mxu0
      %v1052 = vadd.f32 %v948, %v1051
      %v1053 = vpop.f32.mrf.mxu0
      %1054 = vmatprep.mubr.f32.mxu0 0.0
      %1055 = vmatmul.mubr.f32.gmra.mxu0 %v961
      %v1056 = vpop.f32.mrf.mxu0
      %v1057 = vadd.f32 %v948, %v1056
      %v1058 = vpop.f32.mrf.mxu0
      %1059 = vmatprep.mubr.f32.mxu0 0.0
      %1060 = vmatmul.mubr.f32.gmra.mxu0 %v964
      %v1061 = vpop.f32.mrf.mxu0
      %v1062 = vadd.f32 %v948, %v1061
      %v1063 = vpop.f32.mrf.mxu0
      %1064 = vmatprep.mubr.f32.mxu0 0.0
      %1065 = vmatmul.mubr.f32.gmra.mxu0 %v967
      %v1066 = vpop.f32.mrf.mxu0
      %v1067 = vadd.f32 %v948, %v1066
      %v1068 = vpop.f32.mrf.mxu0
      %1069 = vmatprep.mubr.f32.mxu0 0.0
      %1070 = vmatmul.mubr.f32.gmra.mxu0 %v970
      %v1071 = vpop.f32.mrf.mxu0
      %v1072 = vadd.f32 %v948, %v1071
      %v1073 = vpop.f32.mrf.mxu0
      %1074 = vmatprep.mubr.f32.mxu0 0.0
      %1075 = vmatmul.mubr.f32.gmra.mxu0 %v973
      %v1076 = vpop.f32.mrf.mxu0
      %v1077 = vadd.f32 %v948, %v1076
      %v1078 = vpop.f32.mrf.mxu0
      %1079 = vdwg.mxu0
      %v1080 = vmul.f32 %v1042, 0.70710677
      %v1081 = vmul.f32 %v1047, 0.70710677
      %v1082 = vmul.f32 %v1052, 0.70710677
      %v1083 = vmul.f32 %v1057, 0.70710677
      %v1084 = vmul.f32 %v1062, 0.70710677
      %v1085 = vmul.f32 %v1067, 0.70710677
      %v1086 = vmul.f32 %v1072, 0.70710677
      %v1087 = vmul.f32 %v1077, 0.70710677
      %v1088 = vand.u32 2147483647, %v1080
      %v1089 = vand.u32 2147483647, %v1081
      %v1090 = vand.u32 2147483647, %v1082
      %v1091 = vand.u32 2147483647, %v1083
      %v1092 = vand.u32 2147483647, %v1084
      %v1093 = vand.u32 2147483647, %v1085
      %v1094 = vand.u32 2147483647, %v1086
      %v1095 = vand.u32 2147483647, %v1087
      %v1096 = vmul.f32 %v1088, 0.3275911
      %v1097 = vmul.f32 %v1089, 0.3275911
      %v1098 = vmul.f32 %v1090, 0.3275911
      %v1099 = vmul.f32 %v1091, 0.3275911
      %v1100 = vmul.f32 %v1092, 0.3275911
      %v1101 = vmul.f32 %v1093, 0.3275911
      %v1102 = vmul.f32 %v1094, 0.3275911
      %v1103 = vmul.f32 %v1095, 0.3275911
      %v1104 = vadd.f32 %v1096, 1.0
      %v1105 = vadd.f32 %v1097, 1.0
      %v1106 = vadd.f32 %v1098, 1.0
      %v1107 = vadd.f32 %v1099, 1.0
      %v1108 = vadd.f32 %v1100, 1.0
      %v1109 = vadd.f32 %v1101, 1.0
      %v1110 = vadd.f32 %v1102, 1.0
      %v1111 = vadd.f32 %v1103, 1.0
      %v1112 = vrcp.pop %v1104
      %v1113 = vmul.f32 1.0, %v1112
      %v1114 = vrcp.pop %v1105
      %v1115 = vmul.f32 1.0, %v1114
      %v1116 = vrcp.pop %v1106
      %v1117 = vmul.f32 1.0, %v1116
      %v1118 = vrcp.pop %v1107
      %v1119 = vmul.f32 1.0, %v1118
      %v1120 = vrcp.pop %v1108
      %v1121 = vmul.f32 1.0, %v1120
      %v1122 = vrcp.pop %v1109
      %v1123 = vmul.f32 1.0, %v1122
      %v1124 = vrcp.pop %v1110
      %v1125 = vmul.f32 1.0, %v1124
      %v1126 = vrcp.pop %v1111
      %v1127 = vmul.f32 1.0, %v1126
      %v1128 = vmul.f32 %v1113, 1.0614054
      %v1129 = vmul.f32 %v1115, 1.0614054
      %v1130 = vmul.f32 %v1117, 1.0614054
      %v1131 = vmul.f32 %v1119, 1.0614054
      %v1132 = vmul.f32 %v1121, 1.0614054
      %v1133 = vmul.f32 %v1123, 1.0614054
      %v1134 = vmul.f32 %v1125, 1.0614054
      %v1135 = vmul.f32 %v1127, 1.0614054
      %v1136 = vadd.f32 %v1128, -1.4531521
      %v1137 = vadd.f32 %v1129, -1.4531521
      %v1138 = vadd.f32 %v1130, -1.4531521
      %v1139 = vadd.f32 %v1131, -1.4531521
      %v1140 = vadd.f32 %v1132, -1.4531521
      %v1141 = vadd.f32 %v1133, -1.4531521
      %v1142 = vadd.f32 %v1134, -1.4531521
      %v1143 = vadd.f32 %v1135, -1.4531521
      %v1144 = vmul.f32 %v1113, %v1136
      %v1145 = vmul.f32 %v1115, %v1137
      %v1146 = vmul.f32 %v1117, %v1138
      %v1147 = vmul.f32 %v1119, %v1139
      %v1148 = vmul.f32 %v1121, %v1140
      %v1149 = vmul.f32 %v1123, %v1141
      %v1150 = vmul.f32 %v1125, %v1142
      %v1151 = vmul.f32 %v1127, %v1143
      %v1152 = vadd.f32 %v1144, 1.4214138
      %v1153 = vadd.f32 %v1145, 1.4214138
      %v1154 = vadd.f32 %v1146, 1.4214138
      %v1155 = vadd.f32 %v1147, 1.4214138
      %v1156 = vadd.f32 %v1148, 1.4214138
      %v1157 = vadd.f32 %v1149, 1.4214138
      %v1158 = vadd.f32 %v1150, 1.4214138
      %v1159 = vadd.f32 %v1151, 1.4214138
      %v1160 = vmul.f32 %v1113, %v1152
      %v1161 = vmul.f32 %v1115, %v1153
      %v1162 = vmul.f32 %v1117, %v1154
      %v1163 = vmul.f32 %v1119, %v1155
      %v1164 = vmul.f32 %v1121, %v1156
      %v1165 = vmul.f32 %v1123, %v1157
      %v1166 = vmul.f32 %v1125, %v1158
      %v1167 = vmul.f32 %v1127, %v1159
      %v1168 = vadd.f32 %v1160, -0.28449672
      %v1169 = vadd.f32 %v1161, -0.28449672
      %v1170 = vadd.f32 %v1162, -0.28449672
      %v1171 = vadd.f32 %v1163, -0.28449672
      %v1172 = vadd.f32 %v1164, -0.28449672
      %v1173 = vadd.f32 %v1165, -0.28449672
      %v1174 = vadd.f32 %v1166, -0.28449672
      %v1175 = vadd.f32 %v1167, -0.28449672
      %v1176 = vmul.f32 %v1113, %v1168
      %v1177 = vmul.f32 %v1115, %v1169
      %v1178 = vmul.f32 %v1117, %v1170
      %v1179 = vmul.f32 %v1119, %v1171
      %v1180 = vmul.f32 %v1121, %v1172
      %v1181 = vmul.f32 %v1123, %v1173
      %v1182 = vmul.f32 %v1125, %v1174
      %v1183 = vmul.f32 %v1127, %v1175
      %v1184 = vadd.f32 %v1176, 0.2548296
      %v1185 = vadd.f32 %v1177, 0.2548296
      %v1186 = vadd.f32 %v1178, 0.2548296
      %v1187 = vadd.f32 %v1179, 0.2548296
      %v1188 = vadd.f32 %v1180, 0.2548296
      %v1189 = vadd.f32 %v1181, 0.2548296
      %v1190 = vadd.f32 %v1182, 0.2548296
      %v1191 = vadd.f32 %v1183, 0.2548296
      %v1192 = vmul.f32 %v1113, %v1184
      %v1193 = vmul.f32 %v1115, %v1185
      %v1194 = vmul.f32 %v1117, %v1186
      %v1195 = vmul.f32 %v1119, %v1187
      %v1196 = vmul.f32 %v1121, %v1188
      %v1197 = vmul.f32 %v1123, %v1189
      %v1198 = vmul.f32 %v1125, %v1190
      %v1199 = vmul.f32 %v1127, %v1191
      %v1200 = vsub.f32 0.0, %v1088
      %v1201 = vsub.f32 0.0, %v1089
      %v1202 = vsub.f32 0.0, %v1090
      %v1203 = vsub.f32 0.0, %v1091
      %v1204 = vsub.f32 0.0, %v1092
      %v1205 = vsub.f32 0.0, %v1093
      %v1206 = vsub.f32 0.0, %v1094
      %v1207 = vsub.f32 0.0, %v1095
      %v1208 = vmul.f32 %v1200, %v1088
      %v1209 = vmul.f32 %v1201, %v1089
      %v1210 = vmul.f32 %v1202, %v1090
      %v1211 = vmul.f32 %v1203, %v1091
      %v1212 = vmul.f32 %v1204, %v1092
      %v1213 = vmul.f32 %v1205, %v1093
      %v1214 = vmul.f32 %v1206, %v1094
      %v1215 = vmul.f32 %v1207, %v1095
      %v1216 = vmul.f32 %v1208, 1.442695
      %v1217 = vpow.pop %v1216
      %v1218 = vmul.f32 %v1209, 1.442695
      %v1219 = vpow.pop %v1218
      %v1220 = vmul.f32 %v1210, 1.442695
      %v1221 = vpow.pop %v1220
      %v1222 = vmul.f32 %v1211, 1.442695
      %v1223 = vpow.pop %v1222
      %v1224 = vmul.f32 %v1212, 1.442695
      %v1225 = vpow.pop %v1224
      %v1226 = vmul.f32 %v1213, 1.442695
      %v1227 = vpow.pop %v1226
      %v1228 = vmul.f32 %v1214, 1.442695
      %v1229 = vpow.pop %v1228
      %v1230 = vmul.f32 %v1215, 1.442695
      %v1231 = vpow.pop %v1230
      %v1232 = vmul.f32 %v1192, %v1217
      %v1233 = vmul.f32 %v1193, %v1219
      %v1234 = vmul.f32 %v1194, %v1221
      %v1235 = vmul.f32 %v1195, %v1223
      %v1236 = vmul.f32 %v1196, %v1225
      %v1237 = vmul.f32 %v1197, %v1227
      %v1238 = vmul.f32 %v1198, %v1229
      %v1239 = vmul.f32 %v1199, %v1231
      %v1240 = vsub.f32 1.0, %v1232
      %v1241 = vsub.f32 1.0, %v1233
      %v1242 = vsub.f32 1.0, %v1234
      %v1243 = vsub.f32 1.0, %v1235
      %v1244 = vsub.f32 1.0, %v1236
      %v1245 = vsub.f32 1.0, %v1237
      %v1246 = vsub.f32 1.0, %v1238
      %v1247 = vsub.f32 1.0, %v1239
      %vm1248 = vcmp.ge.f32.partialorder %v1080, 0.0
      %vm1249 = vcmp.ge.f32.partialorder %v1081, 0.0
      %vm1250 = vcmp.ge.f32.partialorder %v1082, 0.0
      %vm1251 = vcmp.ge.f32.partialorder %v1083, 0.0
      %vm1252 = vcmp.ge.f32.partialorder %v1084, 0.0
      %vm1253 = vcmp.ge.f32.partialorder %v1085, 0.0
      %vm1254 = vcmp.ge.f32.partialorder %v1086, 0.0
      %vm1255 = vcmp.ge.f32.partialorder %v1087, 0.0
      %v1256 = vsub.f32 0.0, %v1240
      %v1257 = vsub.f32 0.0, %v1241
      %v1258 = vsub.f32 0.0, %v1242
      %v1259 = vsub.f32 0.0, %v1243
      %v1260 = vsub.f32 0.0, %v1244
      %v1261 = vsub.f32 0.0, %v1245
      %v1262 = vsub.f32 0.0, %v1246
      %v1263 = vsub.f32 0.0, %v1247
      %v1264 = vsel %vm1248, %v1240, %v1256
      %v1265 = vsel %vm1249, %v1241, %v1257
      %v1266 = vsel %vm1250, %v1242, %v1258
      %v1267 = vsel %vm1251, %v1243, %v1259
      %v1268 = vsel %vm1252, %v1244, %v1260
      %v1269 = vsel %vm1253, %v1245, %v1261
      %v1270 = vsel %vm1254, %v1246, %v1262
      %v1271 = vsel %vm1255, %v1247, %v1263
      %v1272 = vmul.f32 %v1042, 0.5
      %v1273 = vmul.f32 %v1047, 0.5
      %v1274 = vmul.f32 %v1052, 0.5
      %v1275 = vmul.f32 %v1057, 0.5
      %v1276 = vmul.f32 %v1062, 0.5
      %v1277 = vmul.f32 %v1067, 0.5
      %v1278 = vmul.f32 %v1072, 0.5
      %v1279 = vmul.f32 %v1077, 0.5
      %v1280 = vadd.f32 %v1264, 1.0
      %v1281 = vadd.f32 %v1265, 1.0
      %v1282 = vadd.f32 %v1266, 1.0
      %v1283 = vadd.f32 %v1267, 1.0
      %v1284 = vadd.f32 %v1268, 1.0
      %v1285 = vadd.f32 %v1269, 1.0
      %v1286 = vadd.f32 %v1270, 1.0
      %v1287 = vadd.f32 %v1271, 1.0
      %v1288 = vmul.f32 %v1272, %v1280
      %v1289 = vmul.f32 %v1273, %v1281
      %v1290 = vmul.f32 %v1274, %v1282
      %v1291 = vmul.f32 %v1275, %v1283
      %v1292 = vmul.f32 %v1276, %v1284
      %v1293 = vmul.f32 %v1277, %v1285
      %v1294 = vmul.f32 %v1278, %v1286
      %v1295 = vmul.f32 %v1279, %v1287
      %v1297 = vlaneseq
      %v1298 = vshrl.u32 %v1297, 7
      %v1299 = vsub.s32 0, %v1298
      %v1300 = vrot.slane %v930, %v1299
      %vm1302 = vcmask 64512
      %v1304 = vsel %vm1302, %v1288, 0
      %v1307 = vsel %vm1302, %v1289, 0
      %v1310 = vsel %vm1302, %v1290, 0
      %v1313 = vsel %vm1302, %v1291, 0
      %v1316 = vsel %vm1302, %v1292, 0
      %v1319 = vsel %vm1302, %v1293, 0
      %v1322 = vsel %vm1302, %v1294, 0
      %v1325 = vsel %vm1302, %v1295, 0
      %1327 = vmatprep.subr.mxu0 0.0
      %1328 = vmatpush1.msra.mxu0 0.0
      %1329 = vmatprep.subr.mxu0 0.0
      %1330 = vmatpush1.msra.mxu0 0.0
      %1331 = vmatprep.subr.mxu0 0.0
      %1332 = vmatpush1.msra.mxu0 0.0
      %1333 = vmatprep.subr.mxu0 0.0
      %1334 = vmatpush1.msra.mxu0 0.0
      %1335 = vmatprep.subr.mxu0 0.0
      %1336 = vmatpush1.msra.mxu0 0.0
      %1337 = vmatprep.subr.mxu0 0.0
      %1338 = vmatpush1.msra.mxu0 0.0
      %1339 = vmatprep.subr.mxu0 0.0
      %1340 = vmatpush1.msra.mxu0 0.0
      %1341 = vmatprep.subr.mxu0 0.0
      %1342 = vmatpush1.msra.mxu0 0.0
      %1343 = vmatprep.subr.mxu0 0.0
      %1344 = vmatpush1.msra.mxu0 0.0
      %1345 = vmatprep.subr.mxu0 0.0
      %1346 = vmatpush1.msra.mxu0 0.0
      %1347 = vmatprep.subr.mxu0 0.0
      %1348 = vmatpush1.msra.mxu0 0.0
      %1349 = vmatprep.subr.mxu0 0.0
      %1350 = vmatpush1.msra.mxu0 0.0
      %1351 = vmatprep.subr.mxu0 0.0
      %1352 = vmatpush1.msra.mxu0 0.0
      %1353 = vmatprep.subr.mxu0 0.0
      %1354 = vmatpush1.msra.mxu0 0.0
      %1355 = vmatprep.subr.mxu0 0.0
      %1356 = vmatpush1.msra.mxu0 0.0
      %1357 = vmatprep.subr.mxu0 0.0
      %1358 = vmatpush1.msra.mxu0 %v929
      %1359 = vmatprep.subr.mxu0 0.0
      %1360 = vmatpush2.msra.mxu0 0.0
      %1361 = vmatprep.subr.mxu0 0.0
      %1362 = vmatpush2.msra.mxu0 0.0
      %1363 = vmatprep.subr.mxu0 0.0
      %1364 = vmatpush2.msra.mxu0 0.0
      %1365 = vmatprep.subr.mxu0 0.0
      %1366 = vmatpush2.msra.mxu0 0.0
      %1367 = vmatprep.subr.mxu0 0.0
      %1368 = vmatpush2.msra.mxu0 0.0
      %1369 = vmatprep.subr.mxu0 0.0
      %1370 = vmatpush2.msra.mxu0 0.0
      %1371 = vmatprep.subr.mxu0 0.0
      %1372 = vmatpush2.msra.mxu0 0.0
      %1373 = vmatprep.subr.mxu0 0.0
      %1374 = vmatpush2.msra.mxu0 0.0
      %1375 = vmatprep.subr.mxu0 0.0
      %1376 = vmatpush2.msra.mxu0 0.0
      %1377 = vmatprep.subr.mxu0 0.0
      %1378 = vmatpush2.msra.mxu0 0.0
      %1379 = vmatprep.subr.mxu0 0.0
      %1380 = vmatpush2.msra.mxu0 0.0
      %1381 = vmatprep.subr.mxu0 0.0
      %1382 = vmatpush2.msra.mxu0 0.0
      %1383 = vmatprep.subr.mxu0 0.0
      %1384 = vmatpush2.msra.mxu0 0.0
      %1385 = vmatprep.subr.mxu0 0.0
      %1386 = vmatpush2.msra.mxu0 0.0
      %1387 = vmatprep.subr.mxu0 0.0
      %1388 = vmatpush2.msra.mxu0 0.0
      %1389 = vmatprep.subr.mxu0 0.0
      %1390 = vmatpush2.msra.mxu0 0.0
      %1391 = vmatprep.mubr.f32.mxu0 0.0
      %1392 = vmatmul.mubr.f32.gmra.mxu0 %v1304
      %v1393 = vpop.f32.mrf.mxu0
      %v1394 = vadd.f32 %v1300, %v1393
      %v1395 = vpop.f32.mrf.mxu0
      %1396 = vmatprep.mubr.f32.mxu0 0.0
      %1397 = vmatmul.mubr.f32.gmra.mxu0 %v1307
      %v1398 = vpop.f32.mrf.mxu0
      %v1399 = vadd.f32 %v1300, %v1398
      %v1400 = vpop.f32.mrf.mxu0
      %1401 = vmatprep.mubr.f32.mxu0 0.0
      %1402 = vmatmul.mubr.f32.gmra.mxu0 %v1310
      %v1403 = vpop.f32.mrf.mxu0
      %v1404 = vadd.f32 %v1300, %v1403
      %v1405 = vpop.f32.mrf.mxu0
      %1406 = vmatprep.mubr.f32.mxu0 0.0
      %1407 = vmatmul.mubr.f32.gmra.mxu0 %v1313
      %v1408 = vpop.f32.mrf.mxu0
      %v1409 = vadd.f32 %v1300, %v1408
      %v1410 = vpop.f32.mrf.mxu0
      %1411 = vmatprep.mubr.f32.mxu0 0.0
      %1412 = vmatmul.mubr.f32.gmra.mxu0 %v1316
      %v1413 = vpop.f32.mrf.mxu0
      %v1414 = vadd.f32 %v1300, %v1413
      %v1415 = vpop.f32.mrf.mxu0
      %1416 = vmatprep.mubr.f32.mxu0 0.0
      %1417 = vmatmul.mubr.f32.gmra.mxu0 %v1319
      %v1418 = vpop.f32.mrf.mxu0
      %v1419 = vadd.f32 %v1300, %v1418
      %v1420 = vpop.f32.mrf.mxu0
      %1421 = vmatprep.mubr.f32.mxu0 0.0
      %1422 = vmatmul.mubr.f32.gmra.mxu0 %v1322
      %v1423 = vpop.f32.mrf.mxu0
      %v1424 = vadd.f32 %v1300, %v1423
      %v1425 = vpop.f32.mrf.mxu0
      %1426 = vmatprep.mubr.f32.mxu0 0.0
      %1427 = vmatmul.mubr.f32.gmra.mxu0 %v1325
      %v1428 = vpop.f32.mrf.mxu0
      %v1429 = vadd.f32 %v1300, %v1428
      %v1430 = vpop.f32.mrf.mxu0
      %1431 = vdwg.mxu0
      %v1432 = vadd.f32 %v886, %v1394
      %v1433 = vadd.f32 %v887, %v1399
      %v1434 = vadd.f32 %v888, %v1404
      %v1435 = vadd.f32 %v889, %v1409
      %v1436 = vadd.f32 %v890, %v1414
      %v1437 = vadd.f32 %v891, %v1419
      %v1438 = vadd.f32 %v892, %v1424
      %v1439 = vadd.f32 %v893, %v1429
      %v1441 = vlaneseq
      %v1442 = vshrl.u32 %v1441, 7
      %v1443 = vsub.s32 0, %v1442
      %v1444 = vrot.slane %v932, %v1443
      %v1447 = vsel %vm1302, %v1432, 0
      %v1450 = vsel %vm1302, %v1433, 0
      %v1453 = vsel %vm1302, %v1434, 0
      %v1456 = vsel %vm1302, %v1435, 0
      %v1459 = vsel %vm1302, %v1436, 0
      %v1462 = vsel %vm1302, %v1437, 0
      %v1465 = vsel %vm1302, %v1438, 0
      %v1468 = vsel %vm1302, %v1439, 0
      %1470 = vmatprep.subr.mxu0 0.0
      %1471 = vmatpush1.msra.mxu0 0.0
      %1472 = vmatprep.subr.mxu0 0.0
      %1473 = vmatpush1.msra.mxu0 0.0
      %1474 = vmatprep.subr.mxu0 0.0
      %1475 = vmatpush1.msra.mxu0 0.0
      %1476 = vmatprep.subr.mxu0 0.0
      %1477 = vmatpush1.msra.mxu0 0.0
      %1478 = vmatprep.subr.mxu0 0.0
      %1479 = vmatpush1.msra.mxu0 0.0
      %1480 = vmatprep.subr.mxu0 0.0
      %1481 = vmatpush1.msra.mxu0 0.0
      %1482 = vmatprep.subr.mxu0 0.0
      %1483 = vmatpush1.msra.mxu0 0.0
      %1484 = vmatprep.subr.mxu0 0.0
      %1485 = vmatpush1.msra.mxu0 0.0
      %1486 = vmatprep.subr.mxu0 0.0
      %1487 = vmatpush1.msra.mxu0 0.0
      %1488 = vmatprep.subr.mxu0 0.0
      %1489 = vmatpush1.msra.mxu0 0.0
      %1490 = vmatprep.subr.mxu0 0.0
      %1491 = vmatpush1.msra.mxu0 0.0
      %1492 = vmatprep.subr.mxu0 0.0
      %1493 = vmatpush1.msra.mxu0 0.0
      %1494 = vmatprep.subr.mxu0 0.0
      %1495 = vmatpush1.msra.mxu0 0.0
      %1496 = vmatprep.subr.mxu0 0.0
      %1497 = vmatpush1.msra.mxu0 0.0
      %1498 = vmatprep.subr.mxu0 0.0
      %1499 = vmatpush1.msra.mxu0 0.0
      %1500 = vmatprep.subr.mxu0 0.0
      %1501 = vmatpush1.msra.mxu0 %v931
      %1502 = vmatprep.subr.mxu0 0.0
      %1503 = vmatpush2.msra.mxu0 0.0
      %1504 = vmatprep.subr.mxu0 0.0
      %1505 = vmatpush2.msra.mxu0 0.0
      %1506 = vmatprep.subr.mxu0 0.0
      %1507 = vmatpush2.msra.mxu0 0.0
      %1508 = vmatprep.subr.mxu0 0.0
      %1509 = vmatpush2.msra.mxu0 0.0
      %1510 = vmatprep.subr.mxu0 0.0
      %1511 = vmatpush2.msra.mxu0 0.0
      %1512 = vmatprep.subr.mxu0 0.0
      %1513 = vmatpush2.msra.mxu0 0.0
      %1514 = vmatprep.subr.mxu0 0.0
      %1515 = vmatpush2.msra.mxu0 0.0
      %1516 = vmatprep.subr.mxu0 0.0
      %1517 = vmatpush2.msra.mxu0 0.0
      %1518 = vmatprep.subr.mxu0 0.0
      %1519 = vmatpush2.msra.mxu0 0.0
      %1520 = vmatprep.subr.mxu0 0.0
      %1521 = vmatpush2.msra.mxu0 0.0
      %1522 = vmatprep.subr.mxu0 0.0
      %1523 = vmatpush2.msra.mxu0 0.0
      %1524 = vmatprep.subr.mxu0 0.0
      %1525 = vmatpush2.msra.mxu0 0.0
      %1526 = vmatprep.subr.mxu0 0.0
      %1527 = vmatpush2.msra.mxu0 0.0
      %1528 = vmatprep.subr.mxu0 0.0
      %1529 = vmatpush2.msra.mxu0 0.0
      %1530 = vmatprep.subr.mxu0 0.0
      %1531 = vmatpush2.msra.mxu0 0.0
      %1532 = vmatprep.subr.mxu0 0.0
      %1533 = vmatpush2.msra.mxu0 0.0
      %1534 = vmatprep.mubr.f32.mxu0 0.0
      %1535 = vmatmul.mubr.f32.gmra.mxu0 %v1447
      %v1536 = vpop.f32.mrf.mxu0
      %v1537 = vadd.f32 %v1444, %v1536
      %v1538 = vpop.f32.mrf.mxu0
      %1539 = vmatprep.mubr.f32.mxu0 0.0
      %1540 = vmatmul.mubr.f32.gmra.mxu0 %v1450
      %v1541 = vpop.f32.mrf.mxu0
      %v1542 = vadd.f32 %v1444, %v1541
      %v1543 = vpop.f32.mrf.mxu0
      %1544 = vmatprep.mubr.f32.mxu0 0.0
      %1545 = vmatmul.mubr.f32.gmra.mxu0 %v1453
      %v1546 = vpop.f32.mrf.mxu0
      %v1547 = vadd.f32 %v1444, %v1546
      %v1548 = vpop.f32.mrf.mxu0
      %1549 = vmatprep.mubr.f32.mxu0 0.0
      %1550 = vmatmul.mubr.f32.gmra.mxu0 %v1456
      %v1551 = vpop.f32.mrf.mxu0
      %v1552 = vadd.f32 %v1444, %v1551
      %v1553 = vpop.f32.mrf.mxu0
      %1554 = vmatprep.mubr.f32.mxu0 0.0
      %1555 = vmatmul.mubr.f32.gmra.mxu0 %v1459
      %v1556 = vpop.f32.mrf.mxu0
      %v1557 = vadd.f32 %v1444, %v1556
      %v1558 = vpop.f32.mrf.mxu0
      %1559 = vmatprep.mubr.f32.mxu0 0.0
      %1560 = vmatmul.mubr.f32.gmra.mxu0 %v1462
      %v1561 = vpop.f32.mrf.mxu0
      %v1562 = vadd.f32 %v1444, %v1561
      %v1563 = vpop.f32.mrf.mxu0
      %1564 = vmatprep.mubr.f32.mxu0 0.0
      %1565 = vmatmul.mubr.f32.gmra.mxu0 %v1465
      %v1566 = vpop.f32.mrf.mxu0
      %v1567 = vadd.f32 %v1444, %v1566
      %v1568 = vpop.f32.mrf.mxu0
      %1569 = vmatprep.mubr.f32.mxu0 0.0
      %1570 = vmatmul.mubr.f32.gmra.mxu0 %v1468
      %v1571 = vpop.f32.mrf.mxu0
      %v1572 = vadd.f32 %v1444, %v1571
      %v1573 = vpop.f32.mrf.mxu0
      %1574 = vdwg.mxu0
      %v1575 = vmul.f32 %v1537, 0.70710677
      %v1576 = vmul.f32 %v1542, 0.70710677
      %v1577 = vmul.f32 %v1547, 0.70710677
      %v1578 = vmul.f32 %v1552, 0.70710677
      %v1579 = vmul.f32 %v1557, 0.70710677
      %v1580 = vmul.f32 %v1562, 0.70710677
      %v1581 = vmul.f32 %v1567, 0.70710677
      %v1582 = vmul.f32 %v1572, 0.70710677
      %v1583 = vand.u32 2147483647, %v1575
      %v1584 = vand.u32 2147483647, %v1576
      %v1585 = vand.u32 2147483647, %v1577
      %v1586 = vand.u32 2147483647, %v1578
      %v1587 = vand.u32 2147483647, %v1579
      %v1588 = vand.u32 2147483647, %v1580
      %v1589 = vand.u32 2147483647, %v1581
      %v1590 = vand.u32 2147483647, %v1582
      %v1591 = vmul.f32 %v1583, 0.3275911
      %v1592 = vmul.f32 %v1584, 0.3275911
      %v1593 = vmul.f32 %v1585, 0.3275911
      %v1594 = vmul.f32 %v1586, 0.3275911
      %v1595 = vmul.f32 %v1587, 0.3275911
      %v1596 = vmul.f32 %v1588, 0.3275911
      %v1597 = vmul.f32 %v1589, 0.3275911
      %v1598 = vmul.f32 %v1590, 0.3275911
      %v1599 = vadd.f32 %v1591, 1.0
      %v1600 = vadd.f32 %v1592, 1.0
      %v1601 = vadd.f32 %v1593, 1.0
      %v1602 = vadd.f32 %v1594, 1.0
      %v1603 = vadd.f32 %v1595, 1.0
      %v1604 = vadd.f32 %v1596, 1.0
      %v1605 = vadd.f32 %v1597, 1.0
      %v1606 = vadd.f32 %v1598, 1.0
      %v1607 = vrcp.pop %v1599
      %v1608 = vmul.f32 1.0, %v1607
      %v1609 = vrcp.pop %v1600
      %v1610 = vmul.f32 1.0, %v1609
      %v1611 = vrcp.pop %v1601
      %v1612 = vmul.f32 1.0, %v1611
      %v1613 = vrcp.pop %v1602
      %v1614 = vmul.f32 1.0, %v1613
      %v1615 = vrcp.pop %v1603
      %v1616 = vmul.f32 1.0, %v1615
      %v1617 = vrcp.pop %v1604
      %v1618 = vmul.f32 1.0, %v1617
      %v1619 = vrcp.pop %v1605
      %v1620 = vmul.f32 1.0, %v1619
      %v1621 = vrcp.pop %v1606
      %v1622 = vmul.f32 1.0, %v1621
      %v1623 = vmul.f32 %v1608, 1.0614054
      %v1624 = vmul.f32 %v1610, 1.0614054
      %v1625 = vmul.f32 %v1612, 1.0614054
      %v1626 = vmul.f32 %v1614, 1.0614054
      %v1627 = vmul.f32 %v1616, 1.0614054
      %v1628 = vmul.f32 %v1618, 1.0614054
      %v1629 = vmul.f32 %v1620, 1.0614054
      %v1630 = vmul.f32 %v1622, 1.0614054
      %v1631 = vadd.f32 %v1623, -1.4531521
      %v1632 = vadd.f32 %v1624, -1.4531521
      %v1633 = vadd.f32 %v1625, -1.4531521
      %v1634 = vadd.f32 %v1626, -1.4531521
      %v1635 = vadd.f32 %v1627, -1.4531521
      %v1636 = vadd.f32 %v1628, -1.4531521
      %v1637 = vadd.f32 %v1629, -1.4531521
      %v1638 = vadd.f32 %v1630, -1.4531521
      %v1639 = vmul.f32 %v1608, %v1631
      %v1640 = vmul.f32 %v1610, %v1632
      %v1641 = vmul.f32 %v1612, %v1633
      %v1642 = vmul.f32 %v1614, %v1634
      %v1643 = vmul.f32 %v1616, %v1635
      %v1644 = vmul.f32 %v1618, %v1636
      %v1645 = vmul.f32 %v1620, %v1637
      %v1646 = vmul.f32 %v1622, %v1638
      %v1647 = vadd.f32 %v1639, 1.4214138
      %v1648 = vadd.f32 %v1640, 1.4214138
      %v1649 = vadd.f32 %v1641, 1.4214138
      %v1650 = vadd.f32 %v1642, 1.4214138
      %v1651 = vadd.f32 %v1643, 1.4214138
      %v1652 = vadd.f32 %v1644, 1.4214138
      %v1653 = vadd.f32 %v1645, 1.4214138
      %v1654 = vadd.f32 %v1646, 1.4214138
      %v1655 = vmul.f32 %v1608, %v1647
      %v1656 = vmul.f32 %v1610, %v1648
      %v1657 = vmul.f32 %v1612, %v1649
      %v1658 = vmul.f32 %v1614, %v1650
      %v1659 = vmul.f32 %v1616, %v1651
      %v1660 = vmul.f32 %v1618, %v1652
      %v1661 = vmul.f32 %v1620, %v1653
      %v1662 = vmul.f32 %v1622, %v1654
      %v1663 = vadd.f32 %v1655, -0.28449672
      %v1664 = vadd.f32 %v1656, -0.28449672
      %v1665 = vadd.f32 %v1657, -0.28449672
      %v1666 = vadd.f32 %v1658, -0.28449672
      %v1667 = vadd.f32 %v1659, -0.28449672
      %v1668 = vadd.f32 %v1660, -0.28449672
      %v1669 = vadd.f32 %v1661, -0.28449672
      %v1670 = vadd.f32 %v1662, -0.28449672
      %v1671 = vmul.f32 %v1608, %v1663
      %v1672 = vmul.f32 %v1610, %v1664
      %v1673 = vmul.f32 %v1612, %v1665
      %v1674 = vmul.f32 %v1614, %v1666
      %v1675 = vmul.f32 %v1616, %v1667
      %v1676 = vmul.f32 %v1618, %v1668
      %v1677 = vmul.f32 %v1620, %v1669
      %v1678 = vmul.f32 %v1622, %v1670
      %v1679 = vadd.f32 %v1671, 0.2548296
      %v1680 = vadd.f32 %v1672, 0.2548296
      %v1681 = vadd.f32 %v1673, 0.2548296
      %v1682 = vadd.f32 %v1674, 0.2548296
      %v1683 = vadd.f32 %v1675, 0.2548296
      %v1684 = vadd.f32 %v1676, 0.2548296
      %v1685 = vadd.f32 %v1677, 0.2548296
      %v1686 = vadd.f32 %v1678, 0.2548296
      %v1687 = vmul.f32 %v1608, %v1679
      %v1688 = vmul.f32 %v1610, %v1680
      %v1689 = vmul.f32 %v1612, %v1681
      %v1690 = vmul.f32 %v1614, %v1682
      %v1691 = vmul.f32 %v1616, %v1683
      %v1692 = vmul.f32 %v1618, %v1684
      %v1693 = vmul.f32 %v1620, %v1685
      %v1694 = vmul.f32 %v1622, %v1686
      %v1695 = vsub.f32 0.0, %v1583
      %v1696 = vsub.f32 0.0, %v1584
      %v1697 = vsub.f32 0.0, %v1585
      %v1698 = vsub.f32 0.0, %v1586
      %v1699 = vsub.f32 0.0, %v1587
      %v1700 = vsub.f32 0.0, %v1588
      %v1701 = vsub.f32 0.0, %v1589
      %v1702 = vsub.f32 0.0, %v1590
      %v1703 = vmul.f32 %v1695, %v1583
      %v1704 = vmul.f32 %v1696, %v1584
      %v1705 = vmul.f32 %v1697, %v1585
      %v1706 = vmul.f32 %v1698, %v1586
      %v1707 = vmul.f32 %v1699, %v1587
      %v1708 = vmul.f32 %v1700, %v1588
      %v1709 = vmul.f32 %v1701, %v1589
      %v1710 = vmul.f32 %v1702, %v1590
      %v1711 = vmul.f32 %v1703, 1.442695
      %v1712 = vpow.pop %v1711
      %v1713 = vmul.f32 %v1704, 1.442695
      %v1714 = vpow.pop %v1713
      %v1715 = vmul.f32 %v1705, 1.442695
      %v1716 = vpow.pop %v1715
      %v1717 = vmul.f32 %v1706, 1.442695
      %v1718 = vpow.pop %v1717
      %v1719 = vmul.f32 %v1707, 1.442695
      %v1720 = vpow.pop %v1719
      %v1721 = vmul.f32 %v1708, 1.442695
      %v1722 = vpow.pop %v1721
      %v1723 = vmul.f32 %v1709, 1.442695
      %v1724 = vpow.pop %v1723
      %v1725 = vmul.f32 %v1710, 1.442695
      %v1726 = vpow.pop %v1725
      %v1727 = vmul.f32 %v1687, %v1712
      %v1728 = vmul.f32 %v1688, %v1714
      %v1729 = vmul.f32 %v1689, %v1716
      %v1730 = vmul.f32 %v1690, %v1718
      %v1731 = vmul.f32 %v1691, %v1720
      %v1732 = vmul.f32 %v1692, %v1722
      %v1733 = vmul.f32 %v1693, %v1724
      %v1734 = vmul.f32 %v1694, %v1726
      %v1735 = vsub.f32 1.0, %v1727
      %v1736 = vsub.f32 1.0, %v1728
      %v1737 = vsub.f32 1.0, %v1729
      %v1738 = vsub.f32 1.0, %v1730
      %v1739 = vsub.f32 1.0, %v1731
      %v1740 = vsub.f32 1.0, %v1732
      %v1741 = vsub.f32 1.0, %v1733
      %v1742 = vsub.f32 1.0, %v1734
      %vm1743 = vcmp.ge.f32.partialorder %v1575, 0.0
      %vm1744 = vcmp.ge.f32.partialorder %v1576, 0.0
      %vm1745 = vcmp.ge.f32.partialorder %v1577, 0.0
      %vm1746 = vcmp.ge.f32.partialorder %v1578, 0.0
      %vm1747 = vcmp.ge.f32.partialorder %v1579, 0.0
      %vm1748 = vcmp.ge.f32.partialorder %v1580, 0.0
      %vm1749 = vcmp.ge.f32.partialorder %v1581, 0.0
      %vm1750 = vcmp.ge.f32.partialorder %v1582, 0.0
      %v1751 = vsub.f32 0.0, %v1735
      %v1752 = vsub.f32 0.0, %v1736
      %v1753 = vsub.f32 0.0, %v1737
      %v1754 = vsub.f32 0.0, %v1738
      %v1755 = vsub.f32 0.0, %v1739
      %v1756 = vsub.f32 0.0, %v1740
      %v1757 = vsub.f32 0.0, %v1741
      %v1758 = vsub.f32 0.0, %v1742
      %v1759 = vsel %vm1743, %v1735, %v1751
      %v1760 = vsel %vm1744, %v1736, %v1752
      %v1761 = vsel %vm1745, %v1737, %v1753
      %v1762 = vsel %vm1746, %v1738, %v1754
      %v1763 = vsel %vm1747, %v1739, %v1755
      %v1764 = vsel %vm1748, %v1740, %v1756
      %v1765 = vsel %vm1749, %v1741, %v1757
      %v1766 = vsel %vm1750, %v1742, %v1758
      %v1767 = vmul.f32 %v1537, 0.5
      %v1768 = vmul.f32 %v1542, 0.5
      %v1769 = vmul.f32 %v1547, 0.5
      %v1770 = vmul.f32 %v1552, 0.5
      %v1771 = vmul.f32 %v1557, 0.5
      %v1772 = vmul.f32 %v1562, 0.5
      %v1773 = vmul.f32 %v1567, 0.5
      %v1774 = vmul.f32 %v1572, 0.5
      %v1775 = vadd.f32 %v1759, 1.0
      %v1776 = vadd.f32 %v1760, 1.0
      %v1777 = vadd.f32 %v1761, 1.0
      %v1778 = vadd.f32 %v1762, 1.0
      %v1779 = vadd.f32 %v1763, 1.0
      %v1780 = vadd.f32 %v1764, 1.0
      %v1781 = vadd.f32 %v1765, 1.0
      %v1782 = vadd.f32 %v1766, 1.0
      %v1783 = vmul.f32 %v1767, %v1775
      %v1784 = vmul.f32 %v1768, %v1776
      %v1785 = vmul.f32 %v1769, %v1777
      %v1786 = vmul.f32 %v1770, %v1778
      %v1787 = vmul.f32 %v1771, %v1779
      %v1788 = vmul.f32 %v1772, %v1780
      %v1789 = vmul.f32 %v1773, %v1781
      %v1790 = vmul.f32 %v1774, %v1782
      %v1792 = vlaneseq
      %v1793 = vshrl.u32 %v1792, 7
      %v1794 = vsub.s32 0, %v1793
      %v1795 = vrot.slane %v934, %v1794
      %vm1797 = vcmask 31744
      %v1799 = vsel %vm1797, %v1783, 0
      %v1802 = vsel %vm1797, %v1784, 0
      %v1805 = vsel %vm1797, %v1785, 0
      %v1808 = vsel %vm1797, %v1786, 0
      %v1811 = vsel %vm1797, %v1787, 0
      %v1814 = vsel %vm1797, %v1788, 0
      %v1817 = vsel %vm1797, %v1789, 0
      %v1820 = vsel %vm1797, %v1790, 0
      %vm1822 = vcmask 1043456
      %v1824 = vsel %vm1822, %v933, 0
      %1826 = vmatprep.subr.mxu0 0.0
      %1827 = vmatpush1.msra.mxu0 0.0
      %1828 = vmatprep.subr.mxu0 0.0
      %1829 = vmatpush1.msra.mxu0 0.0
      %1830 = vmatprep.subr.mxu0 0.0
      %1831 = vmatpush1.msra.mxu0 0.0
      %1832 = vmatprep.subr.mxu0 0.0
      %1833 = vmatpush1.msra.mxu0 0.0
      %1834 = vmatprep.subr.mxu0 0.0
      %1835 = vmatpush1.msra.mxu0 0.0
      %1836 = vmatprep.subr.mxu0 0.0
      %1837 = vmatpush1.msra.mxu0 0.0
      %1838 = vmatprep.subr.mxu0 0.0
      %1839 = vmatpush1.msra.mxu0 0.0
      %1840 = vmatprep.subr.mxu0 0.0
      %1841 = vmatpush1.msra.mxu0 0.0
      %1842 = vmatprep.subr.mxu0 0.0
      %1843 = vmatpush1.msra.mxu0 0.0
      %1844 = vmatprep.subr.mxu0 0.0
      %1845 = vmatpush1.msra.mxu0 0.0
      %1846 = vmatprep.subr.mxu0 0.0
      %1847 = vmatpush1.msra.mxu0 0.0
      %1848 = vmatprep.subr.mxu0 0.0
      %1849 = vmatpush1.msra.mxu0 0.0
      %1850 = vmatprep.subr.mxu0 0.0
      %1851 = vmatpush1.msra.mxu0 0.0
      %1852 = vmatprep.subr.mxu0 0.0
      %1853 = vmatpush1.msra.mxu0 0.0
      %1854 = vmatprep.subr.mxu0 0.0
      %1855 = vmatpush1.msra.mxu0 0.0
      %1856 = vmatprep.subr.mxu0 0.0
      %1857 = vmatpush1.msra.mxu0 %v1824
      %1858 = vmatprep.subr.mxu0 0.0
      %1859 = vmatpush2.msra.mxu0 0.0
      %1860 = vmatprep.subr.mxu0 0.0
      %1861 = vmatpush2.msra.mxu0 0.0
      %1862 = vmatprep.subr.mxu0 0.0
      %1863 = vmatpush2.msra.mxu0 0.0
      %1864 = vmatprep.subr.mxu0 0.0
      %1865 = vmatpush2.msra.mxu0 0.0
      %1866 = vmatprep.subr.mxu0 0.0
      %1867 = vmatpush2.msra.mxu0 0.0
      %1868 = vmatprep.subr.mxu0 0.0
      %1869 = vmatpush2.msra.mxu0 0.0
      %1870 = vmatprep.subr.mxu0 0.0
      %1871 = vmatpush2.msra.mxu0 0.0
      %1872 = vmatprep.subr.mxu0 0.0
      %1873 = vmatpush2.msra.mxu0 0.0
      %1874 = vmatprep.subr.mxu0 0.0
      %1875 = vmatpush2.msra.mxu0 0.0
      %1876 = vmatprep.subr.mxu0 0.0
      %1877 = vmatpush2.msra.mxu0 0.0
      %1878 = vmatprep.subr.mxu0 0.0
      %1879 = vmatpush2.msra.mxu0 0.0
      %1880 = vmatprep.subr.mxu0 0.0
      %1881 = vmatpush2.msra.mxu0 0.0
      %1882 = vmatprep.subr.mxu0 0.0
      %1883 = vmatpush2.msra.mxu0 0.0
      %1884 = vmatprep.subr.mxu0 0.0
      %1885 = vmatpush2.msra.mxu0 0.0
      %1886 = vmatprep.subr.mxu0 0.0
      %1887 = vmatpush2.msra.mxu0 0.0
      %1888 = vmatprep.subr.mxu0 0.0
      %1889 = vmatpush2.msra.mxu0 0.0
      %1890 = vmatprep.mubr.f32.mxu0 0.0
      %1891 = vmatmul.mubr.f32.gmra.mxu0 %v1799
      %v1892 = vpop.f32.mrf.mxu0
      %v1893 = vadd.f32 %v1795, %v1892
      %v1894 = vpop.f32.mrf.mxu0
      %1895 = vmatprep.mubr.f32.mxu0 0.0
      %1896 = vmatmul.mubr.f32.gmra.mxu0 %v1802
      %v1897 = vpop.f32.mrf.mxu0
      %v1898 = vadd.f32 %v1795, %v1897
      %v1899 = vpop.f32.mrf.mxu0
      %1900 = vmatprep.mubr.f32.mxu0 0.0
      %1901 = vmatmul.mubr.f32.gmra.mxu0 %v1805
      %v1902 = vpop.f32.mrf.mxu0
      %v1903 = vadd.f32 %v1795, %v1902
      %v1904 = vpop.f32.mrf.mxu0
      %1905 = vmatprep.mubr.f32.mxu0 0.0
      %1906 = vmatmul.mubr.f32.gmra.mxu0 %v1808
      %v1907 = vpop.f32.mrf.mxu0
      %v1908 = vadd.f32 %v1795, %v1907
      %v1909 = vpop.f32.mrf.mxu0
      %1910 = vmatprep.mubr.f32.mxu0 0.0
      %1911 = vmatmul.mubr.f32.gmra.mxu0 %v1811
      %v1912 = vpop.f32.mrf.mxu0
      %v1913 = vadd.f32 %v1795, %v1912
      %v1914 = vpop.f32.mrf.mxu0
      %1915 = vmatprep.mubr.f32.mxu0 0.0
      %1916 = vmatmul.mubr.f32.gmra.mxu0 %v1814
      %v1917 = vpop.f32.mrf.mxu0
      %v1918 = vadd.f32 %v1795, %v1917
      %v1919 = vpop.f32.mrf.mxu0
      %1920 = vmatprep.mubr.f32.mxu0 0.0
      %1921 = vmatmul.mubr.f32.gmra.mxu0 %v1817
      %v1922 = vpop.f32.mrf.mxu0
      %v1923 = vadd.f32 %v1795, %v1922
      %v1924 = vpop.f32.mrf.mxu0
      %1925 = vmatprep.mubr.f32.mxu0 0.0
      %1926 = vmatmul.mubr.f32.gmra.mxu0 %v1820
      %v1927 = vpop.f32.mrf.mxu0
      %v1928 = vadd.f32 %v1795, %v1927
      %v1929 = vpop.f32.mrf.mxu0
      %1930 = vdwg.mxu0
      %v1931 = vadd.f32 %v894, %v1893
      %v1932 = vadd.f32 %v895, %v1898
      %v1933 = vadd.f32 %v896, %v1903
      %v1934 = vadd.f32 %v897, %v1908
      %v1935 = vadd.f32 %v898, %v1913
      %v1936 = vadd.f32 %v899, %v1918
      %v1937 = vadd.f32 %v900, %v1923
      %v1938 = vadd.f32 %v901, %v1928
      %v1940 = vlaneseq
      %v1941 = vshrl.u32 %v1940, 7
      %v1942 = vsub.s32 0, %v1941
      %v1943 = vrot.slane %v936, %v1942
      %v1946 = vsel %vm1797, %v918, 0
      %v1949 = vsel %vm1797, %v919, 0
      %v1952 = vsel %vm1797, %v920, 0
      %v1955 = vsel %vm1797, %v921, 0
      %v1958 = vsel %vm1797, %v922, 0
      %v1961 = vsel %vm1797, %v923, 0
      %v1964 = vsel %vm1797, %v924, 0
      %v1967 = vsel %vm1797, %v925, 0
      %v1970 = vsel %vm1822, %v935, 0
      %1972 = vmatprep.subr.mxu0 0.0
      %1973 = vmatpush1.msra.mxu0 0.0
      %1974 = vmatprep.subr.mxu0 0.0
      %1975 = vmatpush1.msra.mxu0 0.0
      %1976 = vmatprep.subr.mxu0 0.0
      %1977 = vmatpush1.msra.mxu0 0.0
      %1978 = vmatprep.subr.mxu0 0.0
      %1979 = vmatpush1.msra.mxu0 0.0
      %1980 = vmatprep.subr.mxu0 0.0
      %1981 = vmatpush1.msra.mxu0 0.0
      %1982 = vmatprep.subr.mxu0 0.0
      %1983 = vmatpush1.msra.mxu0 0.0
      %1984 = vmatprep.subr.mxu0 0.0
      %1985 = vmatpush1.msra.mxu0 0.0
      %1986 = vmatprep.subr.mxu0 0.0
      %1987 = vmatpush1.msra.mxu0 0.0
      %1988 = vmatprep.subr.mxu0 0.0
      %1989 = vmatpush1.msra.mxu0 0.0
      %1990 = vmatprep.subr.mxu0 0.0
      %1991 = vmatpush1.msra.mxu0 0.0
      %1992 = vmatprep.subr.mxu0 0.0
      %1993 = vmatpush1.msra.mxu0 0.0
      %1994 = vmatprep.subr.mxu0 0.0
      %1995 = vmatpush1.msra.mxu0 0.0
      %1996 = vmatprep.subr.mxu0 0.0
      %1997 = vmatpush1.msra.mxu0 0.0
      %1998 = vmatprep.subr.mxu0 0.0
      %1999 = vmatpush1.msra.mxu0 0.0
      %2000 = vmatprep.subr.mxu0 0.0
      %2001 = vmatpush1.msra.mxu0 0.0
      %2002 = vmatprep.subr.mxu0 0.0
      %2003 = vmatpush1.msra.mxu0 %v1970
      %2004 = vmatprep.subr.mxu0 0.0
      %2005 = vmatpush2.msra.mxu0 0.0
      %2006 = vmatprep.subr.mxu0 0.0
      %2007 = vmatpush2.msra.mxu0 0.0
      %2008 = vmatprep.subr.mxu0 0.0
      %2009 = vmatpush2.msra.mxu0 0.0
      %2010 = vmatprep.subr.mxu0 0.0
      %2011 = vmatpush2.msra.mxu0 0.0
      %2012 = vmatprep.subr.mxu0 0.0
      %2013 = vmatpush2.msra.mxu0 0.0
      %2014 = vmatprep.subr.mxu0 0.0
      %2015 = vmatpush2.msra.mxu0 0.0
      %2016 = vmatprep.subr.mxu0 0.0
      %2017 = vmatpush2.msra.mxu0 0.0
      %2018 = vmatprep.subr.mxu0 0.0
      %2019 = vmatpush2.msra.mxu0 0.0
      %2020 = vmatprep.subr.mxu0 0.0
      %2021 = vmatpush2.msra.mxu0 0.0
      %2022 = vmatprep.subr.mxu0 0.0
      %2023 = vmatpush2.msra.mxu0 0.0
      %2024 = vmatprep.subr.mxu0 0.0
      %2025 = vmatpush2.msra.mxu0 0.0
      %2026 = vmatprep.subr.mxu0 0.0
      %2027 = vmatpush2.msra.mxu0 0.0
      %2028 = vmatprep.subr.mxu0 0.0
      %2029 = vmatpush2.msra.mxu0 0.0
      %2030 = vmatprep.subr.mxu0 0.0
      %2031 = vmatpush2.msra.mxu0 0.0
      %2032 = vmatprep.subr.mxu0 0.0
      %2033 = vmatpush2.msra.mxu0 0.0
      %2034 = vmatprep.subr.mxu0 0.0
      %2035 = vmatpush2.msra.mxu0 0.0
      %2036 = vmatprep.mubr.f32.mxu0 0.0
      %2037 = vmatmul.mubr.f32.gmra.mxu0 %v1946
      %v2038 = vpop.f32.mrf.mxu0
      %v2039 = vadd.f32 %v1943, %v2038
      %v2040 = vpop.f32.mrf.mxu0
      %2041 = vmatprep.mubr.f32.mxu0 0.0
      %2042 = vmatmul.mubr.f32.gmra.mxu0 %v1949
      %v2043 = vpop.f32.mrf.mxu0
      %v2044 = vadd.f32 %v1943, %v2043
      %v2045 = vpop.f32.mrf.mxu0
      %2046 = vmatprep.mubr.f32.mxu0 0.0
      %2047 = vmatmul.mubr.f32.gmra.mxu0 %v1952
      %v2048 = vpop.f32.mrf.mxu0
      %v2049 = vadd.f32 %v1943, %v2048
      %v2050 = vpop.f32.mrf.mxu0
      %2051 = vmatprep.mubr.f32.mxu0 0.0
      %2052 = vmatmul.mubr.f32.gmra.mxu0 %v1955
      %v2053 = vpop.f32.mrf.mxu0
      %v2054 = vadd.f32 %v1943, %v2053
      %v2055 = vpop.f32.mrf.mxu0
      %2056 = vmatprep.mubr.f32.mxu0 0.0
      %2057 = vmatmul.mubr.f32.gmra.mxu0 %v1958
      %v2058 = vpop.f32.mrf.mxu0
      %v2059 = vadd.f32 %v1943, %v2058
      %v2060 = vpop.f32.mrf.mxu0
      %2061 = vmatprep.mubr.f32.mxu0 0.0
      %2062 = vmatmul.mubr.f32.gmra.mxu0 %v1961
      %v2063 = vpop.f32.mrf.mxu0
      %v2064 = vadd.f32 %v1943, %v2063
      %v2065 = vpop.f32.mrf.mxu0
      %2066 = vmatprep.mubr.f32.mxu0 0.0
      %2067 = vmatmul.mubr.f32.gmra.mxu0 %v1964
      %v2068 = vpop.f32.mrf.mxu0
      %v2069 = vadd.f32 %v1943, %v2068
      %v2070 = vpop.f32.mrf.mxu0
      %2071 = vmatprep.mubr.f32.mxu0 0.0
      %2072 = vmatmul.mubr.f32.gmra.mxu0 %v1967
      %v2073 = vpop.f32.mrf.mxu0
      %v2074 = vadd.f32 %v1943, %v2073
      %v2075 = vpop.f32.mrf.mxu0
      %2076 = vdwg.mxu0
      %v2077 = vmul.f32 %v2039, 0.70710677
      %v2078 = vmul.f32 %v2044, 0.70710677
      %v2079 = vmul.f32 %v2049, 0.70710677
      %v2080 = vmul.f32 %v2054, 0.70710677
      %v2081 = vmul.f32 %v2059, 0.70710677
      %v2082 = vmul.f32 %v2064, 0.70710677
      %v2083 = vmul.f32 %v2069, 0.70710677
      %v2084 = vmul.f32 %v2074, 0.70710677
      %v2085 = vand.u32 2147483647, %v2077
      %v2086 = vand.u32 2147483647, %v2078
      %v2087 = vand.u32 2147483647, %v2079
      %v2088 = vand.u32 2147483647, %v2080
      %v2089 = vand.u32 2147483647, %v2081
      %v2090 = vand.u32 2147483647, %v2082
      %v2091 = vand.u32 2147483647, %v2083
      %v2092 = vand.u32 2147483647, %v2084
      %v2093 = vmul.f32 %v2085, 0.3275911
      %v2094 = vmul.f32 %v2086, 0.3275911
      %v2095 = vmul.f32 %v2087, 0.3275911
      %v2096 = vmul.f32 %v2088, 0.3275911
      %v2097 = vmul.f32 %v2089, 0.3275911
      %v2098 = vmul.f32 %v2090, 0.3275911
      %v2099 = vmul.f32 %v2091, 0.3275911
      %v2100 = vmul.f32 %v2092, 0.3275911
      %v2101 = vadd.f32 %v2093, 1.0
      %v2102 = vadd.f32 %v2094, 1.0
      %v2103 = vadd.f32 %v2095, 1.0
      %v2104 = vadd.f32 %v2096, 1.0
      %v2105 = vadd.f32 %v2097, 1.0
      %v2106 = vadd.f32 %v2098, 1.0
      %v2107 = vadd.f32 %v2099, 1.0
      %v2108 = vadd.f32 %v2100, 1.0
      %v2109 = vrcp.pop %v2101
      %v2110 = vmul.f32 1.0, %v2109
      %v2111 = vrcp.pop %v2102
      %v2112 = vmul.f32 1.0, %v2111
      %v2113 = vrcp.pop %v2103
      %v2114 = vmul.f32 1.0, %v2113
      %v2115 = vrcp.pop %v2104
      %v2116 = vmul.f32 1.0, %v2115
      %v2117 = vrcp.pop %v2105
      %v2118 = vmul.f32 1.0, %v2117
      %v2119 = vrcp.pop %v2106
      %v2120 = vmul.f32 1.0, %v2119
      %v2121 = vrcp.pop %v2107
      %v2122 = vmul.f32 1.0, %v2121
      %v2123 = vrcp.pop %v2108
      %v2124 = vmul.f32 1.0, %v2123
      %v2125 = vmul.f32 %v2110, 1.0614054
      %v2126 = vmul.f32 %v2112, 1.0614054
      %v2127 = vmul.f32 %v2114, 1.0614054
      %v2128 = vmul.f32 %v2116, 1.0614054
      %v2129 = vmul.f32 %v2118, 1.0614054
      %v2130 = vmul.f32 %v2120, 1.0614054
      %v2131 = vmul.f32 %v2122, 1.0614054
      %v2132 = vmul.f32 %v2124, 1.0614054
      %v2133 = vadd.f32 %v2125, -1.4531521
      %v2134 = vadd.f32 %v2126, -1.4531521
      %v2135 = vadd.f32 %v2127, -1.4531521
      %v2136 = vadd.f32 %v2128, -1.4531521
      %v2137 = vadd.f32 %v2129, -1.4531521
      %v2138 = vadd.f32 %v2130, -1.4531521
      %v2139 = vadd.f32 %v2131, -1.4531521
      %v2140 = vadd.f32 %v2132, -1.4531521
      %v2141 = vmul.f32 %v2110, %v2133
      %v2142 = vmul.f32 %v2112, %v2134
      %v2143 = vmul.f32 %v2114, %v2135
      %v2144 = vmul.f32 %v2116, %v2136
      %v2145 = vmul.f32 %v2118, %v2137
      %v2146 = vmul.f32 %v2120, %v2138
      %v2147 = vmul.f32 %v2122, %v2139
      %v2148 = vmul.f32 %v2124, %v2140
      %v2149 = vadd.f32 %v2141, 1.4214138
      %v2150 = vadd.f32 %v2142, 1.4214138
      %v2151 = vadd.f32 %v2143, 1.4214138
      %v2152 = vadd.f32 %v2144, 1.4214138
      %v2153 = vadd.f32 %v2145, 1.4214138
      %v2154 = vadd.f32 %v2146, 1.4214138
      %v2155 = vadd.f32 %v2147, 1.4214138
      %v2156 = vadd.f32 %v2148, 1.4214138
      %v2157 = vmul.f32 %v2110, %v2149
      %v2158 = vmul.f32 %v2112, %v2150
      %v2159 = vmul.f32 %v2114, %v2151
      %v2160 = vmul.f32 %v2116, %v2152
      %v2161 = vmul.f32 %v2118, %v2153
      %v2162 = vmul.f32 %v2120, %v2154
      %v2163 = vmul.f32 %v2122, %v2155
      %v2164 = vmul.f32 %v2124, %v2156
      %v2165 = vadd.f32 %v2157, -0.28449672
      %v2166 = vadd.f32 %v2158, -0.28449672
      %v2167 = vadd.f32 %v2159, -0.28449672
      %v2168 = vadd.f32 %v2160, -0.28449672
      %v2169 = vadd.f32 %v2161, -0.28449672
      %v2170 = vadd.f32 %v2162, -0.28449672
      %v2171 = vadd.f32 %v2163, -0.28449672
      %v2172 = vadd.f32 %v2164, -0.28449672
      %v2173 = vmul.f32 %v2110, %v2165
      %v2174 = vmul.f32 %v2112, %v2166
      %v2175 = vmul.f32 %v2114, %v2167
      %v2176 = vmul.f32 %v2116, %v2168
      %v2177 = vmul.f32 %v2118, %v2169
      %v2178 = vmul.f32 %v2120, %v2170
      %v2179 = vmul.f32 %v2122, %v2171
      %v2180 = vmul.f32 %v2124, %v2172
      %v2181 = vadd.f32 %v2173, 0.2548296
      %v2182 = vadd.f32 %v2174, 0.2548296
      %v2183 = vadd.f32 %v2175, 0.2548296
      %v2184 = vadd.f32 %v2176, 0.2548296
      %v2185 = vadd.f32 %v2177, 0.2548296
      %v2186 = vadd.f32 %v2178, 0.2548296
      %v2187 = vadd.f32 %v2179, 0.2548296
      %v2188 = vadd.f32 %v2180, 0.2548296
      %v2189 = vmul.f32 %v2110, %v2181
      %v2190 = vmul.f32 %v2112, %v2182
      %v2191 = vmul.f32 %v2114, %v2183
      %v2192 = vmul.f32 %v2116, %v2184
      %v2193 = vmul.f32 %v2118, %v2185
      %v2194 = vmul.f32 %v2120, %v2186
      %v2195 = vmul.f32 %v2122, %v2187
      %v2196 = vmul.f32 %v2124, %v2188
      %v2197 = vsub.f32 0.0, %v2085
      %v2198 = vsub.f32 0.0, %v2086
      %v2199 = vsub.f32 0.0, %v2087
      %v2200 = vsub.f32 0.0, %v2088
      %v2201 = vsub.f32 0.0, %v2089
      %v2202 = vsub.f32 0.0, %v2090
      %v2203 = vsub.f32 0.0, %v2091
      %v2204 = vsub.f32 0.0, %v2092
      %v2205 = vmul.f32 %v2197, %v2085
      %v2206 = vmul.f32 %v2198, %v2086
      %v2207 = vmul.f32 %v2199, %v2087
      %v2208 = vmul.f32 %v2200, %v2088
      %v2209 = vmul.f32 %v2201, %v2089
      %v2210 = vmul.f32 %v2202, %v2090
      %v2211 = vmul.f32 %v2203, %v2091
      %v2212 = vmul.f32 %v2204, %v2092
      %v2213 = vmul.f32 %v2205, 1.442695
      %v2214 = vpow.pop %v2213
      %v2215 = vmul.f32 %v2206, 1.442695
      %v2216 = vpow.pop %v2215
      %v2217 = vmul.f32 %v2207, 1.442695
      %v2218 = vpow.pop %v2217
      %v2219 = vmul.f32 %v2208, 1.442695
      %v2220 = vpow.pop %v2219
      %v2221 = vmul.f32 %v2209, 1.442695
      %v2222 = vpow.pop %v2221
      %v2223 = vmul.f32 %v2210, 1.442695
      %v2224 = vpow.pop %v2223
      %v2225 = vmul.f32 %v2211, 1.442695
      %v2226 = vpow.pop %v2225
      %v2227 = vmul.f32 %v2212, 1.442695
      %v2228 = vpow.pop %v2227
      %v2229 = vmul.f32 %v2189, %v2214
      %v2230 = vmul.f32 %v2190, %v2216
      %v2231 = vmul.f32 %v2191, %v2218
      %v2232 = vmul.f32 %v2192, %v2220
      %v2233 = vmul.f32 %v2193, %v2222
      %v2234 = vmul.f32 %v2194, %v2224
      %v2235 = vmul.f32 %v2195, %v2226
      %v2236 = vmul.f32 %v2196, %v2228
      %v2237 = vsub.f32 1.0, %v2229
      %v2238 = vsub.f32 1.0, %v2230
      %v2239 = vsub.f32 1.0, %v2231
      %v2240 = vsub.f32 1.0, %v2232
      %v2241 = vsub.f32 1.0, %v2233
      %v2242 = vsub.f32 1.0, %v2234
      %v2243 = vsub.f32 1.0, %v2235
      %v2244 = vsub.f32 1.0, %v2236
      %vm2245 = vcmp.ge.f32.partialorder %v2077, 0.0
      %vm2246 = vcmp.ge.f32.partialorder %v2078, 0.0
      %vm2247 = vcmp.ge.f32.partialorder %v2079, 0.0
      %vm2248 = vcmp.ge.f32.partialorder %v2080, 0.0
      %vm2249 = vcmp.ge.f32.partialorder %v2081, 0.0
      %vm2250 = vcmp.ge.f32.partialorder %v2082, 0.0
      %vm2251 = vcmp.ge.f32.partialorder %v2083, 0.0
      %vm2252 = vcmp.ge.f32.partialorder %v2084, 0.0
      %v2253 = vsub.f32 0.0, %v2237
      %v2254 = vsub.f32 0.0, %v2238
      %v2255 = vsub.f32 0.0, %v2239
      %v2256 = vsub.f32 0.0, %v2240
      %v2257 = vsub.f32 0.0, %v2241
      %v2258 = vsub.f32 0.0, %v2242
      %v2259 = vsub.f32 0.0, %v2243
      %v2260 = vsub.f32 0.0, %v2244
      %v2261 = vsel %vm2245, %v2237, %v2253
      %v2262 = vsel %vm2246, %v2238, %v2254
      %v2263 = vsel %vm2247, %v2239, %v2255
      %v2264 = vsel %vm2248, %v2240, %v2256
      %v2265 = vsel %vm2249, %v2241, %v2257
      %v2266 = vsel %vm2250, %v2242, %v2258
      %v2267 = vsel %vm2251, %v2243, %v2259
      %v2268 = vsel %vm2252, %v2244, %v2260
      %v2269 = vmul.f32 %v2039, 0.5
      %v2270 = vmul.f32 %v2044, 0.5
      %v2271 = vmul.f32 %v2049, 0.5
      %v2272 = vmul.f32 %v2054, 0.5
      %v2273 = vmul.f32 %v2059, 0.5
      %v2274 = vmul.f32 %v2064, 0.5
      %v2275 = vmul.f32 %v2069, 0.5
      %v2276 = vmul.f32 %v2074, 0.5
      %v2277 = vadd.f32 %v2261, 1.0
      %v2278 = vadd.f32 %v2262, 1.0
      %v2279 = vadd.f32 %v2263, 1.0
      %v2280 = vadd.f32 %v2264, 1.0
      %v2281 = vadd.f32 %v2265, 1.0
      %v2282 = vadd.f32 %v2266, 1.0
      %v2283 = vadd.f32 %v2267, 1.0
      %v2284 = vadd.f32 %v2268, 1.0
      %v2285 = vmul.f32 %v2269, %v2277
      %v2286 = vmul.f32 %v2270, %v2278
      %v2287 = vmul.f32 %v2271, %v2279
      %v2288 = vmul.f32 %v2272, %v2280
      %v2289 = vmul.f32 %v2273, %v2281
      %v2290 = vmul.f32 %v2274, %v2282
      %v2291 = vmul.f32 %v2275, %v2283
      %v2292 = vmul.f32 %v2276, %v2284
      %v2294 = vlaneseq
      %v2295 = vshrl.u32 %v2294, 7
      %v2296 = vsub.s32 0, %v2295
      %v2297 = vrot.slane %v938, %v2296
      %v2300 = vsel %vm1302, %v2285, 0
      %v2303 = vsel %vm1302, %v2286, 0
      %v2306 = vsel %vm1302, %v2287, 0
      %v2309 = vsel %vm1302, %v2288, 0
      %v2312 = vsel %vm1302, %v2289, 0
      %v2315 = vsel %vm1302, %v2290, 0
      %v2318 = vsel %vm1302, %v2291, 0
      %v2321 = vsel %vm1302, %v2292, 0
      %2323 = vmatprep.subr.mxu0 0.0
      %2324 = vmatpush1.msra.mxu0 0.0
      %2325 = vmatprep.subr.mxu0 0.0
      %2326 = vmatpush1.msra.mxu0 0.0
      %2327 = vmatprep.subr.mxu0 0.0
      %2328 = vmatpush1.msra.mxu0 0.0
      %2329 = vmatprep.subr.mxu0 0.0
      %2330 = vmatpush1.msra.mxu0 0.0
      %2331 = vmatprep.subr.mxu0 0.0
      %2332 = vmatpush1.msra.mxu0 0.0
      %2333 = vmatprep.subr.mxu0 0.0
      %2334 = vmatpush1.msra.mxu0 0.0
      %2335 = vmatprep.subr.mxu0 0.0
      %2336 = vmatpush1.msra.mxu0 0.0
      %2337 = vmatprep.subr.mxu0 0.0
      %2338 = vmatpush1.msra.mxu0 0.0
      %2339 = vmatprep.subr.mxu0 0.0
      %2340 = vmatpush1.msra.mxu0 0.0
      %2341 = vmatprep.subr.mxu0 0.0
      %2342 = vmatpush1.msra.mxu0 0.0
      %2343 = vmatprep.subr.mxu0 0.0
      %2344 = vmatpush1.msra.mxu0 0.0
      %2345 = vmatprep.subr.mxu0 0.0
      %2346 = vmatpush1.msra.mxu0 0.0
      %2347 = vmatprep.subr.mxu0 0.0
      %2348 = vmatpush1.msra.mxu0 0.0
      %2349 = vmatprep.subr.mxu0 0.0
      %2350 = vmatpush1.msra.mxu0 0.0
      %2351 = vmatprep.subr.mxu0 0.0
      %2352 = vmatpush1.msra.mxu0 0.0
      %2353 = vmatprep.subr.mxu0 0.0
      %2354 = vmatpush1.msra.mxu0 %v937
      %2355 = vmatprep.subr.mxu0 0.0
      %2356 = vmatpush2.msra.mxu0 0.0
      %2357 = vmatprep.subr.mxu0 0.0
      %2358 = vmatpush2.msra.mxu0 0.0
      %2359 = vmatprep.subr.mxu0 0.0
      %2360 = vmatpush2.msra.mxu0 0.0
      %2361 = vmatprep.subr.mxu0 0.0
      %2362 = vmatpush2.msra.mxu0 0.0
      %2363 = vmatprep.subr.mxu0 0.0
      %2364 = vmatpush2.msra.mxu0 0.0
      %2365 = vmatprep.subr.mxu0 0.0
      %2366 = vmatpush2.msra.mxu0 0.0
      %2367 = vmatprep.subr.mxu0 0.0
      %2368 = vmatpush2.msra.mxu0 0.0
      %2369 = vmatprep.subr.mxu0 0.0
      %2370 = vmatpush2.msra.mxu0 0.0
      %2371 = vmatprep.subr.mxu0 0.0
      %2372 = vmatpush2.msra.mxu0 0.0
      %2373 = vmatprep.subr.mxu0 0.0
      %2374 = vmatpush2.msra.mxu0 0.0
      %2375 = vmatprep.subr.mxu0 0.0
      %2376 = vmatpush2.msra.mxu0 0.0
      %2377 = vmatprep.subr.mxu0 0.0
      %2378 = vmatpush2.msra.mxu0 0.0
      %2379 = vmatprep.subr.mxu0 0.0
      %2380 = vmatpush2.msra.mxu0 0.0
      %2381 = vmatprep.subr.mxu0 0.0
      %2382 = vmatpush2.msra.mxu0 0.0
      %2383 = vmatprep.subr.mxu0 0.0
      %2384 = vmatpush2.msra.mxu0 0.0
      %2385 = vmatprep.subr.mxu0 0.0
      %2386 = vmatpush2.msra.mxu0 0.0
      %2387 = vmatprep.mubr.f32.mxu0 0.0
      %2388 = vmatmul.mubr.f32.gmra.mxu0 %v2300
      %v2389 = vpop.f32.mrf.mxu0
      %v2390 = vadd.f32 %v2297, %v2389
      %v2391 = vpop.f32.mrf.mxu0
      %2392 = vmatprep.mubr.f32.mxu0 0.0
      %2393 = vmatmul.mubr.f32.gmra.mxu0 %v2303
      %v2394 = vpop.f32.mrf.mxu0
      %v2395 = vadd.f32 %v2297, %v2394
      %v2396 = vpop.f32.mrf.mxu0
      %2397 = vmatprep.mubr.f32.mxu0 0.0
      %2398 = vmatmul.mubr.f32.gmra.mxu0 %v2306
      %v2399 = vpop.f32.mrf.mxu0
      %v2400 = vadd.f32 %v2297, %v2399
      %v2401 = vpop.f32.mrf.mxu0
      %2402 = vmatprep.mubr.f32.mxu0 0.0
      %2403 = vmatmul.mubr.f32.gmra.mxu0 %v2309
      %v2404 = vpop.f32.mrf.mxu0
      %v2405 = vadd.f32 %v2297, %v2404
      %v2406 = vpop.f32.mrf.mxu0
      %2407 = vmatprep.mubr.f32.mxu0 0.0
      %2408 = vmatmul.mubr.f32.gmra.mxu0 %v2312
      %v2409 = vpop.f32.mrf.mxu0
      %v2410 = vadd.f32 %v2297, %v2409
      %v2411 = vpop.f32.mrf.mxu0
      %2412 = vmatprep.mubr.f32.mxu0 0.0
      %2413 = vmatmul.mubr.f32.gmra.mxu0 %v2315
      %v2414 = vpop.f32.mrf.mxu0
      %v2415 = vadd.f32 %v2297, %v2414
      %v2416 = vpop.f32.mrf.mxu0
      %2417 = vmatprep.mubr.f32.mxu0 0.0
      %2418 = vmatmul.mubr.f32.gmra.mxu0 %v2318
      %v2419 = vpop.f32.mrf.mxu0
      %v2420 = vadd.f32 %v2297, %v2419
      %v2421 = vpop.f32.mrf.mxu0
      %2422 = vmatprep.mubr.f32.mxu0 0.0
      %2423 = vmatmul.mubr.f32.gmra.mxu0 %v2321
      %v2424 = vpop.f32.mrf.mxu0
      %v2425 = vadd.f32 %v2297, %v2424
      %v2426 = vpop.f32.mrf.mxu0
      %2427 = vdwg.mxu0
      %v2428 = vadd.f32 %v910, %v2390
      %v2429 = vadd.f32 %v911, %v2395
      %v2430 = vadd.f32 %v912, %v2400
      %v2431 = vadd.f32 %v913, %v2405
      %v2432 = vadd.f32 %v914, %v2410
      %v2433 = vadd.f32 %v915, %v2415
      %v2434 = vadd.f32 %v916, %v2420
      %v2435 = vadd.f32 %v917, %v2425
      %v2437 = vlaneseq
      %v2438 = vshrl.u32 %v2437, 7
      %v2439 = vsub.s32 0, %v2438
      %v2440 = vrot.slane %v940, %v2439
      %v2443 = vsel %vm1302, %v2428, 0
      %v2446 = vsel %vm1302, %v2429, 0
      %v2449 = vsel %vm1302, %v2430, 0
      %v2452 = vsel %vm1302, %v2431, 0
      %v2455 = vsel %vm1302, %v2432, 0
      %v2458 = vsel %vm1302, %v2433, 0
      %v2461 = vsel %vm1302, %v2434, 0
      %v2464 = vsel %vm1302, %v2435, 0
      %2466 = vmatprep.subr.mxu0 0.0
      %2467 = vmatpush1.msra.mxu0 0.0
      %2468 = vmatprep.subr.mxu0 0.0
      %2469 = vmatpush1.msra.mxu0 0.0
      %2470 = vmatprep.subr.mxu0 0.0
      %2471 = vmatpush1.msra.mxu0 0.0
      %2472 = vmatprep.subr.mxu0 0.0
      %2473 = vmatpush1.msra.mxu0 0.0
      %2474 = vmatprep.subr.mxu0 0.0
      %2475 = vmatpush1.msra.mxu0 0.0
      %2476 = vmatprep.subr.mxu0 0.0
      %2477 = vmatpush1.msra.mxu0 0.0
      %2478 = vmatprep.subr.mxu0 0.0
      %2479 = vmatpush1.msra.mxu0 0.0
      %2480 = vmatprep.subr.mxu0 0.0
      %2481 = vmatpush1.msra.mxu0 0.0
      %2482 = vmatprep.subr.mxu0 0.0
      %2483 = vmatpush1.msra.mxu0 0.0
      %2484 = vmatprep.subr.mxu0 0.0
      %2485 = vmatpush1.msra.mxu0 0.0
      %2486 = vmatprep.subr.mxu0 0.0
      %2487 = vmatpush1.msra.mxu0 0.0
      %2488 = vmatprep.subr.mxu0 0.0
      %2489 = vmatpush1.msra.mxu0 0.0
      %2490 = vmatprep.subr.mxu0 0.0
      %2491 = vmatpush1.msra.mxu0 0.0
      %2492 = vmatprep.subr.mxu0 0.0
      %2493 = vmatpush1.msra.mxu0 0.0
      %2494 = vmatprep.subr.mxu0 0.0
      %2495 = vmatpush1.msra.mxu0 0.0
      %2496 = vmatprep.subr.mxu0 0.0
      %2497 = vmatpush1.msra.mxu0 %v939
      %2498 = vmatprep.subr.mxu0 0.0
      %2499 = vmatpush2.msra.mxu0 0.0
      %2500 = vmatprep.subr.mxu0 0.0
      %2501 = vmatpush2.msra.mxu0 0.0
      %2502 = vmatprep.subr.mxu0 0.0
      %2503 = vmatpush2.msra.mxu0 0.0
      %2504 = vmatprep.subr.mxu0 0.0
      %2505 = vmatpush2.msra.mxu0 0.0
      %2506 = vmatprep.subr.mxu0 0.0
      %2507 = vmatpush2.msra.mxu0 0.0
      %2508 = vmatprep.subr.mxu0 0.0
      %2509 = vmatpush2.msra.mxu0 0.0
      %2510 = vmatprep.subr.mxu0 0.0
      %2511 = vmatpush2.msra.mxu0 0.0
      %2512 = vmatprep.subr.mxu0 0.0
      %2513 = vmatpush2.msra.mxu0 0.0
      %2514 = vmatprep.subr.mxu0 0.0
      %2515 = vmatpush2.msra.mxu0 0.0
      %2516 = vmatprep.subr.mxu0 0.0
      %2517 = vmatpush2.msra.mxu0 0.0
      %2518 = vmatprep.subr.mxu0 0.0
      %2519 = vmatpush2.msra.mxu0 0.0
      %2520 = vmatprep.subr.mxu0 0.0
      %2521 = vmatpush2.msra.mxu0 0.0
      %2522 = vmatprep.subr.mxu0 0.0
      %2523 = vmatpush2.msra.mxu0 0.0
      %2524 = vmatprep.subr.mxu0 0.0
      %2525 = vmatpush2.msra.mxu0 0.0
      %2526 = vmatprep.subr.mxu0 0.0
      %2527 = vmatpush2.msra.mxu0 0.0
      %2528 = vmatprep.subr.mxu0 0.0
      %2529 = vmatpush2.msra.mxu0 0.0
      %2530 = vmatprep.mubr.f32.mxu0 0.0
      %2531 = vmatmul.mubr.f32.gmra.mxu0 %v2443
      %v2532 = vpop.f32.mrf.mxu0
      %v2533 = vadd.f32 %v2440, %v2532
      %v2534 = vpop.f32.mrf.mxu0
      %2535 = vmatprep.mubr.f32.mxu0 0.0
      %2536 = vmatmul.mubr.f32.gmra.mxu0 %v2446
      %v2537 = vpop.f32.mrf.mxu0
      %v2538 = vadd.f32 %v2440, %v2537
      %v2539 = vpop.f32.mrf.mxu0
      %2540 = vmatprep.mubr.f32.mxu0 0.0
      %2541 = vmatmul.mubr.f32.gmra.mxu0 %v2449
      %v2542 = vpop.f32.mrf.mxu0
      %v2543 = vadd.f32 %v2440, %v2542
      %v2544 = vpop.f32.mrf.mxu0
      %2545 = vmatprep.mubr.f32.mxu0 0.0
      %2546 = vmatmul.mubr.f32.gmra.mxu0 %v2452
      %v2547 = vpop.f32.mrf.mxu0
      %v2548 = vadd.f32 %v2440, %v2547
      %v2549 = vpop.f32.mrf.mxu0
      %2550 = vmatprep.mubr.f32.mxu0 0.0
      %2551 = vmatmul.mubr.f32.gmra.mxu0 %v2455
      %v2552 = vpop.f32.mrf.mxu0
      %v2553 = vadd.f32 %v2440, %v2552
      %v2554 = vpop.f32.mrf.mxu0
      %2555 = vmatprep.mubr.f32.mxu0 0.0
      %2556 = vmatmul.mubr.f32.gmra.mxu0 %v2458
      %v2557 = vpop.f32.mrf.mxu0
      %v2558 = vadd.f32 %v2440, %v2557
      %v2559 = vpop.f32.mrf.mxu0
      %2560 = vmatprep.mubr.f32.mxu0 0.0
      %2561 = vmatmul.mubr.f32.gmra.mxu0 %v2461
      %v2562 = vpop.f32.mrf.mxu0
      %v2563 = vadd.f32 %v2440, %v2562
      %v2564 = vpop.f32.mrf.mxu0
      %2565 = vmatprep.mubr.f32.mxu0 0.0
      %2566 = vmatmul.mubr.f32.gmra.mxu0 %v2464
      %v2567 = vpop.f32.mrf.mxu0
      %v2568 = vadd.f32 %v2440, %v2567
      %v2569 = vpop.f32.mrf.mxu0
      %2570 = vdwg.mxu0
      %v2571 = vmul.f32 %v2533, 0.70710677
      %v2572 = vmul.f32 %v2538, 0.70710677
      %v2573 = vmul.f32 %v2543, 0.70710677
      %v2574 = vmul.f32 %v2548, 0.70710677
      %v2575 = vmul.f32 %v2553, 0.70710677
      %v2576 = vmul.f32 %v2558, 0.70710677
      %v2577 = vmul.f32 %v2563, 0.70710677
      %v2578 = vmul.f32 %v2568, 0.70710677
      %v2579 = vand.u32 2147483647, %v2571
      %v2580 = vand.u32 2147483647, %v2572
      %v2581 = vand.u32 2147483647, %v2573
      %v2582 = vand.u32 2147483647, %v2574
      %v2583 = vand.u32 2147483647, %v2575
      %v2584 = vand.u32 2147483647, %v2576
      %v2585 = vand.u32 2147483647, %v2577
      %v2586 = vand.u32 2147483647, %v2578
      %v2587 = vmul.f32 %v2579, 0.3275911
      %v2588 = vmul.f32 %v2580, 0.3275911
      %v2589 = vmul.f32 %v2581, 0.3275911
      %v2590 = vmul.f32 %v2582, 0.3275911
      %v2591 = vmul.f32 %v2583, 0.3275911
      %v2592 = vmul.f32 %v2584, 0.3275911
      %v2593 = vmul.f32 %v2585, 0.3275911
      %v2594 = vmul.f32 %v2586, 0.3275911
      %v2595 = vadd.f32 %v2587, 1.0
      %v2596 = vadd.f32 %v2588, 1.0
      %v2597 = vadd.f32 %v2589, 1.0
      %v2598 = vadd.f32 %v2590, 1.0
      %v2599 = vadd.f32 %v2591, 1.0
      %v2600 = vadd.f32 %v2592, 1.0
      %v2601 = vadd.f32 %v2593, 1.0
      %v2602 = vadd.f32 %v2594, 1.0
      %v2603 = vrcp.pop %v2595
      %v2604 = vmul.f32 1.0, %v2603
      %v2605 = vrcp.pop %v2596
      %v2606 = vmul.f32 1.0, %v2605
      %v2607 = vrcp.pop %v2597
      %v2608 = vmul.f32 1.0, %v2607
      %v2609 = vrcp.pop %v2598
      %v2610 = vmul.f32 1.0, %v2609
      %v2611 = vrcp.pop %v2599
      %v2612 = vmul.f32 1.0, %v2611
      %v2613 = vrcp.pop %v2600
      %v2614 = vmul.f32 1.0, %v2613
      %v2615 = vrcp.pop %v2601
      %v2616 = vmul.f32 1.0, %v2615
      %v2617 = vrcp.pop %v2602
      %v2618 = vmul.f32 1.0, %v2617
      %v2619 = vmul.f32 %v2604, 1.0614054
      %v2620 = vmul.f32 %v2606, 1.0614054
      %v2621 = vmul.f32 %v2608, 1.0614054
      %v2622 = vmul.f32 %v2610, 1.0614054
      %v2623 = vmul.f32 %v2612, 1.0614054
      %v2624 = vmul.f32 %v2614, 1.0614054
      %v2625 = vmul.f32 %v2616, 1.0614054
      %v2626 = vmul.f32 %v2618, 1.0614054
      %v2627 = vadd.f32 %v2619, -1.4531521
      %v2628 = vadd.f32 %v2620, -1.4531521
      %v2629 = vadd.f32 %v2621, -1.4531521
      %v2630 = vadd.f32 %v2622, -1.4531521
      %v2631 = vadd.f32 %v2623, -1.4531521
      %v2632 = vadd.f32 %v2624, -1.4531521
      %v2633 = vadd.f32 %v2625, -1.4531521
      %v2634 = vadd.f32 %v2626, -1.4531521
      %v2635 = vmul.f32 %v2604, %v2627
      %v2636 = vmul.f32 %v2606, %v2628
      %v2637 = vmul.f32 %v2608, %v2629
      %v2638 = vmul.f32 %v2610, %v2630
      %v2639 = vmul.f32 %v2612, %v2631
      %v2640 = vmul.f32 %v2614, %v2632
      %v2641 = vmul.f32 %v2616, %v2633
      %v2642 = vmul.f32 %v2618, %v2634
      %v2643 = vadd.f32 %v2635, 1.4214138
      %v2644 = vadd.f32 %v2636, 1.4214138
      %v2645 = vadd.f32 %v2637, 1.4214138
      %v2646 = vadd.f32 %v2638, 1.4214138
      %v2647 = vadd.f32 %v2639, 1.4214138
      %v2648 = vadd.f32 %v2640, 1.4214138
      %v2649 = vadd.f32 %v2641, 1.4214138
      %v2650 = vadd.f32 %v2642, 1.4214138
      %v2651 = vmul.f32 %v2604, %v2643
      %v2652 = vmul.f32 %v2606, %v2644
      %v2653 = vmul.f32 %v2608, %v2645
      %v2654 = vmul.f32 %v2610, %v2646
      %v2655 = vmul.f32 %v2612, %v2647
      %v2656 = vmul.f32 %v2614, %v2648
      %v2657 = vmul.f32 %v2616, %v2649
      %v2658 = vmul.f32 %v2618, %v2650
      %v2659 = vadd.f32 %v2651, -0.28449672
      %v2660 = vadd.f32 %v2652, -0.28449672
      %v2661 = vadd.f32 %v2653, -0.28449672
      %v2662 = vadd.f32 %v2654, -0.28449672
      %v2663 = vadd.f32 %v2655, -0.28449672
      %v2664 = vadd.f32 %v2656, -0.28449672
      %v2665 = vadd.f32 %v2657, -0.28449672
      %v2666 = vadd.f32 %v2658, -0.28449672
      %v2667 = vmul.f32 %v2604, %v2659
      %v2668 = vmul.f32 %v2606, %v2660
      %v2669 = vmul.f32 %v2608, %v2661
      %v2670 = vmul.f32 %v2610, %v2662
      %v2671 = vmul.f32 %v2612, %v2663
      %v2672 = vmul.f32 %v2614, %v2664
      %v2673 = vmul.f32 %v2616, %v2665
      %v2674 = vmul.f32 %v2618, %v2666
      %v2675 = vadd.f32 %v2667, 0.2548296
      %v2676 = vadd.f32 %v2668, 0.2548296
      %v2677 = vadd.f32 %v2669, 0.2548296
      %v2678 = vadd.f32 %v2670, 0.2548296
      %v2679 = vadd.f32 %v2671, 0.2548296
      %v2680 = vadd.f32 %v2672, 0.2548296
      %v2681 = vadd.f32 %v2673, 0.2548296
      %v2682 = vadd.f32 %v2674, 0.2548296
      %v2683 = vmul.f32 %v2604, %v2675
      %v2684 = vmul.f32 %v2606, %v2676
      %v2685 = vmul.f32 %v2608, %v2677
      %v2686 = vmul.f32 %v2610, %v2678
      %v2687 = vmul.f32 %v2612, %v2679
      %v2688 = vmul.f32 %v2614, %v2680
      %v2689 = vmul.f32 %v2616, %v2681
      %v2690 = vmul.f32 %v2618, %v2682
      %v2691 = vsub.f32 0.0, %v2579
      %v2692 = vsub.f32 0.0, %v2580
      %v2693 = vsub.f32 0.0, %v2581
      %v2694 = vsub.f32 0.0, %v2582
      %v2695 = vsub.f32 0.0, %v2583
      %v2696 = vsub.f32 0.0, %v2584
      %v2697 = vsub.f32 0.0, %v2585
      %v2698 = vsub.f32 0.0, %v2586
      %v2699 = vmul.f32 %v2691, %v2579
      %v2700 = vmul.f32 %v2692, %v2580
      %v2701 = vmul.f32 %v2693, %v2581
      %v2702 = vmul.f32 %v2694, %v2582
      %v2703 = vmul.f32 %v2695, %v2583
      %v2704 = vmul.f32 %v2696, %v2584
      %v2705 = vmul.f32 %v2697, %v2585
      %v2706 = vmul.f32 %v2698, %v2586
      %v2707 = vmul.f32 %v2699, 1.442695
      %v2708 = vpow.pop %v2707
      %v2709 = vmul.f32 %v2700, 1.442695
      %v2710 = vpow.pop %v2709
      %v2711 = vmul.f32 %v2701, 1.442695
      %v2712 = vpow.pop %v2711
      %v2713 = vmul.f32 %v2702, 1.442695
      %v2714 = vpow.pop %v2713
      %v2715 = vmul.f32 %v2703, 1.442695
      %v2716 = vpow.pop %v2715
      %v2717 = vmul.f32 %v2704, 1.442695
      %v2718 = vpow.pop %v2717
      %v2719 = vmul.f32 %v2705, 1.442695
      %v2720 = vpow.pop %v2719
      %v2721 = vmul.f32 %v2706, 1.442695
      %v2722 = vpow.pop %v2721
      %v2723 = vmul.f32 %v2683, %v2708
      %v2724 = vmul.f32 %v2684, %v2710
      %v2725 = vmul.f32 %v2685, %v2712
      %v2726 = vmul.f32 %v2686, %v2714
      %v2727 = vmul.f32 %v2687, %v2716
      %v2728 = vmul.f32 %v2688, %v2718
      %v2729 = vmul.f32 %v2689, %v2720
      %v2730 = vmul.f32 %v2690, %v2722
      %v2731 = vsub.f32 1.0, %v2723
      %v2732 = vsub.f32 1.0, %v2724
      %v2733 = vsub.f32 1.0, %v2725
      %v2734 = vsub.f32 1.0, %v2726
      %v2735 = vsub.f32 1.0, %v2727
      %v2736 = vsub.f32 1.0, %v2728
      %v2737 = vsub.f32 1.0, %v2729
      %v2738 = vsub.f32 1.0, %v2730
      %vm2739 = vcmp.ge.f32.partialorder %v2571, 0.0
      %vm2740 = vcmp.ge.f32.partialorder %v2572, 0.0
      %vm2741 = vcmp.ge.f32.partialorder %v2573, 0.0
      %vm2742 = vcmp.ge.f32.partialorder %v2574, 0.0
      %vm2743 = vcmp.ge.f32.partialorder %v2575, 0.0
      %vm2744 = vcmp.ge.f32.partialorder %v2576, 0.0
      %vm2745 = vcmp.ge.f32.partialorder %v2577, 0.0
      %vm2746 = vcmp.ge.f32.partialorder %v2578, 0.0
      %v2747 = vsub.f32 0.0, %v2731
      %v2748 = vsub.f32 0.0, %v2732
      %v2749 = vsub.f32 0.0, %v2733
      %v2750 = vsub.f32 0.0, %v2734
      %v2751 = vsub.f32 0.0, %v2735
      %v2752 = vsub.f32 0.0, %v2736
      %v2753 = vsub.f32 0.0, %v2737
      %v2754 = vsub.f32 0.0, %v2738
      %v2755 = vsel %vm2739, %v2731, %v2747
      %v2756 = vsel %vm2740, %v2732, %v2748
      %v2757 = vsel %vm2741, %v2733, %v2749
      %v2758 = vsel %vm2742, %v2734, %v2750
      %v2759 = vsel %vm2743, %v2735, %v2751
      %v2760 = vsel %vm2744, %v2736, %v2752
      %v2761 = vsel %vm2745, %v2737, %v2753
      %v2762 = vsel %vm2746, %v2738, %v2754
      %v2763 = vmul.f32 %v2533, 0.5
      %v2764 = vmul.f32 %v2538, 0.5
      %v2765 = vmul.f32 %v2543, 0.5
      %v2766 = vmul.f32 %v2548, 0.5
      %v2767 = vmul.f32 %v2553, 0.5
      %v2768 = vmul.f32 %v2558, 0.5
      %v2769 = vmul.f32 %v2563, 0.5
      %v2770 = vmul.f32 %v2568, 0.5
      %v2771 = vadd.f32 %v2755, 1.0
      %v2772 = vadd.f32 %v2756, 1.0
      %v2773 = vadd.f32 %v2757, 1.0
      %v2774 = vadd.f32 %v2758, 1.0
      %v2775 = vadd.f32 %v2759, 1.0
      %v2776 = vadd.f32 %v2760, 1.0
      %v2777 = vadd.f32 %v2761, 1.0
      %v2778 = vadd.f32 %v2762, 1.0
      %v2779 = vmul.f32 %v2763, %v2771
      %v2780 = vmul.f32 %v2764, %v2772
      %v2781 = vmul.f32 %v2765, %v2773
      %v2782 = vmul.f32 %v2766, %v2774
      %v2783 = vmul.f32 %v2767, %v2775
      %v2784 = vmul.f32 %v2768, %v2776
      %v2785 = vmul.f32 %v2769, %v2777
      %v2786 = vmul.f32 %v2770, %v2778
      %v2788 = vlaneseq
      %v2789 = vshrl.u32 %v2788, 7
      %v2790 = vsub.s32 0, %v2789
      %v2791 = vrot.slane %v943, %v2790
      %v2794 = vsel %vm950, %v2779, 0
      %v2797 = vsel %vm950, %v2780, 0
      %v2800 = vsel %vm950, %v2781, 0
      %v2803 = vsel %vm950, %v2782, 0
      %v2806 = vsel %vm950, %v2783, 0
      %v2809 = vsel %vm950, %v2784, 0
      %v2812 = vsel %vm950, %v2785, 0
      %v2815 = vsel %vm950, %v2786, 0
      %2817 = vmatprep.subr.mxu0 0.0
      %2818 = vmatpush1.msra.mxu0 0.0
      %2819 = vmatprep.subr.mxu0 0.0
      %2820 = vmatpush1.msra.mxu0 0.0
      %2821 = vmatprep.subr.mxu0 0.0
      %2822 = vmatpush1.msra.mxu0 0.0
      %2823 = vmatprep.subr.mxu0 0.0
      %2824 = vmatpush1.msra.mxu0 0.0
      %2825 = vmatprep.subr.mxu0 0.0
      %2826 = vmatpush1.msra.mxu0 0.0
      %2827 = vmatprep.subr.mxu0 0.0
      %2828 = vmatpush1.msra.mxu0 0.0
      %2829 = vmatprep.subr.mxu0 0.0
      %2830 = vmatpush1.msra.mxu0 0.0
      %2831 = vmatprep.subr.mxu0 0.0
      %2832 = vmatpush1.msra.mxu0 0.0
      %2833 = vmatprep.subr.mxu0 0.0
      %2834 = vmatpush1.msra.mxu0 0.0
      %2835 = vmatprep.subr.mxu0 0.0
      %2836 = vmatpush1.msra.mxu0 0.0
      %2837 = vmatprep.subr.mxu0 0.0
      %2838 = vmatpush1.msra.mxu0 0.0
      %2839 = vmatprep.subr.mxu0 0.0
      %2840 = vmatpush1.msra.mxu0 0.0
      %2841 = vmatprep.subr.mxu0 0.0
      %2842 = vmatpush1.msra.mxu0 0.0
      %2843 = vmatprep.subr.mxu0 0.0
      %2844 = vmatpush1.msra.mxu0 0.0
      %2845 = vmatprep.subr.mxu0 0.0
      %2846 = vmatpush1.msra.mxu0 %v942
      %2847 = vmatprep.subr.mxu0 0.0
      %2848 = vmatpush1.msra.mxu0 %v941
      %2849 = vmatprep.subr.mxu0 0.0
      %2850 = vmatpush2.msra.mxu0 0.0
      %2851 = vmatprep.subr.mxu0 0.0
      %2852 = vmatpush2.msra.mxu0 0.0
      %2853 = vmatprep.subr.mxu0 0.0
      %2854 = vmatpush2.msra.mxu0 0.0
      %2855 = vmatprep.subr.mxu0 0.0
      %2856 = vmatpush2.msra.mxu0 0.0
      %2857 = vmatprep.subr.mxu0 0.0
      %2858 = vmatpush2.msra.mxu0 0.0
      %2859 = vmatprep.subr.mxu0 0.0
      %2860 = vmatpush2.msra.mxu0 0.0
      %2861 = vmatprep.subr.mxu0 0.0
      %2862 = vmatpush2.msra.mxu0 0.0
      %2863 = vmatprep.subr.mxu0 0.0
      %2864 = vmatpush2.msra.mxu0 0.0
      %2865 = vmatprep.subr.mxu0 0.0
      %2866 = vmatpush2.msra.mxu0 0.0
      %2867 = vmatprep.subr.mxu0 0.0
      %2868 = vmatpush2.msra.mxu0 0.0
      %2869 = vmatprep.subr.mxu0 0.0
      %2870 = vmatpush2.msra.mxu0 0.0
      %2871 = vmatprep.subr.mxu0 0.0
      %2872 = vmatpush2.msra.mxu0 0.0
      %2873 = vmatprep.subr.mxu0 0.0
      %2874 = vmatpush2.msra.mxu0 0.0
      %2875 = vmatprep.subr.mxu0 0.0
      %2876 = vmatpush2.msra.mxu0 0.0
      %2877 = vmatprep.subr.mxu0 0.0
      %2878 = vmatpush2.msra.mxu0 0.0
      %2879 = vmatprep.subr.mxu0 0.0
      %2880 = vmatpush2.msra.mxu0 0.0
      %2881 = vmatprep.mubr.f32.mxu0 0.0
      %2882 = vmatmul.mubr.f32.gmra.mxu0 %v2794
      %v2883 = vpop.f32.mrf.mxu0
      %v2884 = vadd.f32 %v2791, %v2883
      %v2885 = vpop.f32.mrf.mxu0
      %2886 = vmatprep.mubr.f32.mxu0 0.0
      %2887 = vmatmul.mubr.f32.gmra.mxu0 %v2797
      %v2888 = vpop.f32.mrf.mxu0
      %v2889 = vadd.f32 %v2791, %v2888
      %v2890 = vpop.f32.mrf.mxu0
      %2891 = vmatprep.mubr.f32.mxu0 0.0
      %2892 = vmatmul.mubr.f32.gmra.mxu0 %v2800
      %v2893 = vpop.f32.mrf.mxu0
      %v2894 = vadd.f32 %v2791, %v2893
      %v2895 = vpop.f32.mrf.mxu0
      %2896 = vmatprep.mubr.f32.mxu0 0.0
      %2897 = vmatmul.mubr.f32.gmra.mxu0 %v2803
      %v2898 = vpop.f32.mrf.mxu0
      %v2899 = vadd.f32 %v2791, %v2898
      %v2900 = vpop.f32.mrf.mxu0
      %2901 = vmatprep.mubr.f32.mxu0 0.0
      %2902 = vmatmul.mubr.f32.gmra.mxu0 %v2806
      %v2903 = vpop.f32.mrf.mxu0
      %v2904 = vadd.f32 %v2791, %v2903
      %v2905 = vpop.f32.mrf.mxu0
      %2906 = vmatprep.mubr.f32.mxu0 0.0
      %2907 = vmatmul.mubr.f32.gmra.mxu0 %v2809
      %v2908 = vpop.f32.mrf.mxu0
      %v2909 = vadd.f32 %v2791, %v2908
      %v2910 = vpop.f32.mrf.mxu0
      %2911 = vmatprep.mubr.f32.mxu0 0.0
      %2912 = vmatmul.mubr.f32.gmra.mxu0 %v2812
      %v2913 = vpop.f32.mrf.mxu0
      %v2914 = vadd.f32 %v2791, %v2913
      %v2915 = vpop.f32.mrf.mxu0
      %2916 = vmatprep.mubr.f32.mxu0 0.0
      %2917 = vmatmul.mubr.f32.gmra.mxu0 %v2815
      %v2918 = vpop.f32.mrf.mxu0
      %v2919 = vadd.f32 %v2791, %v2918
      %v2920 = vpop.f32.mrf.mxu0
      %2921 = vdwg.mxu0
      %v2922 = vadd.f32 %v902, %v2884
      %v2923 = vadd.f32 %v903, %v2889
      %v2924 = vadd.f32 %v904, %v2894
      %v2925 = vadd.f32 %v905, %v2899
      %v2926 = vadd.f32 %v906, %v2904
      %v2927 = vadd.f32 %v907, %v2909
      %v2928 = vadd.f32 %v908, %v2914
      %v2929 = vadd.f32 %v909, %v2919
      %v2930 = vadd.f32 %v878, %v2922
      %v2931 = vadd.f32 %v879, %v2923
      %v2932 = vadd.f32 %v880, %v2924
      %v2933 = vadd.f32 %v881, %v2925
      %v2934 = vadd.f32 %v882, %v2926
      %v2935 = vadd.f32 %v883, %v2927
      %v2936 = vadd.f32 %v884, %v2928
      %v2937 = vadd.f32 %v885, %v2929
      %2938 = vst.msk [vmem:[%s864] sm:$0xff] %vm950, %v2930
      %2939 = vst.msk [vmem:[%s864 + $0x8] sm:$0xff] %vm950, %v2931
      %2940 = vst.msk [vmem:[%s864 + $0x10] sm:$0xff] %vm950, %v2932
      %2941 = vst.msk [vmem:[%s864 + $0x18] sm:$0xff] %vm950, %v2933
      %2942 = vst.msk [vmem:[%s864 + $0x20] sm:$0xff] %vm950, %v2934
      %2943 = vst.msk [vmem:[%s864 + $0x28] sm:$0xff] %vm950, %v2935
      %2944 = vst.msk [vmem:[%s864 + $0x30] sm:$0xff] %vm950, %v2936
      %2945 = vst.msk [vmem:[%s864 + $0x38] sm:$0xff] %vm950, %v2937
      %v2946 = vadd.f32 %v1432, %v2428
      %v2947 = vadd.f32 %v1433, %v2429
      %v2948 = vadd.f32 %v1434, %v2430
      %v2949 = vadd.f32 %v1435, %v2431
      %v2950 = vadd.f32 %v1436, %v2432
      %v2951 = vadd.f32 %v1437, %v2433
      %v2952 = vadd.f32 %v1438, %v2434
      %v2953 = vadd.f32 %v1439, %v2435
      %2954 = vst.msk [vmem:[%s870] sm:$0xff] %vm1302, %v2946
      %2955 = vst.msk [vmem:[%s870 + $0x8] sm:$0xff] %vm1302, %v2947
      %2956 = vst.msk [vmem:[%s870 + $0x10] sm:$0xff] %vm1302, %v2948
      %2957 = vst.msk [vmem:[%s870 + $0x18] sm:$0xff] %vm1302, %v2949
      %2958 = vst.msk [vmem:[%s870 + $0x20] sm:$0xff] %vm1302, %v2950
      %2959 = vst.msk [vmem:[%s870 + $0x28] sm:$0xff] %vm1302, %v2951
      %2960 = vst.msk [vmem:[%s870 + $0x30] sm:$0xff] %vm1302, %v2952
      %2961 = vst.msk [vmem:[%s870 + $0x38] sm:$0xff] %vm1302, %v2953
      %v2962 = vadd.f32 %v1931, %v918
      %v2963 = vadd.f32 %v1932, %v919
      %v2964 = vadd.f32 %v1933, %v920
      %v2965 = vadd.f32 %v1934, %v921
      %v2966 = vadd.f32 %v1935, %v922
      %v2967 = vadd.f32 %v1936, %v923
      %v2968 = vadd.f32 %v1937, %v924
      %v2969 = vadd.f32 %v1938, %v925
      %2970 = vst.msk [vmem:[%s876] sm:$0xff] %vm1797, %v2962
      %2971 = vst.msk [vmem:[%s876 + $0x8] sm:$0xff] %vm1797, %v2963
      %2972 = vst.msk [vmem:[%s876 + $0x10] sm:$0xff] %vm1797, %v2964
      %2973 = vst.msk [vmem:[%s876 + $0x18] sm:$0xff] %vm1797, %v2965
      %2974 = vst.msk [vmem:[%s876 + $0x20] sm:$0xff] %vm1797, %v2966
      %2975 = vst.msk [vmem:[%s876 + $0x28] sm:$0xff] %vm1797, %v2967
      %2976 = vst.msk [vmem:[%s876 + $0x30] sm:$0xff] %vm1797, %v2968
      %2977 = vst.msk [vmem:[%s876 + $0x38] sm:$0xff] %vm1797, %v2969
      %s2978 = smul.u32 8, %s36
      %p2979 = scmp.lt.s32.totalorder %s2978, 15
      %s2980 = scalar_select %p2979, %s2978, 15
      %s2981 = smul.addr %s2980, 8
      %s2982 = scalar_lea.vmem %s22, %s2981
      %s2983 = smul.u32 8, %s36
      %p2984 = scmp.lt.s32.totalorder %s2983, 15
      %s2985 = scalar_select %p2984, %s2983, 15
      %s2986 = smul.addr %s2985, 8
      %s2987 = scalar_lea.vmem %s23, %s2986
      %s2988 = smul.u32 8, %s36
      %p2989 = scmp.lt.s32.totalorder %s2988, 15
      %s2990 = scalar_select %p2989, %s2988, 15
      %s2991 = smul.addr %s2990, 8
      %s2992 = scalar_lea.vmem %s24, %s2991
      // Predicated region
      $region109: #{_lambda_.9} parent=107 // pred_check
        %p2993 = pneg %p546
      $region110: #{_lambda_.9} parent=107 // pred_check_branch
        %2995 = sbr.rel (%p2993) target = $region112
      $region111: #{_lambda_.9} parent=107 // pred_region
        %s2996 = smul.u32 8, %s36
      $region112: #{_lambda_.9} parent=107 // pred_fallthru
        _
      // Predicated region
      $region113: #{_lambda_.9} parent=107 // pred_check
        %p2997 = pneg %p572
      $region114: #{_lambda_.9} parent=107 // pred_check_branch
        %2999 = sbr.rel (%p2997) target = $region116
      $region115: #{_lambda_.9} parent=107 // pred_region
        %s3000 = smul.u32 8, %s36
      $region116: #{_lambda_.9} parent=107 // pred_fallthru
        _
      // Predicated region
      $region117: #{_lambda_.9} parent=107 // pred_check
        %p3001 = pneg %p598
      $region118: #{_lambda_.9} parent=107 // pred_check_branch
        %3003 = sbr.rel (%p3001) target = $region120
      $region119: #{_lambda_.9} parent=107 // pred_region
        %s3004 = smul.u32 8, %s36
      $region120: #{_lambda_.9} parent=107 // pred_fallthru
        _
    $region108: #{_lambda_.9} parent=5 // pred_fallthru
      _
    %p3005 = scmp.le.s32.totalorder 2, %s31
    // Predicated region
    $region121: #{_lambda_.9} parent=5 // pred_check
      %p3006 = pneg %p3005
    $region122: #{_lambda_.9} parent=5 // pred_check_branch
      %3008 = sbr.rel (%p3006) target = $region124
    $region123: #{_lambda_.9} parent=5 // pred_region
      %s3009 = ssub.s32 %s31, 2
      // Predicated region
      $region125: #{_lambda_.9} parent=123 // pred_check
        %p3010 = pneg %p552
      $region126: #{_lambda_.9} parent=123 // pred_check_branch
        %3012 = sbr.rel (%p3010) target = $region128
      $region127: #{_lambda_.9} parent=123 // pred_region
        %s3013 = smul.u32 8, %s37
        %p3014 = scmp.lt.s32.totalorder %s3013, 15
        %s3015 = scalar_select %p3014, %s3013, 15
        %s3016 = smul.addr %s3015, 8
        %s3017 = scalar_lea.vmem %s22, %s3016
      $region128: #{_lambda_.9} parent=123 // pred_fallthru
        _
      // Predicated region
      $region129: #{_lambda_.9} parent=123 // pred_check
        %p3018 = pneg %p578
      $region130: #{_lambda_.9} parent=123 // pred_check_branch
        %3020 = sbr.rel (%p3018) target = $region132
      $region131: #{_lambda_.9} parent=123 // pred_region
        %s3021 = smul.u32 8, %s37
        %p3022 = scmp.lt.s32.totalorder %s3021, 15
        %s3023 = scalar_select %p3022, %s3021, 15
        %s3024 = smul.addr %s3023, 8
        %s3025 = scalar_lea.vmem %s23, %s3024
      $region132: #{_lambda_.9} parent=123 // pred_fallthru
        _
      // Predicated region
      $region133: #{_lambda_.9} parent=123 // pred_check
        %p3026 = pneg %p604
      $region134: #{_lambda_.9} parent=123 // pred_check_branch
        %3028 = sbr.rel (%p3026) target = $region136
      $region135: #{_lambda_.9} parent=123 // pred_region
        %s3029 = smul.u32 8, %s37
        %p3030 = scmp.lt.s32.totalorder %s3029, 15
        %s3031 = scalar_select %p3030, %s3029, 15
        %s3032 = smul.addr %s3031, 8
        %s3033 = scalar_lea.vmem %s24, %s3032
      $region136: #{_lambda_.9} parent=123 // pred_fallthru
        _
    $region124: #{_lambda_.9} parent=5 // pred_fallthru
      _
  $region6: #{_lambda_.9} parent=0 // loop_footer
    %s35 = sadd.s32 1, %s31
  $region7: #{_lambda_.9} parent=0 // loop_footer_branch
    %30 = sbr.rel target = $region3
  $region8: #{_lambda_.9} parent=0 // loop_exit
    _

</llo_original>
